<compile_context>
chip_gen: v5e
topology: v5e:2x2
jax: 0.10.0
libtpu: 0.0.40
codegen_flags: <defaults>
</compile_context>

<pallas_src>
import functools

import numpy as np

import jax
import jax.numpy as jnp
from jax.experimental import pallas as pl
from jax.experimental.pallas import tpu as pltpu

NC = 3
NDF = 8
NGF = 8
EPS = 1e-5

# (kind, weight key, bn key suffix or None, Cin, Cout, activation)
LAYERS = (
    ("conv",   "c1", None,  NC,       NDF,      "leaky"),
    ("conv",   "c2", "2",   NDF,      NDF * 4,  "leaky"),
    ("conv",   "c3", "3",   NDF * 4,  NDF * 8,  "leaky"),
    ("conv",   "c4", "4",   NDF * 8,  NDF * 16, "leaky"),
    ("deconv", "d1", "d1",  NGF * 16, NGF * 8,  "relu"),
    ("deconv", "d2", "d2",  NGF * 8,  NGF * 4,  "relu"),
    ("deconv", "d3", "d3",  NGF * 4,  NGF,      "relu"),
    ("deconv", "d4", None,  NGF,      NC,       "tanh"),
)


# ----------------------------------------------------------------------------
# One-time (numpy) construction of the kernel's constant operands
# ----------------------------------------------------------------------------
def _conv_row_select(n, h, kh):
    """L[(n,oh),(n,hin)] = 1 iff hin == 2*oh - 1 + kh (pad rows -> all-zero)."""
    oh = h // 2
    L = np.zeros((n * oh, n * h), np.float32)
    for b in range(n):
        for o in range(oh):
            hin = 2 * o - 1 + kh
            if 0 <= hin < h:
                L[b * oh + o, b * h + hin] = 1.0
    return L


def _conv_col_weight(w, cin, cout, wt, kh):
    """R[(win,ci),(ow,co)] = wt[co,ci,kh,kw] with win = 2*ow - 1 + kw."""
    ow = w // 2
    R = np.zeros((w * cin, ow * cout), np.float32)
    for o in range(ow):
        for kw in range(4):
            win = 2 * o - 1 + kw
            if 0 <= win < w:
                R[win * cin:(win + 1) * cin, o * cout:(o + 1) * cout] = \
                    wt[:, :, kh, kw].T
    return R


def _deconv_row_select(n, h, kh):
    """L[(n,y),(n,i)] = 1 iff y == 2*i + kh - 1 (ConvTranspose scatter rows)."""
    oh = 2 * h
    L = np.zeros((n * oh, n * h), np.float32)
    for b in range(n):
        for i in range(h):
            y = 2 * i + kh - 1
            if 0 <= y < oh:
                L[b * oh + y, b * h + i] = 1.0
    return L


def _deconv_col_weight(w, cin, cout, wt, kh):
    """R[(j,ci),(x,co)] = wt[ci,co,kh,kw] with x = 2*j + kw - 1."""
    ow = 2 * w
    R = np.zeros((w * cin, ow * cout), np.float32)
    for j in range(w):
        for kw in range(4):
            x = 2 * j + kw - 1
            if 0 <= x < ow:
                R[j * cin:(j + 1) * cin, x * cout:(x + 1) * cout] = \
                    wt[:, :, kh, kw]
    return R


def build_plan(params, n, h0):
    """Precompute every constant kernel operand once, outside the forward
    trace: per layer a (4, rows_out, rows_in) bf16 row-selection stack L, a
    (4, W*Cin, OW*Cout) bf16 banded weight stack R, and (for BN layers) the
    0/1 reduce/expand matrices plus gamma/beta."""
    consts = []
    h = h0
    for kind, wkey, bnkey, cin, cout, _ in LAYERS:
        wt = np.asarray(params[wkey], np.float32)
        if kind == "conv":
            oh = h // 2
            L = np.stack([_conv_row_select(n, h, kh) for kh in range(4)])
            R = np.stack([_conv_col_weight(h, cin, cout, wt, kh)
                          for kh in range(4)])
        else:
            oh = 2 * h
            L = np.stack([_deconv_row_select(n, h, kh) for kh in range(4)])
            R = np.stack([_deconv_col_weight(h, cin, cout, wt, kh)
                          for kh in range(4)])
        consts.append(jnp.asarray(L, jnp.bfloat16))
        consts.append(jnp.asarray(R, jnp.bfloat16))
        if bnkey is not None:
            pred = np.tile(np.eye(cout, dtype=np.float32), (oh, 1))  # (OW*C, C)
            consts.append(jnp.asarray(pred))                          # reduce
            consts.append(jnp.asarray(np.ascontiguousarray(pred.T)))  # expand
            consts.append(
                jnp.asarray(params["g" + bnkey], jnp.float32).reshape(1, cout))
            consts.append(
                jnp.asarray(params["b" + bnkey], jnp.float32).reshape(1, cout))
        h = oh
    return consts


def _layer_meta(n, h0):
    meta = []
    h = h0
    for kind, _, bnkey, _, _, act in LAYERS:
        oh = h // 2 if kind == "conv" else 2 * h
        meta.append(dict(bn=bnkey is not None, act=act,
                         count=float(n * oh * oh)))
        h = oh
    return meta


# ----------------------------------------------------------------------------
# The single fused kernel: 8 layers of  sum_kh (L_kh @ X) @ R_kh  + BN + act
# ----------------------------------------------------------------------------
def _generator_kernel(*refs, meta):
    x_ref = refs[0]
    out_ref = refs[-1]
    pos = 1

    xv = x_ref[...]                                   # (N*H0, W0*NC) bf16
    n_layers = len(meta)
    for li, m in enumerate(meta):
        l_ref = refs[pos]
        r_ref = refs[pos + 1]
        pos += 2

        # (De)conv as 4 pairs of MXU matmuls, f32 accumulation.
        y = None
        for kh in range(4):
            sel = jnp.dot(l_ref[kh], xv,
                          preferred_element_type=jnp.float32)
            sel = sel.astype(jnp.bfloat16)            # exact (0/1-selected bf16)
            part = jnp.dot(sel, r_ref[kh],
                           preferred_element_type=jnp.float32)
            y = part if y is None else y + part       # (rows_out, OW*Cout) f32

        if m["bn"]:
            pred_ref, pexp_ref, g_ref, b_ref = refs[pos:pos + 4]
            pos += 4
            # Single-pass training-mode BatchNorm (biased variance), f32.
            inv_cnt = 1.0 / m["count"]
            colsum = jnp.sum(y, axis=0, keepdims=True)        # (1, OW*C)
            colsq = jnp.sum(y * y, axis=0, keepdims=True)     # (1, OW*C)
            mean = inv_cnt * jnp.dot(colsum, pred_ref[...],
                                     preferred_element_type=jnp.float32)
            ex2 = inv_cnt * jnp.dot(colsq, pred_ref[...],
                                    preferred_element_type=jnp.float32)
            var = jnp.maximum(ex2 - mean * mean, 0.0)         # (1, C)
            scale = g_ref[...] * jax.lax.rsqrt(var + EPS)     # (1, C)
            shift = b_ref[...] - mean * scale                 # (1, C)
            y = (y * jnp.dot(scale, pexp_ref[...],
                             preferred_element_type=jnp.float32)
                 + jnp.dot(shift, pexp_ref[...],
                           preferred_element_type=jnp.float32))

        act_kind = m["act"]
        if act_kind == "leaky":
            y = jnp.where(y >= 0.0, y, 0.2 * y)
        elif act_kind == "relu":
            y = jnp.maximum(y, 0.0)
        else:                                         # tanh
            y = jnp.tanh(y)

        if li + 1 < n_layers:
            xv = y.astype(jnp.bfloat16)               # stays on-chip
        else:
            out_ref[...] = y                          # (N*H0, W0*NC) f32

    assert pos == len(refs) - 1


# ----------------------------------------------------------------------------
# Forward wrapper: one pallas_call for the whole generator
# ----------------------------------------------------------------------------
def generator_forward(x_nchw, consts):
    n, c, h, w = x_nchw.shape
    assert c == NC and h == w and h % 16 == 0
    meta = _layer_meta(n, h)

    x2 = jnp.transpose(x_nchw, (0, 2, 3, 1)).reshape(n * h, w * c)
    x2 = x2.astype(jnp.bfloat16)

    vmem = pl.BlockSpec(memory_space=pltpu.MemorySpace.VMEM)
    kernel = functools.partial(_generator_kernel, meta=meta)
    out2 = pl.pallas_call(
        kernel,
        out_shape=jax.ShapeDtypeStruct((n * h, w * c), jnp.float32),
        in_specs=[vmem] * (1 + len(consts)),
        out_specs=vmem,
        compiler_params=pltpu.CompilerParams(
            vmem_limit_bytes=32 * 1024 * 1024),
    )(x2, *consts)

    return jnp.transpose(out2.reshape(n, h, w, c), (0, 3, 1, 2))  # NCHW


# ----------------------------------------------------------------------------
# Parameters (synthetic, deterministic) and a pure-JAX reference
# ----------------------------------------------------------------------------
def init_params(key):
    ks = jax.random.split(key, 8)
    f32 = jnp.float32

    def w(k, shape):
        return (0.02 * jax.random.normal(k, shape)).astype(f32)

    p = {
        # Conv2d weights: (Cout, Cin, 4, 4)
        "c1": w(ks[0], (NDF, NC, 4, 4)),
        "c2": w(ks[1], (NDF * 4, NDF, 4, 4)),
        "c3": w(ks[2], (NDF * 8, NDF * 4, 4, 4)),
        "c4": w(ks[3], (NDF * 16, NDF * 8, 4, 4)),
        # ConvTranspose2d weights: (Cin, Cout, 4, 4)
        "d1": w(ks[4], (NGF * 16, NGF * 8, 4, 4)),
        "d2": w(ks[5], (NGF * 8, NGF * 4, 4, 4)),
        "d3": w(ks[6], (NGF * 4, NGF, 4, 4)),
        "d4": w(ks[7], (NGF, NC, 4, 4)),
    }
    # BatchNorm affine params (PyTorch default init: gamma=1, beta=0)
    for name, ch in (("2", NDF * 4), ("3", NDF * 8), ("4", NDF * 16),
                     ("d1", NGF * 8), ("d2", NGF * 4), ("d3", NGF)):
        p["g" + name] = jnp.ones((ch,), f32)
        p["b" + name] = jnp.zeros((ch,), f32)
    return p


def reference_forward(x, p):
    """Pure-JAX reference with the same numerics as the kernel (bf16 matmul
    operands, f32 accumulation, training-mode BatchNorm)."""
    f32 = jnp.float32

    def r(v):  # mirror the kernel's bf16 operand rounding
        return v.astype(jnp.bfloat16).astype(f32)

    def conv(xx, wt):
        return jax.lax.conv_general_dilated(
            r(xx), r(wt), (2, 2), ((1, 1), (1, 1)),
            dimension_numbers=("NCHW", "OIHW", "NCHW"),
            precision=jax.lax.Precision.HIGHEST)

    def deconv(xx, wt):
        wf = jnp.transpose(jnp.flip(wt, (2, 3)), (1, 0, 2, 3))  # (Cout,Cin,4,4)
        return jax.lax.conv_general_dilated(
            r(xx), r(wf), (1, 1), ((2, 2), (2, 2)), lhs_dilation=(2, 2),
            dimension_numbers=("NCHW", "OIHW", "NCHW"),
            precision=jax.lax.Precision.HIGHEST)

    def bn(xx, g, b):
        mean = jnp.mean(xx, axis=(0, 2, 3), keepdims=True)
        var = jnp.mean((xx - mean) ** 2, axis=(0, 2, 3), keepdims=True)
        xn = (xx - mean) * jax.lax.rsqrt(var + EPS)
        return xn * g.reshape(1, -1, 1, 1) + b.reshape(1, -1, 1, 1)

    def lrelu(xx):
        return jnp.where(xx >= 0, xx, 0.2 * xx)

    x = lrelu(conv(x, p["c1"]))
    x = lrelu(bn(conv(x, p["c2"]), p["g2"], p["b2"]))
    x = lrelu(bn(conv(x, p["c3"]), p["g3"], p["b3"]))
    x = lrelu(bn(conv(x, p["c4"]), p["g4"], p["b4"]))
    x = jnp.maximum(bn(deconv(x, p["d1"]), p["gd1"], p["bd1"]), 0.0)
    x = jnp.maximum(bn(deconv(x, p["d2"]), p["gd2"], p["bd2"]), 0.0)
    x = jnp.maximum(bn(deconv(x, p["d3"]), p["gd3"], p["bd3"]), 0.0)
    x = jnp.tanh(deconv(x, p["d4"]))
    return x


if __name__ == "__main__":
    key = jax.random.PRNGKey(0)
    kx, kp = jax.random.split(key)
    # batch=2, nc=3, 32x32 (divisible by 2^4 so the U-shaped net round-trips)
    x = jax.random.normal(kx, (2, NC, 32, 32), dtype=jnp.float32)
    params = init_params(kp)
    consts = build_plan(params, n=2, h0=32)   # one-time, outside the trace

    fwd = jax.jit(generator_forward)
    out = fwd(x, consts)
    jax.block_until_ready(out)

    ref = jax.block_until_ready(reference_forward(x, params))

    assert out.shape == (2, NC, 32, 32), out.shape
    assert out.dtype == jnp.float32
    assert bool(jnp.all(jnp.isfinite(out)))
    assert bool(jnp.all(jnp.abs(out) <= 1.000001))          # tanh output range
    max_err = float(jnp.max(jnp.abs(out - ref)))
    assert max_err < 5e-3, max_err
    print("KERNEL_OK")
</pallas_src>

<mosaic_0001>
module attributes {stable_mosaic.version = 11 : i64} {
  func.func @_generator_kernel(%arg0: memref<64x96xbf16, #tpu.memory_space<vmem>>, %arg1: memref<4x32x64xbf16, #tpu.memory_space<vmem>>, %arg2: memref<4x96x128xbf16, #tpu.memory_space<vmem>>, %arg3: memref<4x16x32xbf16, #tpu.memory_space<vmem>>, %arg4: memref<4x128x256xbf16, #tpu.memory_space<vmem>>, %arg5: memref<256x32xf32, #tpu.memory_space<vmem>>, %arg6: memref<32x256xf32, #tpu.memory_space<vmem>>, %arg7: memref<1x32xf32, #tpu.memory_space<vmem>>, %arg8: memref<1x32xf32, #tpu.memory_space<vmem>>, %arg9: memref<4x8x16xbf16, #tpu.memory_space<vmem>>, %arg10: memref<4x256x256xbf16, #tpu.memory_space<vmem>>, %arg11: memref<256x64xf32, #tpu.memory_space<vmem>>, %arg12: memref<64x256xf32, #tpu.memory_space<vmem>>, %arg13: memref<1x64xf32, #tpu.memory_space<vmem>>, %arg14: memref<1x64xf32, #tpu.memory_space<vmem>>, %arg15: memref<4x4x8xbf16, #tpu.memory_space<vmem>>, %arg16: memref<4x256x256xbf16, #tpu.memory_space<vmem>>, %arg17: memref<256x128xf32, #tpu.memory_space<vmem>>, %arg18: memref<128x256xf32, #tpu.memory_space<vmem>>, %arg19: memref<1x128xf32, #tpu.memory_space<vmem>>, %arg20: memref<1x128xf32, #tpu.memory_space<vmem>>, %arg21: memref<4x8x4xbf16, #tpu.memory_space<vmem>>, %arg22: memref<4x256x256xbf16, #tpu.memory_space<vmem>>, %arg23: memref<256x64xf32, #tpu.memory_space<vmem>>, %arg24: memref<64x256xf32, #tpu.memory_space<vmem>>, %arg25: memref<1x64xf32, #tpu.memory_space<vmem>>, %arg26: memref<1x64xf32, #tpu.memory_space<vmem>>, %arg27: memref<4x16x8xbf16, #tpu.memory_space<vmem>>, %arg28: memref<4x256x256xbf16, #tpu.memory_space<vmem>>, %arg29: memref<256x32xf32, #tpu.memory_space<vmem>>, %arg30: memref<32x256xf32, #tpu.memory_space<vmem>>, %arg31: memref<1x32xf32, #tpu.memory_space<vmem>>, %arg32: memref<1x32xf32, #tpu.memory_space<vmem>>, %arg33: memref<4x32x16xbf16, #tpu.memory_space<vmem>>, %arg34: memref<4x256x128xbf16, #tpu.memory_space<vmem>>, %arg35: memref<128x8xf32, #tpu.memory_space<vmem>>, %arg36: memref<8x128xf32, #tpu.memory_space<vmem>>, %arg37: memref<1x8xf32, #tpu.memory_space<vmem>>, %arg38: memref<1x8xf32, #tpu.memory_space<vmem>>, %arg39: memref<4x64x32xbf16, #tpu.memory_space<vmem>>, %arg40: memref<4x128x96xbf16, #tpu.memory_space<vmem>>, %arg41: memref<64x96xf32, #tpu.memory_space<vmem>>) attributes {dimension_semantics = [], scalar_prefetch = 0 : i64, scratch_operands = 0 : i64, tpu.core_type = #tpu.core_type<tc>} {
    %c0 = arith.constant 0 : index
    %c0_0 = arith.constant 0 : index
    %0 = vector.load %arg0[%c0, %c0_0] : memref<64x96xbf16, #tpu.memory_space<vmem>>, vector<64x96xbf16>
    %c0_1 = arith.constant 0 : index
    %c0_2 = arith.constant 0 : index
    %c0_3 = arith.constant 0 : index
    %1 = vector.load %arg1[%c0_1, %c0_2, %c0_3] : memref<4x32x64xbf16, #tpu.memory_space<vmem>>, vector<1x32x64xbf16>
    %2 = vector.shape_cast %1 : vector<1x32x64xbf16> to vector<32x64xbf16>
    %cst = arith.constant dense<0.000000e+00> : vector<32x96xf32>
    %3 = tpu.matmul %2, %0, %cst {dimension_numbers = #tpu.dot_dimension_numbers<[1], [0], [0], [1], [0, 0, 1, 1], [], []>} : vector<32x64xbf16>, vector<64x96xbf16>, vector<32x96xf32> -> vector<32x96xf32>
    %4 = arith.truncf %3 : vector<32x96xf32> to vector<32x96xbf16>
    %c0_4 = arith.constant 0 : index
    %c0_5 = arith.constant 0 : index
    %c0_6 = arith.constant 0 : index
    %5 = vector.load %arg2[%c0_4, %c0_5, %c0_6] : memref<4x96x128xbf16, #tpu.memory_space<vmem>>, vector<1x96x128xbf16>
    %6 = vector.shape_cast %5 : vector<1x96x128xbf16> to vector<96x128xbf16>
    %cst_7 = arith.constant dense<0.000000e+00> : vector<32x128xf32>
    %7 = tpu.matmul %4, %6, %cst_7 {dimension_numbers = #tpu.dot_dimension_numbers<[1], [0], [0], [1], [0, 0, 1, 1], [], []>} : vector<32x96xbf16>, vector<96x128xbf16>, vector<32x128xf32> -> vector<32x128xf32>
    %c1 = arith.constant 1 : index
    %c0_8 = arith.constant 0 : index
    %c0_9 = arith.constant 0 : index
    %8 = vector.load %arg1[%c1, %c0_8, %c0_9] : memref<4x32x64xbf16, #tpu.memory_space<vmem>>, vector<1x32x64xbf16>
    %9 = vector.shape_cast %8 : vector<1x32x64xbf16> to vector<32x64xbf16>
    %cst_10 = arith.constant dense<0.000000e+00> : vector<32x96xf32>
    %10 = tpu.matmul %9, %0, %cst_10 {dimension_numbers = #tpu.dot_dimension_numbers<[1], [0], [0], [1], [0, 0, 1, 1], [], []>} : vector<32x64xbf16>, vector<64x96xbf16>, vector<32x96xf32> -> vector<32x96xf32>
    %11 = arith.truncf %10 : vector<32x96xf32> to vector<32x96xbf16>
    %c1_11 = arith.constant 1 : index
    %c0_12 = arith.constant 0 : index
    %c0_13 = arith.constant 0 : index
    %12 = vector.load %arg2[%c1_11, %c0_12, %c0_13] : memref<4x96x128xbf16, #tpu.memory_space<vmem>>, vector<1x96x128xbf16>
    %13 = vector.shape_cast %12 : vector<1x96x128xbf16> to vector<96x128xbf16>
    %cst_14 = arith.constant dense<0.000000e+00> : vector<32x128xf32>
    %14 = tpu.matmul %11, %13, %cst_14 {dimension_numbers = #tpu.dot_dimension_numbers<[1], [0], [0], [1], [0, 0, 1, 1], [], []>} : vector<32x96xbf16>, vector<96x128xbf16>, vector<32x128xf32> -> vector<32x128xf32>
    %15 = arith.addf %7, %14 : vector<32x128xf32>
    %c2 = arith.constant 2 : index
    %c0_15 = arith.constant 0 : index
    %c0_16 = arith.constant 0 : index
    %16 = vector.load %arg1[%c2, %c0_15, %c0_16] : memref<4x32x64xbf16, #tpu.memory_space<vmem>>, vector<1x32x64xbf16>
    %17 = vector.shape_cast %16 : vector<1x32x64xbf16> to vector<32x64xbf16>
    %cst_17 = arith.constant dense<0.000000e+00> : vector<32x96xf32>
    %18 = tpu.matmul %17, %0, %cst_17 {dimension_numbers = #tpu.dot_dimension_numbers<[1], [0], [0], [1], [0, 0, 1, 1], [], []>} : vector<32x64xbf16>, vector<64x96xbf16>, vector<32x96xf32> -> vector<32x96xf32>
    %19 = arith.truncf %18 : vector<32x96xf32> to vector<32x96xbf16>
    %c2_18 = arith.constant 2 : index
    %c0_19 = arith.constant 0 : index
    %c0_20 = arith.constant 0 : index
    %20 = vector.load %arg2[%c2_18, %c0_19, %c0_20] : memref<4x96x128xbf16, #tpu.memory_space<vmem>>, vector<1x96x128xbf16>
    %21 = vector.shape_cast %20 : vector<1x96x128xbf16> to vector<96x128xbf16>
    %cst_21 = arith.constant dense<0.000000e+00> : vector<32x128xf32>
    %22 = tpu.matmul %19, %21, %cst_21 {dimension_numbers = #tpu.dot_dimension_numbers<[1], [0], [0], [1], [0, 0, 1, 1], [], []>} : vector<32x96xbf16>, vector<96x128xbf16>, vector<32x128xf32> -> vector<32x128xf32>
    %23 = arith.addf %15, %22 : vector<32x128xf32>
    %c3 = arith.constant 3 : index
    %c0_22 = arith.constant 0 : index
    %c0_23 = arith.constant 0 : index
    %24 = vector.load %arg1[%c3, %c0_22, %c0_23] : memref<4x32x64xbf16, #tpu.memory_space<vmem>>, vector<1x32x64xbf16>
    %25 = vector.shape_cast %24 : vector<1x32x64xbf16> to vector<32x64xbf16>
    %cst_24 = arith.constant dense<0.000000e+00> : vector<32x96xf32>
    %26 = tpu.matmul %25, %0, %cst_24 {dimension_numbers = #tpu.dot_dimension_numbers<[1], [0], [0], [1], [0, 0, 1, 1], [], []>} : vector<32x64xbf16>, vector<64x96xbf16>, vector<32x96xf32> -> vector<32x96xf32>
    %27 = arith.truncf %26 : vector<32x96xf32> to vector<32x96xbf16>
    %c3_25 = arith.constant 3 : index
    %c0_26 = arith.constant 0 : index
    %c0_27 = arith.constant 0 : index
    %28 = vector.load %arg2[%c3_25, %c0_26, %c0_27] : memref<4x96x128xbf16, #tpu.memory_space<vmem>>, vector<1x96x128xbf16>
    %29 = vector.shape_cast %28 : vector<1x96x128xbf16> to vector<96x128xbf16>
    %cst_28 = arith.constant dense<0.000000e+00> : vector<32x128xf32>
    %30 = tpu.matmul %27, %29, %cst_28 {dimension_numbers = #tpu.dot_dimension_numbers<[1], [0], [0], [1], [0, 0, 1, 1], [], []>} : vector<32x96xbf16>, vector<96x128xbf16>, vector<32x128xf32> -> vector<32x128xf32>
    %31 = arith.addf %23, %30 : vector<32x128xf32>
    %cst_29 = arith.constant 0.000000e+00 : f32
    %32 = vector.broadcast %cst_29 : f32 to vector<32x128xf32>
    %33 = arith.cmpf oge, %31, %32 : vector<32x128xf32>
    %cst_30 = arith.constant 2.000000e-01 : f32
    %34 = vector.broadcast %cst_30 : f32 to vector<32x128xf32>
    %35 = arith.mulf %34, %31 : vector<32x128xf32>
    %36 = arith.select %33, %31, %35 : vector<32x128xi1>, vector<32x128xf32>
    %37 = arith.truncf %36 : vector<32x128xf32> to vector<32x128xbf16>
    %c0_31 = arith.constant 0 : index
    %c0_32 = arith.constant 0 : index
    %c0_33 = arith.constant 0 : index
    %38 = vector.load %arg3[%c0_31, %c0_32, %c0_33] : memref<4x16x32xbf16, #tpu.memory_space<vmem>>, vector<1x16x32xbf16>
    %39 = vector.shape_cast %38 : vector<1x16x32xbf16> to vector<16x32xbf16>
    %cst_34 = arith.constant dense<0.000000e+00> : vector<16x128xf32>
    %40 = tpu.matmul %39, %37, %cst_34 {dimension_numbers = #tpu.dot_dimension_numbers<[1], [0], [0], [1], [0, 0, 1, 1], [], []>} : vector<16x32xbf16>, vector<32x128xbf16>, vector<16x128xf32> -> vector<16x128xf32>
    %41 = arith.truncf %40 : vector<16x128xf32> to vector<16x128xbf16>
    %c0_35 = arith.constant 0 : index
    %c0_36 = arith.constant 0 : index
    %c0_37 = arith.constant 0 : index
    %42 = vector.load %arg4[%c0_35, %c0_36, %c0_37] : memref<4x128x256xbf16, #tpu.memory_space<vmem>>, vector<1x128x256xbf16>
    %43 = vector.shape_cast %42 : vector<1x128x256xbf16> to vector<128x256xbf16>
    %cst_38 = arith.constant dense<0.000000e+00> : vector<16x256xf32>
    %44 = tpu.matmul %41, %43, %cst_38 {dimension_numbers = #tpu.dot_dimension_numbers<[1], [0], [0], [1], [0, 0, 1, 1], [], []>} : vector<16x128xbf16>, vector<128x256xbf16>, vector<16x256xf32> -> vector<16x256xf32>
    %c1_39 = arith.constant 1 : index
    %c0_40 = arith.constant 0 : index
    %c0_41 = arith.constant 0 : index
    %45 = vector.load %arg3[%c1_39, %c0_40, %c0_41] : memref<4x16x32xbf16, #tpu.memory_space<vmem>>, vector<1x16x32xbf16>
    %46 = vector.shape_cast %45 : vector<1x16x32xbf16> to vector<16x32xbf16>
    %cst_42 = arith.constant dense<0.000000e+00> : vector<16x128xf32>
    %47 = tpu.matmul %46, %37, %cst_42 {dimension_numbers = #tpu.dot_dimension_numbers<[1], [0], [0], [1], [0, 0, 1, 1], [], []>} : vector<16x32xbf16>, vector<32x128xbf16>, vector<16x128xf32> -> vector<16x128xf32>
    %48 = arith.truncf %47 : vector<16x128xf32> to vector<16x128xbf16>
    %c1_43 = arith.constant 1 : index
    %c0_44 = arith.constant 0 : index
    %c0_45 = arith.constant 0 : index
    %49 = vector.load %arg4[%c1_43, %c0_44, %c0_45] : memref<4x128x256xbf16, #tpu.memory_space<vmem>>, vector<1x128x256xbf16>
    %50 = vector.shape_cast %49 : vector<1x128x256xbf16> to vector<128x256xbf16>
    %cst_46 = arith.constant dense<0.000000e+00> : vector<16x256xf32>
    %51 = tpu.matmul %48, %50, %cst_46 {dimension_numbers = #tpu.dot_dimension_numbers<[1], [0], [0], [1], [0, 0, 1, 1], [], []>} : vector<16x128xbf16>, vector<128x256xbf16>, vector<16x256xf32> -> vector<16x256xf32>
    %52 = arith.addf %44, %51 : vector<16x256xf32>
    %c2_47 = arith.constant 2 : index
    %c0_48 = arith.constant 0 : index
    %c0_49 = arith.constant 0 : index
    %53 = vector.load %arg3[%c2_47, %c0_48, %c0_49] : memref<4x16x32xbf16, #tpu.memory_space<vmem>>, vector<1x16x32xbf16>
    %54 = vector.shape_cast %53 : vector<1x16x32xbf16> to vector<16x32xbf16>
    %cst_50 = arith.constant dense<0.000000e+00> : vector<16x128xf32>
    %55 = tpu.matmul %54, %37, %cst_50 {dimension_numbers = #tpu.dot_dimension_numbers<[1], [0], [0], [1], [0, 0, 1, 1], [], []>} : vector<16x32xbf16>, vector<32x128xbf16>, vector<16x128xf32> -> vector<16x128xf32>
    %56 = arith.truncf %55 : vector<16x128xf32> to vector<16x128xbf16>
    %c2_51 = arith.constant 2 : index
    %c0_52 = arith.constant 0 : index
    %c0_53 = arith.constant 0 : index
    %57 = vector.load %arg4[%c2_51, %c0_52, %c0_53] : memref<4x128x256xbf16, #tpu.memory_space<vmem>>, vector<1x128x256xbf16>
    %58 = vector.shape_cast %57 : vector<1x128x256xbf16> to vector<128x256xbf16>
    %cst_54 = arith.constant dense<0.000000e+00> : vector<16x256xf32>
    %59 = tpu.matmul %56, %58, %cst_54 {dimension_numbers = #tpu.dot_dimension_numbers<[1], [0], [0], [1], [0, 0, 1, 1], [], []>} : vector<16x128xbf16>, vector<128x256xbf16>, vector<16x256xf32> -> vector<16x256xf32>
    %60 = arith.addf %52, %59 : vector<16x256xf32>
    %c3_55 = arith.constant 3 : index
    %c0_56 = arith.constant 0 : index
    %c0_57 = arith.constant 0 : index
    %61 = vector.load %arg3[%c3_55, %c0_56, %c0_57] : memref<4x16x32xbf16, #tpu.memory_space<vmem>>, vector<1x16x32xbf16>
    %62 = vector.shape_cast %61 : vector<1x16x32xbf16> to vector<16x32xbf16>
    %cst_58 = arith.constant dense<0.000000e+00> : vector<16x128xf32>
    %63 = tpu.matmul %62, %37, %cst_58 {dimension_numbers = #tpu.dot_dimension_numbers<[1], [0], [0], [1], [0, 0, 1, 1], [], []>} : vector<16x32xbf16>, vector<32x128xbf16>, vector<16x128xf32> -> vector<16x128xf32>
    %64 = arith.truncf %63 : vector<16x128xf32> to vector<16x128xbf16>
    %c3_59 = arith.constant 3 : index
    %c0_60 = arith.constant 0 : index
    %c0_61 = arith.constant 0 : index
    %65 = vector.load %arg4[%c3_59, %c0_60, %c0_61] : memref<4x128x256xbf16, #tpu.memory_space<vmem>>, vector<1x128x256xbf16>
    %66 = vector.shape_cast %65 : vector<1x128x256xbf16> to vector<128x256xbf16>
    %cst_62 = arith.constant dense<0.000000e+00> : vector<16x256xf32>
    %67 = tpu.matmul %64, %66, %cst_62 {dimension_numbers = #tpu.dot_dimension_numbers<[1], [0], [0], [1], [0, 0, 1, 1], [], []>} : vector<16x128xbf16>, vector<128x256xbf16>, vector<16x256xf32> -> vector<16x256xf32>
    %68 = arith.addf %60, %67 : vector<16x256xf32>
    %cst_63 = arith.constant dense<0.000000e+00> : vector<256xf32>
    %69 = vector.multi_reduction <add>, %68, %cst_63 [0] : vector<16x256xf32> to vector<256xf32>
    %70 = vector.shape_cast %69 : vector<256xf32> to vector<1x256xf32>
    %71 = arith.mulf %68, %68 : vector<16x256xf32>
    %cst_64 = arith.constant dense<0.000000e+00> : vector<256xf32>
    %72 = vector.multi_reduction <add>, %71, %cst_64 [0] : vector<16x256xf32> to vector<256xf32>
    %73 = vector.shape_cast %72 : vector<256xf32> to vector<1x256xf32>
    %c0_65 = arith.constant 0 : index
    %c0_66 = arith.constant 0 : index
    %74 = vector.load %arg5[%c0_65, %c0_66] : memref<256x32xf32, #tpu.memory_space<vmem>>, vector<256x32xf32>
    %cst_67 = arith.constant dense<0.000000e+00> : vector<1x32xf32>
    %75 = tpu.matmul %70, %74, %cst_67 {dimension_numbers = #tpu.dot_dimension_numbers<[1], [0], [0], [1], [0, 0, 1, 1], [], []>} : vector<1x256xf32>, vector<256x32xf32>, vector<1x32xf32> -> vector<1x32xf32>
    %cst_68 = arith.constant 7.812500e-03 : f32
    %76 = vector.broadcast %cst_68 : f32 to vector<1x32xf32>
    %77 = arith.mulf %76, %75 : vector<1x32xf32>
    %c0_69 = arith.constant 0 : index
    %c0_70 = arith.constant 0 : index
    %78 = vector.load %arg5[%c0_69, %c0_70] : memref<256x32xf32, #tpu.memory_space<vmem>>, vector<256x32xf32>
    %cst_71 = arith.constant dense<0.000000e+00> : vector<1x32xf32>
    %79 = tpu.matmul %73, %78, %cst_71 {dimension_numbers = #tpu.dot_dimension_numbers<[1], [0], [0], [1], [0, 0, 1, 1], [], []>} : vector<1x256xf32>, vector<256x32xf32>, vector<1x32xf32> -> vector<1x32xf32>
    %cst_72 = arith.constant 7.812500e-03 : f32
    %80 = vector.broadcast %cst_72 : f32 to vector<1x32xf32>
    %81 = arith.mulf %80, %79 : vector<1x32xf32>
    %82 = arith.mulf %77, %77 : vector<1x32xf32>
    %83 = arith.subf %81, %82 : vector<1x32xf32>
    %cst_73 = arith.constant 0.000000e+00 : f32
    %84 = vector.broadcast %cst_73 : f32 to vector<1x32xf32>
    %85 = arith.maximumf %83, %84 : vector<1x32xf32>
    %c0_74 = arith.constant 0 : index
    %c0_75 = arith.constant 0 : index
    %86 = vector.load %arg7[%c0_74, %c0_75] : memref<1x32xf32, #tpu.memory_space<vmem>>, vector<1x32xf32>
    %cst_76 = arith.constant 9.99999974E-6 : f32
    %87 = vector.broadcast %cst_76 : f32 to vector<1x32xf32>
    %88 = arith.addf %85, %87 : vector<1x32xf32>
    %89 = math.rsqrt %88 : vector<1x32xf32>
    %90 = arith.mulf %86, %89 : vector<1x32xf32>
    %c0_77 = arith.constant 0 : index
    %c0_78 = arith.constant 0 : index
    %91 = vector.load %arg8[%c0_77, %c0_78] : memref<1x32xf32, #tpu.memory_space<vmem>>, vector<1x32xf32>
    %92 = arith.mulf %77, %90 : vector<1x32xf32>
    %93 = arith.subf %91, %92 : vector<1x32xf32>
    %c0_79 = arith.constant 0 : index
    %c0_80 = arith.constant 0 : index
    %94 = vector.load %arg6[%c0_79, %c0_80] : memref<32x256xf32, #tpu.memory_space<vmem>>, vector<32x256xf32>
    %cst_81 = arith.constant dense<0.000000e+00> : vector<1x256xf32>
    %95 = tpu.matmul %90, %94, %cst_81 {dimension_numbers = #tpu.dot_dimension_numbers<[1], [0], [0], [1], [0, 0, 1, 1], [], []>} : vector<1x32xf32>, vector<32x256xf32>, vector<1x256xf32> -> vector<1x256xf32>
    %96 = vector.broadcast %95 : vector<1x256xf32> to vector<16x256xf32>
    %97 = arith.mulf %68, %96 : vector<16x256xf32>
    %c0_82 = arith.constant 0 : index
    %c0_83 = arith.constant 0 : index
    %98 = vector.load %arg6[%c0_82, %c0_83] : memref<32x256xf32, #tpu.memory_space<vmem>>, vector<32x256xf32>
    %cst_84 = arith.constant dense<0.000000e+00> : vector<1x256xf32>
    %99 = tpu.matmul %93, %98, %cst_84 {dimension_numbers = #tpu.dot_dimension_numbers<[1], [0], [0], [1], [0, 0, 1, 1], [], []>} : vector<1x32xf32>, vector<32x256xf32>, vector<1x256xf32> -> vector<1x256xf32>
    %100 = vector.broadcast %99 : vector<1x256xf32> to vector<16x256xf32>
    %101 = arith.addf %97, %100 : vector<16x256xf32>
    %cst_85 = arith.constant 0.000000e+00 : f32
    %102 = vector.broadcast %cst_85 : f32 to vector<16x256xf32>
    %103 = arith.cmpf oge, %101, %102 : vector<16x256xf32>
    %cst_86 = arith.constant 2.000000e-01 : f32
    %104 = vector.broadcast %cst_86 : f32 to vector<16x256xf32>
    %105 = arith.mulf %104, %101 : vector<16x256xf32>
    %106 = arith.select %103, %101, %105 : vector<16x256xi1>, vector<16x256xf32>
    %107 = arith.truncf %106 : vector<16x256xf32> to vector<16x256xbf16>
    %c0_87 = arith.constant 0 : index
    %c0_88 = arith.constant 0 : index
    %c0_89 = arith.constant 0 : index
    %108 = vector.load %arg9[%c0_87, %c0_88, %c0_89] : memref<4x8x16xbf16, #tpu.memory_space<vmem>>, vector<1x8x16xbf16>
    %109 = vector.shape_cast %108 : vector<1x8x16xbf16> to vector<8x16xbf16>
    %cst_90 = arith.constant dense<0.000000e+00> : vector<8x256xf32>
    %110 = tpu.matmul %109, %107, %cst_90 {dimension_numbers = #tpu.dot_dimension_numbers<[1], [0], [0], [1], [0, 0, 1, 1], [], []>} : vector<8x16xbf16>, vector<16x256xbf16>, vector<8x256xf32> -> vector<8x256xf32>
    %111 = arith.truncf %110 : vector<8x256xf32> to vector<8x256xbf16>
    %c0_91 = arith.constant 0 : index
    %c0_92 = arith.constant 0 : index
    %c0_93 = arith.constant 0 : index
    %112 = vector.load %arg10[%c0_91, %c0_92, %c0_93] : memref<4x256x256xbf16, #tpu.memory_space<vmem>>, vector<1x256x256xbf16>
    %113 = vector.shape_cast %112 : vector<1x256x256xbf16> to vector<256x256xbf16>
    %cst_94 = arith.constant dense<0.000000e+00> : vector<8x256xf32>
    %114 = tpu.matmul %111, %113, %cst_94 {dimension_numbers = #tpu.dot_dimension_numbers<[1], [0], [0], [1], [0, 0, 1, 1], [], []>} : vector<8x256xbf16>, vector<256x256xbf16>, vector<8x256xf32> -> vector<8x256xf32>
    %c1_95 = arith.constant 1 : index
    %c0_96 = arith.constant 0 : index
    %c0_97 = arith.constant 0 : index
    %115 = vector.load %arg9[%c1_95, %c0_96, %c0_97] : memref<4x8x16xbf16, #tpu.memory_space<vmem>>, vector<1x8x16xbf16>
    %116 = vector.shape_cast %115 : vector<1x8x16xbf16> to vector<8x16xbf16>
    %cst_98 = arith.constant dense<0.000000e+00> : vector<8x256xf32>
    %117 = tpu.matmul %116, %107, %cst_98 {dimension_numbers = #tpu.dot_dimension_numbers<[1], [0], [0], [1], [0, 0, 1, 1], [], []>} : vector<8x16xbf16>, vector<16x256xbf16>, vector<8x256xf32> -> vector<8x256xf32>
    %118 = arith.truncf %117 : vector<8x256xf32> to vector<8x256xbf16>
    %c1_99 = arith.constant 1 : index
    %c0_100 = arith.constant 0 : index
    %c0_101 = arith.constant 0 : index
    %119 = vector.load %arg10[%c1_99, %c0_100, %c0_101] : memref<4x256x256xbf16, #tpu.memory_space<vmem>>, vector<1x256x256xbf16>
    %120 = vector.shape_cast %119 : vector<1x256x256xbf16> to vector<256x256xbf16>
    %cst_102 = arith.constant dense<0.000000e+00> : vector<8x256xf32>
    %121 = tpu.matmul %118, %120, %cst_102 {dimension_numbers = #tpu.dot_dimension_numbers<[1], [0], [0], [1], [0, 0, 1, 1], [], []>} : vector<8x256xbf16>, vector<256x256xbf16>, vector<8x256xf32> -> vector<8x256xf32>
    %122 = arith.addf %114, %121 : vector<8x256xf32>
    %c2_103 = arith.constant 2 : index
    %c0_104 = arith.constant 0 : index
    %c0_105 = arith.constant 0 : index
    %123 = vector.load %arg9[%c2_103, %c0_104, %c0_105] : memref<4x8x16xbf16, #tpu.memory_space<vmem>>, vector<1x8x16xbf16>
    %124 = vector.shape_cast %123 : vector<1x8x16xbf16> to vector<8x16xbf16>
    %cst_106 = arith.constant dense<0.000000e+00> : vector<8x256xf32>
    %125 = tpu.matmul %124, %107, %cst_106 {dimension_numbers = #tpu.dot_dimension_numbers<[1], [0], [0], [1], [0, 0, 1, 1], [], []>} : vector<8x16xbf16>, vector<16x256xbf16>, vector<8x256xf32> -> vector<8x256xf32>
    %126 = arith.truncf %125 : vector<8x256xf32> to vector<8x256xbf16>
    %c2_107 = arith.constant 2 : index
    %c0_108 = arith.constant 0 : index
    %c0_109 = arith.constant 0 : index
    %127 = vector.load %arg10[%c2_107, %c0_108, %c0_109] : memref<4x256x256xbf16, #tpu.memory_space<vmem>>, vector<1x256x256xbf16>
    %128 = vector.shape_cast %127 : vector<1x256x256xbf16> to vector<256x256xbf16>
    %cst_110 = arith.constant dense<0.000000e+00> : vector<8x256xf32>
    %129 = tpu.matmul %126, %128, %cst_110 {dimension_numbers = #tpu.dot_dimension_numbers<[1], [0], [0], [1], [0, 0, 1, 1], [], []>} : vector<8x256xbf16>, vector<256x256xbf16>, vector<8x256xf32> -> vector<8x256xf32>
    %130 = arith.addf %122, %129 : vector<8x256xf32>
    %c3_111 = arith.constant 3 : index
    %c0_112 = arith.constant 0 : index
    %c0_113 = arith.constant 0 : index
    %131 = vector.load %arg9[%c3_111, %c0_112, %c0_113] : memref<4x8x16xbf16, #tpu.memory_space<vmem>>, vector<1x8x16xbf16>
    %132 = vector.shape_cast %131 : vector<1x8x16xbf16> to vector<8x16xbf16>
    %cst_114 = arith.constant dense<0.000000e+00> : vector<8x256xf32>
    %133 = tpu.matmul %132, %107, %cst_114 {dimension_numbers = #tpu.dot_dimension_numbers<[1], [0], [0], [1], [0, 0, 1, 1], [], []>} : vector<8x16xbf16>, vector<16x256xbf16>, vector<8x256xf32> -> vector<8x256xf32>
    %134 = arith.truncf %133 : vector<8x256xf32> to vector<8x256xbf16>
    %c3_115 = arith.constant 3 : index
    %c0_116 = arith.constant 0 : index
    %c0_117 = arith.constant 0 : index
    %135 = vector.load %arg10[%c3_115, %c0_116, %c0_117] : memref<4x256x256xbf16, #tpu.memory_space<vmem>>, vector<1x256x256xbf16>
    %136 = vector.shape_cast %135 : vector<1x256x256xbf16> to vector<256x256xbf16>
    %cst_118 = arith.constant dense<0.000000e+00> : vector<8x256xf32>
    %137 = tpu.matmul %134, %136, %cst_118 {dimension_numbers = #tpu.dot_dimension_numbers<[1], [0], [0], [1], [0, 0, 1, 1], [], []>} : vector<8x256xbf16>, vector<256x256xbf16>, vector<8x256xf32> -> vector<8x256xf32>
    %138 = arith.addf %130, %137 : vector<8x256xf32>
    %cst_119 = arith.constant dense<0.000000e+00> : vector<256xf32>
    %139 = vector.multi_reduction <add>, %138, %cst_119 [0] : vector<8x256xf32> to vector<256xf32>
    %140 = vector.shape_cast %139 : vector<256xf32> to vector<1x256xf32>
    %141 = arith.mulf %138, %138 : vector<8x256xf32>
    %cst_120 = arith.constant dense<0.000000e+00> : vector<256xf32>
    %142 = vector.multi_reduction <add>, %141, %cst_120 [0] : vector<8x256xf32> to vector<256xf32>
    %143 = vector.shape_cast %142 : vector<256xf32> to vector<1x256xf32>
    %c0_121 = arith.constant 0 : index
    %c0_122 = arith.constant 0 : index
    %144 = vector.load %arg11[%c0_121, %c0_122] : memref<256x64xf32, #tpu.memory_space<vmem>>, vector<256x64xf32>
    %cst_123 = arith.constant dense<0.000000e+00> : vector<1x64xf32>
    %145 = tpu.matmul %140, %144, %cst_123 {dimension_numbers = #tpu.dot_dimension_numbers<[1], [0], [0], [1], [0, 0, 1, 1], [], []>} : vector<1x256xf32>, vector<256x64xf32>, vector<1x64xf32> -> vector<1x64xf32>
    %cst_124 = arith.constant 3.125000e-02 : f32
    %146 = vector.broadcast %cst_124 : f32 to vector<1x64xf32>
    %147 = arith.mulf %146, %145 : vector<1x64xf32>
    %c0_125 = arith.constant 0 : index
    %c0_126 = arith.constant 0 : index
    %148 = vector.load %arg11[%c0_125, %c0_126] : memref<256x64xf32, #tpu.memory_space<vmem>>, vector<256x64xf32>
    %cst_127 = arith.constant dense<0.000000e+00> : vector<1x64xf32>
    %149 = tpu.matmul %143, %148, %cst_127 {dimension_numbers = #tpu.dot_dimension_numbers<[1], [0], [0], [1], [0, 0, 1, 1], [], []>} : vector<1x256xf32>, vector<256x64xf32>, vector<1x64xf32> -> vector<1x64xf32>
    %cst_128 = arith.constant 3.125000e-02 : f32
    %150 = vector.broadcast %cst_128 : f32 to vector<1x64xf32>
    %151 = arith.mulf %150, %149 : vector<1x64xf32>
    %152 = arith.mulf %147, %147 : vector<1x64xf32>
    %153 = arith.subf %151, %152 : vector<1x64xf32>
    %cst_129 = arith.constant 0.000000e+00 : f32
    %154 = vector.broadcast %cst_129 : f32 to vector<1x64xf32>
    %155 = arith.maximumf %153, %154 : vector<1x64xf32>
    %c0_130 = arith.constant 0 : index
    %c0_131 = arith.constant 0 : index
    %156 = vector.load %arg13[%c0_130, %c0_131] : memref<1x64xf32, #tpu.memory_space<vmem>>, vector<1x64xf32>
    %cst_132 = arith.constant 9.99999974E-6 : f32
    %157 = vector.broadcast %cst_132 : f32 to vector<1x64xf32>
    %158 = arith.addf %155, %157 : vector<1x64xf32>
    %159 = math.rsqrt %158 : vector<1x64xf32>
    %160 = arith.mulf %156, %159 : vector<1x64xf32>
    %c0_133 = arith.constant 0 : index
    %c0_134 = arith.constant 0 : index
    %161 = vector.load %arg14[%c0_133, %c0_134] : memref<1x64xf32, #tpu.memory_space<vmem>>, vector<1x64xf32>
    %162 = arith.mulf %147, %160 : vector<1x64xf32>
    %163 = arith.subf %161, %162 : vector<1x64xf32>
    %c0_135 = arith.constant 0 : index
    %c0_136 = arith.constant 0 : index
    %164 = vector.load %arg12[%c0_135, %c0_136] : memref<64x256xf32, #tpu.memory_space<vmem>>, vector<64x256xf32>
    %cst_137 = arith.constant dense<0.000000e+00> : vector<1x256xf32>
    %165 = tpu.matmul %160, %164, %cst_137 {dimension_numbers = #tpu.dot_dimension_numbers<[1], [0], [0], [1], [0, 0, 1, 1], [], []>} : vector<1x64xf32>, vector<64x256xf32>, vector<1x256xf32> -> vector<1x256xf32>
    %166 = vector.broadcast %165 : vector<1x256xf32> to vector<8x256xf32>
    %167 = arith.mulf %138, %166 : vector<8x256xf32>
    %c0_138 = arith.constant 0 : index
    %c0_139 = arith.constant 0 : index
    %168 = vector.load %arg12[%c0_138, %c0_139] : memref<64x256xf32, #tpu.memory_space<vmem>>, vector<64x256xf32>
    %cst_140 = arith.constant dense<0.000000e+00> : vector<1x256xf32>
    %169 = tpu.matmul %163, %168, %cst_140 {dimension_numbers = #tpu.dot_dimension_numbers<[1], [0], [0], [1], [0, 0, 1, 1], [], []>} : vector<1x64xf32>, vector<64x256xf32>, vector<1x256xf32> -> vector<1x256xf32>
    %170 = vector.broadcast %169 : vector<1x256xf32> to vector<8x256xf32>
    %171 = arith.addf %167, %170 : vector<8x256xf32>
    %cst_141 = arith.constant 0.000000e+00 : f32
    %172 = vector.broadcast %cst_141 : f32 to vector<8x256xf32>
    %173 = arith.cmpf oge, %171, %172 : vector<8x256xf32>
    %cst_142 = arith.constant 2.000000e-01 : f32
    %174 = vector.broadcast %cst_142 : f32 to vector<8x256xf32>
    %175 = arith.mulf %174, %171 : vector<8x256xf32>
    %176 = arith.select %173, %171, %175 : vector<8x256xi1>, vector<8x256xf32>
    %177 = arith.truncf %176 : vector<8x256xf32> to vector<8x256xbf16>
    %c0_143 = arith.constant 0 : index
    %c0_144 = arith.constant 0 : index
    %c0_145 = arith.constant 0 : index
    %178 = vector.load %arg15[%c0_143, %c0_144, %c0_145] : memref<4x4x8xbf16, #tpu.memory_space<vmem>>, vector<1x4x8xbf16>
    %179 = vector.shape_cast %178 : vector<1x4x8xbf16> to vector<4x8xbf16>
    %cst_146 = arith.constant dense<0.000000e+00> : vector<4x256xf32>
    %180 = tpu.matmul %179, %177, %cst_146 {dimension_numbers = #tpu.dot_dimension_numbers<[1], [0], [0], [1], [0, 0, 1, 1], [], []>} : vector<4x8xbf16>, vector<8x256xbf16>, vector<4x256xf32> -> vector<4x256xf32>
    %181 = arith.truncf %180 : vector<4x256xf32> to vector<4x256xbf16>
    %c0_147 = arith.constant 0 : index
    %c0_148 = arith.constant 0 : index
    %c0_149 = arith.constant 0 : index
    %182 = vector.load %arg16[%c0_147, %c0_148, %c0_149] : memref<4x256x256xbf16, #tpu.memory_space<vmem>>, vector<1x256x256xbf16>
    %183 = vector.shape_cast %182 : vector<1x256x256xbf16> to vector<256x256xbf16>
    %cst_150 = arith.constant dense<0.000000e+00> : vector<4x256xf32>
    %184 = tpu.matmul %181, %183, %cst_150 {dimension_numbers = #tpu.dot_dimension_numbers<[1], [0], [0], [1], [0, 0, 1, 1], [], []>} : vector<4x256xbf16>, vector<256x256xbf16>, vector<4x256xf32> -> vector<4x256xf32>
    %c1_151 = arith.constant 1 : index
    %c0_152 = arith.constant 0 : index
    %c0_153 = arith.constant 0 : index
    %185 = vector.load %arg15[%c1_151, %c0_152, %c0_153] : memref<4x4x8xbf16, #tpu.memory_space<vmem>>, vector<1x4x8xbf16>
    %186 = vector.shape_cast %185 : vector<1x4x8xbf16> to vector<4x8xbf16>
    %cst_154 = arith.constant dense<0.000000e+00> : vector<4x256xf32>
    %187 = tpu.matmul %186, %177, %cst_154 {dimension_numbers = #tpu.dot_dimension_numbers<[1], [0], [0], [1], [0, 0, 1, 1], [], []>} : vector<4x8xbf16>, vector<8x256xbf16>, vector<4x256xf32> -> vector<4x256xf32>
    %188 = arith.truncf %187 : vector<4x256xf32> to vector<4x256xbf16>
    %c1_155 = arith.constant 1 : index
    %c0_156 = arith.constant 0 : index
    %c0_157 = arith.constant 0 : index
    %189 = vector.load %arg16[%c1_155, %c0_156, %c0_157] : memref<4x256x256xbf16, #tpu.memory_space<vmem>>, vector<1x256x256xbf16>
    %190 = vector.shape_cast %189 : vector<1x256x256xbf16> to vector<256x256xbf16>
    %cst_158 = arith.constant dense<0.000000e+00> : vector<4x256xf32>
    %191 = tpu.matmul %188, %190, %cst_158 {dimension_numbers = #tpu.dot_dimension_numbers<[1], [0], [0], [1], [0, 0, 1, 1], [], []>} : vector<4x256xbf16>, vector<256x256xbf16>, vector<4x256xf32> -> vector<4x256xf32>
    %192 = arith.addf %184, %191 : vector<4x256xf32>
    %c2_159 = arith.constant 2 : index
    %c0_160 = arith.constant 0 : index
    %c0_161 = arith.constant 0 : index
    %193 = vector.load %arg15[%c2_159, %c0_160, %c0_161] : memref<4x4x8xbf16, #tpu.memory_space<vmem>>, vector<1x4x8xbf16>
    %194 = vector.shape_cast %193 : vector<1x4x8xbf16> to vector<4x8xbf16>
    %cst_162 = arith.constant dense<0.000000e+00> : vector<4x256xf32>
    %195 = tpu.matmul %194, %177, %cst_162 {dimension_numbers = #tpu.dot_dimension_numbers<[1], [0], [0], [1], [0, 0, 1, 1], [], []>} : vector<4x8xbf16>, vector<8x256xbf16>, vector<4x256xf32> -> vector<4x256xf32>
    %196 = arith.truncf %195 : vector<4x256xf32> to vector<4x256xbf16>
    %c2_163 = arith.constant 2 : index
    %c0_164 = arith.constant 0 : index
    %c0_165 = arith.constant 0 : index
    %197 = vector.load %arg16[%c2_163, %c0_164, %c0_165] : memref<4x256x256xbf16, #tpu.memory_space<vmem>>, vector<1x256x256xbf16>
    %198 = vector.shape_cast %197 : vector<1x256x256xbf16> to vector<256x256xbf16>
    %cst_166 = arith.constant dense<0.000000e+00> : vector<4x256xf32>
    %199 = tpu.matmul %196, %198, %cst_166 {dimension_numbers = #tpu.dot_dimension_numbers<[1], [0], [0], [1], [0, 0, 1, 1], [], []>} : vector<4x256xbf16>, vector<256x256xbf16>, vector<4x256xf32> -> vector<4x256xf32>
    %200 = arith.addf %192, %199 : vector<4x256xf32>
    %c3_167 = arith.constant 3 : index
    %c0_168 = arith.constant 0 : index
    %c0_169 = arith.constant 0 : index
    %201 = vector.load %arg15[%c3_167, %c0_168, %c0_169] : memref<4x4x8xbf16, #tpu.memory_space<vmem>>, vector<1x4x8xbf16>
    %202 = vector.shape_cast %201 : vector<1x4x8xbf16> to vector<4x8xbf16>
    %cst_170 = arith.constant dense<0.000000e+00> : vector<4x256xf32>
    %203 = tpu.matmul %202, %177, %cst_170 {dimension_numbers = #tpu.dot_dimension_numbers<[1], [0], [0], [1], [0, 0, 1, 1], [], []>} : vector<4x8xbf16>, vector<8x256xbf16>, vector<4x256xf32> -> vector<4x256xf32>
    %204 = arith.truncf %203 : vector<4x256xf32> to vector<4x256xbf16>
    %c3_171 = arith.constant 3 : index
    %c0_172 = arith.constant 0 : index
    %c0_173 = arith.constant 0 : index
    %205 = vector.load %arg16[%c3_171, %c0_172, %c0_173] : memref<4x256x256xbf16, #tpu.memory_space<vmem>>, vector<1x256x256xbf16>
    %206 = vector.shape_cast %205 : vector<1x256x256xbf16> to vector<256x256xbf16>
    %cst_174 = arith.constant dense<0.000000e+00> : vector<4x256xf32>
    %207 = tpu.matmul %204, %206, %cst_174 {dimension_numbers = #tpu.dot_dimension_numbers<[1], [0], [0], [1], [0, 0, 1, 1], [], []>} : vector<4x256xbf16>, vector<256x256xbf16>, vector<4x256xf32> -> vector<4x256xf32>
    %208 = arith.addf %200, %207 : vector<4x256xf32>
    %cst_175 = arith.constant dense<0.000000e+00> : vector<256xf32>
    %209 = vector.multi_reduction <add>, %208, %cst_175 [0] : vector<4x256xf32> to vector<256xf32>
    %210 = vector.shape_cast %209 : vector<256xf32> to vector<1x256xf32>
    %211 = arith.mulf %208, %208 : vector<4x256xf32>
    %cst_176 = arith.constant dense<0.000000e+00> : vector<256xf32>
    %212 = vector.multi_reduction <add>, %211, %cst_176 [0] : vector<4x256xf32> to vector<256xf32>
    %213 = vector.shape_cast %212 : vector<256xf32> to vector<1x256xf32>
    %c0_177 = arith.constant 0 : index
    %c0_178 = arith.constant 0 : index
    %214 = vector.load %arg17[%c0_177, %c0_178] : memref<256x128xf32, #tpu.memory_space<vmem>>, vector<256x128xf32>
    %cst_179 = arith.constant dense<0.000000e+00> : vector<1x128xf32>
    %215 = tpu.matmul %210, %214, %cst_179 {dimension_numbers = #tpu.dot_dimension_numbers<[1], [0], [0], [1], [0, 0, 1, 1], [], []>} : vector<1x256xf32>, vector<256x128xf32>, vector<1x128xf32> -> vector<1x128xf32>
    %cst_180 = arith.constant 1.250000e-01 : f32
    %216 = vector.broadcast %cst_180 : f32 to vector<1x128xf32>
    %217 = arith.mulf %216, %215 : vector<1x128xf32>
    %c0_181 = arith.constant 0 : index
    %c0_182 = arith.constant 0 : index
    %218 = vector.load %arg17[%c0_181, %c0_182] : memref<256x128xf32, #tpu.memory_space<vmem>>, vector<256x128xf32>
    %cst_183 = arith.constant dense<0.000000e+00> : vector<1x128xf32>
    %219 = tpu.matmul %213, %218, %cst_183 {dimension_numbers = #tpu.dot_dimension_numbers<[1], [0], [0], [1], [0, 0, 1, 1], [], []>} : vector<1x256xf32>, vector<256x128xf32>, vector<1x128xf32> -> vector<1x128xf32>
    %cst_184 = arith.constant 1.250000e-01 : f32
    %220 = vector.broadcast %cst_184 : f32 to vector<1x128xf32>
    %221 = arith.mulf %220, %219 : vector<1x128xf32>
    %222 = arith.mulf %217, %217 : vector<1x128xf32>
    %223 = arith.subf %221, %222 : vector<1x128xf32>
    %cst_185 = arith.constant 0.000000e+00 : f32
    %224 = vector.broadcast %cst_185 : f32 to vector<1x128xf32>
    %225 = arith.maximumf %223, %224 : vector<1x128xf32>
    %c0_186 = arith.constant 0 : index
    %c0_187 = arith.constant 0 : index
    %226 = vector.load %arg19[%c0_186, %c0_187] : memref<1x128xf32, #tpu.memory_space<vmem>>, vector<1x128xf32>
    %cst_188 = arith.constant 9.99999974E-6 : f32
    %227 = vector.broadcast %cst_188 : f32 to vector<1x128xf32>
    %228 = arith.addf %225, %227 : vector<1x128xf32>
    %229 = math.rsqrt %228 : vector<1x128xf32>
    %230 = arith.mulf %226, %229 : vector<1x128xf32>
    %c0_189 = arith.constant 0 : index
    %c0_190 = arith.constant 0 : index
    %231 = vector.load %arg20[%c0_189, %c0_190] : memref<1x128xf32, #tpu.memory_space<vmem>>, vector<1x128xf32>
    %232 = arith.mulf %217, %230 : vector<1x128xf32>
    %233 = arith.subf %231, %232 : vector<1x128xf32>
    %c0_191 = arith.constant 0 : index
    %c0_192 = arith.constant 0 : index
    %234 = vector.load %arg18[%c0_191, %c0_192] : memref<128x256xf32, #tpu.memory_space<vmem>>, vector<128x256xf32>
    %cst_193 = arith.constant dense<0.000000e+00> : vector<1x256xf32>
    %235 = tpu.matmul %230, %234, %cst_193 {dimension_numbers = #tpu.dot_dimension_numbers<[1], [0], [0], [1], [0, 0, 1, 1], [], []>} : vector<1x128xf32>, vector<128x256xf32>, vector<1x256xf32> -> vector<1x256xf32>
    %236 = vector.broadcast %235 : vector<1x256xf32> to vector<4x256xf32>
    %237 = arith.mulf %208, %236 : vector<4x256xf32>
    %c0_194 = arith.constant 0 : index
    %c0_195 = arith.constant 0 : index
    %238 = vector.load %arg18[%c0_194, %c0_195] : memref<128x256xf32, #tpu.memory_space<vmem>>, vector<128x256xf32>
    %cst_196 = arith.constant dense<0.000000e+00> : vector<1x256xf32>
    %239 = tpu.matmul %233, %238, %cst_196 {dimension_numbers = #tpu.dot_dimension_numbers<[1], [0], [0], [1], [0, 0, 1, 1], [], []>} : vector<1x128xf32>, vector<128x256xf32>, vector<1x256xf32> -> vector<1x256xf32>
    %240 = vector.broadcast %239 : vector<1x256xf32> to vector<4x256xf32>
    %241 = arith.addf %237, %240 : vector<4x256xf32>
    %cst_197 = arith.constant 0.000000e+00 : f32
    %242 = vector.broadcast %cst_197 : f32 to vector<4x256xf32>
    %243 = arith.cmpf oge, %241, %242 : vector<4x256xf32>
    %cst_198 = arith.constant 2.000000e-01 : f32
    %244 = vector.broadcast %cst_198 : f32 to vector<4x256xf32>
    %245 = arith.mulf %244, %241 : vector<4x256xf32>
    %246 = arith.select %243, %241, %245 : vector<4x256xi1>, vector<4x256xf32>
    %247 = arith.truncf %246 : vector<4x256xf32> to vector<4x256xbf16>
    %c0_199 = arith.constant 0 : index
    %c0_200 = arith.constant 0 : index
    %c0_201 = arith.constant 0 : index
    %248 = vector.load %arg21[%c0_199, %c0_200, %c0_201] : memref<4x8x4xbf16, #tpu.memory_space<vmem>>, vector<1x8x4xbf16>
    %249 = vector.shape_cast %248 : vector<1x8x4xbf16> to vector<8x4xbf16>
    %cst_202 = arith.constant dense<0.000000e+00> : vector<8x256xf32>
    %250 = tpu.matmul %249, %247, %cst_202 {dimension_numbers = #tpu.dot_dimension_numbers<[1], [0], [0], [1], [0, 0, 1, 1], [], []>} : vector<8x4xbf16>, vector<4x256xbf16>, vector<8x256xf32> -> vector<8x256xf32>
    %251 = arith.truncf %250 : vector<8x256xf32> to vector<8x256xbf16>
    %c0_203 = arith.constant 0 : index
    %c0_204 = arith.constant 0 : index
    %c0_205 = arith.constant 0 : index
    %252 = vector.load %arg22[%c0_203, %c0_204, %c0_205] : memref<4x256x256xbf16, #tpu.memory_space<vmem>>, vector<1x256x256xbf16>
    %253 = vector.shape_cast %252 : vector<1x256x256xbf16> to vector<256x256xbf16>
    %cst_206 = arith.constant dense<0.000000e+00> : vector<8x256xf32>
    %254 = tpu.matmul %251, %253, %cst_206 {dimension_numbers = #tpu.dot_dimension_numbers<[1], [0], [0], [1], [0, 0, 1, 1], [], []>} : vector<8x256xbf16>, vector<256x256xbf16>, vector<8x256xf32> -> vector<8x256xf32>
    %c1_207 = arith.constant 1 : index
    %c0_208 = arith.constant 0 : index
    %c0_209 = arith.constant 0 : index
    %255 = vector.load %arg21[%c1_207, %c0_208, %c0_209] : memref<4x8x4xbf16, #tpu.memory_space<vmem>>, vector<1x8x4xbf16>
    %256 = vector.shape_cast %255 : vector<1x8x4xbf16> to vector<8x4xbf16>
    %cst_210 = arith.constant dense<0.000000e+00> : vector<8x256xf32>
    %257 = tpu.matmul %256, %247, %cst_210 {dimension_numbers = #tpu.dot_dimension_numbers<[1], [0], [0], [1], [0, 0, 1, 1], [], []>} : vector<8x4xbf16>, vector<4x256xbf16>, vector<8x256xf32> -> vector<8x256xf32>
    %258 = arith.truncf %257 : vector<8x256xf32> to vector<8x256xbf16>
    %c1_211 = arith.constant 1 : index
    %c0_212 = arith.constant 0 : index
    %c0_213 = arith.constant 0 : index
    %259 = vector.load %arg22[%c1_211, %c0_212, %c0_213] : memref<4x256x256xbf16, #tpu.memory_space<vmem>>, vector<1x256x256xbf16>
    %260 = vector.shape_cast %259 : vector<1x256x256xbf16> to vector<256x256xbf16>
    %cst_214 = arith.constant dense<0.000000e+00> : vector<8x256xf32>
    %261 = tpu.matmul %258, %260, %cst_214 {dimension_numbers = #tpu.dot_dimension_numbers<[1], [0], [0], [1], [0, 0, 1, 1], [], []>} : vector<8x256xbf16>, vector<256x256xbf16>, vector<8x256xf32> -> vector<8x256xf32>
    %262 = arith.addf %254, %261 : vector<8x256xf32>
    %c2_215 = arith.constant 2 : index
    %c0_216 = arith.constant 0 : index
    %c0_217 = arith.constant 0 : index
    %263 = vector.load %arg21[%c2_215, %c0_216, %c0_217] : memref<4x8x4xbf16, #tpu.memory_space<vmem>>, vector<1x8x4xbf16>
    %264 = vector.shape_cast %263 : vector<1x8x4xbf16> to vector<8x4xbf16>
    %cst_218 = arith.constant dense<0.000000e+00> : vector<8x256xf32>
    %265 = tpu.matmul %264, %247, %cst_218 {dimension_numbers = #tpu.dot_dimension_numbers<[1], [0], [0], [1], [0, 0, 1, 1], [], []>} : vector<8x4xbf16>, vector<4x256xbf16>, vector<8x256xf32> -> vector<8x256xf32>
    %266 = arith.truncf %265 : vector<8x256xf32> to vector<8x256xbf16>
    %c2_219 = arith.constant 2 : index
    %c0_220 = arith.constant 0 : index
    %c0_221 = arith.constant 0 : index
    %267 = vector.load %arg22[%c2_219, %c0_220, %c0_221] : memref<4x256x256xbf16, #tpu.memory_space<vmem>>, vector<1x256x256xbf16>
    %268 = vector.shape_cast %267 : vector<1x256x256xbf16> to vector<256x256xbf16>
    %cst_222 = arith.constant dense<0.000000e+00> : vector<8x256xf32>
    %269 = tpu.matmul %266, %268, %cst_222 {dimension_numbers = #tpu.dot_dimension_numbers<[1], [0], [0], [1], [0, 0, 1, 1], [], []>} : vector<8x256xbf16>, vector<256x256xbf16>, vector<8x256xf32> -> vector<8x256xf32>
    %270 = arith.addf %262, %269 : vector<8x256xf32>
    %c3_223 = arith.constant 3 : index
    %c0_224 = arith.constant 0 : index
    %c0_225 = arith.constant 0 : index
    %271 = vector.load %arg21[%c3_223, %c0_224, %c0_225] : memref<4x8x4xbf16, #tpu.memory_space<vmem>>, vector<1x8x4xbf16>
    %272 = vector.shape_cast %271 : vector<1x8x4xbf16> to vector<8x4xbf16>
    %cst_226 = arith.constant dense<0.000000e+00> : vector<8x256xf32>
    %273 = tpu.matmul %272, %247, %cst_226 {dimension_numbers = #tpu.dot_dimension_numbers<[1], [0], [0], [1], [0, 0, 1, 1], [], []>} : vector<8x4xbf16>, vector<4x256xbf16>, vector<8x256xf32> -> vector<8x256xf32>
    %274 = arith.truncf %273 : vector<8x256xf32> to vector<8x256xbf16>
    %c3_227 = arith.constant 3 : index
    %c0_228 = arith.constant 0 : index
    %c0_229 = arith.constant 0 : index
    %275 = vector.load %arg22[%c3_227, %c0_228, %c0_229] : memref<4x256x256xbf16, #tpu.memory_space<vmem>>, vector<1x256x256xbf16>
    %276 = vector.shape_cast %275 : vector<1x256x256xbf16> to vector<256x256xbf16>
    %cst_230 = arith.constant dense<0.000000e+00> : vector<8x256xf32>
    %277 = tpu.matmul %274, %276, %cst_230 {dimension_numbers = #tpu.dot_dimension_numbers<[1], [0], [0], [1], [0, 0, 1, 1], [], []>} : vector<8x256xbf16>, vector<256x256xbf16>, vector<8x256xf32> -> vector<8x256xf32>
    %278 = arith.addf %270, %277 : vector<8x256xf32>
    %cst_231 = arith.constant dense<0.000000e+00> : vector<256xf32>
    %279 = vector.multi_reduction <add>, %278, %cst_231 [0] : vector<8x256xf32> to vector<256xf32>
    %280 = vector.shape_cast %279 : vector<256xf32> to vector<1x256xf32>
    %281 = arith.mulf %278, %278 : vector<8x256xf32>
    %cst_232 = arith.constant dense<0.000000e+00> : vector<256xf32>
    %282 = vector.multi_reduction <add>, %281, %cst_232 [0] : vector<8x256xf32> to vector<256xf32>
    %283 = vector.shape_cast %282 : vector<256xf32> to vector<1x256xf32>
    %c0_233 = arith.constant 0 : index
    %c0_234 = arith.constant 0 : index
    %284 = vector.load %arg23[%c0_233, %c0_234] : memref<256x64xf32, #tpu.memory_space<vmem>>, vector<256x64xf32>
    %cst_235 = arith.constant dense<0.000000e+00> : vector<1x64xf32>
    %285 = tpu.matmul %280, %284, %cst_235 {dimension_numbers = #tpu.dot_dimension_numbers<[1], [0], [0], [1], [0, 0, 1, 1], [], []>} : vector<1x256xf32>, vector<256x64xf32>, vector<1x64xf32> -> vector<1x64xf32>
    %cst_236 = arith.constant 3.125000e-02 : f32
    %286 = vector.broadcast %cst_236 : f32 to vector<1x64xf32>
    %287 = arith.mulf %286, %285 : vector<1x64xf32>
    %c0_237 = arith.constant 0 : index
    %c0_238 = arith.constant 0 : index
    %288 = vector.load %arg23[%c0_237, %c0_238] : memref<256x64xf32, #tpu.memory_space<vmem>>, vector<256x64xf32>
    %cst_239 = arith.constant dense<0.000000e+00> : vector<1x64xf32>
    %289 = tpu.matmul %283, %288, %cst_239 {dimension_numbers = #tpu.dot_dimension_numbers<[1], [0], [0], [1], [0, 0, 1, 1], [], []>} : vector<1x256xf32>, vector<256x64xf32>, vector<1x64xf32> -> vector<1x64xf32>
    %cst_240 = arith.constant 3.125000e-02 : f32
    %290 = vector.broadcast %cst_240 : f32 to vector<1x64xf32>
    %291 = arith.mulf %290, %289 : vector<1x64xf32>
    %292 = arith.mulf %287, %287 : vector<1x64xf32>
    %293 = arith.subf %291, %292 : vector<1x64xf32>
    %cst_241 = arith.constant 0.000000e+00 : f32
    %294 = vector.broadcast %cst_241 : f32 to vector<1x64xf32>
    %295 = arith.maximumf %293, %294 : vector<1x64xf32>
    %c0_242 = arith.constant 0 : index
    %c0_243 = arith.constant 0 : index
    %296 = vector.load %arg25[%c0_242, %c0_243] : memref<1x64xf32, #tpu.memory_space<vmem>>, vector<1x64xf32>
    %cst_244 = arith.constant 9.99999974E-6 : f32
    %297 = vector.broadcast %cst_244 : f32 to vector<1x64xf32>
    %298 = arith.addf %295, %297 : vector<1x64xf32>
    %299 = math.rsqrt %298 : vector<1x64xf32>
    %300 = arith.mulf %296, %299 : vector<1x64xf32>
    %c0_245 = arith.constant 0 : index
    %c0_246 = arith.constant 0 : index
    %301 = vector.load %arg26[%c0_245, %c0_246] : memref<1x64xf32, #tpu.memory_space<vmem>>, vector<1x64xf32>
    %302 = arith.mulf %287, %300 : vector<1x64xf32>
    %303 = arith.subf %301, %302 : vector<1x64xf32>
    %c0_247 = arith.constant 0 : index
    %c0_248 = arith.constant 0 : index
    %304 = vector.load %arg24[%c0_247, %c0_248] : memref<64x256xf32, #tpu.memory_space<vmem>>, vector<64x256xf32>
    %cst_249 = arith.constant dense<0.000000e+00> : vector<1x256xf32>
    %305 = tpu.matmul %300, %304, %cst_249 {dimension_numbers = #tpu.dot_dimension_numbers<[1], [0], [0], [1], [0, 0, 1, 1], [], []>} : vector<1x64xf32>, vector<64x256xf32>, vector<1x256xf32> -> vector<1x256xf32>
    %306 = vector.broadcast %305 : vector<1x256xf32> to vector<8x256xf32>
    %307 = arith.mulf %278, %306 : vector<8x256xf32>
    %c0_250 = arith.constant 0 : index
    %c0_251 = arith.constant 0 : index
    %308 = vector.load %arg24[%c0_250, %c0_251] : memref<64x256xf32, #tpu.memory_space<vmem>>, vector<64x256xf32>
    %cst_252 = arith.constant dense<0.000000e+00> : vector<1x256xf32>
    %309 = tpu.matmul %303, %308, %cst_252 {dimension_numbers = #tpu.dot_dimension_numbers<[1], [0], [0], [1], [0, 0, 1, 1], [], []>} : vector<1x64xf32>, vector<64x256xf32>, vector<1x256xf32> -> vector<1x256xf32>
    %310 = vector.broadcast %309 : vector<1x256xf32> to vector<8x256xf32>
    %311 = arith.addf %307, %310 : vector<8x256xf32>
    %cst_253 = arith.constant 0.000000e+00 : f32
    %312 = vector.broadcast %cst_253 : f32 to vector<8x256xf32>
    %313 = arith.maximumf %311, %312 : vector<8x256xf32>
    %314 = arith.truncf %313 : vector<8x256xf32> to vector<8x256xbf16>
    %c0_254 = arith.constant 0 : index
    %c0_255 = arith.constant 0 : index
    %c0_256 = arith.constant 0 : index
    %315 = vector.load %arg27[%c0_254, %c0_255, %c0_256] : memref<4x16x8xbf16, #tpu.memory_space<vmem>>, vector<1x16x8xbf16>
    %316 = vector.shape_cast %315 : vector<1x16x8xbf16> to vector<16x8xbf16>
    %cst_257 = arith.constant dense<0.000000e+00> : vector<16x256xf32>
    %317 = tpu.matmul %316, %314, %cst_257 {dimension_numbers = #tpu.dot_dimension_numbers<[1], [0], [0], [1], [0, 0, 1, 1], [], []>} : vector<16x8xbf16>, vector<8x256xbf16>, vector<16x256xf32> -> vector<16x256xf32>
    %318 = arith.truncf %317 : vector<16x256xf32> to vector<16x256xbf16>
    %c0_258 = arith.constant 0 : index
    %c0_259 = arith.constant 0 : index
    %c0_260 = arith.constant 0 : index
    %319 = vector.load %arg28[%c0_258, %c0_259, %c0_260] : memref<4x256x256xbf16, #tpu.memory_space<vmem>>, vector<1x256x256xbf16>
    %320 = vector.shape_cast %319 : vector<1x256x256xbf16> to vector<256x256xbf16>
    %cst_261 = arith.constant dense<0.000000e+00> : vector<16x256xf32>
    %321 = tpu.matmul %318, %320, %cst_261 {dimension_numbers = #tpu.dot_dimension_numbers<[1], [0], [0], [1], [0, 0, 1, 1], [], []>} : vector<16x256xbf16>, vector<256x256xbf16>, vector<16x256xf32> -> vector<16x256xf32>
    %c1_262 = arith.constant 1 : index
    %c0_263 = arith.constant 0 : index
    %c0_264 = arith.constant 0 : index
    %322 = vector.load %arg27[%c1_262, %c0_263, %c0_264] : memref<4x16x8xbf16, #tpu.memory_space<vmem>>, vector<1x16x8xbf16>
    %323 = vector.shape_cast %322 : vector<1x16x8xbf16> to vector<16x8xbf16>
    %cst_265 = arith.constant dense<0.000000e+00> : vector<16x256xf32>
    %324 = tpu.matmul %323, %314, %cst_265 {dimension_numbers = #tpu.dot_dimension_numbers<[1], [0], [0], [1], [0, 0, 1, 1], [], []>} : vector<16x8xbf16>, vector<8x256xbf16>, vector<16x256xf32> -> vector<16x256xf32>
    %325 = arith.truncf %324 : vector<16x256xf32> to vector<16x256xbf16>
    %c1_266 = arith.constant 1 : index
    %c0_267 = arith.constant 0 : index
    %c0_268 = arith.constant 0 : index
    %326 = vector.load %arg28[%c1_266, %c0_267, %c0_268] : memref<4x256x256xbf16, #tpu.memory_space<vmem>>, vector<1x256x256xbf16>
    %327 = vector.shape_cast %326 : vector<1x256x256xbf16> to vector<256x256xbf16>
    %cst_269 = arith.constant dense<0.000000e+00> : vector<16x256xf32>
    %328 = tpu.matmul %325, %327, %cst_269 {dimension_numbers = #tpu.dot_dimension_numbers<[1], [0], [0], [1], [0, 0, 1, 1], [], []>} : vector<16x256xbf16>, vector<256x256xbf16>, vector<16x256xf32> -> vector<16x256xf32>
    %329 = arith.addf %321, %328 : vector<16x256xf32>
    %c2_270 = arith.constant 2 : index
    %c0_271 = arith.constant 0 : index
    %c0_272 = arith.constant 0 : index
    %330 = vector.load %arg27[%c2_270, %c0_271, %c0_272] : memref<4x16x8xbf16, #tpu.memory_space<vmem>>, vector<1x16x8xbf16>
    %331 = vector.shape_cast %330 : vector<1x16x8xbf16> to vector<16x8xbf16>
    %cst_273 = arith.constant dense<0.000000e+00> : vector<16x256xf32>
    %332 = tpu.matmul %331, %314, %cst_273 {dimension_numbers = #tpu.dot_dimension_numbers<[1], [0], [0], [1], [0, 0, 1, 1], [], []>} : vector<16x8xbf16>, vector<8x256xbf16>, vector<16x256xf32> -> vector<16x256xf32>
    %333 = arith.truncf %332 : vector<16x256xf32> to vector<16x256xbf16>
    %c2_274 = arith.constant 2 : index
    %c0_275 = arith.constant 0 : index
    %c0_276 = arith.constant 0 : index
    %334 = vector.load %arg28[%c2_274, %c0_275, %c0_276] : memref<4x256x256xbf16, #tpu.memory_space<vmem>>, vector<1x256x256xbf16>
    %335 = vector.shape_cast %334 : vector<1x256x256xbf16> to vector<256x256xbf16>
    %cst_277 = arith.constant dense<0.000000e+00> : vector<16x256xf32>
    %336 = tpu.matmul %333, %335, %cst_277 {dimension_numbers = #tpu.dot_dimension_numbers<[1], [0], [0], [1], [0, 0, 1, 1], [], []>} : vector<16x256xbf16>, vector<256x256xbf16>, vector<16x256xf32> -> vector<16x256xf32>
    %337 = arith.addf %329, %336 : vector<16x256xf32>
    %c3_278 = arith.constant 3 : index
    %c0_279 = arith.constant 0 : index
    %c0_280 = arith.constant 0 : index
    %338 = vector.load %arg27[%c3_278, %c0_279, %c0_280] : memref<4x16x8xbf16, #tpu.memory_space<vmem>>, vector<1x16x8xbf16>
    %339 = vector.shape_cast %338 : vector<1x16x8xbf16> to vector<16x8xbf16>
    %cst_281 = arith.constant dense<0.000000e+00> : vector<16x256xf32>
    %340 = tpu.matmul %339, %314, %cst_281 {dimension_numbers = #tpu.dot_dimension_numbers<[1], [0], [0], [1], [0, 0, 1, 1], [], []>} : vector<16x8xbf16>, vector<8x256xbf16>, vector<16x256xf32> -> vector<16x256xf32>
    %341 = arith.truncf %340 : vector<16x256xf32> to vector<16x256xbf16>
    %c3_282 = arith.constant 3 : index
    %c0_283 = arith.constant 0 : index
    %c0_284 = arith.constant 0 : index
    %342 = vector.load %arg28[%c3_282, %c0_283, %c0_284] : memref<4x256x256xbf16, #tpu.memory_space<vmem>>, vector<1x256x256xbf16>
    %343 = vector.shape_cast %342 : vector<1x256x256xbf16> to vector<256x256xbf16>
    %cst_285 = arith.constant dense<0.000000e+00> : vector<16x256xf32>
    %344 = tpu.matmul %341, %343, %cst_285 {dimension_numbers = #tpu.dot_dimension_numbers<[1], [0], [0], [1], [0, 0, 1, 1], [], []>} : vector<16x256xbf16>, vector<256x256xbf16>, vector<16x256xf32> -> vector<16x256xf32>
    %345 = arith.addf %337, %344 : vector<16x256xf32>
    %cst_286 = arith.constant dense<0.000000e+00> : vector<256xf32>
    %346 = vector.multi_reduction <add>, %345, %cst_286 [0] : vector<16x256xf32> to vector<256xf32>
    %347 = vector.shape_cast %346 : vector<256xf32> to vector<1x256xf32>
    %348 = arith.mulf %345, %345 : vector<16x256xf32>
    %cst_287 = arith.constant dense<0.000000e+00> : vector<256xf32>
    %349 = vector.multi_reduction <add>, %348, %cst_287 [0] : vector<16x256xf32> to vector<256xf32>
    %350 = vector.shape_cast %349 : vector<256xf32> to vector<1x256xf32>
    %c0_288 = arith.constant 0 : index
    %c0_289 = arith.constant 0 : index
    %351 = vector.load %arg29[%c0_288, %c0_289] : memref<256x32xf32, #tpu.memory_space<vmem>>, vector<256x32xf32>
    %cst_290 = arith.constant dense<0.000000e+00> : vector<1x32xf32>
    %352 = tpu.matmul %347, %351, %cst_290 {dimension_numbers = #tpu.dot_dimension_numbers<[1], [0], [0], [1], [0, 0, 1, 1], [], []>} : vector<1x256xf32>, vector<256x32xf32>, vector<1x32xf32> -> vector<1x32xf32>
    %cst_291 = arith.constant 7.812500e-03 : f32
    %353 = vector.broadcast %cst_291 : f32 to vector<1x32xf32>
    %354 = arith.mulf %353, %352 : vector<1x32xf32>
    %c0_292 = arith.constant 0 : index
    %c0_293 = arith.constant 0 : index
    %355 = vector.load %arg29[%c0_292, %c0_293] : memref<256x32xf32, #tpu.memory_space<vmem>>, vector<256x32xf32>
    %cst_294 = arith.constant dense<0.000000e+00> : vector<1x32xf32>
    %356 = tpu.matmul %350, %355, %cst_294 {dimension_numbers = #tpu.dot_dimension_numbers<[1], [0], [0], [1], [0, 0, 1, 1], [], []>} : vector<1x256xf32>, vector<256x32xf32>, vector<1x32xf32> -> vector<1x32xf32>
    %cst_295 = arith.constant 7.812500e-03 : f32
    %357 = vector.broadcast %cst_295 : f32 to vector<1x32xf32>
    %358 = arith.mulf %357, %356 : vector<1x32xf32>
    %359 = arith.mulf %354, %354 : vector<1x32xf32>
    %360 = arith.subf %358, %359 : vector<1x32xf32>
    %cst_296 = arith.constant 0.000000e+00 : f32
    %361 = vector.broadcast %cst_296 : f32 to vector<1x32xf32>
    %362 = arith.maximumf %360, %361 : vector<1x32xf32>
    %c0_297 = arith.constant 0 : index
    %c0_298 = arith.constant 0 : index
    %363 = vector.load %arg31[%c0_297, %c0_298] : memref<1x32xf32, #tpu.memory_space<vmem>>, vector<1x32xf32>
    %cst_299 = arith.constant 9.99999974E-6 : f32
    %364 = vector.broadcast %cst_299 : f32 to vector<1x32xf32>
    %365 = arith.addf %362, %364 : vector<1x32xf32>
    %366 = math.rsqrt %365 : vector<1x32xf32>
    %367 = arith.mulf %363, %366 : vector<1x32xf32>
    %c0_300 = arith.constant 0 : index
    %c0_301 = arith.constant 0 : index
    %368 = vector.load %arg32[%c0_300, %c0_301] : memref<1x32xf32, #tpu.memory_space<vmem>>, vector<1x32xf32>
    %369 = arith.mulf %354, %367 : vector<1x32xf32>
    %370 = arith.subf %368, %369 : vector<1x32xf32>
    %c0_302 = arith.constant 0 : index
    %c0_303 = arith.constant 0 : index
    %371 = vector.load %arg30[%c0_302, %c0_303] : memref<32x256xf32, #tpu.memory_space<vmem>>, vector<32x256xf32>
    %cst_304 = arith.constant dense<0.000000e+00> : vector<1x256xf32>
    %372 = tpu.matmul %367, %371, %cst_304 {dimension_numbers = #tpu.dot_dimension_numbers<[1], [0], [0], [1], [0, 0, 1, 1], [], []>} : vector<1x32xf32>, vector<32x256xf32>, vector<1x256xf32> -> vector<1x256xf32>
    %373 = vector.broadcast %372 : vector<1x256xf32> to vector<16x256xf32>
    %374 = arith.mulf %345, %373 : vector<16x256xf32>
    %c0_305 = arith.constant 0 : index
    %c0_306 = arith.constant 0 : index
    %375 = vector.load %arg30[%c0_305, %c0_306] : memref<32x256xf32, #tpu.memory_space<vmem>>, vector<32x256xf32>
    %cst_307 = arith.constant dense<0.000000e+00> : vector<1x256xf32>
    %376 = tpu.matmul %370, %375, %cst_307 {dimension_numbers = #tpu.dot_dimension_numbers<[1], [0], [0], [1], [0, 0, 1, 1], [], []>} : vector<1x32xf32>, vector<32x256xf32>, vector<1x256xf32> -> vector<1x256xf32>
    %377 = vector.broadcast %376 : vector<1x256xf32> to vector<16x256xf32>
    %378 = arith.addf %374, %377 : vector<16x256xf32>
    %cst_308 = arith.constant 0.000000e+00 : f32
    %379 = vector.broadcast %cst_308 : f32 to vector<16x256xf32>
    %380 = arith.maximumf %378, %379 : vector<16x256xf32>
    %381 = arith.truncf %380 : vector<16x256xf32> to vector<16x256xbf16>
    %c0_309 = arith.constant 0 : index
    %c0_310 = arith.constant 0 : index
    %c0_311 = arith.constant 0 : index
    %382 = vector.load %arg33[%c0_309, %c0_310, %c0_311] : memref<4x32x16xbf16, #tpu.memory_space<vmem>>, vector<1x32x16xbf16>
    %383 = vector.shape_cast %382 : vector<1x32x16xbf16> to vector<32x16xbf16>
    %cst_312 = arith.constant dense<0.000000e+00> : vector<32x256xf32>
    %384 = tpu.matmul %383, %381, %cst_312 {dimension_numbers = #tpu.dot_dimension_numbers<[1], [0], [0], [1], [0, 0, 1, 1], [], []>} : vector<32x16xbf16>, vector<16x256xbf16>, vector<32x256xf32> -> vector<32x256xf32>
    %385 = arith.truncf %384 : vector<32x256xf32> to vector<32x256xbf16>
    %c0_313 = arith.constant 0 : index
    %c0_314 = arith.constant 0 : index
    %c0_315 = arith.constant 0 : index
    %386 = vector.load %arg34[%c0_313, %c0_314, %c0_315] : memref<4x256x128xbf16, #tpu.memory_space<vmem>>, vector<1x256x128xbf16>
    %387 = vector.shape_cast %386 : vector<1x256x128xbf16> to vector<256x128xbf16>
    %cst_316 = arith.constant dense<0.000000e+00> : vector<32x128xf32>
    %388 = tpu.matmul %385, %387, %cst_316 {dimension_numbers = #tpu.dot_dimension_numbers<[1], [0], [0], [1], [0, 0, 1, 1], [], []>} : vector<32x256xbf16>, vector<256x128xbf16>, vector<32x128xf32> -> vector<32x128xf32>
    %c1_317 = arith.constant 1 : index
    %c0_318 = arith.constant 0 : index
    %c0_319 = arith.constant 0 : index
    %389 = vector.load %arg33[%c1_317, %c0_318, %c0_319] : memref<4x32x16xbf16, #tpu.memory_space<vmem>>, vector<1x32x16xbf16>
    %390 = vector.shape_cast %389 : vector<1x32x16xbf16> to vector<32x16xbf16>
    %cst_320 = arith.constant dense<0.000000e+00> : vector<32x256xf32>
    %391 = tpu.matmul %390, %381, %cst_320 {dimension_numbers = #tpu.dot_dimension_numbers<[1], [0], [0], [1], [0, 0, 1, 1], [], []>} : vector<32x16xbf16>, vector<16x256xbf16>, vector<32x256xf32> -> vector<32x256xf32>
    %392 = arith.truncf %391 : vector<32x256xf32> to vector<32x256xbf16>
    %c1_321 = arith.constant 1 : index
    %c0_322 = arith.constant 0 : index
    %c0_323 = arith.constant 0 : index
    %393 = vector.load %arg34[%c1_321, %c0_322, %c0_323] : memref<4x256x128xbf16, #tpu.memory_space<vmem>>, vector<1x256x128xbf16>
    %394 = vector.shape_cast %393 : vector<1x256x128xbf16> to vector<256x128xbf16>
    %cst_324 = arith.constant dense<0.000000e+00> : vector<32x128xf32>
    %395 = tpu.matmul %392, %394, %cst_324 {dimension_numbers = #tpu.dot_dimension_numbers<[1], [0], [0], [1], [0, 0, 1, 1], [], []>} : vector<32x256xbf16>, vector<256x128xbf16>, vector<32x128xf32> -> vector<32x128xf32>
    %396 = arith.addf %388, %395 : vector<32x128xf32>
    %c2_325 = arith.constant 2 : index
    %c0_326 = arith.constant 0 : index
    %c0_327 = arith.constant 0 : index
    %397 = vector.load %arg33[%c2_325, %c0_326, %c0_327] : memref<4x32x16xbf16, #tpu.memory_space<vmem>>, vector<1x32x16xbf16>
    %398 = vector.shape_cast %397 : vector<1x32x16xbf16> to vector<32x16xbf16>
    %cst_328 = arith.constant dense<0.000000e+00> : vector<32x256xf32>
    %399 = tpu.matmul %398, %381, %cst_328 {dimension_numbers = #tpu.dot_dimension_numbers<[1], [0], [0], [1], [0, 0, 1, 1], [], []>} : vector<32x16xbf16>, vector<16x256xbf16>, vector<32x256xf32> -> vector<32x256xf32>
    %400 = arith.truncf %399 : vector<32x256xf32> to vector<32x256xbf16>
    %c2_329 = arith.constant 2 : index
    %c0_330 = arith.constant 0 : index
    %c0_331 = arith.constant 0 : index
    %401 = vector.load %arg34[%c2_329, %c0_330, %c0_331] : memref<4x256x128xbf16, #tpu.memory_space<vmem>>, vector<1x256x128xbf16>
    %402 = vector.shape_cast %401 : vector<1x256x128xbf16> to vector<256x128xbf16>
    %cst_332 = arith.constant dense<0.000000e+00> : vector<32x128xf32>
    %403 = tpu.matmul %400, %402, %cst_332 {dimension_numbers = #tpu.dot_dimension_numbers<[1], [0], [0], [1], [0, 0, 1, 1], [], []>} : vector<32x256xbf16>, vector<256x128xbf16>, vector<32x128xf32> -> vector<32x128xf32>
    %404 = arith.addf %396, %403 : vector<32x128xf32>
    %c3_333 = arith.constant 3 : index
    %c0_334 = arith.constant 0 : index
    %c0_335 = arith.constant 0 : index
    %405 = vector.load %arg33[%c3_333, %c0_334, %c0_335] : memref<4x32x16xbf16, #tpu.memory_space<vmem>>, vector<1x32x16xbf16>
    %406 = vector.shape_cast %405 : vector<1x32x16xbf16> to vector<32x16xbf16>
    %cst_336 = arith.constant dense<0.000000e+00> : vector<32x256xf32>
    %407 = tpu.matmul %406, %381, %cst_336 {dimension_numbers = #tpu.dot_dimension_numbers<[1], [0], [0], [1], [0, 0, 1, 1], [], []>} : vector<32x16xbf16>, vector<16x256xbf16>, vector<32x256xf32> -> vector<32x256xf32>
    %408 = arith.truncf %407 : vector<32x256xf32> to vector<32x256xbf16>
    %c3_337 = arith.constant 3 : index
    %c0_338 = arith.constant 0 : index
    %c0_339 = arith.constant 0 : index
    %409 = vector.load %arg34[%c3_337, %c0_338, %c0_339] : memref<4x256x128xbf16, #tpu.memory_space<vmem>>, vector<1x256x128xbf16>
    %410 = vector.shape_cast %409 : vector<1x256x128xbf16> to vector<256x128xbf16>
    %cst_340 = arith.constant dense<0.000000e+00> : vector<32x128xf32>
    %411 = tpu.matmul %408, %410, %cst_340 {dimension_numbers = #tpu.dot_dimension_numbers<[1], [0], [0], [1], [0, 0, 1, 1], [], []>} : vector<32x256xbf16>, vector<256x128xbf16>, vector<32x128xf32> -> vector<32x128xf32>
    %412 = arith.addf %404, %411 : vector<32x128xf32>
    %cst_341 = arith.constant dense<0.000000e+00> : vector<128xf32>
    %413 = vector.multi_reduction <add>, %412, %cst_341 [0] : vector<32x128xf32> to vector<128xf32>
    %414 = vector.shape_cast %413 : vector<128xf32> to vector<1x128xf32>
    %415 = arith.mulf %412, %412 : vector<32x128xf32>
    %cst_342 = arith.constant dense<0.000000e+00> : vector<128xf32>
    %416 = vector.multi_reduction <add>, %415, %cst_342 [0] : vector<32x128xf32> to vector<128xf32>
    %417 = vector.shape_cast %416 : vector<128xf32> to vector<1x128xf32>
    %c0_343 = arith.constant 0 : index
    %c0_344 = arith.constant 0 : index
    %418 = vector.load %arg35[%c0_343, %c0_344] : memref<128x8xf32, #tpu.memory_space<vmem>>, vector<128x8xf32>
    %cst_345 = arith.constant dense<0.000000e+00> : vector<1x8xf32>
    %419 = tpu.matmul %414, %418, %cst_345 {dimension_numbers = #tpu.dot_dimension_numbers<[1], [0], [0], [1], [0, 0, 1, 1], [], []>} : vector<1x128xf32>, vector<128x8xf32>, vector<1x8xf32> -> vector<1x8xf32>
    %cst_346 = arith.constant 0.001953125 : f32
    %420 = vector.broadcast %cst_346 : f32 to vector<1x8xf32>
    %421 = arith.mulf %420, %419 : vector<1x8xf32>
    %c0_347 = arith.constant 0 : index
    %c0_348 = arith.constant 0 : index
    %422 = vector.load %arg35[%c0_347, %c0_348] : memref<128x8xf32, #tpu.memory_space<vmem>>, vector<128x8xf32>
    %cst_349 = arith.constant dense<0.000000e+00> : vector<1x8xf32>
    %423 = tpu.matmul %417, %422, %cst_349 {dimension_numbers = #tpu.dot_dimension_numbers<[1], [0], [0], [1], [0, 0, 1, 1], [], []>} : vector<1x128xf32>, vector<128x8xf32>, vector<1x8xf32> -> vector<1x8xf32>
    %cst_350 = arith.constant 0.001953125 : f32
    %424 = vector.broadcast %cst_350 : f32 to vector<1x8xf32>
    %425 = arith.mulf %424, %423 : vector<1x8xf32>
    %426 = arith.mulf %421, %421 : vector<1x8xf32>
    %427 = arith.subf %425, %426 : vector<1x8xf32>
    %cst_351 = arith.constant 0.000000e+00 : f32
    %428 = vector.broadcast %cst_351 : f32 to vector<1x8xf32>
    %429 = arith.maximumf %427, %428 : vector<1x8xf32>
    %c0_352 = arith.constant 0 : index
    %c0_353 = arith.constant 0 : index
    %430 = vector.load %arg37[%c0_352, %c0_353] : memref<1x8xf32, #tpu.memory_space<vmem>>, vector<1x8xf32>
    %cst_354 = arith.constant 9.99999974E-6 : f32
    %431 = vector.broadcast %cst_354 : f32 to vector<1x8xf32>
    %432 = arith.addf %429, %431 : vector<1x8xf32>
    %433 = math.rsqrt %432 : vector<1x8xf32>
    %434 = arith.mulf %430, %433 : vector<1x8xf32>
    %c0_355 = arith.constant 0 : index
    %c0_356 = arith.constant 0 : index
    %435 = vector.load %arg38[%c0_355, %c0_356] : memref<1x8xf32, #tpu.memory_space<vmem>>, vector<1x8xf32>
    %436 = arith.mulf %421, %434 : vector<1x8xf32>
    %437 = arith.subf %435, %436 : vector<1x8xf32>
    %c0_357 = arith.constant 0 : index
    %c0_358 = arith.constant 0 : index
    %438 = vector.load %arg36[%c0_357, %c0_358] : memref<8x128xf32, #tpu.memory_space<vmem>>, vector<8x128xf32>
    %cst_359 = arith.constant dense<0.000000e+00> : vector<1x128xf32>
    %439 = tpu.matmul %434, %438, %cst_359 {dimension_numbers = #tpu.dot_dimension_numbers<[1], [0], [0], [1], [0, 0, 1, 1], [], []>} : vector<1x8xf32>, vector<8x128xf32>, vector<1x128xf32> -> vector<1x128xf32>
    %440 = vector.broadcast %439 : vector<1x128xf32> to vector<32x128xf32>
    %441 = arith.mulf %412, %440 : vector<32x128xf32>
    %c0_360 = arith.constant 0 : index
    %c0_361 = arith.constant 0 : index
    %442 = vector.load %arg36[%c0_360, %c0_361] : memref<8x128xf32, #tpu.memory_space<vmem>>, vector<8x128xf32>
    %cst_362 = arith.constant dense<0.000000e+00> : vector<1x128xf32>
    %443 = tpu.matmul %437, %442, %cst_362 {dimension_numbers = #tpu.dot_dimension_numbers<[1], [0], [0], [1], [0, 0, 1, 1], [], []>} : vector<1x8xf32>, vector<8x128xf32>, vector<1x128xf32> -> vector<1x128xf32>
    %444 = vector.broadcast %443 : vector<1x128xf32> to vector<32x128xf32>
    %445 = arith.addf %441, %444 : vector<32x128xf32>
    %cst_363 = arith.constant 0.000000e+00 : f32
    %446 = vector.broadcast %cst_363 : f32 to vector<32x128xf32>
    %447 = arith.maximumf %445, %446 : vector<32x128xf32>
    %448 = arith.truncf %447 : vector<32x128xf32> to vector<32x128xbf16>
    %c0_364 = arith.constant 0 : index
    %c0_365 = arith.constant 0 : index
    %c0_366 = arith.constant 0 : index
    %449 = vector.load %arg39[%c0_364, %c0_365, %c0_366] : memref<4x64x32xbf16, #tpu.memory_space<vmem>>, vector<1x64x32xbf16>
    %450 = vector.shape_cast %449 : vector<1x64x32xbf16> to vector<64x32xbf16>
    %cst_367 = arith.constant dense<0.000000e+00> : vector<64x128xf32>
    %451 = tpu.matmul %450, %448, %cst_367 {dimension_numbers = #tpu.dot_dimension_numbers<[1], [0], [0], [1], [0, 0, 1, 1], [], []>} : vector<64x32xbf16>, vector<32x128xbf16>, vector<64x128xf32> -> vector<64x128xf32>
    %452 = arith.truncf %451 : vector<64x128xf32> to vector<64x128xbf16>
    %c0_368 = arith.constant 0 : index
    %c0_369 = arith.constant 0 : index
    %c0_370 = arith.constant 0 : index
    %453 = vector.load %arg40[%c0_368, %c0_369, %c0_370] : memref<4x128x96xbf16, #tpu.memory_space<vmem>>, vector<1x128x96xbf16>
    %454 = vector.shape_cast %453 : vector<1x128x96xbf16> to vector<128x96xbf16>
    %cst_371 = arith.constant dense<0.000000e+00> : vector<64x96xf32>
    %455 = tpu.matmul %452, %454, %cst_371 {dimension_numbers = #tpu.dot_dimension_numbers<[1], [0], [0], [1], [0, 0, 1, 1], [], []>} : vector<64x128xbf16>, vector<128x96xbf16>, vector<64x96xf32> -> vector<64x96xf32>
    %c1_372 = arith.constant 1 : index
    %c0_373 = arith.constant 0 : index
    %c0_374 = arith.constant 0 : index
    %456 = vector.load %arg39[%c1_372, %c0_373, %c0_374] : memref<4x64x32xbf16, #tpu.memory_space<vmem>>, vector<1x64x32xbf16>
    %457 = vector.shape_cast %456 : vector<1x64x32xbf16> to vector<64x32xbf16>
    %cst_375 = arith.constant dense<0.000000e+00> : vector<64x128xf32>
    %458 = tpu.matmul %457, %448, %cst_375 {dimension_numbers = #tpu.dot_dimension_numbers<[1], [0], [0], [1], [0, 0, 1, 1], [], []>} : vector<64x32xbf16>, vector<32x128xbf16>, vector<64x128xf32> -> vector<64x128xf32>
    %459 = arith.truncf %458 : vector<64x128xf32> to vector<64x128xbf16>
    %c1_376 = arith.constant 1 : index
    %c0_377 = arith.constant 0 : index
    %c0_378 = arith.constant 0 : index
    %460 = vector.load %arg40[%c1_376, %c0_377, %c0_378] : memref<4x128x96xbf16, #tpu.memory_space<vmem>>, vector<1x128x96xbf16>
    %461 = vector.shape_cast %460 : vector<1x128x96xbf16> to vector<128x96xbf16>
    %cst_379 = arith.constant dense<0.000000e+00> : vector<64x96xf32>
    %462 = tpu.matmul %459, %461, %cst_379 {dimension_numbers = #tpu.dot_dimension_numbers<[1], [0], [0], [1], [0, 0, 1, 1], [], []>} : vector<64x128xbf16>, vector<128x96xbf16>, vector<64x96xf32> -> vector<64x96xf32>
    %463 = arith.addf %455, %462 : vector<64x96xf32>
    %c2_380 = arith.constant 2 : index
    %c0_381 = arith.constant 0 : index
    %c0_382 = arith.constant 0 : index
    %464 = vector.load %arg39[%c2_380, %c0_381, %c0_382] : memref<4x64x32xbf16, #tpu.memory_space<vmem>>, vector<1x64x32xbf16>
    %465 = vector.shape_cast %464 : vector<1x64x32xbf16> to vector<64x32xbf16>
    %cst_383 = arith.constant dense<0.000000e+00> : vector<64x128xf32>
    %466 = tpu.matmul %465, %448, %cst_383 {dimension_numbers = #tpu.dot_dimension_numbers<[1], [0], [0], [1], [0, 0, 1, 1], [], []>} : vector<64x32xbf16>, vector<32x128xbf16>, vector<64x128xf32> -> vector<64x128xf32>
    %467 = arith.truncf %466 : vector<64x128xf32> to vector<64x128xbf16>
    %c2_384 = arith.constant 2 : index
    %c0_385 = arith.constant 0 : index
    %c0_386 = arith.constant 0 : index
    %468 = vector.load %arg40[%c2_384, %c0_385, %c0_386] : memref<4x128x96xbf16, #tpu.memory_space<vmem>>, vector<1x128x96xbf16>
    %469 = vector.shape_cast %468 : vector<1x128x96xbf16> to vector<128x96xbf16>
    %cst_387 = arith.constant dense<0.000000e+00> : vector<64x96xf32>
    %470 = tpu.matmul %467, %469, %cst_387 {dimension_numbers = #tpu.dot_dimension_numbers<[1], [0], [0], [1], [0, 0, 1, 1], [], []>} : vector<64x128xbf16>, vector<128x96xbf16>, vector<64x96xf32> -> vector<64x96xf32>
    %471 = arith.addf %463, %470 : vector<64x96xf32>
    %c3_388 = arith.constant 3 : index
    %c0_389 = arith.constant 0 : index
    %c0_390 = arith.constant 0 : index
    %472 = vector.load %arg39[%c3_388, %c0_389, %c0_390] : memref<4x64x32xbf16, #tpu.memory_space<vmem>>, vector<1x64x32xbf16>
    %473 = vector.shape_cast %472 : vector<1x64x32xbf16> to vector<64x32xbf16>
    %cst_391 = arith.constant dense<0.000000e+00> : vector<64x128xf32>
    %474 = tpu.matmul %473, %448, %cst_391 {dimension_numbers = #tpu.dot_dimension_numbers<[1], [0], [0], [1], [0, 0, 1, 1], [], []>} : vector<64x32xbf16>, vector<32x128xbf16>, vector<64x128xf32> -> vector<64x128xf32>
    %475 = arith.truncf %474 : vector<64x128xf32> to vector<64x128xbf16>
    %c3_392 = arith.constant 3 : index
    %c0_393 = arith.constant 0 : index
    %c0_394 = arith.constant 0 : index
    %476 = vector.load %arg40[%c3_392, %c0_393, %c0_394] : memref<4x128x96xbf16, #tpu.memory_space<vmem>>, vector<1x128x96xbf16>
    %477 = vector.shape_cast %476 : vector<1x128x96xbf16> to vector<128x96xbf16>
    %cst_395 = arith.constant dense<0.000000e+00> : vector<64x96xf32>
    %478 = tpu.matmul %475, %477, %cst_395 {dimension_numbers = #tpu.dot_dimension_numbers<[1], [0], [0], [1], [0, 0, 1, 1], [], []>} : vector<64x128xbf16>, vector<128x96xbf16>, vector<64x96xf32> -> vector<64x96xf32>
    %479 = arith.addf %471, %478 : vector<64x96xf32>
    %480 = math.tanh %479 : vector<64x96xf32>
    %c0_396 = arith.constant 0 : index
    %c0_397 = arith.constant 0 : index
    %481 = vector.load %arg41[%c0_396, %c0_397] : memref<64x96xf32, #tpu.memory_space<vmem>>, vector<64x96xf32>
    tpu.vector_store %arg41[%c0_396, %c0_397], %480 {strides = array<i32>} : memref<64x96xf32, #tpu.memory_space<vmem>>, vector<64x96xf32>,
    return
  }
}

</mosaic_0001>

<llo_original>
// kernel: generator_forward.1
$region0: #{generator_forward.1}
  #allocation0 [shape = 'u32[]', space=smem, size = 0x4, offset = 0x4, fixed_abs, tag = 'smem constant byte address 0x4 - core index']
  #allocation1 [shape = 'u32[72,128]{1,0:T(1,128)}', space=vmem, size = 0x9000, scoped, tag = 'internal scratch']
  %s0 = inlined_call_operand.smem [shape: u32[42], index: -1, kind: input, shape index: {}]
  %s1 = sld [smem:[%s0]]
  %s2 = scalar_lea.smem %s0, 1
  %s3 = sld [smem:[%s2]]
  %s4 = scalar_lea.smem %s0, 2
  %s5 = sld [smem:[%s4]]
  %s6 = scalar_lea.smem %s0, 3
  %s7 = sld [smem:[%s6]]
  %s8 = scalar_lea.smem %s0, 4
  %s9 = sld [smem:[%s8]]
  %s10 = scalar_lea.smem %s0, 5
  %s11 = sld [smem:[%s10]]
  %s12 = scalar_lea.smem %s0, 6
  %s13 = sld [smem:[%s12]]
  %s14 = scalar_lea.smem %s0, 7
  %s15 = sld [smem:[%s14]]
  %s16 = scalar_lea.smem %s0, 8
  %s17 = sld [smem:[%s16]]
  %s18 = scalar_lea.smem %s0, 9
  %s19 = sld [smem:[%s18]]
  %s20 = scalar_lea.smem %s0, 10
  %s21 = sld [smem:[%s20]]
  %s22 = scalar_lea.smem %s0, 11
  %s23 = sld [smem:[%s22]]
  %s24 = scalar_lea.smem %s0, 12
  %s25 = sld [smem:[%s24]]
  %s26 = scalar_lea.smem %s0, 13
  %s27 = sld [smem:[%s26]]
  %s28 = scalar_lea.smem %s0, 14
  %s29 = sld [smem:[%s28]]
  %s30 = scalar_lea.smem %s0, 15
  %s31 = sld [smem:[%s30]]
  %s32 = scalar_lea.smem %s0, 16
  %s33 = sld [smem:[%s32]]
  %s34 = scalar_lea.smem %s0, 17
  %s35 = sld [smem:[%s34]]
  %s36 = scalar_lea.smem %s0, 18
  %s37 = sld [smem:[%s36]]
  %s38 = scalar_lea.smem %s0, 19
  %s39 = sld [smem:[%s38]]
  %s40 = scalar_lea.smem %s0, 20
  %s41 = sld [smem:[%s40]]
  %s42 = scalar_lea.smem %s0, 21
  %s43 = sld [smem:[%s42]]
  %s44 = scalar_lea.smem %s0, 22
  %s45 = sld [smem:[%s44]]
  %s46 = scalar_lea.smem %s0, 23
  %s47 = sld [smem:[%s46]]
  %s48 = scalar_lea.smem %s0, 24
  %s49 = sld [smem:[%s48]]
  %s50 = scalar_lea.smem %s0, 25
  %s51 = sld [smem:[%s50]]
  %s52 = scalar_lea.smem %s0, 26
  %s53 = sld [smem:[%s52]]
  %s54 = scalar_lea.smem %s0, 27
  %s55 = sld [smem:[%s54]]
  %s56 = scalar_lea.smem %s0, 28
  %s57 = sld [smem:[%s56]]
  %s58 = scalar_lea.smem %s0, 29
  %s59 = sld [smem:[%s58]]
  %s60 = scalar_lea.smem %s0, 30
  %s61 = sld [smem:[%s60]]
  %s62 = scalar_lea.smem %s0, 31
  %s63 = sld [smem:[%s62]]
  %s64 = scalar_lea.smem %s0, 32
  %s65 = sld [smem:[%s64]]
  %s66 = scalar_lea.smem %s0, 33
  %s67 = sld [smem:[%s66]]
  %s68 = scalar_lea.smem %s0, 34
  %s69 = sld [smem:[%s68]]
  %s70 = scalar_lea.smem %s0, 35
  %s71 = sld [smem:[%s70]]
  %s72 = scalar_lea.smem %s0, 36
  %s73 = sld [smem:[%s72]]
  %s74 = scalar_lea.smem %s0, 37
  %s75 = sld [smem:[%s74]]
  %s76 = scalar_lea.smem %s0, 38
  %s77 = sld [smem:[%s76]]
  %s78 = scalar_lea.smem %s0, 39
  %s79 = sld [smem:[%s78]]
  %s80 = scalar_lea.smem %s0, 40
  %s81 = sld [smem:[%s80]]
  %s82 = scalar_lea.smem %s0, 41
  %s83 = sld [smem:[%s82]]
  %s84 = sld [smem:[#allocation0]]
  $region190: #{generator_forward.1} parent=0
    _
  %s86 = ssub.s32 1, %s84
  %s87 = scalar_select 0, %s86, %s84
  $region1: #{generator_forward.1} parent=0
    #allocation2 [shape = 'u8[524288]{0}', space=vmem, size = 0x80000, scoped, tag = 'input window, operand 10, single buffered']
    #allocation3 [shape = 's32[1]{0}', space=sflag, size = 0x4, scoped, tag = 'scoped memory for generator_forward.1']
    #allocation4 [shape = 'u8[524288]{0}', space=vmem, size = 0x80000, scoped, tag = 'input window, operand 16, single buffered']
    #allocation5 [shape = 's32[1]{0}', space=sflag, size = 0x4, scoped, tag = 'scoped memory for generator_forward.1']
    #allocation6 [shape = 'u8[524288]{0}', space=vmem, size = 0x80000, scoped, tag = 'input window, operand 22, single buffered']
    #allocation7 [shape = 'u8[524288]{0}', space=vmem, size = 0x80000, scoped, tag = 'input window, operand 28, single buffered']
    #allocation8 [shape = 's32[1]{0}', space=sflag, size = 0x4, scoped, tag = 'scoped memory for generator_forward.1']
    %88 = vsyncpa [#allocation3], 0
    %89 = vsyncpa [#allocation5], 0
    %90 = vsyncpa [#allocation8], 0
    // Predicated region
    $region2: #{generator_forward.1} parent=1 // pred_check
      _
    $region3: #{generator_forward.1} parent=1 // pred_check_branch
      %92 = sbr.rel (0) target = $region5
    $region4: #{generator_forward.1} parent=1 // pred_region
      _
    $region5: #{generator_forward.1} parent=1 // pred_fallthru
      _
    // Predicated region
    $region6: #{generator_forward.1} parent=1 // pred_check
      _
    $region7: #{generator_forward.1} parent=1 // pred_check_branch
      %94 = sbr.rel (0) target = $region9
    $region8: #{generator_forward.1} parent=1 // pred_region
      _
    $region9: #{generator_forward.1} parent=1 // pred_fallthru
      _
    // Predicated region
    $region10: #{generator_forward.1} parent=1 // pred_check
      _
    $region11: #{generator_forward.1} parent=1 // pred_check_branch
      %96 = sbr.rel (0) target = $region13
    $region12: #{generator_forward.1} parent=1 // pred_region
      _
    $region13: #{generator_forward.1} parent=1 // pred_fallthru
      _
    // Predicated region
    $region14: #{generator_forward.1} parent=1 // pred_check
      _
    $region15: #{generator_forward.1} parent=1 // pred_check_branch
      %98 = sbr.rel (0) target = $region17
    $region16: #{generator_forward.1} parent=1 // pred_region
      _
    $region17: #{generator_forward.1} parent=1 // pred_fallthru
      _
    // Predicated region
    $region18: #{generator_forward.1} parent=1 // pred_check
      _
    $region19: #{generator_forward.1} parent=1 // pred_check_branch
      %100 = sbr.rel (0) target = $region21
    $region20: #{generator_forward.1} parent=1 // pred_region
      _
    $region21: #{generator_forward.1} parent=1 // pred_fallthru
      _
    // Predicated region
    $region22: #{generator_forward.1} parent=1 // pred_check
      _
    $region23: #{generator_forward.1} parent=1 // pred_check_branch
      %102 = sbr.rel (0) target = $region25
    $region24: #{generator_forward.1} parent=1 // pred_region
      _
    $region25: #{generator_forward.1} parent=1 // pred_fallthru
      _
    // Predicated region
    $region26: #{generator_forward.1} parent=1 // pred_check
      _
    $region27: #{generator_forward.1} parent=1 // pred_check_branch
      %104 = sbr.rel (0) target = $region29
    $region28: #{generator_forward.1} parent=1 // pred_region
      _
    $region29: #{generator_forward.1} parent=1 // pred_fallthru
      _
    // Predicated region
    $region30: #{generator_forward.1} parent=1 // pred_check
      _
    $region31: #{generator_forward.1} parent=1 // pred_check_branch
      %106 = sbr.rel (0) target = $region33
    $region32: #{generator_forward.1} parent=1 // pred_region
      _
    $region33: #{generator_forward.1} parent=1 // pred_fallthru
      _
    // Predicated region
    $region34: #{generator_forward.1} parent=1 // pred_check
      _
    $region35: #{generator_forward.1} parent=1 // pred_check_branch
      %108 = sbr.rel (0) target = $region37
    $region36: #{generator_forward.1} parent=1 // pred_region
      _
    $region37: #{generator_forward.1} parent=1 // pred_fallthru
      _
    // Predicated region
    $region38: #{generator_forward.1} parent=1 // pred_check
      _
    $region39: #{generator_forward.1} parent=1 // pred_check_branch
      %110 = sbr.rel (0) target = $region41
    $region40: #{generator_forward.1} parent=1 // pred_region
      _
    $region41: #{generator_forward.1} parent=1 // pred_fallthru
      _
    // Predicated region
    $region42: #{generator_forward.1} parent=1 // pred_check
      _
    $region43: #{generator_forward.1} parent=1 // pred_check_branch
      %112 = sbr.rel (0) target = $region45
    $region44: #{generator_forward.1} parent=1 // pred_region
      %114 = vsyncadd [#allocation3], 0
      %s115 = sshll.u32 %s21, 4
      %s116 = int_to_ptr.hbm [resolvable:$true] %s115
      %s117 = sshll.u32 [#allocation2], 4
      %s118 = int_to_ptr.vmem [resolvable:$true] %s117
      %123 = dma.hbm_to_vmem [thread:$0]  %s116, 16384, %s118, [#allocation3], 128, 128, 8
    $region45: #{generator_forward.1} parent=1 // pred_fallthru
      _
    // Predicated region
    $region46: #{generator_forward.1} parent=1 // pred_check
      _
    $region47: #{generator_forward.1} parent=1 // pred_check_branch
      %125 = sbr.rel (0) target = $region49
    $region48: #{generator_forward.1} parent=1 // pred_region
      _
    $region49: #{generator_forward.1} parent=1 // pred_fallthru
      _
    // Predicated region
    $region50: #{generator_forward.1} parent=1 // pred_check
      _
    $region51: #{generator_forward.1} parent=1 // pred_check_branch
      %127 = sbr.rel (0) target = $region53
    $region52: #{generator_forward.1} parent=1 // pred_region
      _
    $region53: #{generator_forward.1} parent=1 // pred_fallthru
      _
    // Predicated region
    $region54: #{generator_forward.1} parent=1 // pred_check
      _
    $region55: #{generator_forward.1} parent=1 // pred_check_branch
      %129 = sbr.rel (0) target = $region57
    $region56: #{generator_forward.1} parent=1 // pred_region
      _
    $region57: #{generator_forward.1} parent=1 // pred_fallthru
      _
    // Predicated region
    $region58: #{generator_forward.1} parent=1 // pred_check
      _
    $region59: #{generator_forward.1} parent=1 // pred_check_branch
      %131 = sbr.rel (0) target = $region61
    $region60: #{generator_forward.1} parent=1 // pred_region
      _
    $region61: #{generator_forward.1} parent=1 // pred_fallthru
      _
    // Predicated region
    $region62: #{generator_forward.1} parent=1 // pred_check
      _
    $region63: #{generator_forward.1} parent=1 // pred_check_branch
      %133 = sbr.rel (0) target = $region65
    $region64: #{generator_forward.1} parent=1 // pred_region
      _
    $region65: #{generator_forward.1} parent=1 // pred_fallthru
      _
    // Predicated region
    $region66: #{generator_forward.1} parent=1 // pred_check
      _
    $region67: #{generator_forward.1} parent=1 // pred_check_branch
      %135 = sbr.rel (0) target = $region69
    $region68: #{generator_forward.1} parent=1 // pred_region
      %137 = vsyncadd [#allocation5], 0
      %s138 = sshll.u32 %s33, 4
      %s139 = int_to_ptr.hbm [resolvable:$true] %s138
      %s140 = sshll.u32 [#allocation4], 4
      %s141 = int_to_ptr.vmem [resolvable:$true] %s140
      %146 = dma.hbm_to_vmem [thread:$0]  %s139, 16384, %s141, [#allocation5], 128, 128, 8
    $region69: #{generator_forward.1} parent=1 // pred_fallthru
      _
    // Predicated region
    $region70: #{generator_forward.1} parent=1 // pred_check
      _
    $region71: #{generator_forward.1} parent=1 // pred_check_branch
      %148 = sbr.rel (0) target = $region73
    $region72: #{generator_forward.1} parent=1 // pred_region
      _
    $region73: #{generator_forward.1} parent=1 // pred_fallthru
      _
    // Predicated region
    $region74: #{generator_forward.1} parent=1 // pred_check
      _
    $region75: #{generator_forward.1} parent=1 // pred_check_branch
      %150 = sbr.rel (0) target = $region77
    $region76: #{generator_forward.1} parent=1 // pred_region
      _
    $region77: #{generator_forward.1} parent=1 // pred_fallthru
      _
    // Predicated region
    $region78: #{generator_forward.1} parent=1 // pred_check
      _
    $region79: #{generator_forward.1} parent=1 // pred_check_branch
      %152 = sbr.rel (0) target = $region81
    $region80: #{generator_forward.1} parent=1 // pred_region
      _
    $region81: #{generator_forward.1} parent=1 // pred_fallthru
      _
    // Predicated region
    $region82: #{generator_forward.1} parent=1 // pred_check
      _
    $region83: #{generator_forward.1} parent=1 // pred_check_branch
      %154 = sbr.rel (0) target = $region85
    $region84: #{generator_forward.1} parent=1 // pred_region
      _
    $region85: #{generator_forward.1} parent=1 // pred_fallthru
      _
    // Predicated region
    $region86: #{generator_forward.1} parent=1 // pred_check
      _
    $region87: #{generator_forward.1} parent=1 // pred_check_branch
      %156 = sbr.rel (0) target = $region89
    $region88: #{generator_forward.1} parent=1 // pred_region
      _
    $region89: #{generator_forward.1} parent=1 // pred_fallthru
      _
    // Predicated region
    $region90: #{generator_forward.1} parent=1 // pred_check
      _
    $region91: #{generator_forward.1} parent=1 // pred_check_branch
      %158 = sbr.rel (0) target = $region93
    $region92: #{generator_forward.1} parent=1 // pred_region
      %160 = vsyncadd [#allocation5], 0
      %s161 = sshll.u32 %s45, 4
      %s162 = int_to_ptr.hbm [resolvable:$true] %s161
      %s163 = sshll.u32 [#allocation6], 4
      %s164 = int_to_ptr.vmem [resolvable:$true] %s163
      %169 = dma.hbm_to_vmem [thread:$0]  %s162, 16384, %s164, [#allocation5], 128, 128, 8
    $region93: #{generator_forward.1} parent=1 // pred_fallthru
      _
    // Predicated region
    $region94: #{generator_forward.1} parent=1 // pred_check
      _
    $region95: #{generator_forward.1} parent=1 // pred_check_branch
      %171 = sbr.rel (0) target = $region97
    $region96: #{generator_forward.1} parent=1 // pred_region
      _
    $region97: #{generator_forward.1} parent=1 // pred_fallthru
      _
    // Predicated region
    $region98: #{generator_forward.1} parent=1 // pred_check
      _
    $region99: #{generator_forward.1} parent=1 // pred_check_branch
      %173 = sbr.rel (0) target = $region101
    $region100: #{generator_forward.1} parent=1 // pred_region
      _
    $region101: #{generator_forward.1} parent=1 // pred_fallthru
      _
    // Predicated region
    $region102: #{generator_forward.1} parent=1 // pred_check
      _
    $region103: #{generator_forward.1} parent=1 // pred_check_branch
      %175 = sbr.rel (0) target = $region105
    $region104: #{generator_forward.1} parent=1 // pred_region
      _
    $region105: #{generator_forward.1} parent=1 // pred_fallthru
      _
    // Predicated region
    $region106: #{generator_forward.1} parent=1 // pred_check
      _
    $region107: #{generator_forward.1} parent=1 // pred_check_branch
      %177 = sbr.rel (0) target = $region109
    $region108: #{generator_forward.1} parent=1 // pred_region
      _
    $region109: #{generator_forward.1} parent=1 // pred_fallthru
      _
    // Predicated region
    $region110: #{generator_forward.1} parent=1 // pred_check
      _
    $region111: #{generator_forward.1} parent=1 // pred_check_branch
      %179 = sbr.rel (0) target = $region113
    $region112: #{generator_forward.1} parent=1 // pred_region
      _
    $region113: #{generator_forward.1} parent=1 // pred_fallthru
      _
    // Predicated region
    $region114: #{generator_forward.1} parent=1 // pred_check
      _
    $region115: #{generator_forward.1} parent=1 // pred_check_branch
      %181 = sbr.rel (0) target = $region117
    $region116: #{generator_forward.1} parent=1 // pred_region
      %183 = vsyncadd [#allocation8], 0
      %s184 = sshll.u32 %s57, 4
      %s185 = int_to_ptr.hbm [resolvable:$true] %s184
      %s186 = sshll.u32 [#allocation7], 4
      %s187 = int_to_ptr.vmem [resolvable:$true] %s186
      %192 = dma.hbm_to_vmem [thread:$0]  %s185, 16384, %s187, [#allocation8], 128, 128, 8
    $region117: #{generator_forward.1} parent=1 // pred_fallthru
      _
    // Predicated region
    $region118: #{generator_forward.1} parent=1 // pred_check
      _
    $region119: #{generator_forward.1} parent=1 // pred_check_branch
      %194 = sbr.rel (0) target = $region121
    $region120: #{generator_forward.1} parent=1 // pred_region
      _
    $region121: #{generator_forward.1} parent=1 // pred_fallthru
      _
    // Predicated region
    $region122: #{generator_forward.1} parent=1 // pred_check
      _
    $region123: #{generator_forward.1} parent=1 // pred_check_branch
      %196 = sbr.rel (0) target = $region125
    $region124: #{generator_forward.1} parent=1 // pred_region
      _
    $region125: #{generator_forward.1} parent=1 // pred_fallthru
      _
    // Predicated region
    $region126: #{generator_forward.1} parent=1 // pred_check
      _
    $region127: #{generator_forward.1} parent=1 // pred_check_branch
      %198 = sbr.rel (0) target = $region129
    $region128: #{generator_forward.1} parent=1 // pred_region
      _
    $region129: #{generator_forward.1} parent=1 // pred_fallthru
      _
    // Predicated region
    $region130: #{generator_forward.1} parent=1 // pred_check
      _
    $region131: #{generator_forward.1} parent=1 // pred_check_branch
      %200 = sbr.rel (0) target = $region133
    $region132: #{generator_forward.1} parent=1 // pred_region
      _
    $region133: #{generator_forward.1} parent=1 // pred_fallthru
      _
    // Predicated region
    $region134: #{generator_forward.1} parent=1 // pred_check
      _
    $region135: #{generator_forward.1} parent=1 // pred_check_branch
      %202 = sbr.rel (0) target = $region137
    $region136: #{generator_forward.1} parent=1 // pred_region
      _
    $region137: #{generator_forward.1} parent=1 // pred_fallthru
      _
    // Predicated region
    $region138: #{generator_forward.1} parent=1 // pred_check
      _
    $region139: #{generator_forward.1} parent=1 // pred_check_branch
      %204 = sbr.rel (0) target = $region141
    $region140: #{generator_forward.1} parent=1 // pred_region
      _
    $region141: #{generator_forward.1} parent=1 // pred_fallthru
      _
    // Predicated region
    $region142: #{generator_forward.1} parent=1 // pred_check
      _
    $region143: #{generator_forward.1} parent=1 // pred_check_branch
      %206 = sbr.rel (0) target = $region145
    $region144: #{generator_forward.1} parent=1 // pred_region
      _
    $region145: #{generator_forward.1} parent=1 // pred_fallthru
      _
    // Predicated region
    $region146: #{generator_forward.1} parent=1 // pred_check
      _
    $region147: #{generator_forward.1} parent=1 // pred_check_branch
      %208 = sbr.rel (0) target = $region149
    $region148: #{generator_forward.1} parent=1 // pred_region
      _
    $region149: #{generator_forward.1} parent=1 // pred_fallthru
      _
    // Predicated region
    $region150: #{generator_forward.1} parent=1 // pred_check
      _
    $region151: #{generator_forward.1} parent=1 // pred_check_branch
      %210 = sbr.rel (0) target = $region153
    $region152: #{generator_forward.1} parent=1 // pred_region
      _
    $region153: #{generator_forward.1} parent=1 // pred_fallthru
      _
    // Predicated region
    $region154: #{generator_forward.1} parent=1 // pred_check
      _
    $region155: #{generator_forward.1} parent=1 // pred_check_branch
      %212 = sbr.rel (0) target = $region157
    $region156: #{generator_forward.1} parent=1 // pred_region
      _
    $region157: #{generator_forward.1} parent=1 // pred_fallthru
      _
    // Predicated region
    $region158: #{generator_forward.1} parent=1 // pred_check
      _
    $region159: #{generator_forward.1} parent=1 // pred_check_branch
      %214 = sbr.rel (0) target = $region161
    $region160: #{generator_forward.1} parent=1 // pred_region
      _
    $region161: #{generator_forward.1} parent=1 // pred_fallthru
      _
    // Predicated region
    $region162: #{generator_forward.1} parent=1 // pred_check
      _
    $region163: #{generator_forward.1} parent=1 // pred_check_branch
      %216 = sbr.rel (0) target = $region165
    $region164: #{generator_forward.1} parent=1 // pred_region
      _
    $region165: #{generator_forward.1} parent=1 // pred_fallthru
      _
    // Predicated region
    $region166: #{generator_forward.1} parent=1 // pred_check
      _
    $region167: #{generator_forward.1} parent=1 // pred_check_branch
      %218 = sbr.rel (0) target = $region169
    $region168: #{generator_forward.1} parent=1 // pred_region
      %220 = dma.done [#allocation3], 16384
    $region169: #{generator_forward.1} parent=1 // pred_fallthru
      _
    // Predicated region
    $region170: #{generator_forward.1} parent=1 // pred_check
      _
    $region171: #{generator_forward.1} parent=1 // pred_check_branch
      %222 = sbr.rel (0) target = $region173
    $region172: #{generator_forward.1} parent=1 // pred_region
      %224 = dma.done [#allocation5], 16384
    $region173: #{generator_forward.1} parent=1 // pred_fallthru
      _
    // Predicated region
    $region174: #{generator_forward.1} parent=1 // pred_check
      _
    $region175: #{generator_forward.1} parent=1 // pred_check_branch
      %226 = sbr.rel (0) target = $region177
    $region176: #{generator_forward.1} parent=1 // pred_region
      %228 = dma.done [#allocation5], 16384
    $region177: #{generator_forward.1} parent=1 // pred_fallthru
      _
    // Predicated region
    $region178: #{generator_forward.1} parent=1 // pred_check
      _
    $region179: #{generator_forward.1} parent=1 // pred_check_branch
      %230 = sbr.rel (0) target = $region181
    $region180: #{generator_forward.1} parent=1 // pred_region
      %232 = dma.done [#allocation8], 16384
    $region181: #{generator_forward.1} parent=1 // pred_fallthru
      _
    %v234 = vld [vmem:[%s1] sm:$0xf]
    %v235 = vld [vmem:[%s1 + $0x4] sm:$0xf]
    %v236 = vld [vmem:[%s1 + $0x8] sm:$0xf]
    %v237 = vld [vmem:[%s1 + $0xc] sm:$0xf]
    %v238 = vld [vmem:[%s1 + $0x10] sm:$0xf]
    %v239 = vld [vmem:[%s1 + $0x14] sm:$0xf]
    %v240 = vld [vmem:[%s1 + $0x18] sm:$0xf]
    %v241 = vld [vmem:[%s1 + $0x1c] sm:$0xf]
    %v242 = vld [vmem:[%s3] sm:$0xf]
    %v243 = vld [vmem:[%s3 + $0x4] sm:$0xf]
    %v244 = vld [vmem:[%s3 + $0x8] sm:$0xf]
    %v245 = vld [vmem:[%s3 + $0xc] sm:$0xf]
    %v250 = vunpack.c.l.b16 %v242
    %v251 = vunpack.c.l.b16 %v243
    %v252 = vunpack.c.l.b16 %v244
    %v253 = vunpack.c.l.b16 %v245
    %v254 = vpack.c.b16 %v251, %v250
    %v255 = vpack.c.b16 %v253, %v252
    %v264 = vunpack.c.l.b16 %v234
    %v265 = vunpack.c.l.b16 %v235
    %v266 = vunpack.c.l.b16 %v236
    %v267 = vunpack.c.l.b16 %v237
    %v268 = vunpack.c.l.b16 %v238
    %v269 = vunpack.c.l.b16 %v239
    %v270 = vunpack.c.l.b16 %v240
    %v271 = vunpack.c.l.b16 %v241
    %v272 = vpack.c.b16 %v265, %v264
    %v273 = vpack.c.b16 %v267, %v266
    %v274 = vpack.c.b16 %v269, %v268
    %v275 = vpack.c.b16 %v271, %v270
    %vm280 = vcmask 523264
    %v282 = vsel %vm280, %v254, 0
    %v285 = vsel %vm280, %v255, 0
    %287 = vmatpush.bf16.msra.mxu0 0
    %288 = vmatpush.bf16.msra.mxu0 0
    %289 = vmatpush.bf16.msra.mxu0 0
    %290 = vmatpush.bf16.msra.mxu0 0
    %291 = vmatpush.bf16.msra.mxu0 %v275
    %292 = vmatpush.bf16.msra.mxu0 %v274
    %293 = vmatpush.bf16.msra.mxu0 %v273
    %294 = vmatpush.bf16.msra.mxu0 %v272
    %295 = vmatmul.bf16.gmra.mxu0 %v282
    %v296 = vpop.f32.mrf.mxu0
    %v297 = vadd.f32 0.0, %v296
    %v298 = vpop.f32.mrf.mxu0
    %v299 = vadd.f32 0.0, %v298
    %300 = vmatmul.bf16.gmra.mxu0 %v285
    %v301 = vpop.f32.mrf.mxu0
    %v302 = vadd.f32 0.0, %v301
    %v303 = vpop.f32.mrf.mxu0
    %v304 = vadd.f32 0.0, %v303
    %305 = vdwg.mxu0
    %v306 = vpack.c.bf16 %v299, %v297
    %v307 = vpack.c.bf16 %v304, %v302
    %v308 = vld [vmem:[%s5] sm:$0xf]
    %v309 = vld [vmem:[%s5 + $0x4] sm:$0xf]
    %v310 = vld [vmem:[%s5 + $0x8] sm:$0xf]
    %v311 = vld [vmem:[%s5 + $0xc] sm:$0xf]
    %v312 = vld [vmem:[%s5 + $0x10] sm:$0xf]
    %v313 = vld [vmem:[%s5 + $0x14] sm:$0xf]
    %v314 = vld [vmem:[%s5 + $0x18] sm:$0xf]
    %v315 = vld [vmem:[%s5 + $0x1c] sm:$0xf]
    %v316 = vld [vmem:[%s5 + $0x20] sm:$0xf]
    %v317 = vld [vmem:[%s5 + $0x24] sm:$0xf]
    %v318 = vld [vmem:[%s5 + $0x28] sm:$0xf]
    %v319 = vld [vmem:[%s5 + $0x2c] sm:$0xf]
    %s320 = scalar_lea.vmem %s3, 16
    %v321 = vld [vmem:[%s320] sm:$0xf]
    %v322 = vld [vmem:[%s320 + $0x4] sm:$0xf]
    %v323 = vld [vmem:[%s320 + $0x8] sm:$0xf]
    %v324 = vld [vmem:[%s320 + $0xc] sm:$0xf]
    %v329 = vunpack.c.l.b16 %v321
    %v330 = vunpack.c.l.b16 %v322
    %v331 = vunpack.c.l.b16 %v323
    %v332 = vunpack.c.l.b16 %v324
    %v333 = vpack.c.b16 %v330, %v329
    %v334 = vpack.c.b16 %v332, %v331
    %v336 = vsel %vm280, %v333, 0
    %v339 = vsel %vm280, %v334, 0
    %341 = vmatpush.bf16.msra.mxu0 0
    %342 = vmatpush.bf16.msra.mxu0 0
    %343 = vmatpush.bf16.msra.mxu0 0
    %344 = vmatpush.bf16.msra.mxu0 0
    %345 = vmatpush.bf16.msra.mxu0 %v275
    %346 = vmatpush.bf16.msra.mxu0 %v274
    %347 = vmatpush.bf16.msra.mxu0 %v273
    %348 = vmatpush.bf16.msra.mxu0 %v272
    %349 = vmatmul.bf16.gmra.mxu0 %v336
    %v350 = vpop.f32.mrf.mxu0
    %v351 = vadd.f32 0.0, %v350
    %v352 = vpop.f32.mrf.mxu0
    %v353 = vadd.f32 0.0, %v352
    %354 = vmatmul.bf16.gmra.mxu0 %v339
    %v355 = vpop.f32.mrf.mxu0
    %v356 = vadd.f32 0.0, %v355
    %v357 = vpop.f32.mrf.mxu0
    %v358 = vadd.f32 0.0, %v357
    %359 = vdwg.mxu0
    %v360 = vpack.c.bf16 %v353, %v351
    %v361 = vpack.c.bf16 %v358, %v356
    %s362 = scalar_lea.vmem %s5, 48
    %v363 = vld [vmem:[%s362] sm:$0xf]
    %v364 = vld [vmem:[%s362 + $0x4] sm:$0xf]
    %v365 = vld [vmem:[%s362 + $0x8] sm:$0xf]
    %v366 = vld [vmem:[%s362 + $0xc] sm:$0xf]
    %v367 = vld [vmem:[%s362 + $0x10] sm:$0xf]
    %v368 = vld [vmem:[%s362 + $0x14] sm:$0xf]
    %v369 = vld [vmem:[%s362 + $0x18] sm:$0xf]
    %v370 = vld [vmem:[%s362 + $0x1c] sm:$0xf]
    %v371 = vld [vmem:[%s362 + $0x20] sm:$0xf]
    %v372 = vld [vmem:[%s362 + $0x24] sm:$0xf]
    %v373 = vld [vmem:[%s362 + $0x28] sm:$0xf]
    %v374 = vld [vmem:[%s362 + $0x2c] sm:$0xf]
    %v387 = vunpack.c.l.b16 %v363
    %v388 = vunpack.c.l.b16 %v364
    %v389 = vunpack.c.l.b16 %v365
    %v390 = vunpack.c.l.b16 %v366
    %v391 = vunpack.c.l.b16 %v367
    %v392 = vunpack.c.l.b16 %v368
    %v393 = vunpack.c.l.b16 %v369
    %v394 = vunpack.c.l.b16 %v370
    %v395 = vunpack.c.l.b16 %v371
    %v396 = vunpack.c.l.b16 %v372
    %v397 = vunpack.c.l.b16 %v373
    %v398 = vunpack.c.l.b16 %v374
    %v399 = vpack.c.b16 %v388, %v387
    %v400 = vpack.c.b16 %v390, %v389
    %v401 = vpack.c.b16 %v392, %v391
    %v402 = vpack.c.b16 %v394, %v393
    %v403 = vpack.c.b16 %v396, %v395
    %v404 = vpack.c.b16 %v398, %v397
    %vm411 = vcmask 785408
    %v413 = vsel %vm411, %v360, 0
    %v416 = vsel %vm411, %v361, 0
    %418 = vmatpush.bf16.msra.mxu0 0
    %419 = vmatpush.bf16.msra.mxu0 0
    %420 = vmatpush.bf16.msra.mxu0 %v404
    %421 = vmatpush.bf16.msra.mxu0 %v403
    %422 = vmatpush.bf16.msra.mxu0 %v402
    %423 = vmatpush.bf16.msra.mxu0 %v401
    %424 = vmatpush.bf16.msra.mxu0 %v400
    %425 = vmatpush.bf16.msra.mxu0 %v399
    %426 = vmatmul.bf16.gmra.mxu0 %v413
    %v427 = vpop.f32.mrf.mxu0
    %v428 = vadd.f32 0.0, %v427
    %v429 = vpop.f32.mrf.mxu0
    %v430 = vadd.f32 0.0, %v429
    %431 = vmatmul.bf16.gmra.mxu0 %v416
    %v432 = vpop.f32.mrf.mxu0
    %v433 = vadd.f32 0.0, %v432
    %v434 = vpop.f32.mrf.mxu0
    %v435 = vadd.f32 0.0, %v434
    %436 = vdwg.mxu0
    %v449 = vunpack.c.l.b16 %v308
    %v450 = vunpack.c.l.b16 %v309
    %v451 = vunpack.c.l.b16 %v310
    %v452 = vunpack.c.l.b16 %v311
    %v453 = vunpack.c.l.b16 %v312
    %v454 = vunpack.c.l.b16 %v313
    %v455 = vunpack.c.l.b16 %v314
    %v456 = vunpack.c.l.b16 %v315
    %v457 = vunpack.c.l.b16 %v316
    %v458 = vunpack.c.l.b16 %v317
    %v459 = vunpack.c.l.b16 %v318
    %v460 = vunpack.c.l.b16 %v319
    %v461 = vpack.c.b16 %v450, %v449
    %v462 = vpack.c.b16 %v452, %v451
    %v463 = vpack.c.b16 %v454, %v453
    %v464 = vpack.c.b16 %v456, %v455
    %v465 = vpack.c.b16 %v458, %v457
    %v466 = vpack.c.b16 %v460, %v459
    %v474 = vsel %vm411, %v306, 0
    %v477 = vsel %vm411, %v307, 0
    %479 = vmatpush.bf16.msra.mxu0 0
    %480 = vmatpush.bf16.msra.mxu0 0
    %481 = vmatpush.bf16.msra.mxu0 %v466
    %482 = vmatpush.bf16.msra.mxu0 %v465
    %483 = vmatpush.bf16.msra.mxu0 %v464
    %484 = vmatpush.bf16.msra.mxu0 %v463
    %485 = vmatpush.bf16.msra.mxu0 %v462
    %486 = vmatpush.bf16.msra.mxu0 %v461
    %487 = vmatmul.bf16.gmra.mxu0 %v474
    %v488 = vpop.f32.mrf.mxu0
    %v489 = vadd.f32 %v428, %v488
    %v490 = vpop.f32.mrf.mxu0
    %v491 = vadd.f32 %v430, %v490
    %492 = vmatmul.bf16.gmra.mxu0 %v477
    %v493 = vpop.f32.mrf.mxu0
    %v494 = vadd.f32 %v433, %v493
    %v495 = vpop.f32.mrf.mxu0
    %v496 = vadd.f32 %v435, %v495
    %497 = vdwg.mxu0
    %s498 = scalar_lea.vmem %s3, 32
    %v499 = vld [vmem:[%s498] sm:$0xf]
    %v500 = vld [vmem:[%s498 + $0x4] sm:$0xf]
    %v501 = vld [vmem:[%s498 + $0x8] sm:$0xf]
    %v502 = vld [vmem:[%s498 + $0xc] sm:$0xf]
    %v507 = vunpack.c.l.b16 %v499
    %v508 = vunpack.c.l.b16 %v500
    %v509 = vunpack.c.l.b16 %v501
    %v510 = vunpack.c.l.b16 %v502
    %v511 = vpack.c.b16 %v508, %v507
    %v512 = vpack.c.b16 %v510, %v509
    %v514 = vsel %vm280, %v511, 0
    %v517 = vsel %vm280, %v512, 0
    %519 = vmatpush.bf16.msra.mxu0 0
    %520 = vmatpush.bf16.msra.mxu0 0
    %521 = vmatpush.bf16.msra.mxu0 0
    %522 = vmatpush.bf16.msra.mxu0 0
    %523 = vmatpush.bf16.msra.mxu0 %v275
    %524 = vmatpush.bf16.msra.mxu0 %v274
    %525 = vmatpush.bf16.msra.mxu0 %v273
    %526 = vmatpush.bf16.msra.mxu0 %v272
    %527 = vmatmul.bf16.gmra.mxu0 %v514
    %v528 = vpop.f32.mrf.mxu0
    %v529 = vadd.f32 0.0, %v528
    %v530 = vpop.f32.mrf.mxu0
    %v531 = vadd.f32 0.0, %v530
    %532 = vmatmul.bf16.gmra.mxu0 %v517
    %v533 = vpop.f32.mrf.mxu0
    %v534 = vadd.f32 0.0, %v533
    %v535 = vpop.f32.mrf.mxu0
    %v536 = vadd.f32 0.0, %v535
    %537 = vdwg.mxu0
    %v538 = vpack.c.bf16 %v531, %v529
    %v539 = vpack.c.bf16 %v536, %v534
    %s540 = scalar_lea.vmem %s5, 96
    %v541 = vld [vmem:[%s540] sm:$0xf]
    %v542 = vld [vmem:[%s540 + $0x4] sm:$0xf]
    %v543 = vld [vmem:[%s540 + $0x8] sm:$0xf]
    %v544 = vld [vmem:[%s540 + $0xc] sm:$0xf]
    %v545 = vld [vmem:[%s540 + $0x10] sm:$0xf]
    %v546 = vld [vmem:[%s540 + $0x14] sm:$0xf]
    %v547 = vld [vmem:[%s540 + $0x18] sm:$0xf]
    %v548 = vld [vmem:[%s540 + $0x1c] sm:$0xf]
    %v549 = vld [vmem:[%s540 + $0x20] sm:$0xf]
    %v550 = vld [vmem:[%s540 + $0x24] sm:$0xf]
    %v551 = vld [vmem:[%s540 + $0x28] sm:$0xf]
    %v552 = vld [vmem:[%s540 + $0x2c] sm:$0xf]
    %v565 = vunpack.c.l.b16 %v541
    %v566 = vunpack.c.l.b16 %v542
    %v567 = vunpack.c.l.b16 %v543
    %v568 = vunpack.c.l.b16 %v544
    %v569 = vunpack.c.l.b16 %v545
    %v570 = vunpack.c.l.b16 %v546
    %v571 = vunpack.c.l.b16 %v547
    %v572 = vunpack.c.l.b16 %v548
    %v573 = vunpack.c.l.b16 %v549
    %v574 = vunpack.c.l.b16 %v550
    %v575 = vunpack.c.l.b16 %v551
    %v576 = vunpack.c.l.b16 %v552
    %v577 = vpack.c.b16 %v566, %v565
    %v578 = vpack.c.b16 %v568, %v567
    %v579 = vpack.c.b16 %v570, %v569
    %v580 = vpack.c.b16 %v572, %v571
    %v581 = vpack.c.b16 %v574, %v573
    %v582 = vpack.c.b16 %v576, %v575
    %v590 = vsel %vm411, %v538, 0
    %v593 = vsel %vm411, %v539, 0
    %595 = vmatpush.bf16.msra.mxu0 0
    %596 = vmatpush.bf16.msra.mxu0 0
    %597 = vmatpush.bf16.msra.mxu0 %v582
    %598 = vmatpush.bf16.msra.mxu0 %v581
    %599 = vmatpush.bf16.msra.mxu0 %v580
    %600 = vmatpush.bf16.msra.mxu0 %v579
    %601 = vmatpush.bf16.msra.mxu0 %v578
    %602 = vmatpush.bf16.msra.mxu0 %v577
    %603 = vmatmul.bf16.gmra.mxu0 %v590
    %v604 = vpop.f32.mrf.mxu0
    %v605 = vadd.f32 0.0, %v604
    %v606 = vpop.f32.mrf.mxu0
    %v607 = vadd.f32 0.0, %v606
    %608 = vmatmul.bf16.gmra.mxu0 %v593
    %v609 = vpop.f32.mrf.mxu0
    %v610 = vadd.f32 0.0, %v609
    %v611 = vpop.f32.mrf.mxu0
    %v612 = vadd.f32 0.0, %v611
    %613 = vdwg.mxu0
    %v614 = vadd.f32 %v489, %v605
    %v615 = vadd.f32 %v491, %v607
    %v616 = vadd.f32 %v494, %v610
    %v617 = vadd.f32 %v496, %v612
    %s618 = scalar_lea.vmem %s3, 48
    %v619 = vld [vmem:[%s618] sm:$0xf]
    %v620 = vld [vmem:[%s618 + $0x4] sm:$0xf]
    %v621 = vld [vmem:[%s618 + $0x8] sm:$0xf]
    %v622 = vld [vmem:[%s618 + $0xc] sm:$0xf]
    %v627 = vunpack.c.l.b16 %v619
    %v628 = vunpack.c.l.b16 %v620
    %v629 = vunpack.c.l.b16 %v621
    %v630 = vunpack.c.l.b16 %v622
    %v631 = vpack.c.b16 %v628, %v627
    %v632 = vpack.c.b16 %v630, %v629
    %v634 = vsel %vm280, %v631, 0
    %v637 = vsel %vm280, %v632, 0
    %639 = vmatpush.bf16.msra.mxu0 0
    %640 = vmatpush.bf16.msra.mxu0 0
    %641 = vmatpush.bf16.msra.mxu0 0
    %642 = vmatpush.bf16.msra.mxu0 0
    %643 = vmatpush.bf16.msra.mxu0 %v275
    %644 = vmatpush.bf16.msra.mxu0 %v274
    %645 = vmatpush.bf16.msra.mxu0 %v273
    %646 = vmatpush.bf16.msra.mxu0 %v272
    %647 = vmatmul.bf16.gmra.mxu0 %v634
    %v648 = vpop.f32.mrf.mxu0
    %v649 = vadd.f32 0.0, %v648
    %v650 = vpop.f32.mrf.mxu0
    %v651 = vadd.f32 0.0, %v650
    %652 = vmatmul.bf16.gmra.mxu0 %v637
    %v653 = vpop.f32.mrf.mxu0
    %v654 = vadd.f32 0.0, %v653
    %v655 = vpop.f32.mrf.mxu0
    %v656 = vadd.f32 0.0, %v655
    %657 = vdwg.mxu0
    %v658 = vpack.c.bf16 %v651, %v649
    %v659 = vpack.c.bf16 %v656, %v654
    %s660 = scalar_lea.vmem %s5, 144
    %v661 = vld [vmem:[%s660] sm:$0xf]
    %v662 = vld [vmem:[%s660 + $0x4] sm:$0xf]
    %v663 = vld [vmem:[%s660 + $0x8] sm:$0xf]
    %v664 = vld [vmem:[%s660 + $0xc] sm:$0xf]
    %v665 = vld [vmem:[%s660 + $0x10] sm:$0xf]
    %v666 = vld [vmem:[%s660 + $0x14] sm:$0xf]
    %v667 = vld [vmem:[%s660 + $0x18] sm:$0xf]
    %v668 = vld [vmem:[%s660 + $0x1c] sm:$0xf]
    %v669 = vld [vmem:[%s660 + $0x20] sm:$0xf]
    %v670 = vld [vmem:[%s660 + $0x24] sm:$0xf]
    %v671 = vld [vmem:[%s660 + $0x28] sm:$0xf]
    %v672 = vld [vmem:[%s660 + $0x2c] sm:$0xf]
    %v685 = vunpack.c.l.b16 %v661
    %v686 = vunpack.c.l.b16 %v662
    %v687 = vunpack.c.l.b16 %v663
    %v688 = vunpack.c.l.b16 %v664
    %v689 = vunpack.c.l.b16 %v665
    %v690 = vunpack.c.l.b16 %v666
    %v691 = vunpack.c.l.b16 %v667
    %v692 = vunpack.c.l.b16 %v668
    %v693 = vunpack.c.l.b16 %v669
    %v694 = vunpack.c.l.b16 %v670
    %v695 = vunpack.c.l.b16 %v671
    %v696 = vunpack.c.l.b16 %v672
    %v697 = vpack.c.b16 %v686, %v685
    %v698 = vpack.c.b16 %v688, %v687
    %v699 = vpack.c.b16 %v690, %v689
    %v700 = vpack.c.b16 %v692, %v691
    %v701 = vpack.c.b16 %v694, %v693
    %v702 = vpack.c.b16 %v696, %v695
    %v710 = vsel %vm411, %v658, 0
    %v713 = vsel %vm411, %v659, 0
    %715 = vmatpush.bf16.msra.mxu0 0
    %716 = vmatpush.bf16.msra.mxu0 0
    %717 = vmatpush.bf16.msra.mxu0 %v702
    %718 = vmatpush.bf16.msra.mxu0 %v701
    %719 = vmatpush.bf16.msra.mxu0 %v700
    %720 = vmatpush.bf16.msra.mxu0 %v699
    %721 = vmatpush.bf16.msra.mxu0 %v698
    %722 = vmatpush.bf16.msra.mxu0 %v697
    %723 = vmatmul.bf16.gmra.mxu0 %v710
    %v724 = vpop.f32.mrf.mxu0
    %v725 = vadd.f32 0.0, %v724
    %v726 = vpop.f32.mrf.mxu0
    %v727 = vadd.f32 0.0, %v726
    %728 = vmatmul.bf16.gmra.mxu0 %v713
    %v729 = vpop.f32.mrf.mxu0
    %v730 = vadd.f32 0.0, %v729
    %v731 = vpop.f32.mrf.mxu0
    %v732 = vadd.f32 0.0, %v731
    %733 = vdwg.mxu0
    %v734 = vadd.f32 %v614, %v725
    %v735 = vadd.f32 %v615, %v727
    %v736 = vadd.f32 %v616, %v730
    %v737 = vadd.f32 %v617, %v732
    %vm738 = vcmp.ge.f32.partialorder %v734, 0.0
    %vm739 = vcmp.ge.f32.partialorder %v735, 0.0
    %vm740 = vcmp.ge.f32.partialorder %v736, 0.0
    %vm741 = vcmp.ge.f32.partialorder %v737, 0.0
    %v742 = vmul.f32 %v734, 0.2
    %v743 = vmul.f32 %v735, 0.2
    %v744 = vmul.f32 %v736, 0.2
    %v745 = vmul.f32 %v737, 0.2
    %v746 = vsel %vm738, %v734, %v742
    %v747 = vsel %vm739, %v735, %v743
    %v748 = vsel %vm740, %v736, %v744
    %v749 = vsel %vm741, %v737, %v745
    %v750 = vpack.c.bf16 %v747, %v746
    %v751 = vpack.c.bf16 %v749, %v748
    %v752 = vld [vmem:[%s7] sm:$0xf]
    %v753 = vld [vmem:[%s7 + $0x4] sm:$0xf]
    %v756 = vunpack.c.l.b16 %v752
    %v757 = vunpack.c.l.b16 %v753
    %v758 = vpack.c.b16 %v757, %v756
    %vm759 = vcmask 261120
    %v761 = vsel %vm759, %v758, 0
    %763 = vmatpush.bf16.msra.mxu0 0
    %764 = vmatpush.bf16.msra.mxu0 0
    %765 = vmatpush.bf16.msra.mxu0 0
    %766 = vmatpush.bf16.msra.mxu0 0
    %767 = vmatpush.bf16.msra.mxu0 0
    %768 = vmatpush.bf16.msra.mxu0 0
    %769 = vmatpush.bf16.msra.mxu0 %v751
    %770 = vmatpush.bf16.msra.mxu0 %v750
    %771 = vmatmul.bf16.gmra.mxu0 %v761
    %v772 = vpop.f32.mrf.mxu0
    %v773 = vadd.f32 0.0, %v772
    %v774 = vpop.f32.mrf.mxu0
    %v775 = vadd.f32 0.0, %v774
    %776 = vdwg.mxu0
    %v777 = vpack.c.bf16 %v775, %v773
    %v778 = vld [vmem:[%s9] sm:$0xff]
    %v779 = vld [vmem:[%s9 + $0x8] sm:$0xff]
    %v780 = vld [vmem:[%s9 + $0x10] sm:$0xff]
    %v781 = vld [vmem:[%s9 + $0x18] sm:$0xff]
    %v782 = vld [vmem:[%s9 + $0x20] sm:$0xff]
    %v783 = vld [vmem:[%s9 + $0x28] sm:$0xff]
    %v784 = vld [vmem:[%s9 + $0x30] sm:$0xff]
    %v785 = vld [vmem:[%s9 + $0x38] sm:$0xff]
    %v786 = vld [vmem:[%s9 + $0x40] sm:$0xff]
    %v787 = vld [vmem:[%s9 + $0x48] sm:$0xff]
    %v788 = vld [vmem:[%s9 + $0x50] sm:$0xff]
    %v789 = vld [vmem:[%s9 + $0x58] sm:$0xff]
    %v790 = vld [vmem:[%s9 + $0x60] sm:$0xff]
    %v791 = vld [vmem:[%s9 + $0x68] sm:$0xff]
    %v792 = vld [vmem:[%s9 + $0x70] sm:$0xff]
    %v793 = vld [vmem:[%s9 + $0x78] sm:$0xff]
    %s794 = scalar_lea.vmem %s7, 8
    %v795 = vld [vmem:[%s794] sm:$0xf]
    %v796 = vld [vmem:[%s794 + $0x4] sm:$0xf]
    %v799 = vunpack.c.l.b16 %v795
    %v800 = vunpack.c.l.b16 %v796
    %v801 = vpack.c.b16 %v800, %v799
    %v803 = vsel %vm759, %v801, 0
    %805 = vmatpush.bf16.msra.mxu0 0
    %806 = vmatpush.bf16.msra.mxu0 0
    %807 = vmatpush.bf16.msra.mxu0 0
    %808 = vmatpush.bf16.msra.mxu0 0
    %809 = vmatpush.bf16.msra.mxu0 0
    %810 = vmatpush.bf16.msra.mxu0 0
    %811 = vmatpush.bf16.msra.mxu0 %v751
    %812 = vmatpush.bf16.msra.mxu0 %v750
    %813 = vmatmul.bf16.gmra.mxu0 %v803
    %v814 = vpop.f32.mrf.mxu0
    %v815 = vadd.f32 0.0, %v814
    %v816 = vpop.f32.mrf.mxu0
    %v817 = vadd.f32 0.0, %v816
    %818 = vdwg.mxu0
    %v819 = vpack.c.bf16 %v817, %v815
    %s820 = scalar_lea.vmem %s9, 128
    %v821 = vld [vmem:[%s820] sm:$0xff]
    %v822 = vld [vmem:[%s820 + $0x8] sm:$0xff]
    %v823 = vld [vmem:[%s820 + $0x10] sm:$0xff]
    %v824 = vld [vmem:[%s820 + $0x18] sm:$0xff]
    %v825 = vld [vmem:[%s820 + $0x20] sm:$0xff]
    %v826 = vld [vmem:[%s820 + $0x28] sm:$0xff]
    %v827 = vld [vmem:[%s820 + $0x30] sm:$0xff]
    %v828 = vld [vmem:[%s820 + $0x38] sm:$0xff]
    %v829 = vld [vmem:[%s820 + $0x40] sm:$0xff]
    %v830 = vld [vmem:[%s820 + $0x48] sm:$0xff]
    %v831 = vld [vmem:[%s820 + $0x50] sm:$0xff]
    %v832 = vld [vmem:[%s820 + $0x58] sm:$0xff]
    %v833 = vld [vmem:[%s820 + $0x60] sm:$0xff]
    %v834 = vld [vmem:[%s820 + $0x68] sm:$0xff]
    %v835 = vld [vmem:[%s820 + $0x70] sm:$0xff]
    %v836 = vld [vmem:[%s820 + $0x78] sm:$0xff]
    %v853 = vunpack.c.l.b16 %v821
    %v854 = vunpack.c.h.b16 %v821
    %v855 = vunpack.c.l.b16 %v822
    %v856 = vunpack.c.h.b16 %v822
    %v857 = vunpack.c.l.b16 %v823
    %v858 = vunpack.c.h.b16 %v823
    %v859 = vunpack.c.l.b16 %v824
    %v860 = vunpack.c.h.b16 %v824
    %v861 = vunpack.c.l.b16 %v825
    %v862 = vunpack.c.h.b16 %v825
    %v863 = vunpack.c.l.b16 %v826
    %v864 = vunpack.c.h.b16 %v826
    %v865 = vunpack.c.l.b16 %v827
    %v866 = vunpack.c.h.b16 %v827
    %v867 = vunpack.c.l.b16 %v828
    %v868 = vunpack.c.h.b16 %v828
    %v869 = vunpack.c.l.b16 %v829
    %v870 = vunpack.c.h.b16 %v829
    %v871 = vunpack.c.l.b16 %v830
    %v872 = vunpack.c.h.b16 %v830
    %v873 = vunpack.c.l.b16 %v831
    %v874 = vunpack.c.h.b16 %v831
    %v875 = vunpack.c.l.b16 %v832
    %v876 = vunpack.c.h.b16 %v832
    %v877 = vunpack.c.l.b16 %v833
    %v878 = vunpack.c.h.b16 %v833
    %v879 = vunpack.c.l.b16 %v834
    %v880 = vunpack.c.h.b16 %v834
    %v881 = vunpack.c.l.b16 %v835
    %v882 = vunpack.c.h.b16 %v835
    %v883 = vunpack.c.l.b16 %v836
    %v884 = vunpack.c.h.b16 %v836
    %v885 = vpack.c.b16 %v855, %v853
    %v886 = vpack.c.b16 %v856, %v854
    %v887 = vpack.c.b16 %v859, %v857
    %v888 = vpack.c.b16 %v860, %v858
    %v889 = vpack.c.b16 %v863, %v861
    %v890 = vpack.c.b16 %v864, %v862
    %v891 = vpack.c.b16 %v867, %v865
    %v892 = vpack.c.b16 %v868, %v866
    %v893 = vpack.c.b16 %v871, %v869
    %v894 = vpack.c.b16 %v872, %v870
    %v895 = vpack.c.b16 %v875, %v873
    %v896 = vpack.c.b16 %v876, %v874
    %v897 = vpack.c.b16 %v879, %v877
    %v898 = vpack.c.b16 %v880, %v878
    %v899 = vpack.c.b16 %v883, %v881
    %v900 = vpack.c.b16 %v884, %v882
    %917 = vmatpush.bf16.msra.mxu0 %v899
    %918 = vmatpush.bf16.msra.mxu0 %v897
    %919 = vmatpush.bf16.msra.mxu0 %v895
    %920 = vmatpush.bf16.msra.mxu0 %v893
    %921 = vmatpush.bf16.msra.mxu0 %v891
    %922 = vmatpush.bf16.msra.mxu0 %v889
    %923 = vmatpush.bf16.msra.mxu0 %v887
    %924 = vmatpush.bf16.msra.mxu0 %v885
    %925 = vmatmul.bf16.gmra.mxu0 %v819
    %v926 = vpop.f32.mrf.mxu0
    %v927 = vadd.f32 0.0, %v926
    %v928 = vpop.f32.mrf.mxu0
    %v929 = vadd.f32 0.0, %v928
    %930 = vdwg.mxu0
    %931 = vmatpush.bf16.msra.mxu0 %v900
    %932 = vmatpush.bf16.msra.mxu0 %v898
    %933 = vmatpush.bf16.msra.mxu0 %v896
    %934 = vmatpush.bf16.msra.mxu0 %v894
    %935 = vmatpush.bf16.msra.mxu0 %v892
    %936 = vmatpush.bf16.msra.mxu0 %v890
    %937 = vmatpush.bf16.msra.mxu0 %v888
    %938 = vmatpush.bf16.msra.mxu0 %v886
    %939 = vmatmul.bf16.gmra.mxu0 %v819
    %v940 = vpop.f32.mrf.mxu0
    %v941 = vadd.f32 0.0, %v940
    %v942 = vpop.f32.mrf.mxu0
    %v943 = vadd.f32 0.0, %v942
    %944 = vdwg.mxu0
    %v961 = vunpack.c.l.b16 %v778
    %v962 = vunpack.c.h.b16 %v778
    %v963 = vunpack.c.l.b16 %v779
    %v964 = vunpack.c.h.b16 %v779
    %v965 = vunpack.c.l.b16 %v780
    %v966 = vunpack.c.h.b16 %v780
    %v967 = vunpack.c.l.b16 %v781
    %v968 = vunpack.c.h.b16 %v781
    %v969 = vunpack.c.l.b16 %v782
    %v970 = vunpack.c.h.b16 %v782
    %v971 = vunpack.c.l.b16 %v783
    %v972 = vunpack.c.h.b16 %v783
    %v973 = vunpack.c.l.b16 %v784
    %v974 = vunpack.c.h.b16 %v784
    %v975 = vunpack.c.l.b16 %v785
    %v976 = vunpack.c.h.b16 %v785
    %v977 = vunpack.c.l.b16 %v786
    %v978 = vunpack.c.h.b16 %v786
    %v979 = vunpack.c.l.b16 %v787
    %v980 = vunpack.c.h.b16 %v787
    %v981 = vunpack.c.l.b16 %v788
    %v982 = vunpack.c.h.b16 %v788
    %v983 = vunpack.c.l.b16 %v789
    %v984 = vunpack.c.h.b16 %v789
    %v985 = vunpack.c.l.b16 %v790
    %v986 = vunpack.c.h.b16 %v790
    %v987 = vunpack.c.l.b16 %v791
    %v988 = vunpack.c.h.b16 %v791
    %v989 = vunpack.c.l.b16 %v792
    %v990 = vunpack.c.h.b16 %v792
    %v991 = vunpack.c.l.b16 %v793
    %v992 = vunpack.c.h.b16 %v793
    %v993 = vpack.c.b16 %v963, %v961
    %v994 = vpack.c.b16 %v964, %v962
    %v995 = vpack.c.b16 %v967, %v965
    %v996 = vpack.c.b16 %v968, %v966
    %v997 = vpack.c.b16 %v971, %v969
    %v998 = vpack.c.b16 %v972, %v970
    %v999 = vpack.c.b16 %v975, %v973
    %v1000 = vpack.c.b16 %v976, %v974
    %v1001 = vpack.c.b16 %v979, %v977
    %v1002 = vpack.c.b16 %v980, %v978
    %v1003 = vpack.c.b16 %v983, %v981
    %v1004 = vpack.c.b16 %v984, %v982
    %v1005 = vpack.c.b16 %v987, %v985
    %v1006 = vpack.c.b16 %v988, %v986
    %v1007 = vpack.c.b16 %v991, %v989
    %v1008 = vpack.c.b16 %v992, %v990
    %1025 = vmatpush.bf16.msra.mxu0 %v1007
    %1026 = vmatpush.bf16.msra.mxu0 %v1005
    %1027 = vmatpush.bf16.msra.mxu0 %v1003
    %1028 = vmatpush.bf16.msra.mxu0 %v1001
    %1029 = vmatpush.bf16.msra.mxu0 %v999
    %1030 = vmatpush.bf16.msra.mxu0 %v997
    %1031 = vmatpush.bf16.msra.mxu0 %v995
    %1032 = vmatpush.bf16.msra.mxu0 %v993
    %1033 = vmatmul.bf16.gmra.mxu0 %v777
    %v1034 = vpop.f32.mrf.mxu0
    %v1035 = vadd.f32 %v927, %v1034
    %v1036 = vpop.f32.mrf.mxu0
    %v1037 = vadd.f32 %v929, %v1036
    %1038 = vdwg.mxu0
    %1039 = vmatpush.bf16.msra.mxu0 %v1008
    %1040 = vmatpush.bf16.msra.mxu0 %v1006
    %1041 = vmatpush.bf16.msra.mxu0 %v1004
    %1042 = vmatpush.bf16.msra.mxu0 %v1002
    %1043 = vmatpush.bf16.msra.mxu0 %v1000
    %1044 = vmatpush.bf16.msra.mxu0 %v998
    %1045 = vmatpush.bf16.msra.mxu0 %v996
    %1046 = vmatpush.bf16.msra.mxu0 %v994
    %1047 = vmatmul.bf16.gmra.mxu0 %v777
    %v1048 = vpop.f32.mrf.mxu0
    %v1049 = vadd.f32 %v941, %v1048
    %v1050 = vpop.f32.mrf.mxu0
    %v1051 = vadd.f32 %v943, %v1050
    %1052 = vdwg.mxu0
    %s1053 = scalar_lea.vmem %s7, 16
    %v1054 = vld [vmem:[%s1053] sm:$0xf]
    %v1055 = vld [vmem:[%s1053 + $0x4] sm:$0xf]
    %v1058 = vunpack.c.l.b16 %v1054
    %v1059 = vunpack.c.l.b16 %v1055
    %v1060 = vpack.c.b16 %v1059, %v1058
    %v1062 = vsel %vm759, %v1060, 0
    %1064 = vmatpush.bf16.msra.mxu0 0
    %1065 = vmatpush.bf16.msra.mxu0 0
    %1066 = vmatpush.bf16.msra.mxu0 0
    %1067 = vmatpush.bf16.msra.mxu0 0
    %1068 = vmatpush.bf16.msra.mxu0 0
    %1069 = vmatpush.bf16.msra.mxu0 0
    %1070 = vmatpush.bf16.msra.mxu0 %v751
    %1071 = vmatpush.bf16.msra.mxu0 %v750
    %1072 = vmatmul.bf16.gmra.mxu0 %v1062
    %v1073 = vpop.f32.mrf.mxu0
    %v1074 = vadd.f32 0.0, %v1073
    %v1075 = vpop.f32.mrf.mxu0
    %v1076 = vadd.f32 0.0, %v1075
    %1077 = vdwg.mxu0
    %v1078 = vpack.c.bf16 %v1076, %v1074
    %s1079 = scalar_lea.vmem %s9, 256
    %v1080 = vld [vmem:[%s1079] sm:$0xff]
    %v1081 = vld [vmem:[%s1079 + $0x8] sm:$0xff]
    %v1082 = vld [vmem:[%s1079 + $0x10] sm:$0xff]
    %v1083 = vld [vmem:[%s1079 + $0x18] sm:$0xff]
    %v1084 = vld [vmem:[%s1079 + $0x20] sm:$0xff]
    %v1085 = vld [vmem:[%s1079 + $0x28] sm:$0xff]
    %v1086 = vld [vmem:[%s1079 + $0x30] sm:$0xff]
    %v1087 = vld [vmem:[%s1079 + $0x38] sm:$0xff]
    %v1088 = vld [vmem:[%s1079 + $0x40] sm:$0xff]
    %v1089 = vld [vmem:[%s1079 + $0x48] sm:$0xff]
    %v1090 = vld [vmem:[%s1079 + $0x50] sm:$0xff]
    %v1091 = vld [vmem:[%s1079 + $0x58] sm:$0xff]
    %v1092 = vld [vmem:[%s1079 + $0x60] sm:$0xff]
    %v1093 = vld [vmem:[%s1079 + $0x68] sm:$0xff]
    %v1094 = vld [vmem:[%s1079 + $0x70] sm:$0xff]
    %v1095 = vld [vmem:[%s1079 + $0x78] sm:$0xff]
    %v1112 = vunpack.c.l.b16 %v1080
    %v1113 = vunpack.c.h.b16 %v1080
    %v1114 = vunpack.c.l.b16 %v1081
    %v1115 = vunpack.c.h.b16 %v1081
    %v1116 = vunpack.c.l.b16 %v1082
    %v1117 = vunpack.c.h.b16 %v1082
    %v1118 = vunpack.c.l.b16 %v1083
    %v1119 = vunpack.c.h.b16 %v1083
    %v1120 = vunpack.c.l.b16 %v1084
    %v1121 = vunpack.c.h.b16 %v1084
    %v1122 = vunpack.c.l.b16 %v1085
    %v1123 = vunpack.c.h.b16 %v1085
    %v1124 = vunpack.c.l.b16 %v1086
    %v1125 = vunpack.c.h.b16 %v1086
    %v1126 = vunpack.c.l.b16 %v1087
    %v1127 = vunpack.c.h.b16 %v1087
    %v1128 = vunpack.c.l.b16 %v1088
    %v1129 = vunpack.c.h.b16 %v1088
    %v1130 = vunpack.c.l.b16 %v1089
    %v1131 = vunpack.c.h.b16 %v1089
    %v1132 = vunpack.c.l.b16 %v1090
    %v1133 = vunpack.c.h.b16 %v1090
    %v1134 = vunpack.c.l.b16 %v1091
    %v1135 = vunpack.c.h.b16 %v1091
    %v1136 = vunpack.c.l.b16 %v1092
    %v1137 = vunpack.c.h.b16 %v1092
    %v1138 = vunpack.c.l.b16 %v1093
    %v1139 = vunpack.c.h.b16 %v1093
    %v1140 = vunpack.c.l.b16 %v1094
    %v1141 = vunpack.c.h.b16 %v1094
    %v1142 = vunpack.c.l.b16 %v1095
    %v1143 = vunpack.c.h.b16 %v1095
    %v1144 = vpack.c.b16 %v1114, %v1112
    %v1145 = vpack.c.b16 %v1115, %v1113
    %v1146 = vpack.c.b16 %v1118, %v1116
    %v1147 = vpack.c.b16 %v1119, %v1117
    %v1148 = vpack.c.b16 %v1122, %v1120
    %v1149 = vpack.c.b16 %v1123, %v1121
    %v1150 = vpack.c.b16 %v1126, %v1124
    %v1151 = vpack.c.b16 %v1127, %v1125
    %v1152 = vpack.c.b16 %v1130, %v1128
    %v1153 = vpack.c.b16 %v1131, %v1129
    %v1154 = vpack.c.b16 %v1134, %v1132
    %v1155 = vpack.c.b16 %v1135, %v1133
    %v1156 = vpack.c.b16 %v1138, %v1136
    %v1157 = vpack.c.b16 %v1139, %v1137
    %v1158 = vpack.c.b16 %v1142, %v1140
    %v1159 = vpack.c.b16 %v1143, %v1141
    %1176 = vmatpush.bf16.msra.mxu0 %v1158
    %1177 = vmatpush.bf16.msra.mxu0 %v1156
    %1178 = vmatpush.bf16.msra.mxu0 %v1154
    %1179 = vmatpush.bf16.msra.mxu0 %v1152
    %1180 = vmatpush.bf16.msra.mxu0 %v1150
    %1181 = vmatpush.bf16.msra.mxu0 %v1148
    %1182 = vmatpush.bf16.msra.mxu0 %v1146
    %1183 = vmatpush.bf16.msra.mxu0 %v1144
    %1184 = vmatmul.bf16.gmra.mxu0 %v1078
    %v1185 = vpop.f32.mrf.mxu0
    %v1186 = vadd.f32 0.0, %v1185
    %v1187 = vpop.f32.mrf.mxu0
    %v1188 = vadd.f32 0.0, %v1187
    %1189 = vdwg.mxu0
    %1190 = vmatpush.bf16.msra.mxu0 %v1159
    %1191 = vmatpush.bf16.msra.mxu0 %v1157
    %1192 = vmatpush.bf16.msra.mxu0 %v1155
    %1193 = vmatpush.bf16.msra.mxu0 %v1153
    %1194 = vmatpush.bf16.msra.mxu0 %v1151
    %1195 = vmatpush.bf16.msra.mxu0 %v1149
    %1196 = vmatpush.bf16.msra.mxu0 %v1147
    %1197 = vmatpush.bf16.msra.mxu0 %v1145
    %1198 = vmatmul.bf16.gmra.mxu0 %v1078
    %v1199 = vpop.f32.mrf.mxu0
    %v1200 = vadd.f32 0.0, %v1199
    %v1201 = vpop.f32.mrf.mxu0
    %v1202 = vadd.f32 0.0, %v1201
    %1203 = vdwg.mxu0
    %v1204 = vadd.f32 %v1035, %v1186
    %v1205 = vadd.f32 %v1049, %v1200
    %v1206 = vadd.f32 %v1037, %v1188
    %v1207 = vadd.f32 %v1051, %v1202
    %s1208 = scalar_lea.vmem %s7, 24
    %v1209 = vld [vmem:[%s1208] sm:$0xf]
    %v1210 = vld [vmem:[%s1208 + $0x4] sm:$0xf]
    %v1213 = vunpack.c.l.b16 %v1209
    %v1214 = vunpack.c.l.b16 %v1210
    %v1215 = vpack.c.b16 %v1214, %v1213
    %v1217 = vsel %vm759, %v1215, 0
    %1219 = vmatpush.bf16.msra.mxu0 0
    %1220 = vmatpush.bf16.msra.mxu0 0
    %1221 = vmatpush.bf16.msra.mxu0 0
    %1222 = vmatpush.bf16.msra.mxu0 0
    %1223 = vmatpush.bf16.msra.mxu0 0
    %1224 = vmatpush.bf16.msra.mxu0 0
    %1225 = vmatpush.bf16.msra.mxu0 %v751
    %1226 = vmatpush.bf16.msra.mxu0 %v750
    %1227 = vmatmul.bf16.gmra.mxu0 %v1217
    %v1228 = vpop.f32.mrf.mxu0
    %v1229 = vadd.f32 0.0, %v1228
    %v1230 = vpop.f32.mrf.mxu0
    %v1231 = vadd.f32 0.0, %v1230
    %1232 = vdwg.mxu0
    %v1233 = vpack.c.bf16 %v1231, %v1229
    %s1234 = scalar_lea.vmem %s9, 384
    %v1235 = vld [vmem:[%s1234] sm:$0xff]
    %v1236 = vld [vmem:[%s1234 + $0x8] sm:$0xff]
    %v1237 = vld [vmem:[%s1234 + $0x10] sm:$0xff]
    %v1238 = vld [vmem:[%s1234 + $0x18] sm:$0xff]
    %v1239 = vld [vmem:[%s1234 + $0x20] sm:$0xff]
    %v1240 = vld [vmem:[%s1234 + $0x28] sm:$0xff]
    %v1241 = vld [vmem:[%s1234 + $0x30] sm:$0xff]
    %v1242 = vld [vmem:[%s1234 + $0x38] sm:$0xff]
    %v1243 = vld [vmem:[%s1234 + $0x40] sm:$0xff]
    %v1244 = vld [vmem:[%s1234 + $0x48] sm:$0xff]
    %v1245 = vld [vmem:[%s1234 + $0x50] sm:$0xff]
    %v1246 = vld [vmem:[%s1234 + $0x58] sm:$0xff]
    %v1247 = vld [vmem:[%s1234 + $0x60] sm:$0xff]
    %v1248 = vld [vmem:[%s1234 + $0x68] sm:$0xff]
    %v1249 = vld [vmem:[%s1234 + $0x70] sm:$0xff]
    %v1250 = vld [vmem:[%s1234 + $0x78] sm:$0xff]
    %v1267 = vunpack.c.l.b16 %v1235
    %v1268 = vunpack.c.h.b16 %v1235
    %v1269 = vunpack.c.l.b16 %v1236
    %v1270 = vunpack.c.h.b16 %v1236
    %v1271 = vunpack.c.l.b16 %v1237
    %v1272 = vunpack.c.h.b16 %v1237
    %v1273 = vunpack.c.l.b16 %v1238
    %v1274 = vunpack.c.h.b16 %v1238
    %v1275 = vunpack.c.l.b16 %v1239
    %v1276 = vunpack.c.h.b16 %v1239
    %v1277 = vunpack.c.l.b16 %v1240
    %v1278 = vunpack.c.h.b16 %v1240
    %v1279 = vunpack.c.l.b16 %v1241
    %v1280 = vunpack.c.h.b16 %v1241
    %v1281 = vunpack.c.l.b16 %v1242
    %v1282 = vunpack.c.h.b16 %v1242
    %v1283 = vunpack.c.l.b16 %v1243
    %v1284 = vunpack.c.h.b16 %v1243
    %v1285 = vunpack.c.l.b16 %v1244
    %v1286 = vunpack.c.h.b16 %v1244
    %v1287 = vunpack.c.l.b16 %v1245
    %v1288 = vunpack.c.h.b16 %v1245
    %v1289 = vunpack.c.l.b16 %v1246
    %v1290 = vunpack.c.h.b16 %v1246
    %v1291 = vunpack.c.l.b16 %v1247
    %v1292 = vunpack.c.h.b16 %v1247
    %v1293 = vunpack.c.l.b16 %v1248
    %v1294 = vunpack.c.h.b16 %v1248
    %v1295 = vunpack.c.l.b16 %v1249
    %v1296 = vunpack.c.h.b16 %v1249
    %v1297 = vunpack.c.l.b16 %v1250
    %v1298 = vunpack.c.h.b16 %v1250
    %v1299 = vpack.c.b16 %v1269, %v1267
    %v1300 = vpack.c.b16 %v1270, %v1268
    %v1301 = vpack.c.b16 %v1273, %v1271
    %v1302 = vpack.c.b16 %v1274, %v1272
    %v1303 = vpack.c.b16 %v1277, %v1275
    %v1304 = vpack.c.b16 %v1278, %v1276
    %v1305 = vpack.c.b16 %v1281, %v1279
    %v1306 = vpack.c.b16 %v1282, %v1280
    %v1307 = vpack.c.b16 %v1285, %v1283
    %v1308 = vpack.c.b16 %v1286, %v1284
    %v1309 = vpack.c.b16 %v1289, %v1287
    %v1310 = vpack.c.b16 %v1290, %v1288
    %v1311 = vpack.c.b16 %v1293, %v1291
    %v1312 = vpack.c.b16 %v1294, %v1292
    %v1313 = vpack.c.b16 %v1297, %v1295
    %v1314 = vpack.c.b16 %v1298, %v1296
    %1331 = vmatpush.bf16.msra.mxu0 %v1313
    %1332 = vmatpush.bf16.msra.mxu0 %v1311
    %1333 = vmatpush.bf16.msra.mxu0 %v1309
    %1334 = vmatpush.bf16.msra.mxu0 %v1307
    %1335 = vmatpush.bf16.msra.mxu0 %v1305
    %1336 = vmatpush.bf16.msra.mxu0 %v1303
    %1337 = vmatpush.bf16.msra.mxu0 %v1301
    %1338 = vmatpush.bf16.msra.mxu0 %v1299
    %1339 = vmatmul.bf16.gmra.mxu0 %v1233
    %v1340 = vpop.f32.mrf.mxu0
    %v1341 = vadd.f32 0.0, %v1340
    %v1342 = vpop.f32.mrf.mxu0
    %v1343 = vadd.f32 0.0, %v1342
    %1344 = vdwg.mxu0
    %1345 = vmatpush.bf16.msra.mxu0 %v1314
    %1346 = vmatpush.bf16.msra.mxu0 %v1312
    %1347 = vmatpush.bf16.msra.mxu0 %v1310
    %1348 = vmatpush.bf16.msra.mxu0 %v1308
    %1349 = vmatpush.bf16.msra.mxu0 %v1306
    %1350 = vmatpush.bf16.msra.mxu0 %v1304
    %1351 = vmatpush.bf16.msra.mxu0 %v1302
    %1352 = vmatpush.bf16.msra.mxu0 %v1300
    %1353 = vmatmul.bf16.gmra.mxu0 %v1233
    %v1354 = vpop.f32.mrf.mxu0
    %v1355 = vadd.f32 0.0, %v1354
    %v1356 = vpop.f32.mrf.mxu0
    %v1357 = vadd.f32 0.0, %v1356
    %1358 = vdwg.mxu0
    %v1359 = vadd.f32 %v1204, %v1341
    %v1360 = vadd.f32 %v1205, %v1355
    %v1361 = vadd.f32 %v1206, %v1343
    %v1362 = vadd.f32 %v1207, %v1357
    %v1363 = vadd.f32 %v1359, %v1361
    %v1364 = vrot.slane %v1363, 4
    %v1365 = vadd.f32 %v1363, %v1364
    %v1366 = vrot.slane %v1365, 2
    %v1367 = vadd.f32 %v1365, %v1366
    %v1368 = vrot.slane %v1367, 1
    %v1369 = vadd.f32 %v1367, %v1368
    %v1370 = vadd.f32 %v1360, %v1362
    %v1371 = vrot.slane %v1370, 4
    %v1372 = vadd.f32 %v1370, %v1371
    %v1373 = vrot.slane %v1372, 2
    %v1374 = vadd.f32 %v1372, %v1373
    %v1375 = vrot.slane %v1374, 1
    %v1376 = vadd.f32 %v1374, %v1375
    %v1377 = vmul.f32 %v1359, %v1359
    %v1378 = vmul.f32 %v1360, %v1360
    %v1379 = vmul.f32 %v1361, %v1361
    %v1380 = vmul.f32 %v1362, %v1362
    %v1381 = vadd.f32 %v1377, %v1379
    %v1382 = vrot.slane %v1381, 4
    %v1383 = vadd.f32 %v1381, %v1382
    %v1384 = vrot.slane %v1383, 2
    %v1385 = vadd.f32 %v1383, %v1384
    %v1386 = vrot.slane %v1385, 1
    %v1387 = vadd.f32 %v1385, %v1386
    %v1388 = vadd.f32 %v1378, %v1380
    %v1389 = vrot.slane %v1388, 4
    %v1390 = vadd.f32 %v1388, %v1389
    %v1391 = vrot.slane %v1390, 2
    %v1392 = vadd.f32 %v1390, %v1391
    %v1393 = vrot.slane %v1392, 1
    %v1394 = vadd.f32 %v1392, %v1393
    %v1395 = vld [vmem:[%s11] sm:$0xff]
    %v1396 = vld [vmem:[%s11 + $0x8] sm:$0xff]
    %v1397 = vld [vmem:[%s11 + $0x10] sm:$0xff]
    %v1398 = vld [vmem:[%s11 + $0x18] sm:$0xff]
    %v1399 = vld [vmem:[%s11 + $0x20] sm:$0xff]
    %v1400 = vld [vmem:[%s11 + $0x28] sm:$0xff]
    %v1401 = vld [vmem:[%s11 + $0x30] sm:$0xff]
    %v1402 = vld [vmem:[%s11 + $0x38] sm:$0xff]
    %v1403 = vld [vmem:[%s11 + $0x40] sm:$0xff]
    %v1404 = vld [vmem:[%s11 + $0x48] sm:$0xff]
    %v1405 = vld [vmem:[%s11 + $0x50] sm:$0xff]
    %v1406 = vld [vmem:[%s11 + $0x58] sm:$0xff]
    %v1407 = vld [vmem:[%s11 + $0x60] sm:$0xff]
    %v1408 = vld [vmem:[%s11 + $0x68] sm:$0xff]
    %v1409 = vld [vmem:[%s11 + $0x70] sm:$0xff]
    %v1410 = vld [vmem:[%s11 + $0x78] sm:$0xff]
    %v1411 = vld [vmem:[%s11 + $0x80] sm:$0xff]
    %v1412 = vld [vmem:[%s11 + $0x88] sm:$0xff]
    %v1413 = vld [vmem:[%s11 + $0x90] sm:$0xff]
    %v1414 = vld [vmem:[%s11 + $0x98] sm:$0xff]
    %v1415 = vld [vmem:[%s11 + $0xa0] sm:$0xff]
    %v1416 = vld [vmem:[%s11 + $0xa8] sm:$0xff]
    %v1417 = vld [vmem:[%s11 + $0xb0] sm:$0xff]
    %v1418 = vld [vmem:[%s11 + $0xb8] sm:$0xff]
    %v1419 = vld [vmem:[%s11 + $0xc0] sm:$0xff]
    %v1420 = vld [vmem:[%s11 + $0xc8] sm:$0xff]
    %v1421 = vld [vmem:[%s11 + $0xd0] sm:$0xff]
    %v1422 = vld [vmem:[%s11 + $0xd8] sm:$0xff]
    %v1423 = vld [vmem:[%s11 + $0xe0] sm:$0xff]
    %v1424 = vld [vmem:[%s11 + $0xe8] sm:$0xff]
    %v1425 = vld [vmem:[%s11 + $0xf0] sm:$0xff]
    %v1426 = vld [vmem:[%s11 + $0xf8] sm:$0xff]
    %1427 = vmatpush.msra.mxu0 %v1410
    %1428 = vmatpush.msra.mxu0 %v1409
    %1429 = vmatpush.msra.mxu0 %v1408
    %1430 = vmatpush.msra.mxu0 %v1407
    %1431 = vmatpush.msra.mxu0 %v1406
    %1432 = vmatpush.msra.mxu0 %v1405
    %1433 = vmatpush.msra.mxu0 %v1404
    %1434 = vmatpush.msra.mxu0 %v1403
    %1435 = vmatpush.msra.mxu0 %v1402
    %1436 = vmatpush.msra.mxu0 %v1401
    %1437 = vmatpush.msra.mxu0 %v1400
    %1438 = vmatpush.msra.mxu0 %v1399
    %1439 = vmatpush.msra.mxu0 %v1398
    %1440 = vmatpush.msra.mxu0 %v1397
    %1441 = vmatpush.msra.mxu0 %v1396
    %1442 = vmatpush.msra.mxu0 %v1395
    %1443 = vmatmul.f32.gmra.mxu0 %v1369
    %v1444 = vpop.f32.mrf.mxu0
    %v1445 = vadd.f32 0.0, %v1444
    %1446 = vdwg.mxu0
    %1447 = vmatpush.msra.mxu0 %v1426
    %1448 = vmatpush.msra.mxu0 %v1425
    %1449 = vmatpush.msra.mxu0 %v1424
    %1450 = vmatpush.msra.mxu0 %v1423
    %1451 = vmatpush.msra.mxu0 %v1422
    %1452 = vmatpush.msra.mxu0 %v1421
    %1453 = vmatpush.msra.mxu0 %v1420
    %1454 = vmatpush.msra.mxu0 %v1419
    %1455 = vmatpush.msra.mxu0 %v1418
    %1456 = vmatpush.msra.mxu0 %v1417
    %1457 = vmatpush.msra.mxu0 %v1416
    %1458 = vmatpush.msra.mxu0 %v1415
    %1459 = vmatpush.msra.mxu0 %v1414
    %1460 = vmatpush.msra.mxu0 %v1413
    %1461 = vmatpush.msra.mxu0 %v1412
    %1462 = vmatpush.msra.mxu0 %v1411
    %1463 = vmatmul.f32.gmra.mxu0 %v1376
    %v1464 = vpop.f32.mrf.mxu0
    %v1465 = vadd.f32 %v1445, %v1464
    %1466 = vdwg.mxu0
    %v1467 = vmul.f32 %v1465, 0.0078125
    %1468 = vmatpush.msra.mxu0 %v1410
    %1469 = vmatpush.msra.mxu0 %v1409
    %1470 = vmatpush.msra.mxu0 %v1408
    %1471 = vmatpush.msra.mxu0 %v1407
    %1472 = vmatpush.msra.mxu0 %v1406
    %1473 = vmatpush.msra.mxu0 %v1405
    %1474 = vmatpush.msra.mxu0 %v1404
    %1475 = vmatpush.msra.mxu0 %v1403
    %1476 = vmatpush.msra.mxu0 %v1402
    %1477 = vmatpush.msra.mxu0 %v1401
    %1478 = vmatpush.msra.mxu0 %v1400
    %1479 = vmatpush.msra.mxu0 %v1399
    %1480 = vmatpush.msra.mxu0 %v1398
    %1481 = vmatpush.msra.mxu0 %v1397
    %1482 = vmatpush.msra.mxu0 %v1396
    %1483 = vmatpush.msra.mxu0 %v1395
    %1484 = vmatmul.f32.gmra.mxu0 %v1387
    %v1485 = vpop.f32.mrf.mxu0
    %v1486 = vadd.f32 0.0, %v1485
    %1487 = vdwg.mxu0
    %1488 = vmatpush.msra.mxu0 %v1426
    %1489 = vmatpush.msra.mxu0 %v1425
    %1490 = vmatpush.msra.mxu0 %v1424
    %1491 = vmatpush.msra.mxu0 %v1423
    %1492 = vmatpush.msra.mxu0 %v1422
    %1493 = vmatpush.msra.mxu0 %v1421
    %1494 = vmatpush.msra.mxu0 %v1420
    %1495 = vmatpush.msra.mxu0 %v1419
    %1496 = vmatpush.msra.mxu0 %v1418
    %1497 = vmatpush.msra.mxu0 %v1417
    %1498 = vmatpush.msra.mxu0 %v1416
    %1499 = vmatpush.msra.mxu0 %v1415
    %1500 = vmatpush.msra.mxu0 %v1414
    %1501 = vmatpush.msra.mxu0 %v1413
    %1502 = vmatpush.msra.mxu0 %v1412
    %1503 = vmatpush.msra.mxu0 %v1411
    %1504 = vmatmul.f32.gmra.mxu0 %v1394
    %v1505 = vpop.f32.mrf.mxu0
    %v1506 = vadd.f32 %v1486, %v1505
    %1507 = vdwg.mxu0
    %v1508 = vmul.f32 %v1506, 0.0078125
    %v1509 = vmul.f32 %v1467, %v1467
    %v1510 = vsub.f32 %v1508, %v1509
    %v1511 = vmax.f32 %v1510, 0.0
    %v1512 = vld [vmem:[%s15] sm:$0x1]
    %v1513 = vadd.f32 %v1511, 1e-05
    %v1514 = vrsqrt.pop %v1513
    %v1515 = vmul.f32 %v1514, %v1513
    %v1516 = vmul.f32 %v1515, %v1514
    %v1517 = vmul.f32 0.5, %v1516
    %v1518 = vsub.f32 1.5, %v1517
    %v1519 = vmul.f32 %v1514, %v1518
    %vm1520 = vweird.f32 %v1513
    %vm1521 = vweird.f32 %v1514
    %vm1522 = vmor %vm1520, %vm1521
    %v1523 = vsel %vm1522, %v1514, %v1519
    %v1524 = vmul.f32 %v1512, %v1523
    %v1525 = vld [vmem:[%s17] sm:$0x1]
    %v1526 = vmul.f32 %v1467, %v1524
    %v1527 = vsub.f32 %v1525, %v1526
    %v1528 = vld [vmem:[%s13] sm:$0xff]
    %v1529 = vld [vmem:[%s13 + $0x8] sm:$0xff]
    %v1530 = vld [vmem:[%s13 + $0x10] sm:$0xff]
    %v1531 = vld [vmem:[%s13 + $0x18] sm:$0xff]
    %v1532 = vld [vmem:[%s13 + $0x20] sm:$0xff]
    %v1533 = vld [vmem:[%s13 + $0x28] sm:$0xff]
    %v1534 = vld [vmem:[%s13 + $0x30] sm:$0xff]
    %v1535 = vld [vmem:[%s13 + $0x38] sm:$0xff]
    %v1537 = vsel %vm759, %v1524, 0
    %1539 = vmatpush.msra.mxu0 0.0
    %1540 = vmatpush.msra.mxu0 0.0
    %1541 = vmatpush.msra.mxu0 0.0
    %1542 = vmatpush.msra.mxu0 0.0
    %1543 = vmatpush.msra.mxu0 0.0
    %1544 = vmatpush.msra.mxu0 0.0
    %1545 = vmatpush.msra.mxu0 0.0
    %1546 = vmatpush.msra.mxu0 0.0
    %1547 = vmatpush.msra.mxu0 0.0
    %1548 = vmatpush.msra.mxu0 0.0
    %1549 = vmatpush.msra.mxu0 0.0
    %1550 = vmatpush.msra.mxu0 0.0
    %1551 = vmatpush.msra.mxu0 %v1534
    %1552 = vmatpush.msra.mxu0 %v1532
    %1553 = vmatpush.msra.mxu0 %v1530
    %1554 = vmatpush.msra.mxu0 %v1528
    %1555 = vmatmul.f32.gmra.mxu0 %v1537
    %v1556 = vpop.f32.mrf.mxu0
    %v1557 = vadd.f32 0.0, %v1556
    %1558 = vdwg.mxu0
    %1559 = vmatpush.msra.mxu0 0.0
    %1560 = vmatpush.msra.mxu0 0.0
    %1561 = vmatpush.msra.mxu0 0.0
    %1562 = vmatpush.msra.mxu0 0.0
    %1563 = vmatpush.msra.mxu0 0.0
    %1564 = vmatpush.msra.mxu0 0.0
    %1565 = vmatpush.msra.mxu0 0.0
    %1566 = vmatpush.msra.mxu0 0.0
    %1567 = vmatpush.msra.mxu0 0.0
    %1568 = vmatpush.msra.mxu0 0.0
    %1569 = vmatpush.msra.mxu0 0.0
    %1570 = vmatpush.msra.mxu0 0.0
    %1571 = vmatpush.msra.mxu0 %v1535
    %1572 = vmatpush.msra.mxu0 %v1533
    %1573 = vmatpush.msra.mxu0 %v1531
    %1574 = vmatpush.msra.mxu0 %v1529
    %1575 = vmatmul.f32.gmra.mxu0 %v1537
    %v1576 = vpop.f32.mrf.mxu0
    %v1577 = vadd.f32 0.0, %v1576
    %1578 = vdwg.mxu0
    %v1579 = vperm.slane %v1557, 0
    %v1580 = vperm.slane %v1577, 0
    %v1581 = vmul.f32 %v1359, %v1579
    %v1582 = vmul.f32 %v1360, %v1580
    %v1583 = vmul.f32 %v1361, %v1579
    %v1584 = vmul.f32 %v1362, %v1580
    %v1586 = vsel %vm759, %v1527, 0
    %1588 = vmatpush.msra.mxu0 0.0
    %1589 = vmatpush.msra.mxu0 0.0
    %1590 = vmatpush.msra.mxu0 0.0
    %1591 = vmatpush.msra.mxu0 0.0
    %1592 = vmatpush.msra.mxu0 0.0
    %1593 = vmatpush.msra.mxu0 0.0
    %1594 = vmatpush.msra.mxu0 0.0
    %1595 = vmatpush.msra.mxu0 0.0
    %1596 = vmatpush.msra.mxu0 0.0
    %1597 = vmatpush.msra.mxu0 0.0
    %1598 = vmatpush.msra.mxu0 0.0
    %1599 = vmatpush.msra.mxu0 0.0
    %1600 = vmatpush.msra.mxu0 %v1534
    %1601 = vmatpush.msra.mxu0 %v1532
    %1602 = vmatpush.msra.mxu0 %v1530
    %1603 = vmatpush.msra.mxu0 %v1528
    %1604 = vmatmul.f32.gmra.mxu0 %v1586
    %v1605 = vpop.f32.mrf.mxu0
    %v1606 = vadd.f32 0.0, %v1605
    %1607 = vdwg.mxu0
    %1608 = vmatpush.msra.mxu0 0.0
    %1609 = vmatpush.msra.mxu0 0.0
    %1610 = vmatpush.msra.mxu0 0.0
    %1611 = vmatpush.msra.mxu0 0.0
    %1612 = vmatpush.msra.mxu0 0.0
    %1613 = vmatpush.msra.mxu0 0.0
    %1614 = vmatpush.msra.mxu0 0.0
    %1615 = vmatpush.msra.mxu0 0.0
    %1616 = vmatpush.msra.mxu0 0.0
    %1617 = vmatpush.msra.mxu0 0.0
    %1618 = vmatpush.msra.mxu0 0.0
    %1619 = vmatpush.msra.mxu0 0.0
    %1620 = vmatpush.msra.mxu0 %v1535
    %1621 = vmatpush.msra.mxu0 %v1533
    %1622 = vmatpush.msra.mxu0 %v1531
    %1623 = vmatpush.msra.mxu0 %v1529
    %1624 = vmatmul.f32.gmra.mxu0 %v1586
    %v1625 = vpop.f32.mrf.mxu0
    %v1626 = vadd.f32 0.0, %v1625
    %1627 = vdwg.mxu0
    %v1628 = vperm.slane %v1606, 0
    %v1629 = vperm.slane %v1626, 0
    %v1630 = vadd.f32 %v1581, %v1628
    %v1631 = vadd.f32 %v1582, %v1629
    %v1632 = vadd.f32 %v1583, %v1628
    %v1633 = vadd.f32 %v1584, %v1629
    %vm1634 = vcmp.ge.f32.partialorder %v1630, 0.0
    %vm1635 = vcmp.ge.f32.partialorder %v1631, 0.0
    %vm1636 = vcmp.ge.f32.partialorder %v1632, 0.0
    %vm1637 = vcmp.ge.f32.partialorder %v1633, 0.0
    %v1638 = vmul.f32 %v1630, 0.2
    %v1639 = vmul.f32 %v1631, 0.2
    %v1640 = vmul.f32 %v1632, 0.2
    %v1641 = vmul.f32 %v1633, 0.2
    %v1642 = vsel %vm1634, %v1630, %v1638
    %v1643 = vsel %vm1635, %v1631, %v1639
    %v1644 = vsel %vm1636, %v1632, %v1640
    %v1645 = vsel %vm1637, %v1633, %v1641
    %v1646 = vpack.c.bf16 %v1644, %v1642
    %v1647 = vpack.c.bf16 %v1645, %v1643
    %v1648 = vld [vmem:[%s19] sm:$0xf]
    %vm1649 = vcmask 130048
    %v1651 = vsel %vm1649, %v1648, 0
    %1653 = vmatpush.bf16.msra.mxu0 0
    %1654 = vmatpush.bf16.msra.mxu0 0
    %1655 = vmatpush.bf16.msra.mxu0 0
    %1656 = vmatpush.bf16.msra.mxu0 0
    %1657 = vmatpush.bf16.msra.mxu0 0
    %1658 = vmatpush.bf16.msra.mxu0 0
    %1659 = vmatpush.bf16.msra.mxu0 0
    %1660 = vmatpush.bf16.msra.mxu0 %v1646
    %1661 = vmatmul.bf16.gmra.mxu0 %v1651
    %v1662 = vpop.f32.mrf.mxu0
    %v1663 = vadd.f32 0.0, %v1662
    %v1664 = vpop.f32.mrf.mxu0
    %1665 = vdwg.mxu0
    %1666 = vmatpush.bf16.msra.mxu0 0
    %1667 = vmatpush.bf16.msra.mxu0 0
    %1668 = vmatpush.bf16.msra.mxu0 0
    %1669 = vmatpush.bf16.msra.mxu0 0
    %1670 = vmatpush.bf16.msra.mxu0 0
    %1671 = vmatpush.bf16.msra.mxu0 0
    %1672 = vmatpush.bf16.msra.mxu0 0
    %1673 = vmatpush.bf16.msra.mxu0 %v1647
    %1674 = vmatmul.bf16.gmra.mxu0 %v1651
    %v1675 = vpop.f32.mrf.mxu0
    %v1676 = vadd.f32 0.0, %v1675
    %v1677 = vpop.f32.mrf.mxu0
    %1678 = vdwg.mxu0
    %v1679 = vpack.c.bf16 %v1663, %v1663
    %v1680 = vpack.c.bf16 %v1676, %v1676
    %v1681 = vld [vmem:[#allocation2] sm:$0xff]
    %v1682 = vld [vmem:[#allocation2 + $0x8] sm:$0xff]
    %v1683 = vld [vmem:[#allocation2 + $0x10] sm:$0xff]
    %v1684 = vld [vmem:[#allocation2 + $0x18] sm:$0xff]
    %v1685 = vld [vmem:[#allocation2 + $0x20] sm:$0xff]
    %v1686 = vld [vmem:[#allocation2 + $0x28] sm:$0xff]
    %v1687 = vld [vmem:[#allocation2 + $0x30] sm:$0xff]
    %v1688 = vld [vmem:[#allocation2 + $0x38] sm:$0xff]
    %v1689 = vld [vmem:[#allocation2 + $0x40] sm:$0xff]
    %v1690 = vld [vmem:[#allocation2 + $0x48] sm:$0xff]
    %v1691 = vld [vmem:[#allocation2 + $0x50] sm:$0xff]
    %v1692 = vld [vmem:[#allocation2 + $0x58] sm:$0xff]
    %v1693 = vld [vmem:[#allocation2 + $0x60] sm:$0xff]
    %v1694 = vld [vmem:[#allocation2 + $0x68] sm:$0xff]
    %v1695 = vld [vmem:[#allocation2 + $0x70] sm:$0xff]
    %v1696 = vld [vmem:[#allocation2 + $0x78] sm:$0xff]
    %v1697 = vld [vmem:[#allocation2 + $0x80] sm:$0xff]
    %v1698 = vld [vmem:[#allocation2 + $0x88] sm:$0xff]
    %v1699 = vld [vmem:[#allocation2 + $0x90] sm:$0xff]
    %v1700 = vld [vmem:[#allocation2 + $0x98] sm:$0xff]
    %v1701 = vld [vmem:[#allocation2 + $0xa0] sm:$0xff]
    %v1702 = vld [vmem:[#allocation2 + $0xa8] sm:$0xff]
    %v1703 = vld [vmem:[#allocation2 + $0xb0] sm:$0xff]
    %v1704 = vld [vmem:[#allocation2 + $0xb8] sm:$0xff]
    %v1705 = vld [vmem:[#allocation2 + $0xc0] sm:$0xff]
    %v1706 = vld [vmem:[#allocation2 + $0xc8] sm:$0xff]
    %v1707 = vld [vmem:[#allocation2 + $0xd0] sm:$0xff]
    %v1708 = vld [vmem:[#allocation2 + $0xd8] sm:$0xff]
    %v1709 = vld [vmem:[#allocation2 + $0xe0] sm:$0xff]
    %v1710 = vld [vmem:[#allocation2 + $0xe8] sm:$0xff]
    %v1711 = vld [vmem:[#allocation2 + $0xf0] sm:$0xff]
    %v1712 = vld [vmem:[#allocation2 + $0xf8] sm:$0xff]
    %s1713 = scalar_lea.vmem %s19, 4
    %v1714 = vld [vmem:[%s1713] sm:$0xf]
    %v1716 = vsel %vm1649, %v1714, 0
    %1718 = vmatpush.bf16.msra.mxu0 0
    %1719 = vmatpush.bf16.msra.mxu0 0
    %1720 = vmatpush.bf16.msra.mxu0 0
    %1721 = vmatpush.bf16.msra.mxu0 0
    %1722 = vmatpush.bf16.msra.mxu0 0
    %1723 = vmatpush.bf16.msra.mxu0 0
    %1724 = vmatpush.bf16.msra.mxu0 0
    %1725 = vmatpush.bf16.msra.mxu0 %v1646
    %1726 = vmatmul.bf16.gmra.mxu0 %v1716
    %v1727 = vpop.f32.mrf.mxu0
    %v1728 = vadd.f32 0.0, %v1727
    %v1729 = vpop.f32.mrf.mxu0
    %1730 = vdwg.mxu0
    %1731 = vmatpush.bf16.msra.mxu0 0
    %1732 = vmatpush.bf16.msra.mxu0 0
    %1733 = vmatpush.bf16.msra.mxu0 0
    %1734 = vmatpush.bf16.msra.mxu0 0
    %1735 = vmatpush.bf16.msra.mxu0 0
    %1736 = vmatpush.bf16.msra.mxu0 0
    %1737 = vmatpush.bf16.msra.mxu0 0
    %1738 = vmatpush.bf16.msra.mxu0 %v1647
    %1739 = vmatmul.bf16.gmra.mxu0 %v1716
    %v1740 = vpop.f32.mrf.mxu0
    %v1741 = vadd.f32 0.0, %v1740
    %v1742 = vpop.f32.mrf.mxu0
    %1743 = vdwg.mxu0
    %v1744 = vpack.c.bf16 %v1728, %v1728
    %v1745 = vpack.c.bf16 %v1741, %v1741
    %s1746 = scalar_lea.vmem [#allocation2], 256
    %v1747 = vld [vmem:[%s1746] sm:$0xff]
    %v1748 = vld [vmem:[%s1746 + $0x8] sm:$0xff]
    %v1749 = vld [vmem:[%s1746 + $0x10] sm:$0xff]
    %v1750 = vld [vmem:[%s1746 + $0x18] sm:$0xff]
    %v1751 = vld [vmem:[%s1746 + $0x20] sm:$0xff]
    %v1752 = vld [vmem:[%s1746 + $0x28] sm:$0xff]
    %v1753 = vld [vmem:[%s1746 + $0x30] sm:$0xff]
    %v1754 = vld [vmem:[%s1746 + $0x38] sm:$0xff]
    %v1755 = vld [vmem:[%s1746 + $0x40] sm:$0xff]
    %v1756 = vld [vmem:[%s1746 + $0x48] sm:$0xff]
    %v1757 = vld [vmem:[%s1746 + $0x50] sm:$0xff]
    %v1758 = vld [vmem:[%s1746 + $0x58] sm:$0xff]
    %v1759 = vld [vmem:[%s1746 + $0x60] sm:$0xff]
    %v1760 = vld [vmem:[%s1746 + $0x68] sm:$0xff]
    %v1761 = vld [vmem:[%s1746 + $0x70] sm:$0xff]
    %v1762 = vld [vmem:[%s1746 + $0x78] sm:$0xff]
    %v1763 = vld [vmem:[%s1746 + $0x80] sm:$0xff]
    %v1764 = vld [vmem:[%s1746 + $0x88] sm:$0xff]
    %v1765 = vld [vmem:[%s1746 + $0x90] sm:$0xff]
    %v1766 = vld [vmem:[%s1746 + $0x98] sm:$0xff]
    %v1767 = vld [vmem:[%s1746 + $0xa0] sm:$0xff]
    %v1768 = vld [vmem:[%s1746 + $0xa8] sm:$0xff]
    %v1769 = vld [vmem:[%s1746 + $0xb0] sm:$0xff]
    %v1770 = vld [vmem:[%s1746 + $0xb8] sm:$0xff]
    %v1771 = vld [vmem:[%s1746 + $0xc0] sm:$0xff]
    %v1772 = vld [vmem:[%s1746 + $0xc8] sm:$0xff]
    %v1773 = vld [vmem:[%s1746 + $0xd0] sm:$0xff]
    %v1774 = vld [vmem:[%s1746 + $0xd8] sm:$0xff]
    %v1775 = vld [vmem:[%s1746 + $0xe0] sm:$0xff]
    %v1776 = vld [vmem:[%s1746 + $0xe8] sm:$0xff]
    %v1777 = vld [vmem:[%s1746 + $0xf0] sm:$0xff]
    %v1778 = vld [vmem:[%s1746 + $0xf8] sm:$0xff]
    %v1811 = vunpack.c.l.b16 %v1747
    %v1812 = vunpack.c.h.b16 %v1747
    %v1813 = vunpack.c.l.b16 %v1748
    %v1814 = vunpack.c.h.b16 %v1748
    %v1815 = vunpack.c.l.b16 %v1749
    %v1816 = vunpack.c.h.b16 %v1749
    %v1817 = vunpack.c.l.b16 %v1750
    %v1818 = vunpack.c.h.b16 %v1750
    %v1819 = vunpack.c.l.b16 %v1751
    %v1820 = vunpack.c.h.b16 %v1751
    %v1821 = vunpack.c.l.b16 %v1752
    %v1822 = vunpack.c.h.b16 %v1752
    %v1823 = vunpack.c.l.b16 %v1753
    %v1824 = vunpack.c.h.b16 %v1753
    %v1825 = vunpack.c.l.b16 %v1754
    %v1826 = vunpack.c.h.b16 %v1754
    %v1827 = vunpack.c.l.b16 %v1755
    %v1828 = vunpack.c.h.b16 %v1755
    %v1829 = vunpack.c.l.b16 %v1756
    %v1830 = vunpack.c.h.b16 %v1756
    %v1831 = vunpack.c.l.b16 %v1757
    %v1832 = vunpack.c.h.b16 %v1757
    %v1833 = vunpack.c.l.b16 %v1758
    %v1834 = vunpack.c.h.b16 %v1758
    %v1835 = vunpack.c.l.b16 %v1759
    %v1836 = vunpack.c.h.b16 %v1759
    %v1837 = vunpack.c.l.b16 %v1760
    %v1838 = vunpack.c.h.b16 %v1760
    %v1839 = vunpack.c.l.b16 %v1761
    %v1840 = vunpack.c.h.b16 %v1761
    %v1841 = vunpack.c.l.b16 %v1762
    %v1842 = vunpack.c.h.b16 %v1762
    %v1843 = vunpack.c.l.b16 %v1763
    %v1844 = vunpack.c.h.b16 %v1763
    %v1845 = vunpack.c.l.b16 %v1764
    %v1846 = vunpack.c.h.b16 %v1764
    %v1847 = vunpack.c.l.b16 %v1765
    %v1848 = vunpack.c.h.b16 %v1765
    %v1849 = vunpack.c.l.b16 %v1766
    %v1850 = vunpack.c.h.b16 %v1766
    %v1851 = vunpack.c.l.b16 %v1767
    %v1852 = vunpack.c.h.b16 %v1767
    %v1853 = vunpack.c.l.b16 %v1768
    %v1854 = vunpack.c.h.b16 %v1768
    %v1855 = vunpack.c.l.b16 %v1769
    %v1856 = vunpack.c.h.b16 %v1769
    %v1857 = vunpack.c.l.b16 %v1770
    %v1858 = vunpack.c.h.b16 %v1770
    %v1859 = vunpack.c.l.b16 %v1771
    %v1860 = vunpack.c.h.b16 %v1771
    %v1861 = vunpack.c.l.b16 %v1772
    %v1862 = vunpack.c.h.b16 %v1772
    %v1863 = vunpack.c.l.b16 %v1773
    %v1864 = vunpack.c.h.b16 %v1773
    %v1865 = vunpack.c.l.b16 %v1774
    %v1866 = vunpack.c.h.b16 %v1774
    %v1867 = vunpack.c.l.b16 %v1775
    %v1868 = vunpack.c.h.b16 %v1775
    %v1869 = vunpack.c.l.b16 %v1776
    %v1870 = vunpack.c.h.b16 %v1776
    %v1871 = vunpack.c.l.b16 %v1777
    %v1872 = vunpack.c.h.b16 %v1777
    %v1873 = vunpack.c.l.b16 %v1778
    %v1874 = vunpack.c.h.b16 %v1778
    %v1875 = vpack.c.b16 %v1813, %v1811
    %v1876 = vpack.c.b16 %v1814, %v1812
    %v1877 = vpack.c.b16 %v1817, %v1815
    %v1878 = vpack.c.b16 %v1818, %v1816
    %v1879 = vpack.c.b16 %v1821, %v1819
    %v1880 = vpack.c.b16 %v1822, %v1820
    %v1881 = vpack.c.b16 %v1825, %v1823
    %v1882 = vpack.c.b16 %v1826, %v1824
    %v1883 = vpack.c.b16 %v1829, %v1827
    %v1884 = vpack.c.b16 %v1830, %v1828
    %v1885 = vpack.c.b16 %v1833, %v1831
    %v1886 = vpack.c.b16 %v1834, %v1832
    %v1887 = vpack.c.b16 %v1837, %v1835
    %v1888 = vpack.c.b16 %v1838, %v1836
    %v1889 = vpack.c.b16 %v1841, %v1839
    %v1890 = vpack.c.b16 %v1842, %v1840
    %v1891 = vpack.c.b16 %v1845, %v1843
    %v1892 = vpack.c.b16 %v1846, %v1844
    %v1893 = vpack.c.b16 %v1849, %v1847
    %v1894 = vpack.c.b16 %v1850, %v1848
    %v1895 = vpack.c.b16 %v1853, %v1851
    %v1896 = vpack.c.b16 %v1854, %v1852
    %v1897 = vpack.c.b16 %v1857, %v1855
    %v1898 = vpack.c.b16 %v1858, %v1856
    %v1899 = vpack.c.b16 %v1861, %v1859
    %v1900 = vpack.c.b16 %v1862, %v1860
    %v1901 = vpack.c.b16 %v1865, %v1863
    %v1902 = vpack.c.b16 %v1866, %v1864
    %v1903 = vpack.c.b16 %v1869, %v1867
    %v1904 = vpack.c.b16 %v1870, %v1868
    %v1905 = vpack.c.b16 %v1873, %v1871
    %v1906 = vpack.c.b16 %v1874, %v1872
    %1939 = vmatpush.bf16.msra.mxu0 %v1889
    %1940 = vmatpush.bf16.msra.mxu0 %v1887
    %1941 = vmatpush.bf16.msra.mxu0 %v1885
    %1942 = vmatpush.bf16.msra.mxu0 %v1883
    %1943 = vmatpush.bf16.msra.mxu0 %v1881
    %1944 = vmatpush.bf16.msra.mxu0 %v1879
    %1945 = vmatpush.bf16.msra.mxu0 %v1877
    %1946 = vmatpush.bf16.msra.mxu0 %v1875
    %1947 = vmatmul.bf16.gmra.mxu0 %v1744
    %v1948 = vpop.f32.mrf.mxu0
    %v1949 = vadd.f32 0.0, %v1948
    %v1950 = vpop.f32.mrf.mxu0
    %1951 = vdwg.mxu0
    %1952 = vmatpush.bf16.msra.mxu0 %v1905
    %1953 = vmatpush.bf16.msra.mxu0 %v1903
    %1954 = vmatpush.bf16.msra.mxu0 %v1901
    %1955 = vmatpush.bf16.msra.mxu0 %v1899
    %1956 = vmatpush.bf16.msra.mxu0 %v1897
    %1957 = vmatpush.bf16.msra.mxu0 %v1895
    %1958 = vmatpush.bf16.msra.mxu0 %v1893
    %1959 = vmatpush.bf16.msra.mxu0 %v1891
    %1960 = vmatmul.bf16.gmra.mxu0 %v1745
    %v1961 = vpop.f32.mrf.mxu0
    %v1962 = vadd.f32 %v1949, %v1961
    %v1963 = vpop.f32.mrf.mxu0
    %1964 = vdwg.mxu0
    %1965 = vmatpush.bf16.msra.mxu0 %v1890
    %1966 = vmatpush.bf16.msra.mxu0 %v1888
    %1967 = vmatpush.bf16.msra.mxu0 %v1886
    %1968 = vmatpush.bf16.msra.mxu0 %v1884
    %1969 = vmatpush.bf16.msra.mxu0 %v1882
    %1970 = vmatpush.bf16.msra.mxu0 %v1880
    %1971 = vmatpush.bf16.msra.mxu0 %v1878
    %1972 = vmatpush.bf16.msra.mxu0 %v1876
    %1973 = vmatmul.bf16.gmra.mxu0 %v1744
    %v1974 = vpop.f32.mrf.mxu0
    %v1975 = vadd.f32 0.0, %v1974
    %v1976 = vpop.f32.mrf.mxu0
    %1977 = vdwg.mxu0
    %1978 = vmatpush.bf16.msra.mxu0 %v1906
    %1979 = vmatpush.bf16.msra.mxu0 %v1904
    %1980 = vmatpush.bf16.msra.mxu0 %v1902
    %1981 = vmatpush.bf16.msra.mxu0 %v1900
    %1982 = vmatpush.bf16.msra.mxu0 %v1898
    %1983 = vmatpush.bf16.msra.mxu0 %v1896
    %1984 = vmatpush.bf16.msra.mxu0 %v1894
    %1985 = vmatpush.bf16.msra.mxu0 %v1892
    %1986 = vmatmul.bf16.gmra.mxu0 %v1745
    %v1987 = vpop.f32.mrf.mxu0
    %v1988 = vadd.f32 %v1975, %v1987
    %v1989 = vpop.f32.mrf.mxu0
    %1990 = vdwg.mxu0
    %v2023 = vunpack.c.l.b16 %v1681
    %v2024 = vunpack.c.h.b16 %v1681
    %v2025 = vunpack.c.l.b16 %v1682
    %v2026 = vunpack.c.h.b16 %v1682
    %v2027 = vunpack.c.l.b16 %v1683
    %v2028 = vunpack.c.h.b16 %v1683
    %v2029 = vunpack.c.l.b16 %v1684
    %v2030 = vunpack.c.h.b16 %v1684
    %v2031 = vunpack.c.l.b16 %v1685
    %v2032 = vunpack.c.h.b16 %v1685
    %v2033 = vunpack.c.l.b16 %v1686
    %v2034 = vunpack.c.h.b16 %v1686
    %v2035 = vunpack.c.l.b16 %v1687
    %v2036 = vunpack.c.h.b16 %v1687
    %v2037 = vunpack.c.l.b16 %v1688
    %v2038 = vunpack.c.h.b16 %v1688
    %v2039 = vunpack.c.l.b16 %v1689
    %v2040 = vunpack.c.h.b16 %v1689
    %v2041 = vunpack.c.l.b16 %v1690
    %v2042 = vunpack.c.h.b16 %v1690
    %v2043 = vunpack.c.l.b16 %v1691
    %v2044 = vunpack.c.h.b16 %v1691
    %v2045 = vunpack.c.l.b16 %v1692
    %v2046 = vunpack.c.h.b16 %v1692
    %v2047 = vunpack.c.l.b16 %v1693
    %v2048 = vunpack.c.h.b16 %v1693
    %v2049 = vunpack.c.l.b16 %v1694
    %v2050 = vunpack.c.h.b16 %v1694
    %v2051 = vunpack.c.l.b16 %v1695
    %v2052 = vunpack.c.h.b16 %v1695
    %v2053 = vunpack.c.l.b16 %v1696
    %v2054 = vunpack.c.h.b16 %v1696
    %v2055 = vunpack.c.l.b16 %v1697
    %v2056 = vunpack.c.h.b16 %v1697
    %v2057 = vunpack.c.l.b16 %v1698
    %v2058 = vunpack.c.h.b16 %v1698
    %v2059 = vunpack.c.l.b16 %v1699
    %v2060 = vunpack.c.h.b16 %v1699
    %v2061 = vunpack.c.l.b16 %v1700
    %v2062 = vunpack.c.h.b16 %v1700
    %v2063 = vunpack.c.l.b16 %v1701
    %v2064 = vunpack.c.h.b16 %v1701
    %v2065 = vunpack.c.l.b16 %v1702
    %v2066 = vunpack.c.h.b16 %v1702
    %v2067 = vunpack.c.l.b16 %v1703
    %v2068 = vunpack.c.h.b16 %v1703
    %v2069 = vunpack.c.l.b16 %v1704
    %v2070 = vunpack.c.h.b16 %v1704
    %v2071 = vunpack.c.l.b16 %v1705
    %v2072 = vunpack.c.h.b16 %v1705
    %v2073 = vunpack.c.l.b16 %v1706
    %v2074 = vunpack.c.h.b16 %v1706
    %v2075 = vunpack.c.l.b16 %v1707
    %v2076 = vunpack.c.h.b16 %v1707
    %v2077 = vunpack.c.l.b16 %v1708
    %v2078 = vunpack.c.h.b16 %v1708
    %v2079 = vunpack.c.l.b16 %v1709
    %v2080 = vunpack.c.h.b16 %v1709
    %v2081 = vunpack.c.l.b16 %v1710
    %v2082 = vunpack.c.h.b16 %v1710
    %v2083 = vunpack.c.l.b16 %v1711
    %v2084 = vunpack.c.h.b16 %v1711
    %v2085 = vunpack.c.l.b16 %v1712
    %v2086 = vunpack.c.h.b16 %v1712
    %v2087 = vpack.c.b16 %v2025, %v2023
    %v2088 = vpack.c.b16 %v2026, %v2024
    %v2089 = vpack.c.b16 %v2029, %v2027
    %v2090 = vpack.c.b16 %v2030, %v2028
    %v2091 = vpack.c.b16 %v2033, %v2031
    %v2092 = vpack.c.b16 %v2034, %v2032
    %v2093 = vpack.c.b16 %v2037, %v2035
    %v2094 = vpack.c.b16 %v2038, %v2036
    %v2095 = vpack.c.b16 %v2041, %v2039
    %v2096 = vpack.c.b16 %v2042, %v2040
    %v2097 = vpack.c.b16 %v2045, %v2043
    %v2098 = vpack.c.b16 %v2046, %v2044
    %v2099 = vpack.c.b16 %v2049, %v2047
    %v2100 = vpack.c.b16 %v2050, %v2048
    %v2101 = vpack.c.b16 %v2053, %v2051
    %v2102 = vpack.c.b16 %v2054, %v2052
    %v2103 = vpack.c.b16 %v2057, %v2055
    %v2104 = vpack.c.b16 %v2058, %v2056
    %v2105 = vpack.c.b16 %v2061, %v2059
    %v2106 = vpack.c.b16 %v2062, %v2060
    %v2107 = vpack.c.b16 %v2065, %v2063
    %v2108 = vpack.c.b16 %v2066, %v2064
    %v2109 = vpack.c.b16 %v2069, %v2067
    %v2110 = vpack.c.b16 %v2070, %v2068
    %v2111 = vpack.c.b16 %v2073, %v2071
    %v2112 = vpack.c.b16 %v2074, %v2072
    %v2113 = vpack.c.b16 %v2077, %v2075
    %v2114 = vpack.c.b16 %v2078, %v2076
    %v2115 = vpack.c.b16 %v2081, %v2079
    %v2116 = vpack.c.b16 %v2082, %v2080
    %v2117 = vpack.c.b16 %v2085, %v2083
    %v2118 = vpack.c.b16 %v2086, %v2084
    %2151 = vmatpush.bf16.msra.mxu0 %v2101
    %2152 = vmatpush.bf16.msra.mxu0 %v2099
    %2153 = vmatpush.bf16.msra.mxu0 %v2097
    %2154 = vmatpush.bf16.msra.mxu0 %v2095
    %2155 = vmatpush.bf16.msra.mxu0 %v2093
    %2156 = vmatpush.bf16.msra.mxu0 %v2091
    %2157 = vmatpush.bf16.msra.mxu0 %v2089
    %2158 = vmatpush.bf16.msra.mxu0 %v2087
    %2159 = vmatmul.bf16.gmra.mxu0 %v1679
    %v2160 = vpop.f32.mrf.mxu0
    %v2161 = vadd.f32 %v1962, %v2160
    %v2162 = vpop.f32.mrf.mxu0
    %2163 = vdwg.mxu0
    %2164 = vmatpush.bf16.msra.mxu0 %v2117
    %2165 = vmatpush.bf16.msra.mxu0 %v2115
    %2166 = vmatpush.bf16.msra.mxu0 %v2113
    %2167 = vmatpush.bf16.msra.mxu0 %v2111
    %2168 = vmatpush.bf16.msra.mxu0 %v2109
    %2169 = vmatpush.bf16.msra.mxu0 %v2107
    %2170 = vmatpush.bf16.msra.mxu0 %v2105
    %2171 = vmatpush.bf16.msra.mxu0 %v2103
    %2172 = vmatmul.bf16.gmra.mxu0 %v1680
    %v2173 = vpop.f32.mrf.mxu0
    %v2174 = vadd.f32 %v2161, %v2173
    %v2175 = vpop.f32.mrf.mxu0
    %2176 = vdwg.mxu0
    %2177 = vmatpush.bf16.msra.mxu0 %v2102
    %2178 = vmatpush.bf16.msra.mxu0 %v2100
    %2179 = vmatpush.bf16.msra.mxu0 %v2098
    %2180 = vmatpush.bf16.msra.mxu0 %v2096
    %2181 = vmatpush.bf16.msra.mxu0 %v2094
    %2182 = vmatpush.bf16.msra.mxu0 %v2092
    %2183 = vmatpush.bf16.msra.mxu0 %v2090
    %2184 = vmatpush.bf16.msra.mxu0 %v2088
    %2185 = vmatmul.bf16.gmra.mxu0 %v1679
    %v2186 = vpop.f32.mrf.mxu0
    %v2187 = vadd.f32 %v1988, %v2186
    %v2188 = vpop.f32.mrf.mxu0
    %2189 = vdwg.mxu0
    %2190 = vmatpush.bf16.msra.mxu0 %v2118
    %2191 = vmatpush.bf16.msra.mxu0 %v2116
    %2192 = vmatpush.bf16.msra.mxu0 %v2114
    %2193 = vmatpush.bf16.msra.mxu0 %v2112
    %2194 = vmatpush.bf16.msra.mxu0 %v2110
    %2195 = vmatpush.bf16.msra.mxu0 %v2108
    %2196 = vmatpush.bf16.msra.mxu0 %v2106
    %2197 = vmatpush.bf16.msra.mxu0 %v2104
    %2198 = vmatmul.bf16.gmra.mxu0 %v1680
    %v2199 = vpop.f32.mrf.mxu0
    %v2200 = vadd.f32 %v2187, %v2199
    %v2201 = vpop.f32.mrf.mxu0
    %2202 = vdwg.mxu0
    %s2203 = scalar_lea.vmem %s19, 8
    %v2204 = vld [vmem:[%s2203] sm:$0xf]
    %v2206 = vsel %vm1649, %v2204, 0
    %2208 = vmatpush.bf16.msra.mxu0 0
    %2209 = vmatpush.bf16.msra.mxu0 0
    %2210 = vmatpush.bf16.msra.mxu0 0
    %2211 = vmatpush.bf16.msra.mxu0 0
    %2212 = vmatpush.bf16.msra.mxu0 0
    %2213 = vmatpush.bf16.msra.mxu0 0
    %2214 = vmatpush.bf16.msra.mxu0 0
    %2215 = vmatpush.bf16.msra.mxu0 %v1646
    %2216 = vmatmul.bf16.gmra.mxu0 %v2206
    %v2217 = vpop.f32.mrf.mxu0
    %v2218 = vadd.f32 0.0, %v2217
    %v2219 = vpop.f32.mrf.mxu0
    %2220 = vdwg.mxu0
    %2221 = vmatpush.bf16.msra.mxu0 0
    %2222 = vmatpush.bf16.msra.mxu0 0
    %2223 = vmatpush.bf16.msra.mxu0 0
    %2224 = vmatpush.bf16.msra.mxu0 0
    %2225 = vmatpush.bf16.msra.mxu0 0
    %2226 = vmatpush.bf16.msra.mxu0 0
    %2227 = vmatpush.bf16.msra.mxu0 0
    %2228 = vmatpush.bf16.msra.mxu0 %v1647
    %2229 = vmatmul.bf16.gmra.mxu0 %v2206
    %v2230 = vpop.f32.mrf.mxu0
    %v2231 = vadd.f32 0.0, %v2230
    %v2232 = vpop.f32.mrf.mxu0
    %2233 = vdwg.mxu0
    %v2234 = vpack.c.bf16 %v2218, %v2218
    %v2235 = vpack.c.bf16 %v2231, %v2231
    %s2236 = scalar_lea.vmem [#allocation2], 512
    %v2237 = vld [vmem:[%s2236] sm:$0xff]
    %v2238 = vld [vmem:[%s2236 + $0x8] sm:$0xff]
    %v2239 = vld [vmem:[%s2236 + $0x10] sm:$0xff]
    %v2240 = vld [vmem:[%s2236 + $0x18] sm:$0xff]
    %v2241 = vld [vmem:[%s2236 + $0x20] sm:$0xff]
    %v2242 = vld [vmem:[%s2236 + $0x28] sm:$0xff]
    %v2243 = vld [vmem:[%s2236 + $0x30] sm:$0xff]
    %v2244 = vld [vmem:[%s2236 + $0x38] sm:$0xff]
    %v2245 = vld [vmem:[%s2236 + $0x40] sm:$0xff]
    %v2246 = vld [vmem:[%s2236 + $0x48] sm:$0xff]
    %v2247 = vld [vmem:[%s2236 + $0x50] sm:$0xff]
    %v2248 = vld [vmem:[%s2236 + $0x58] sm:$0xff]
    %v2249 = vld [vmem:[%s2236 + $0x60] sm:$0xff]
    %v2250 = vld [vmem:[%s2236 + $0x68] sm:$0xff]
    %v2251 = vld [vmem:[%s2236 + $0x70] sm:$0xff]
    %v2252 = vld [vmem:[%s2236 + $0x78] sm:$0xff]
    %v2253 = vld [vmem:[%s2236 + $0x80] sm:$0xff]
    %v2254 = vld [vmem:[%s2236 + $0x88] sm:$0xff]
    %v2255 = vld [vmem:[%s2236 + $0x90] sm:$0xff]
    %v2256 = vld [vmem:[%s2236 + $0x98] sm:$0xff]
    %v2257 = vld [vmem:[%s2236 + $0xa0] sm:$0xff]
    %v2258 = vld [vmem:[%s2236 + $0xa8] sm:$0xff]
    %v2259 = vld [vmem:[%s2236 + $0xb0] sm:$0xff]
    %v2260 = vld [vmem:[%s2236 + $0xb8] sm:$0xff]
    %v2261 = vld [vmem:[%s2236 + $0xc0] sm:$0xff]
    %v2262 = vld [vmem:[%s2236 + $0xc8] sm:$0xff]
    %v2263 = vld [vmem:[%s2236 + $0xd0] sm:$0xff]
    %v2264 = vld [vmem:[%s2236 + $0xd8] sm:$0xff]
    %v2265 = vld [vmem:[%s2236 + $0xe0] sm:$0xff]
    %v2266 = vld [vmem:[%s2236 + $0xe8] sm:$0xff]
    %v2267 = vld [vmem:[%s2236 + $0xf0] sm:$0xff]
    %v2268 = vld [vmem:[%s2236 + $0xf8] sm:$0xff]
    %v2301 = vunpack.c.l.b16 %v2237
    %v2302 = vunpack.c.h.b16 %v2237
    %v2303 = vunpack.c.l.b16 %v2238
    %v2304 = vunpack.c.h.b16 %v2238
    %v2305 = vunpack.c.l.b16 %v2239
    %v2306 = vunpack.c.h.b16 %v2239
    %v2307 = vunpack.c.l.b16 %v2240
    %v2308 = vunpack.c.h.b16 %v2240
    %v2309 = vunpack.c.l.b16 %v2241
    %v2310 = vunpack.c.h.b16 %v2241
    %v2311 = vunpack.c.l.b16 %v2242
    %v2312 = vunpack.c.h.b16 %v2242
    %v2313 = vunpack.c.l.b16 %v2243
    %v2314 = vunpack.c.h.b16 %v2243
    %v2315 = vunpack.c.l.b16 %v2244
    %v2316 = vunpack.c.h.b16 %v2244
    %v2317 = vunpack.c.l.b16 %v2245
    %v2318 = vunpack.c.h.b16 %v2245
    %v2319 = vunpack.c.l.b16 %v2246
    %v2320 = vunpack.c.h.b16 %v2246
    %v2321 = vunpack.c.l.b16 %v2247
    %v2322 = vunpack.c.h.b16 %v2247
    %v2323 = vunpack.c.l.b16 %v2248
    %v2324 = vunpack.c.h.b16 %v2248
    %v2325 = vunpack.c.l.b16 %v2249
    %v2326 = vunpack.c.h.b16 %v2249
    %v2327 = vunpack.c.l.b16 %v2250
    %v2328 = vunpack.c.h.b16 %v2250
    %v2329 = vunpack.c.l.b16 %v2251
    %v2330 = vunpack.c.h.b16 %v2251
    %v2331 = vunpack.c.l.b16 %v2252
    %v2332 = vunpack.c.h.b16 %v2252
    %v2333 = vunpack.c.l.b16 %v2253
    %v2334 = vunpack.c.h.b16 %v2253
    %v2335 = vunpack.c.l.b16 %v2254
    %v2336 = vunpack.c.h.b16 %v2254
    %v2337 = vunpack.c.l.b16 %v2255
    %v2338 = vunpack.c.h.b16 %v2255
    %v2339 = vunpack.c.l.b16 %v2256
    %v2340 = vunpack.c.h.b16 %v2256
    %v2341 = vunpack.c.l.b16 %v2257
    %v2342 = vunpack.c.h.b16 %v2257
    %v2343 = vunpack.c.l.b16 %v2258
    %v2344 = vunpack.c.h.b16 %v2258
    %v2345 = vunpack.c.l.b16 %v2259
    %v2346 = vunpack.c.h.b16 %v2259
    %v2347 = vunpack.c.l.b16 %v2260
    %v2348 = vunpack.c.h.b16 %v2260
    %v2349 = vunpack.c.l.b16 %v2261
    %v2350 = vunpack.c.h.b16 %v2261
    %v2351 = vunpack.c.l.b16 %v2262
    %v2352 = vunpack.c.h.b16 %v2262
    %v2353 = vunpack.c.l.b16 %v2263
    %v2354 = vunpack.c.h.b16 %v2263
    %v2355 = vunpack.c.l.b16 %v2264
    %v2356 = vunpack.c.h.b16 %v2264
    %v2357 = vunpack.c.l.b16 %v2265
    %v2358 = vunpack.c.h.b16 %v2265
    %v2359 = vunpack.c.l.b16 %v2266
    %v2360 = vunpack.c.h.b16 %v2266
    %v2361 = vunpack.c.l.b16 %v2267
    %v2362 = vunpack.c.h.b16 %v2267
    %v2363 = vunpack.c.l.b16 %v2268
    %v2364 = vunpack.c.h.b16 %v2268
    %v2365 = vpack.c.b16 %v2303, %v2301
    %v2366 = vpack.c.b16 %v2304, %v2302
    %v2367 = vpack.c.b16 %v2307, %v2305
    %v2368 = vpack.c.b16 %v2308, %v2306
    %v2369 = vpack.c.b16 %v2311, %v2309
    %v2370 = vpack.c.b16 %v2312, %v2310
    %v2371 = vpack.c.b16 %v2315, %v2313
    %v2372 = vpack.c.b16 %v2316, %v2314
    %v2373 = vpack.c.b16 %v2319, %v2317
    %v2374 = vpack.c.b16 %v2320, %v2318
    %v2375 = vpack.c.b16 %v2323, %v2321
    %v2376 = vpack.c.b16 %v2324, %v2322
    %v2377 = vpack.c.b16 %v2327, %v2325
    %v2378 = vpack.c.b16 %v2328, %v2326
    %v2379 = vpack.c.b16 %v2331, %v2329
    %v2380 = vpack.c.b16 %v2332, %v2330
    %v2381 = vpack.c.b16 %v2335, %v2333
    %v2382 = vpack.c.b16 %v2336, %v2334
    %v2383 = vpack.c.b16 %v2339, %v2337
    %v2384 = vpack.c.b16 %v2340, %v2338
    %v2385 = vpack.c.b16 %v2343, %v2341
    %v2386 = vpack.c.b16 %v2344, %v2342
    %v2387 = vpack.c.b16 %v2347, %v2345
    %v2388 = vpack.c.b16 %v2348, %v2346
    %v2389 = vpack.c.b16 %v2351, %v2349
    %v2390 = vpack.c.b16 %v2352, %v2350
    %v2391 = vpack.c.b16 %v2355, %v2353
    %v2392 = vpack.c.b16 %v2356, %v2354
    %v2393 = vpack.c.b16 %v2359, %v2357
    %v2394 = vpack.c.b16 %v2360, %v2358
    %v2395 = vpack.c.b16 %v2363, %v2361
    %v2396 = vpack.c.b16 %v2364, %v2362
    %2429 = vmatpush.bf16.msra.mxu0 %v2379
    %2430 = vmatpush.bf16.msra.mxu0 %v2377
    %2431 = vmatpush.bf16.msra.mxu0 %v2375
    %2432 = vmatpush.bf16.msra.mxu0 %v2373
    %2433 = vmatpush.bf16.msra.mxu0 %v2371
    %2434 = vmatpush.bf16.msra.mxu0 %v2369
    %2435 = vmatpush.bf16.msra.mxu0 %v2367
    %2436 = vmatpush.bf16.msra.mxu0 %v2365
    %2437 = vmatmul.bf16.gmra.mxu0 %v2234
    %v2438 = vpop.f32.mrf.mxu0
    %v2439 = vadd.f32 0.0, %v2438
    %v2440 = vpop.f32.mrf.mxu0
    %2441 = vdwg.mxu0
    %2442 = vmatpush.bf16.msra.mxu0 %v2395
    %2443 = vmatpush.bf16.msra.mxu0 %v2393
    %2444 = vmatpush.bf16.msra.mxu0 %v2391
    %2445 = vmatpush.bf16.msra.mxu0 %v2389
    %2446 = vmatpush.bf16.msra.mxu0 %v2387
    %2447 = vmatpush.bf16.msra.mxu0 %v2385
    %2448 = vmatpush.bf16.msra.mxu0 %v2383
    %2449 = vmatpush.bf16.msra.mxu0 %v2381
    %2450 = vmatmul.bf16.gmra.mxu0 %v2235
    %v2451 = vpop.f32.mrf.mxu0
    %v2452 = vadd.f32 %v2439, %v2451
    %v2453 = vpop.f32.mrf.mxu0
    %2454 = vdwg.mxu0
    %2455 = vmatpush.bf16.msra.mxu0 %v2380
    %2456 = vmatpush.bf16.msra.mxu0 %v2378
    %2457 = vmatpush.bf16.msra.mxu0 %v2376
    %2458 = vmatpush.bf16.msra.mxu0 %v2374
    %2459 = vmatpush.bf16.msra.mxu0 %v2372
    %2460 = vmatpush.bf16.msra.mxu0 %v2370
    %2461 = vmatpush.bf16.msra.mxu0 %v2368
    %2462 = vmatpush.bf16.msra.mxu0 %v2366
    %2463 = vmatmul.bf16.gmra.mxu0 %v2234
    %v2464 = vpop.f32.mrf.mxu0
    %v2465 = vadd.f32 0.0, %v2464
    %v2466 = vpop.f32.mrf.mxu0
    %2467 = vdwg.mxu0
    %2468 = vmatpush.bf16.msra.mxu0 %v2396
    %2469 = vmatpush.bf16.msra.mxu0 %v2394
    %2470 = vmatpush.bf16.msra.mxu0 %v2392
    %2471 = vmatpush.bf16.msra.mxu0 %v2390
    %2472 = vmatpush.bf16.msra.mxu0 %v2388
    %2473 = vmatpush.bf16.msra.mxu0 %v2386
    %2474 = vmatpush.bf16.msra.mxu0 %v2384
    %2475 = vmatpush.bf16.msra.mxu0 %v2382
    %2476 = vmatmul.bf16.gmra.mxu0 %v2235
    %v2477 = vpop.f32.mrf.mxu0
    %v2478 = vadd.f32 %v2465, %v2477
    %v2479 = vpop.f32.mrf.mxu0
    %2480 = vdwg.mxu0
    %v2481 = vadd.f32 %v2174, %v2452
    %v2482 = vadd.f32 %v2200, %v2478
    %s2483 = scalar_lea.vmem %s19, 12
    %v2484 = vld [vmem:[%s2483] sm:$0xf]
    %v2486 = vsel %vm1649, %v2484, 0
    %2488 = vmatpush.bf16.msra.mxu0 0
    %2489 = vmatpush.bf16.msra.mxu0 0
    %2490 = vmatpush.bf16.msra.mxu0 0
    %2491 = vmatpush.bf16.msra.mxu0 0
    %2492 = vmatpush.bf16.msra.mxu0 0
    %2493 = vmatpush.bf16.msra.mxu0 0
    %2494 = vmatpush.bf16.msra.mxu0 0
    %2495 = vmatpush.bf16.msra.mxu0 %v1646
    %2496 = vmatmul.bf16.gmra.mxu0 %v2486
    %v2497 = vpop.f32.mrf.mxu0
    %v2498 = vadd.f32 0.0, %v2497
    %v2499 = vpop.f32.mrf.mxu0
    %2500 = vdwg.mxu0
    %2501 = vmatpush.bf16.msra.mxu0 0
    %2502 = vmatpush.bf16.msra.mxu0 0
    %2503 = vmatpush.bf16.msra.mxu0 0
    %2504 = vmatpush.bf16.msra.mxu0 0
    %2505 = vmatpush.bf16.msra.mxu0 0
    %2506 = vmatpush.bf16.msra.mxu0 0
    %2507 = vmatpush.bf16.msra.mxu0 0
    %2508 = vmatpush.bf16.msra.mxu0 %v1647
    %2509 = vmatmul.bf16.gmra.mxu0 %v2486
    %v2510 = vpop.f32.mrf.mxu0
    %v2511 = vadd.f32 0.0, %v2510
    %v2512 = vpop.f32.mrf.mxu0
    %2513 = vdwg.mxu0
    %v2514 = vpack.c.bf16 %v2498, %v2498
    %v2515 = vpack.c.bf16 %v2511, %v2511
    %s2516 = scalar_lea.vmem [#allocation2], 768
    %v2517 = vld [vmem:[%s2516] sm:$0xff]
    %v2518 = vld [vmem:[%s2516 + $0x8] sm:$0xff]
    %v2519 = vld [vmem:[%s2516 + $0x10] sm:$0xff]
    %v2520 = vld [vmem:[%s2516 + $0x18] sm:$0xff]
    %v2521 = vld [vmem:[%s2516 + $0x20] sm:$0xff]
    %v2522 = vld [vmem:[%s2516 + $0x28] sm:$0xff]
    %v2523 = vld [vmem:[%s2516 + $0x30] sm:$0xff]
    %v2524 = vld [vmem:[%s2516 + $0x38] sm:$0xff]
    %v2525 = vld [vmem:[%s2516 + $0x40] sm:$0xff]
    %v2526 = vld [vmem:[%s2516 + $0x48] sm:$0xff]
    %v2527 = vld [vmem:[%s2516 + $0x50] sm:$0xff]
    %v2528 = vld [vmem:[%s2516 + $0x58] sm:$0xff]
    %v2529 = vld [vmem:[%s2516 + $0x60] sm:$0xff]
    %v2530 = vld [vmem:[%s2516 + $0x68] sm:$0xff]
    %v2531 = vld [vmem:[%s2516 + $0x70] sm:$0xff]
    %v2532 = vld [vmem:[%s2516 + $0x78] sm:$0xff]
    %v2533 = vld [vmem:[%s2516 + $0x80] sm:$0xff]
    %v2534 = vld [vmem:[%s2516 + $0x88] sm:$0xff]
    %v2535 = vld [vmem:[%s2516 + $0x90] sm:$0xff]
    %v2536 = vld [vmem:[%s2516 + $0x98] sm:$0xff]
    %v2537 = vld [vmem:[%s2516 + $0xa0] sm:$0xff]
    %v2538 = vld [vmem:[%s2516 + $0xa8] sm:$0xff]
    %v2539 = vld [vmem:[%s2516 + $0xb0] sm:$0xff]
    %v2540 = vld [vmem:[%s2516 + $0xb8] sm:$0xff]
    %v2541 = vld [vmem:[%s2516 + $0xc0] sm:$0xff]
    %v2542 = vld [vmem:[%s2516 + $0xc8] sm:$0xff]
    %v2543 = vld [vmem:[%s2516 + $0xd0] sm:$0xff]
    %v2544 = vld [vmem:[%s2516 + $0xd8] sm:$0xff]
    %v2545 = vld [vmem:[%s2516 + $0xe0] sm:$0xff]
    %v2546 = vld [vmem:[%s2516 + $0xe8] sm:$0xff]
    %v2547 = vld [vmem:[%s2516 + $0xf0] sm:$0xff]
    %v2548 = vld [vmem:[%s2516 + $0xf8] sm:$0xff]
    %v2581 = vunpack.c.l.b16 %v2517
    %v2582 = vunpack.c.h.b16 %v2517
    %v2583 = vunpack.c.l.b16 %v2518
    %v2584 = vunpack.c.h.b16 %v2518
    %v2585 = vunpack.c.l.b16 %v2519
    %v2586 = vunpack.c.h.b16 %v2519
    %v2587 = vunpack.c.l.b16 %v2520
    %v2588 = vunpack.c.h.b16 %v2520
    %v2589 = vunpack.c.l.b16 %v2521
    %v2590 = vunpack.c.h.b16 %v2521
    %v2591 = vunpack.c.l.b16 %v2522
    %v2592 = vunpack.c.h.b16 %v2522
    %v2593 = vunpack.c.l.b16 %v2523
    %v2594 = vunpack.c.h.b16 %v2523
    %v2595 = vunpack.c.l.b16 %v2524
    %v2596 = vunpack.c.h.b16 %v2524
    %v2597 = vunpack.c.l.b16 %v2525
    %v2598 = vunpack.c.h.b16 %v2525
    %v2599 = vunpack.c.l.b16 %v2526
    %v2600 = vunpack.c.h.b16 %v2526
    %v2601 = vunpack.c.l.b16 %v2527
    %v2602 = vunpack.c.h.b16 %v2527
    %v2603 = vunpack.c.l.b16 %v2528
    %v2604 = vunpack.c.h.b16 %v2528
    %v2605 = vunpack.c.l.b16 %v2529
    %v2606 = vunpack.c.h.b16 %v2529
    %v2607 = vunpack.c.l.b16 %v2530
    %v2608 = vunpack.c.h.b16 %v2530
    %v2609 = vunpack.c.l.b16 %v2531
    %v2610 = vunpack.c.h.b16 %v2531
    %v2611 = vunpack.c.l.b16 %v2532
    %v2612 = vunpack.c.h.b16 %v2532
    %v2613 = vunpack.c.l.b16 %v2533
    %v2614 = vunpack.c.h.b16 %v2533
    %v2615 = vunpack.c.l.b16 %v2534
    %v2616 = vunpack.c.h.b16 %v2534
    %v2617 = vunpack.c.l.b16 %v2535
    %v2618 = vunpack.c.h.b16 %v2535
    %v2619 = vunpack.c.l.b16 %v2536
    %v2620 = vunpack.c.h.b16 %v2536
    %v2621 = vunpack.c.l.b16 %v2537
    %v2622 = vunpack.c.h.b16 %v2537
    %v2623 = vunpack.c.l.b16 %v2538
    %v2624 = vunpack.c.h.b16 %v2538
    %v2625 = vunpack.c.l.b16 %v2539
    %v2626 = vunpack.c.h.b16 %v2539
    %v2627 = vunpack.c.l.b16 %v2540
    %v2628 = vunpack.c.h.b16 %v2540
    %v2629 = vunpack.c.l.b16 %v2541
    %v2630 = vunpack.c.h.b16 %v2541
    %v2631 = vunpack.c.l.b16 %v2542
    %v2632 = vunpack.c.h.b16 %v2542
    %v2633 = vunpack.c.l.b16 %v2543
    %v2634 = vunpack.c.h.b16 %v2543
    %v2635 = vunpack.c.l.b16 %v2544
    %v2636 = vunpack.c.h.b16 %v2544
    %v2637 = vunpack.c.l.b16 %v2545
    %v2638 = vunpack.c.h.b16 %v2545
    %v2639 = vunpack.c.l.b16 %v2546
    %v2640 = vunpack.c.h.b16 %v2546
    %v2641 = vunpack.c.l.b16 %v2547
    %v2642 = vunpack.c.h.b16 %v2547
    %v2643 = vunpack.c.l.b16 %v2548
    %v2644 = vunpack.c.h.b16 %v2548
    %v2645 = vpack.c.b16 %v2583, %v2581
    %v2646 = vpack.c.b16 %v2584, %v2582
    %v2647 = vpack.c.b16 %v2587, %v2585
    %v2648 = vpack.c.b16 %v2588, %v2586
    %v2649 = vpack.c.b16 %v2591, %v2589
    %v2650 = vpack.c.b16 %v2592, %v2590
    %v2651 = vpack.c.b16 %v2595, %v2593
    %v2652 = vpack.c.b16 %v2596, %v2594
    %v2653 = vpack.c.b16 %v2599, %v2597
    %v2654 = vpack.c.b16 %v2600, %v2598
    %v2655 = vpack.c.b16 %v2603, %v2601
    %v2656 = vpack.c.b16 %v2604, %v2602
    %v2657 = vpack.c.b16 %v2607, %v2605
    %v2658 = vpack.c.b16 %v2608, %v2606
    %v2659 = vpack.c.b16 %v2611, %v2609
    %v2660 = vpack.c.b16 %v2612, %v2610
    %v2661 = vpack.c.b16 %v2615, %v2613
    %v2662 = vpack.c.b16 %v2616, %v2614
    %v2663 = vpack.c.b16 %v2619, %v2617
    %v2664 = vpack.c.b16 %v2620, %v2618
    %v2665 = vpack.c.b16 %v2623, %v2621
    %v2666 = vpack.c.b16 %v2624, %v2622
    %v2667 = vpack.c.b16 %v2627, %v2625
    %v2668 = vpack.c.b16 %v2628, %v2626
    %v2669 = vpack.c.b16 %v2631, %v2629
    %v2670 = vpack.c.b16 %v2632, %v2630
    %v2671 = vpack.c.b16 %v2635, %v2633
    %v2672 = vpack.c.b16 %v2636, %v2634
    %v2673 = vpack.c.b16 %v2639, %v2637
    %v2674 = vpack.c.b16 %v2640, %v2638
    %v2675 = vpack.c.b16 %v2643, %v2641
    %v2676 = vpack.c.b16 %v2644, %v2642
    %2709 = vmatpush.bf16.msra.mxu0 %v2659
    %2710 = vmatpush.bf16.msra.mxu0 %v2657
    %2711 = vmatpush.bf16.msra.mxu0 %v2655
    %2712 = vmatpush.bf16.msra.mxu0 %v2653
    %2713 = vmatpush.bf16.msra.mxu0 %v2651
    %2714 = vmatpush.bf16.msra.mxu0 %v2649
    %2715 = vmatpush.bf16.msra.mxu0 %v2647
    %2716 = vmatpush.bf16.msra.mxu0 %v2645
    %2717 = vmatmul.bf16.gmra.mxu0 %v2514
    %v2718 = vpop.f32.mrf.mxu0
    %v2719 = vadd.f32 0.0, %v2718
    %v2720 = vpop.f32.mrf.mxu0
    %2721 = vdwg.mxu0
    %2722 = vmatpush.bf16.msra.mxu0 %v2675
    %2723 = vmatpush.bf16.msra.mxu0 %v2673
    %2724 = vmatpush.bf16.msra.mxu0 %v2671
    %2725 = vmatpush.bf16.msra.mxu0 %v2669
    %2726 = vmatpush.bf16.msra.mxu0 %v2667
    %2727 = vmatpush.bf16.msra.mxu0 %v2665
    %2728 = vmatpush.bf16.msra.mxu0 %v2663
    %2729 = vmatpush.bf16.msra.mxu0 %v2661
    %2730 = vmatmul.bf16.gmra.mxu0 %v2515
    %v2731 = vpop.f32.mrf.mxu0
    %v2732 = vadd.f32 %v2719, %v2731
    %v2733 = vpop.f32.mrf.mxu0
    %2734 = vdwg.mxu0
    %2735 = vmatpush.bf16.msra.mxu0 %v2660
    %2736 = vmatpush.bf16.msra.mxu0 %v2658
    %2737 = vmatpush.bf16.msra.mxu0 %v2656
    %2738 = vmatpush.bf16.msra.mxu0 %v2654
    %2739 = vmatpush.bf16.msra.mxu0 %v2652
    %2740 = vmatpush.bf16.msra.mxu0 %v2650
    %2741 = vmatpush.bf16.msra.mxu0 %v2648
    %2742 = vmatpush.bf16.msra.mxu0 %v2646
    %2743 = vmatmul.bf16.gmra.mxu0 %v2514
    %v2744 = vpop.f32.mrf.mxu0
    %v2745 = vadd.f32 0.0, %v2744
    %v2746 = vpop.f32.mrf.mxu0
    %2747 = vdwg.mxu0
    %2748 = vmatpush.bf16.msra.mxu0 %v2676
    %2749 = vmatpush.bf16.msra.mxu0 %v2674
    %2750 = vmatpush.bf16.msra.mxu0 %v2672
    %2751 = vmatpush.bf16.msra.mxu0 %v2670
    %2752 = vmatpush.bf16.msra.mxu0 %v2668
    %2753 = vmatpush.bf16.msra.mxu0 %v2666
    %2754 = vmatpush.bf16.msra.mxu0 %v2664
    %2755 = vmatpush.bf16.msra.mxu0 %v2662
    %2756 = vmatmul.bf16.gmra.mxu0 %v2515
    %v2757 = vpop.f32.mrf.mxu0
    %v2758 = vadd.f32 %v2745, %v2757
    %v2759 = vpop.f32.mrf.mxu0
    %2760 = vdwg.mxu0
    %v2761 = vadd.f32 %v2481, %v2732
    %v2762 = vadd.f32 %v2482, %v2758
    %v2763 = vrot.slane %v2761, 4
    %v2764 = vadd.f32 %v2761, %v2763
    %v2765 = vrot.slane %v2764, 2
    %v2766 = vadd.f32 %v2764, %v2765
    %v2767 = vrot.slane %v2766, 1
    %v2768 = vadd.f32 %v2766, %v2767
    %v2769 = vrot.slane %v2762, 4
    %v2770 = vadd.f32 %v2762, %v2769
    %v2771 = vrot.slane %v2770, 2
    %v2772 = vadd.f32 %v2770, %v2771
    %v2773 = vrot.slane %v2772, 1
    %v2774 = vadd.f32 %v2772, %v2773
    %v2775 = vmul.f32 %v2761, %v2761
    %v2776 = vmul.f32 %v2762, %v2762
    %v2777 = vrot.slane %v2775, 4
    %v2778 = vadd.f32 %v2775, %v2777
    %v2779 = vrot.slane %v2778, 2
    %v2780 = vadd.f32 %v2778, %v2779
    %v2781 = vrot.slane %v2780, 1
    %v2782 = vadd.f32 %v2780, %v2781
    %v2783 = vrot.slane %v2776, 4
    %v2784 = vadd.f32 %v2776, %v2783
    %v2785 = vrot.slane %v2784, 2
    %v2786 = vadd.f32 %v2784, %v2785
    %v2787 = vrot.slane %v2786, 1
    %v2788 = vadd.f32 %v2786, %v2787
    %v2789 = vld [vmem:[%s23] sm:$0xff]
    %v2790 = vld [vmem:[%s23 + $0x8] sm:$0xff]
    %v2791 = vld [vmem:[%s23 + $0x10] sm:$0xff]
    %v2792 = vld [vmem:[%s23 + $0x18] sm:$0xff]
    %v2793 = vld [vmem:[%s23 + $0x20] sm:$0xff]
    %v2794 = vld [vmem:[%s23 + $0x28] sm:$0xff]
    %v2795 = vld [vmem:[%s23 + $0x30] sm:$0xff]
    %v2796 = vld [vmem:[%s23 + $0x38] sm:$0xff]
    %v2797 = vld [vmem:[%s23 + $0x40] sm:$0xff]
    %v2798 = vld [vmem:[%s23 + $0x48] sm:$0xff]
    %v2799 = vld [vmem:[%s23 + $0x50] sm:$0xff]
    %v2800 = vld [vmem:[%s23 + $0x58] sm:$0xff]
    %v2801 = vld [vmem:[%s23 + $0x60] sm:$0xff]
    %v2802 = vld [vmem:[%s23 + $0x68] sm:$0xff]
    %v2803 = vld [vmem:[%s23 + $0x70] sm:$0xff]
    %v2804 = vld [vmem:[%s23 + $0x78] sm:$0xff]
    %v2805 = vld [vmem:[%s23 + $0x80] sm:$0xff]
    %v2806 = vld [vmem:[%s23 + $0x88] sm:$0xff]
    %v2807 = vld [vmem:[%s23 + $0x90] sm:$0xff]
    %v2808 = vld [vmem:[%s23 + $0x98] sm:$0xff]
    %v2809 = vld [vmem:[%s23 + $0xa0] sm:$0xff]
    %v2810 = vld [vmem:[%s23 + $0xa8] sm:$0xff]
    %v2811 = vld [vmem:[%s23 + $0xb0] sm:$0xff]
    %v2812 = vld [vmem:[%s23 + $0xb8] sm:$0xff]
    %v2813 = vld [vmem:[%s23 + $0xc0] sm:$0xff]
    %v2814 = vld [vmem:[%s23 + $0xc8] sm:$0xff]
    %v2815 = vld [vmem:[%s23 + $0xd0] sm:$0xff]
    %v2816 = vld [vmem:[%s23 + $0xd8] sm:$0xff]
    %v2817 = vld [vmem:[%s23 + $0xe0] sm:$0xff]
    %v2818 = vld [vmem:[%s23 + $0xe8] sm:$0xff]
    %v2819 = vld [vmem:[%s23 + $0xf0] sm:$0xff]
    %v2820 = vld [vmem:[%s23 + $0xf8] sm:$0xff]
    %2821 = vmatpush.msra.mxu0 %v2804
    %2822 = vmatpush.msra.mxu0 %v2803
    %2823 = vmatpush.msra.mxu0 %v2802
    %2824 = vmatpush.msra.mxu0 %v2801
    %2825 = vmatpush.msra.mxu0 %v2800
    %2826 = vmatpush.msra.mxu0 %v2799
    %2827 = vmatpush.msra.mxu0 %v2798
    %2828 = vmatpush.msra.mxu0 %v2797
    %2829 = vmatpush.msra.mxu0 %v2796
    %2830 = vmatpush.msra.mxu0 %v2795
    %2831 = vmatpush.msra.mxu0 %v2794
    %2832 = vmatpush.msra.mxu0 %v2793
    %2833 = vmatpush.msra.mxu0 %v2792
    %2834 = vmatpush.msra.mxu0 %v2791
    %2835 = vmatpush.msra.mxu0 %v2790
    %2836 = vmatpush.msra.mxu0 %v2789
    %2837 = vmatmul.f32.gmra.mxu0 %v2768
    %v2838 = vpop.f32.mrf.mxu0
    %v2839 = vadd.f32 0.0, %v2838
    %2840 = vdwg.mxu0
    %2841 = vmatpush.msra.mxu0 %v2820
    %2842 = vmatpush.msra.mxu0 %v2819
    %2843 = vmatpush.msra.mxu0 %v2818
    %2844 = vmatpush.msra.mxu0 %v2817
    %2845 = vmatpush.msra.mxu0 %v2816
    %2846 = vmatpush.msra.mxu0 %v2815
    %2847 = vmatpush.msra.mxu0 %v2814
    %2848 = vmatpush.msra.mxu0 %v2813
    %2849 = vmatpush.msra.mxu0 %v2812
    %2850 = vmatpush.msra.mxu0 %v2811
    %2851 = vmatpush.msra.mxu0 %v2810
    %2852 = vmatpush.msra.mxu0 %v2809
    %2853 = vmatpush.msra.mxu0 %v2808
    %2854 = vmatpush.msra.mxu0 %v2807
    %2855 = vmatpush.msra.mxu0 %v2806
    %2856 = vmatpush.msra.mxu0 %v2805
    %2857 = vmatmul.f32.gmra.mxu0 %v2774
    %v2858 = vpop.f32.mrf.mxu0
    %v2859 = vadd.f32 %v2839, %v2858
    %2860 = vdwg.mxu0
    %v2861 = vmul.f32 %v2859, 0.03125
    %2862 = vmatpush.msra.mxu0 %v2804
    %2863 = vmatpush.msra.mxu0 %v2803
    %2864 = vmatpush.msra.mxu0 %v2802
    %2865 = vmatpush.msra.mxu0 %v2801
    %2866 = vmatpush.msra.mxu0 %v2800
    %2867 = vmatpush.msra.mxu0 %v2799
    %2868 = vmatpush.msra.mxu0 %v2798
    %2869 = vmatpush.msra.mxu0 %v2797
    %2870 = vmatpush.msra.mxu0 %v2796
    %2871 = vmatpush.msra.mxu0 %v2795
    %2872 = vmatpush.msra.mxu0 %v2794
    %2873 = vmatpush.msra.mxu0 %v2793
    %2874 = vmatpush.msra.mxu0 %v2792
    %2875 = vmatpush.msra.mxu0 %v2791
    %2876 = vmatpush.msra.mxu0 %v2790
    %2877 = vmatpush.msra.mxu0 %v2789
    %2878 = vmatmul.f32.gmra.mxu0 %v2782
    %v2879 = vpop.f32.mrf.mxu0
    %v2880 = vadd.f32 0.0, %v2879
    %2881 = vdwg.mxu0
    %2882 = vmatpush.msra.mxu0 %v2820
    %2883 = vmatpush.msra.mxu0 %v2819
    %2884 = vmatpush.msra.mxu0 %v2818
    %2885 = vmatpush.msra.mxu0 %v2817
    %2886 = vmatpush.msra.mxu0 %v2816
    %2887 = vmatpush.msra.mxu0 %v2815
    %2888 = vmatpush.msra.mxu0 %v2814
    %2889 = vmatpush.msra.mxu0 %v2813
    %2890 = vmatpush.msra.mxu0 %v2812
    %2891 = vmatpush.msra.mxu0 %v2811
    %2892 = vmatpush.msra.mxu0 %v2810
    %2893 = vmatpush.msra.mxu0 %v2809
    %2894 = vmatpush.msra.mxu0 %v2808
    %2895 = vmatpush.msra.mxu0 %v2807
    %2896 = vmatpush.msra.mxu0 %v2806
    %2897 = vmatpush.msra.mxu0 %v2805
    %2898 = vmatmul.f32.gmra.mxu0 %v2788
    %v2899 = vpop.f32.mrf.mxu0
    %v2900 = vadd.f32 %v2880, %v2899
    %2901 = vdwg.mxu0
    %v2902 = vmul.f32 %v2900, 0.03125
    %v2903 = vmul.f32 %v2861, %v2861
    %v2904 = vsub.f32 %v2902, %v2903
    %v2905 = vmax.f32 %v2904, 0.0
    %v2906 = vld [vmem:[%s27] sm:$0x1]
    %v2907 = vadd.f32 %v2905, 1e-05
    %v2908 = vrsqrt.pop %v2907
    %v2909 = vmul.f32 %v2908, %v2907
    %v2910 = vmul.f32 %v2909, %v2908
    %v2911 = vmul.f32 0.5, %v2910
    %v2912 = vsub.f32 1.5, %v2911
    %v2913 = vmul.f32 %v2908, %v2912
    %vm2914 = vweird.f32 %v2907
    %vm2915 = vweird.f32 %v2908
    %vm2916 = vmor %vm2914, %vm2915
    %v2917 = vsel %vm2916, %v2908, %v2913
    %v2918 = vmul.f32 %v2906, %v2917
    %v2919 = vld [vmem:[%s29] sm:$0x1]
    %v2920 = vmul.f32 %v2861, %v2918
    %v2921 = vsub.f32 %v2919, %v2920
    %v2922 = vld [vmem:[%s25] sm:$0xff]
    %v2923 = vld [vmem:[%s25 + $0x8] sm:$0xff]
    %v2924 = vld [vmem:[%s25 + $0x10] sm:$0xff]
    %v2925 = vld [vmem:[%s25 + $0x18] sm:$0xff]
    %v2926 = vld [vmem:[%s25 + $0x20] sm:$0xff]
    %v2927 = vld [vmem:[%s25 + $0x28] sm:$0xff]
    %v2928 = vld [vmem:[%s25 + $0x30] sm:$0xff]
    %v2929 = vld [vmem:[%s25 + $0x38] sm:$0xff]
    %v2930 = vld [vmem:[%s25 + $0x40] sm:$0xff]
    %v2931 = vld [vmem:[%s25 + $0x48] sm:$0xff]
    %v2932 = vld [vmem:[%s25 + $0x50] sm:$0xff]
    %v2933 = vld [vmem:[%s25 + $0x58] sm:$0xff]
    %v2934 = vld [vmem:[%s25 + $0x60] sm:$0xff]
    %v2935 = vld [vmem:[%s25 + $0x68] sm:$0xff]
    %v2936 = vld [vmem:[%s25 + $0x70] sm:$0xff]
    %v2937 = vld [vmem:[%s25 + $0x78] sm:$0xff]
    %v2939 = vsel %vm280, %v2918, 0
    %2941 = vmatpush.msra.mxu0 0.0
    %2942 = vmatpush.msra.mxu0 0.0
    %2943 = vmatpush.msra.mxu0 0.0
    %2944 = vmatpush.msra.mxu0 0.0
    %2945 = vmatpush.msra.mxu0 0.0
    %2946 = vmatpush.msra.mxu0 0.0
    %2947 = vmatpush.msra.mxu0 0.0
    %2948 = vmatpush.msra.mxu0 0.0
    %2949 = vmatpush.msra.mxu0 %v2936
    %2950 = vmatpush.msra.mxu0 %v2934
    %2951 = vmatpush.msra.mxu0 %v2932
    %2952 = vmatpush.msra.mxu0 %v2930
    %2953 = vmatpush.msra.mxu0 %v2928
    %2954 = vmatpush.msra.mxu0 %v2926
    %2955 = vmatpush.msra.mxu0 %v2924
    %2956 = vmatpush.msra.mxu0 %v2922
    %2957 = vmatmul.f32.gmra.mxu0 %v2939
    %v2958 = vpop.f32.mrf.mxu0
    %v2959 = vadd.f32 0.0, %v2958
    %2960 = vdwg.mxu0
    %2961 = vmatpush.msra.mxu0 0.0
    %2962 = vmatpush.msra.mxu0 0.0
    %2963 = vmatpush.msra.mxu0 0.0
    %2964 = vmatpush.msra.mxu0 0.0
    %2965 = vmatpush.msra.mxu0 0.0
    %2966 = vmatpush.msra.mxu0 0.0
    %2967 = vmatpush.msra.mxu0 0.0
    %2968 = vmatpush.msra.mxu0 0.0
    %2969 = vmatpush.msra.mxu0 %v2937
    %2970 = vmatpush.msra.mxu0 %v2935
    %2971 = vmatpush.msra.mxu0 %v2933
    %2972 = vmatpush.msra.mxu0 %v2931
    %2973 = vmatpush.msra.mxu0 %v2929
    %2974 = vmatpush.msra.mxu0 %v2927
    %2975 = vmatpush.msra.mxu0 %v2925
    %2976 = vmatpush.msra.mxu0 %v2923
    %2977 = vmatmul.f32.gmra.mxu0 %v2939
    %v2978 = vpop.f32.mrf.mxu0
    %v2979 = vadd.f32 0.0, %v2978
    %2980 = vdwg.mxu0
    %v2981 = vperm.slane %v2959, 0
    %v2982 = vperm.slane %v2979, 0
    %v2983 = vmul.f32 %v2761, %v2981
    %v2984 = vmul.f32 %v2762, %v2982
    %v2986 = vsel %vm280, %v2921, 0
    %2988 = vmatpush.msra.mxu0 0.0
    %2989 = vmatpush.msra.mxu0 0.0
    %2990 = vmatpush.msra.mxu0 0.0
    %2991 = vmatpush.msra.mxu0 0.0
    %2992 = vmatpush.msra.mxu0 0.0
    %2993 = vmatpush.msra.mxu0 0.0
    %2994 = vmatpush.msra.mxu0 0.0
    %2995 = vmatpush.msra.mxu0 0.0
    %2996 = vmatpush.msra.mxu0 %v2936
    %2997 = vmatpush.msra.mxu0 %v2934
    %2998 = vmatpush.msra.mxu0 %v2932
    %2999 = vmatpush.msra.mxu0 %v2930
    %3000 = vmatpush.msra.mxu0 %v2928
    %3001 = vmatpush.msra.mxu0 %v2926
    %3002 = vmatpush.msra.mxu0 %v2924
    %3003 = vmatpush.msra.mxu0 %v2922
    %3004 = vmatmul.f32.gmra.mxu0 %v2986
    %v3005 = vpop.f32.mrf.mxu0
    %v3006 = vadd.f32 0.0, %v3005
    %3007 = vdwg.mxu0
    %3008 = vmatpush.msra.mxu0 0.0
    %3009 = vmatpush.msra.mxu0 0.0
    %3010 = vmatpush.msra.mxu0 0.0
    %3011 = vmatpush.msra.mxu0 0.0
    %3012 = vmatpush.msra.mxu0 0.0
    %3013 = vmatpush.msra.mxu0 0.0
    %3014 = vmatpush.msra.mxu0 0.0
    %3015 = vmatpush.msra.mxu0 0.0
    %3016 = vmatpush.msra.mxu0 %v2937
    %3017 = vmatpush.msra.mxu0 %v2935
    %3018 = vmatpush.msra.mxu0 %v2933
    %3019 = vmatpush.msra.mxu0 %v2931
    %3020 = vmatpush.msra.mxu0 %v2929
    %3021 = vmatpush.msra.mxu0 %v2927
    %3022 = vmatpush.msra.mxu0 %v2925
    %3023 = vmatpush.msra.mxu0 %v2923
    %3024 = vmatmul.f32.gmra.mxu0 %v2986
    %v3025 = vpop.f32.mrf.mxu0
    %v3026 = vadd.f32 0.0, %v3025
    %3027 = vdwg.mxu0
    %v3028 = vperm.slane %v3006, 0
    %v3029 = vperm.slane %v3026, 0
    %v3030 = vadd.f32 %v2983, %v3028
    %v3031 = vadd.f32 %v2984, %v3029
    %vm3032 = vcmp.ge.f32.partialorder %v3030, 0.0
    %vm3033 = vcmp.ge.f32.partialorder %v3031, 0.0
    %v3034 = vmul.f32 %v3030, 0.2
    %v3035 = vmul.f32 %v3031, 0.2
    %v3036 = vsel %vm3032, %v3030, %v3034
    %v3037 = vsel %vm3033, %v3031, %v3035
    %v3038 = vpack.c.bf16 %v3036, %v3036
    %v3039 = vpack.c.bf16 %v3037, %v3037
    %v3040 = vld [vmem:[%s31] sm:$0x3]
    %vm3041 = vcmask 64512
    %v3043 = vsel %vm3041, %v3040, 0
    %vm3045 = vcmask 1043456
    %v3047 = vsel %vm3045, %v3038, 0
    %v3050 = vsel %vm3045, %v3039, 0
    %3052 = vmatpush.bf16.msra.mxu0 0
    %3053 = vmatpush.bf16.msra.mxu0 0
    %3054 = vmatpush.bf16.msra.mxu0 0
    %3055 = vmatpush.bf16.msra.mxu0 0
    %3056 = vmatpush.bf16.msra.mxu0 0
    %3057 = vmatpush.bf16.msra.mxu0 0
    %3058 = vmatpush.bf16.msra.mxu0 0
    %3059 = vmatpush.bf16.msra.mxu0 %v3047
    %3060 = vmatmul.bf16.gmra.mxu0 %v3043
    %v3061 = vpop.f32.mrf.mxu0
    %v3062 = vadd.f32 0.0, %v3061
    %v3063 = vpop.f32.mrf.mxu0
    %3064 = vdwg.mxu0
    %3065 = vmatpush.bf16.msra.mxu0 0
    %3066 = vmatpush.bf16.msra.mxu0 0
    %3067 = vmatpush.bf16.msra.mxu0 0
    %3068 = vmatpush.bf16.msra.mxu0 0
    %3069 = vmatpush.bf16.msra.mxu0 0
    %3070 = vmatpush.bf16.msra.mxu0 0
    %3071 = vmatpush.bf16.msra.mxu0 0
    %3072 = vmatpush.bf16.msra.mxu0 %v3050
    %3073 = vmatmul.bf16.gmra.mxu0 %v3043
    %v3074 = vpop.f32.mrf.mxu0
    %v3075 = vadd.f32 0.0, %v3074
    %v3076 = vpop.f32.mrf.mxu0
    %3077 = vdwg.mxu0
    %v3078 = vpack.c.bf16 %v3062, %v3062
    %v3079 = vpack.c.bf16 %v3075, %v3075
    %v3080 = vld [vmem:[#allocation4] sm:$0xff]
    %v3081 = vld [vmem:[#allocation4 + $0x8] sm:$0xff]
    %v3082 = vld [vmem:[#allocation4 + $0x10] sm:$0xff]
    %v3083 = vld [vmem:[#allocation4 + $0x18] sm:$0xff]
    %v3084 = vld [vmem:[#allocation4 + $0x20] sm:$0xff]
    %v3085 = vld [vmem:[#allocation4 + $0x28] sm:$0xff]
    %v3086 = vld [vmem:[#allocation4 + $0x30] sm:$0xff]
    %v3087 = vld [vmem:[#allocation4 + $0x38] sm:$0xff]
    %v3088 = vld [vmem:[#allocation4 + $0x40] sm:$0xff]
    %v3089 = vld [vmem:[#allocation4 + $0x48] sm:$0xff]
    %v3090 = vld [vmem:[#allocation4 + $0x50] sm:$0xff]
    %v3091 = vld [vmem:[#allocation4 + $0x58] sm:$0xff]
    %v3092 = vld [vmem:[#allocation4 + $0x60] sm:$0xff]
    %v3093 = vld [vmem:[#allocation4 + $0x68] sm:$0xff]
    %v3094 = vld [vmem:[#allocation4 + $0x70] sm:$0xff]
    %v3095 = vld [vmem:[#allocation4 + $0x78] sm:$0xff]
    %v3096 = vld [vmem:[#allocation4 + $0x80] sm:$0xff]
    %v3097 = vld [vmem:[#allocation4 + $0x88] sm:$0xff]
    %v3098 = vld [vmem:[#allocation4 + $0x90] sm:$0xff]
    %v3099 = vld [vmem:[#allocation4 + $0x98] sm:$0xff]
    %v3100 = vld [vmem:[#allocation4 + $0xa0] sm:$0xff]
    %v3101 = vld [vmem:[#allocation4 + $0xa8] sm:$0xff]
    %v3102 = vld [vmem:[#allocation4 + $0xb0] sm:$0xff]
    %v3103 = vld [vmem:[#allocation4 + $0xb8] sm:$0xff]
    %v3104 = vld [vmem:[#allocation4 + $0xc0] sm:$0xff]
    %v3105 = vld [vmem:[#allocation4 + $0xc8] sm:$0xff]
    %v3106 = vld [vmem:[#allocation4 + $0xd0] sm:$0xff]
    %v3107 = vld [vmem:[#allocation4 + $0xd8] sm:$0xff]
    %v3108 = vld [vmem:[#allocation4 + $0xe0] sm:$0xff]
    %v3109 = vld [vmem:[#allocation4 + $0xe8] sm:$0xff]
    %v3110 = vld [vmem:[#allocation4 + $0xf0] sm:$0xff]
    %v3111 = vld [vmem:[#allocation4 + $0xf8] sm:$0xff]
    %s3112 = scalar_lea.vmem %s31, 2
    %v3113 = vld [vmem:[%s3112] sm:$0x3]
    %v3115 = vsel %vm3041, %v3113, 0
    %3117 = vmatpush.bf16.msra.mxu0 0
    %3118 = vmatpush.bf16.msra.mxu0 0
    %3119 = vmatpush.bf16.msra.mxu0 0
    %3120 = vmatpush.bf16.msra.mxu0 0
    %3121 = vmatpush.bf16.msra.mxu0 0
    %3122 = vmatpush.bf16.msra.mxu0 0
    %3123 = vmatpush.bf16.msra.mxu0 0
    %3124 = vmatpush.bf16.msra.mxu0 %v3047
    %3125 = vmatmul.bf16.gmra.mxu0 %v3115
    %v3126 = vpop.f32.mrf.mxu0
    %v3127 = vadd.f32 0.0, %v3126
    %v3128 = vpop.f32.mrf.mxu0
    %3129 = vdwg.mxu0
    %3130 = vmatpush.bf16.msra.mxu0 0
    %3131 = vmatpush.bf16.msra.mxu0 0
    %3132 = vmatpush.bf16.msra.mxu0 0
    %3133 = vmatpush.bf16.msra.mxu0 0
    %3134 = vmatpush.bf16.msra.mxu0 0
    %3135 = vmatpush.bf16.msra.mxu0 0
    %3136 = vmatpush.bf16.msra.mxu0 0
    %3137 = vmatpush.bf16.msra.mxu0 %v3050
    %3138 = vmatmul.bf16.gmra.mxu0 %v3115
    %v3139 = vpop.f32.mrf.mxu0
    %v3140 = vadd.f32 0.0, %v3139
    %v3141 = vpop.f32.mrf.mxu0
    %3142 = vdwg.mxu0
    %v3143 = vpack.c.bf16 %v3127, %v3127
    %v3144 = vpack.c.bf16 %v3140, %v3140
    %s3145 = scalar_lea.vmem [#allocation4], 256
    %v3146 = vld [vmem:[%s3145] sm:$0xff]
    %v3147 = vld [vmem:[%s3145 + $0x8] sm:$0xff]
    %v3148 = vld [vmem:[%s3145 + $0x10] sm:$0xff]
    %v3149 = vld [vmem:[%s3145 + $0x18] sm:$0xff]
    %v3150 = vld [vmem:[%s3145 + $0x20] sm:$0xff]
    %v3151 = vld [vmem:[%s3145 + $0x28] sm:$0xff]
    %v3152 = vld [vmem:[%s3145 + $0x30] sm:$0xff]
    %v3153 = vld [vmem:[%s3145 + $0x38] sm:$0xff]
    %v3154 = vld [vmem:[%s3145 + $0x40] sm:$0xff]
    %v3155 = vld [vmem:[%s3145 + $0x48] sm:$0xff]
    %v3156 = vld [vmem:[%s3145 + $0x50] sm:$0xff]
    %v3157 = vld [vmem:[%s3145 + $0x58] sm:$0xff]
    %v3158 = vld [vmem:[%s3145 + $0x60] sm:$0xff]
    %v3159 = vld [vmem:[%s3145 + $0x68] sm:$0xff]
    %v3160 = vld [vmem:[%s3145 + $0x70] sm:$0xff]
    %v3161 = vld [vmem:[%s3145 + $0x78] sm:$0xff]
    %v3162 = vld [vmem:[%s3145 + $0x80] sm:$0xff]
    %v3163 = vld [vmem:[%s3145 + $0x88] sm:$0xff]
    %v3164 = vld [vmem:[%s3145 + $0x90] sm:$0xff]
    %v3165 = vld [vmem:[%s3145 + $0x98] sm:$0xff]
    %v3166 = vld [vmem:[%s3145 + $0xa0] sm:$0xff]
    %v3167 = vld [vmem:[%s3145 + $0xa8] sm:$0xff]
    %v3168 = vld [vmem:[%s3145 + $0xb0] sm:$0xff]
    %v3169 = vld [vmem:[%s3145 + $0xb8] sm:$0xff]
    %v3170 = vld [vmem:[%s3145 + $0xc0] sm:$0xff]
    %v3171 = vld [vmem:[%s3145 + $0xc8] sm:$0xff]
    %v3172 = vld [vmem:[%s3145 + $0xd0] sm:$0xff]
    %v3173 = vld [vmem:[%s3145 + $0xd8] sm:$0xff]
    %v3174 = vld [vmem:[%s3145 + $0xe0] sm:$0xff]
    %v3175 = vld [vmem:[%s3145 + $0xe8] sm:$0xff]
    %v3176 = vld [vmem:[%s3145 + $0xf0] sm:$0xff]
    %v3177 = vld [vmem:[%s3145 + $0xf8] sm:$0xff]
    %v3210 = vunpack.c.l.b16 %v3146
    %v3211 = vunpack.c.h.b16 %v3146
    %v3212 = vunpack.c.l.b16 %v3147
    %v3213 = vunpack.c.h.b16 %v3147
    %v3214 = vunpack.c.l.b16 %v3148
    %v3215 = vunpack.c.h.b16 %v3148
    %v3216 = vunpack.c.l.b16 %v3149
    %v3217 = vunpack.c.h.b16 %v3149
    %v3218 = vunpack.c.l.b16 %v3150
    %v3219 = vunpack.c.h.b16 %v3150
    %v3220 = vunpack.c.l.b16 %v3151
    %v3221 = vunpack.c.h.b16 %v3151
    %v3222 = vunpack.c.l.b16 %v3152
    %v3223 = vunpack.c.h.b16 %v3152
    %v3224 = vunpack.c.l.b16 %v3153
    %v3225 = vunpack.c.h.b16 %v3153
    %v3226 = vunpack.c.l.b16 %v3154
    %v3227 = vunpack.c.h.b16 %v3154
    %v3228 = vunpack.c.l.b16 %v3155
    %v3229 = vunpack.c.h.b16 %v3155
    %v3230 = vunpack.c.l.b16 %v3156
    %v3231 = vunpack.c.h.b16 %v3156
    %v3232 = vunpack.c.l.b16 %v3157
    %v3233 = vunpack.c.h.b16 %v3157
    %v3234 = vunpack.c.l.b16 %v3158
    %v3235 = vunpack.c.h.b16 %v3158
    %v3236 = vunpack.c.l.b16 %v3159
    %v3237 = vunpack.c.h.b16 %v3159
    %v3238 = vunpack.c.l.b16 %v3160
    %v3239 = vunpack.c.h.b16 %v3160
    %v3240 = vunpack.c.l.b16 %v3161
    %v3241 = vunpack.c.h.b16 %v3161
    %v3242 = vunpack.c.l.b16 %v3162
    %v3243 = vunpack.c.h.b16 %v3162
    %v3244 = vunpack.c.l.b16 %v3163
    %v3245 = vunpack.c.h.b16 %v3163
    %v3246 = vunpack.c.l.b16 %v3164
    %v3247 = vunpack.c.h.b16 %v3164
    %v3248 = vunpack.c.l.b16 %v3165
    %v3249 = vunpack.c.h.b16 %v3165
    %v3250 = vunpack.c.l.b16 %v3166
    %v3251 = vunpack.c.h.b16 %v3166
    %v3252 = vunpack.c.l.b16 %v3167
    %v3253 = vunpack.c.h.b16 %v3167
    %v3254 = vunpack.c.l.b16 %v3168
    %v3255 = vunpack.c.h.b16 %v3168
    %v3256 = vunpack.c.l.b16 %v3169
    %v3257 = vunpack.c.h.b16 %v3169
    %v3258 = vunpack.c.l.b16 %v3170
    %v3259 = vunpack.c.h.b16 %v3170
    %v3260 = vunpack.c.l.b16 %v3171
    %v3261 = vunpack.c.h.b16 %v3171
    %v3262 = vunpack.c.l.b16 %v3172
    %v3263 = vunpack.c.h.b16 %v3172
    %v3264 = vunpack.c.l.b16 %v3173
    %v3265 = vunpack.c.h.b16 %v3173
    %v3266 = vunpack.c.l.b16 %v3174
    %v3267 = vunpack.c.h.b16 %v3174
    %v3268 = vunpack.c.l.b16 %v3175
    %v3269 = vunpack.c.h.b16 %v3175
    %v3270 = vunpack.c.l.b16 %v3176
    %v3271 = vunpack.c.h.b16 %v3176
    %v3272 = vunpack.c.l.b16 %v3177
    %v3273 = vunpack.c.h.b16 %v3177
    %v3274 = vpack.c.b16 %v3212, %v3210
    %v3275 = vpack.c.b16 %v3213, %v3211
    %v3276 = vpack.c.b16 %v3216, %v3214
    %v3277 = vpack.c.b16 %v3217, %v3215
    %v3278 = vpack.c.b16 %v3220, %v3218
    %v3279 = vpack.c.b16 %v3221, %v3219
    %v3280 = vpack.c.b16 %v3224, %v3222
    %v3281 = vpack.c.b16 %v3225, %v3223
    %v3282 = vpack.c.b16 %v3228, %v3226
    %v3283 = vpack.c.b16 %v3229, %v3227
    %v3284 = vpack.c.b16 %v3232, %v3230
    %v3285 = vpack.c.b16 %v3233, %v3231
    %v3286 = vpack.c.b16 %v3236, %v3234
    %v3287 = vpack.c.b16 %v3237, %v3235
    %v3288 = vpack.c.b16 %v3240, %v3238
    %v3289 = vpack.c.b16 %v3241, %v3239
    %v3290 = vpack.c.b16 %v3244, %v3242
    %v3291 = vpack.c.b16 %v3245, %v3243
    %v3292 = vpack.c.b16 %v3248, %v3246
    %v3293 = vpack.c.b16 %v3249, %v3247
    %v3294 = vpack.c.b16 %v3252, %v3250
    %v3295 = vpack.c.b16 %v3253, %v3251
    %v3296 = vpack.c.b16 %v3256, %v3254
    %v3297 = vpack.c.b16 %v3257, %v3255
    %v3298 = vpack.c.b16 %v3260, %v3258
    %v3299 = vpack.c.b16 %v3261, %v3259
    %v3300 = vpack.c.b16 %v3264, %v3262
    %v3301 = vpack.c.b16 %v3265, %v3263
    %v3302 = vpack.c.b16 %v3268, %v3266
    %v3303 = vpack.c.b16 %v3269, %v3267
    %v3304 = vpack.c.b16 %v3272, %v3270
    %v3305 = vpack.c.b16 %v3273, %v3271
    %3338 = vmatpush.bf16.msra.mxu0 %v3288
    %3339 = vmatpush.bf16.msra.mxu0 %v3286
    %3340 = vmatpush.bf16.msra.mxu0 %v3284
    %3341 = vmatpush.bf16.msra.mxu0 %v3282
    %3342 = vmatpush.bf16.msra.mxu0 %v3280
    %3343 = vmatpush.bf16.msra.mxu0 %v3278
    %3344 = vmatpush.bf16.msra.mxu0 %v3276
    %3345 = vmatpush.bf16.msra.mxu0 %v3274
    %3346 = vmatmul.bf16.gmra.mxu0 %v3143
    %v3347 = vpop.f32.mrf.mxu0
    %v3348 = vadd.f32 0.0, %v3347
    %v3349 = vpop.f32.mrf.mxu0
    %3350 = vdwg.mxu0
    %3351 = vmatpush.bf16.msra.mxu0 %v3304
    %3352 = vmatpush.bf16.msra.mxu0 %v3302
    %3353 = vmatpush.bf16.msra.mxu0 %v3300
    %3354 = vmatpush.bf16.msra.mxu0 %v3298
    %3355 = vmatpush.bf16.msra.mxu0 %v3296
    %3356 = vmatpush.bf16.msra.mxu0 %v3294
    %3357 = vmatpush.bf16.msra.mxu0 %v3292
    %3358 = vmatpush.bf16.msra.mxu0 %v3290
    %3359 = vmatmul.bf16.gmra.mxu0 %v3144
    %v3360 = vpop.f32.mrf.mxu0
    %v3361 = vadd.f32 %v3348, %v3360
    %v3362 = vpop.f32.mrf.mxu0
    %3363 = vdwg.mxu0
    %3364 = vmatpush.bf16.msra.mxu0 %v3289
    %3365 = vmatpush.bf16.msra.mxu0 %v3287
    %3366 = vmatpush.bf16.msra.mxu0 %v3285
    %3367 = vmatpush.bf16.msra.mxu0 %v3283
    %3368 = vmatpush.bf16.msra.mxu0 %v3281
    %3369 = vmatpush.bf16.msra.mxu0 %v3279
    %3370 = vmatpush.bf16.msra.mxu0 %v3277
    %3371 = vmatpush.bf16.msra.mxu0 %v3275
    %3372 = vmatmul.bf16.gmra.mxu0 %v3143
    %v3373 = vpop.f32.mrf.mxu0
    %v3374 = vadd.f32 0.0, %v3373
    %v3375 = vpop.f32.mrf.mxu0
    %3376 = vdwg.mxu0
    %3377 = vmatpush.bf16.msra.mxu0 %v3305
    %3378 = vmatpush.bf16.msra.mxu0 %v3303
    %3379 = vmatpush.bf16.msra.mxu0 %v3301
    %3380 = vmatpush.bf16.msra.mxu0 %v3299
    %3381 = vmatpush.bf16.msra.mxu0 %v3297
    %3382 = vmatpush.bf16.msra.mxu0 %v3295
    %3383 = vmatpush.bf16.msra.mxu0 %v3293
    %3384 = vmatpush.bf16.msra.mxu0 %v3291
    %3385 = vmatmul.bf16.gmra.mxu0 %v3144
    %v3386 = vpop.f32.mrf.mxu0
    %v3387 = vadd.f32 %v3374, %v3386
    %v3388 = vpop.f32.mrf.mxu0
    %3389 = vdwg.mxu0
    %v3422 = vunpack.c.l.b16 %v3080
    %v3423 = vunpack.c.h.b16 %v3080
    %v3424 = vunpack.c.l.b16 %v3081
    %v3425 = vunpack.c.h.b16 %v3081
    %v3426 = vunpack.c.l.b16 %v3082
    %v3427 = vunpack.c.h.b16 %v3082
    %v3428 = vunpack.c.l.b16 %v3083
    %v3429 = vunpack.c.h.b16 %v3083
    %v3430 = vunpack.c.l.b16 %v3084
    %v3431 = vunpack.c.h.b16 %v3084
    %v3432 = vunpack.c.l.b16 %v3085
    %v3433 = vunpack.c.h.b16 %v3085
    %v3434 = vunpack.c.l.b16 %v3086
    %v3435 = vunpack.c.h.b16 %v3086
    %v3436 = vunpack.c.l.b16 %v3087
    %v3437 = vunpack.c.h.b16 %v3087
    %v3438 = vunpack.c.l.b16 %v3088
    %v3439 = vunpack.c.h.b16 %v3088
    %v3440 = vunpack.c.l.b16 %v3089
    %v3441 = vunpack.c.h.b16 %v3089
    %v3442 = vunpack.c.l.b16 %v3090
    %v3443 = vunpack.c.h.b16 %v3090
    %v3444 = vunpack.c.l.b16 %v3091
    %v3445 = vunpack.c.h.b16 %v3091
    %v3446 = vunpack.c.l.b16 %v3092
    %v3447 = vunpack.c.h.b16 %v3092
    %v3448 = vunpack.c.l.b16 %v3093
    %v3449 = vunpack.c.h.b16 %v3093
    %v3450 = vunpack.c.l.b16 %v3094
    %v3451 = vunpack.c.h.b16 %v3094
    %v3452 = vunpack.c.l.b16 %v3095
    %v3453 = vunpack.c.h.b16 %v3095
    %v3454 = vunpack.c.l.b16 %v3096
    %v3455 = vunpack.c.h.b16 %v3096
    %v3456 = vunpack.c.l.b16 %v3097
    %v3457 = vunpack.c.h.b16 %v3097
    %v3458 = vunpack.c.l.b16 %v3098
    %v3459 = vunpack.c.h.b16 %v3098
    %v3460 = vunpack.c.l.b16 %v3099
    %v3461 = vunpack.c.h.b16 %v3099
    %v3462 = vunpack.c.l.b16 %v3100
    %v3463 = vunpack.c.h.b16 %v3100
    %v3464 = vunpack.c.l.b16 %v3101
    %v3465 = vunpack.c.h.b16 %v3101
    %v3466 = vunpack.c.l.b16 %v3102
    %v3467 = vunpack.c.h.b16 %v3102
    %v3468 = vunpack.c.l.b16 %v3103
    %v3469 = vunpack.c.h.b16 %v3103
    %v3470 = vunpack.c.l.b16 %v3104
    %v3471 = vunpack.c.h.b16 %v3104
    %v3472 = vunpack.c.l.b16 %v3105
    %v3473 = vunpack.c.h.b16 %v3105
    %v3474 = vunpack.c.l.b16 %v3106
    %v3475 = vunpack.c.h.b16 %v3106
    %v3476 = vunpack.c.l.b16 %v3107
    %v3477 = vunpack.c.h.b16 %v3107
    %v3478 = vunpack.c.l.b16 %v3108
    %v3479 = vunpack.c.h.b16 %v3108
    %v3480 = vunpack.c.l.b16 %v3109
    %v3481 = vunpack.c.h.b16 %v3109
    %v3482 = vunpack.c.l.b16 %v3110
    %v3483 = vunpack.c.h.b16 %v3110
    %v3484 = vunpack.c.l.b16 %v3111
    %v3485 = vunpack.c.h.b16 %v3111
    %v3486 = vpack.c.b16 %v3424, %v3422
    %v3487 = vpack.c.b16 %v3425, %v3423
    %v3488 = vpack.c.b16 %v3428, %v3426
    %v3489 = vpack.c.b16 %v3429, %v3427
    %v3490 = vpack.c.b16 %v3432, %v3430
    %v3491 = vpack.c.b16 %v3433, %v3431
    %v3492 = vpack.c.b16 %v3436, %v3434
    %v3493 = vpack.c.b16 %v3437, %v3435
    %v3494 = vpack.c.b16 %v3440, %v3438
    %v3495 = vpack.c.b16 %v3441, %v3439
    %v3496 = vpack.c.b16 %v3444, %v3442
    %v3497 = vpack.c.b16 %v3445, %v3443
    %v3498 = vpack.c.b16 %v3448, %v3446
    %v3499 = vpack.c.b16 %v3449, %v3447
    %v3500 = vpack.c.b16 %v3452, %v3450
    %v3501 = vpack.c.b16 %v3453, %v3451
    %v3502 = vpack.c.b16 %v3456, %v3454
    %v3503 = vpack.c.b16 %v3457, %v3455
    %v3504 = vpack.c.b16 %v3460, %v3458
    %v3505 = vpack.c.b16 %v3461, %v3459
    %v3506 = vpack.c.b16 %v3464, %v3462
    %v3507 = vpack.c.b16 %v3465, %v3463
    %v3508 = vpack.c.b16 %v3468, %v3466
    %v3509 = vpack.c.b16 %v3469, %v3467
    %v3510 = vpack.c.b16 %v3472, %v3470
    %v3511 = vpack.c.b16 %v3473, %v3471
    %v3512 = vpack.c.b16 %v3476, %v3474
    %v3513 = vpack.c.b16 %v3477, %v3475
    %v3514 = vpack.c.b16 %v3480, %v3478
    %v3515 = vpack.c.b16 %v3481, %v3479
    %v3516 = vpack.c.b16 %v3484, %v3482
    %v3517 = vpack.c.b16 %v3485, %v3483
    %3550 = vmatpush.bf16.msra.mxu0 %v3500
    %3551 = vmatpush.bf16.msra.mxu0 %v3498
    %3552 = vmatpush.bf16.msra.mxu0 %v3496
    %3553 = vmatpush.bf16.msra.mxu0 %v3494
    %3554 = vmatpush.bf16.msra.mxu0 %v3492
    %3555 = vmatpush.bf16.msra.mxu0 %v3490
    %3556 = vmatpush.bf16.msra.mxu0 %v3488
    %3557 = vmatpush.bf16.msra.mxu0 %v3486
    %3558 = vmatmul.bf16.gmra.mxu0 %v3078
    %v3559 = vpop.f32.mrf.mxu0
    %v3560 = vadd.f32 %v3361, %v3559
    %v3561 = vpop.f32.mrf.mxu0
    %3562 = vdwg.mxu0
    %3563 = vmatpush.bf16.msra.mxu0 %v3516
    %3564 = vmatpush.bf16.msra.mxu0 %v3514
    %3565 = vmatpush.bf16.msra.mxu0 %v3512
    %3566 = vmatpush.bf16.msra.mxu0 %v3510
    %3567 = vmatpush.bf16.msra.mxu0 %v3508
    %3568 = vmatpush.bf16.msra.mxu0 %v3506
    %3569 = vmatpush.bf16.msra.mxu0 %v3504
    %3570 = vmatpush.bf16.msra.mxu0 %v3502
    %3571 = vmatmul.bf16.gmra.mxu0 %v3079
    %v3572 = vpop.f32.mrf.mxu0
    %v3573 = vadd.f32 %v3560, %v3572
    %v3574 = vpop.f32.mrf.mxu0
    %3575 = vdwg.mxu0
    %3576 = vmatpush.bf16.msra.mxu0 %v3501
    %3577 = vmatpush.bf16.msra.mxu0 %v3499
    %3578 = vmatpush.bf16.msra.mxu0 %v3497
    %3579 = vmatpush.bf16.msra.mxu0 %v3495
    %3580 = vmatpush.bf16.msra.mxu0 %v3493
    %3581 = vmatpush.bf16.msra.mxu0 %v3491
    %3582 = vmatpush.bf16.msra.mxu0 %v3489
    %3583 = vmatpush.bf16.msra.mxu0 %v3487
    %3584 = vmatmul.bf16.gmra.mxu0 %v3078
    %v3585 = vpop.f32.mrf.mxu0
    %v3586 = vadd.f32 %v3387, %v3585
    %v3587 = vpop.f32.mrf.mxu0
    %3588 = vdwg.mxu0
    %3589 = vmatpush.bf16.msra.mxu0 %v3517
    %3590 = vmatpush.bf16.msra.mxu0 %v3515
    %3591 = vmatpush.bf16.msra.mxu0 %v3513
    %3592 = vmatpush.bf16.msra.mxu0 %v3511
    %3593 = vmatpush.bf16.msra.mxu0 %v3509
    %3594 = vmatpush.bf16.msra.mxu0 %v3507
    %3595 = vmatpush.bf16.msra.mxu0 %v3505
    %3596 = vmatpush.bf16.msra.mxu0 %v3503
    %3597 = vmatmul.bf16.gmra.mxu0 %v3079
    %v3598 = vpop.f32.mrf.mxu0
    %v3599 = vadd.f32 %v3586, %v3598
    %v3600 = vpop.f32.mrf.mxu0
    %3601 = vdwg.mxu0
    %s3602 = scalar_lea.vmem %s31, 4
    %v3603 = vld [vmem:[%s3602] sm:$0x3]
    %v3605 = vsel %vm3041, %v3603, 0
    %3607 = vmatpush.bf16.msra.mxu0 0
    %3608 = vmatpush.bf16.msra.mxu0 0
    %3609 = vmatpush.bf16.msra.mxu0 0
    %3610 = vmatpush.bf16.msra.mxu0 0
    %3611 = vmatpush.bf16.msra.mxu0 0
    %3612 = vmatpush.bf16.msra.mxu0 0
    %3613 = vmatpush.bf16.msra.mxu0 0
    %3614 = vmatpush.bf16.msra.mxu0 %v3047
    %3615 = vmatmul.bf16.gmra.mxu0 %v3605
    %v3616 = vpop.f32.mrf.mxu0
    %v3617 = vadd.f32 0.0, %v3616
    %v3618 = vpop.f32.mrf.mxu0
    %3619 = vdwg.mxu0
    %3620 = vmatpush.bf16.msra.mxu0 0
    %3621 = vmatpush.bf16.msra.mxu0 0
    %3622 = vmatpush.bf16.msra.mxu0 0
    %3623 = vmatpush.bf16.msra.mxu0 0
    %3624 = vmatpush.bf16.msra.mxu0 0
    %3625 = vmatpush.bf16.msra.mxu0 0
    %3626 = vmatpush.bf16.msra.mxu0 0
    %3627 = vmatpush.bf16.msra.mxu0 %v3050
    %3628 = vmatmul.bf16.gmra.mxu0 %v3605
    %v3629 = vpop.f32.mrf.mxu0
    %v3630 = vadd.f32 0.0, %v3629
    %v3631 = vpop.f32.mrf.mxu0
    %3632 = vdwg.mxu0
    %v3633 = vpack.c.bf16 %v3617, %v3617
    %v3634 = vpack.c.bf16 %v3630, %v3630
    %s3635 = scalar_lea.vmem [#allocation4], 512
    %v3636 = vld [vmem:[%s3635] sm:$0xff]
    %v3637 = vld [vmem:[%s3635 + $0x8] sm:$0xff]
    %v3638 = vld [vmem:[%s3635 + $0x10] sm:$0xff]
    %v3639 = vld [vmem:[%s3635 + $0x18] sm:$0xff]
    %v3640 = vld [vmem:[%s3635 + $0x20] sm:$0xff]
    %v3641 = vld [vmem:[%s3635 + $0x28] sm:$0xff]
    %v3642 = vld [vmem:[%s3635 + $0x30] sm:$0xff]
    %v3643 = vld [vmem:[%s3635 + $0x38] sm:$0xff]
    %v3644 = vld [vmem:[%s3635 + $0x40] sm:$0xff]
    %v3645 = vld [vmem:[%s3635 + $0x48] sm:$0xff]
    %v3646 = vld [vmem:[%s3635 + $0x50] sm:$0xff]
    %v3647 = vld [vmem:[%s3635 + $0x58] sm:$0xff]
    %v3648 = vld [vmem:[%s3635 + $0x60] sm:$0xff]
    %v3649 = vld [vmem:[%s3635 + $0x68] sm:$0xff]
    %v3650 = vld [vmem:[%s3635 + $0x70] sm:$0xff]
    %v3651 = vld [vmem:[%s3635 + $0x78] sm:$0xff]
    %v3652 = vld [vmem:[%s3635 + $0x80] sm:$0xff]
    %v3653 = vld [vmem:[%s3635 + $0x88] sm:$0xff]
    %v3654 = vld [vmem:[%s3635 + $0x90] sm:$0xff]
    %v3655 = vld [vmem:[%s3635 + $0x98] sm:$0xff]
    %v3656 = vld [vmem:[%s3635 + $0xa0] sm:$0xff]
    %v3657 = vld [vmem:[%s3635 + $0xa8] sm:$0xff]
    %v3658 = vld [vmem:[%s3635 + $0xb0] sm:$0xff]
    %v3659 = vld [vmem:[%s3635 + $0xb8] sm:$0xff]
    %v3660 = vld [vmem:[%s3635 + $0xc0] sm:$0xff]
    %v3661 = vld [vmem:[%s3635 + $0xc8] sm:$0xff]
    %v3662 = vld [vmem:[%s3635 + $0xd0] sm:$0xff]
    %v3663 = vld [vmem:[%s3635 + $0xd8] sm:$0xff]
    %v3664 = vld [vmem:[%s3635 + $0xe0] sm:$0xff]
    %v3665 = vld [vmem:[%s3635 + $0xe8] sm:$0xff]
    %v3666 = vld [vmem:[%s3635 + $0xf0] sm:$0xff]
    %v3667 = vld [vmem:[%s3635 + $0xf8] sm:$0xff]
    %v3700 = vunpack.c.l.b16 %v3636
    %v3701 = vunpack.c.h.b16 %v3636
    %v3702 = vunpack.c.l.b16 %v3637
    %v3703 = vunpack.c.h.b16 %v3637
    %v3704 = vunpack.c.l.b16 %v3638
    %v3705 = vunpack.c.h.b16 %v3638
    %v3706 = vunpack.c.l.b16 %v3639
    %v3707 = vunpack.c.h.b16 %v3639
    %v3708 = vunpack.c.l.b16 %v3640
    %v3709 = vunpack.c.h.b16 %v3640
    %v3710 = vunpack.c.l.b16 %v3641
    %v3711 = vunpack.c.h.b16 %v3641
    %v3712 = vunpack.c.l.b16 %v3642
    %v3713 = vunpack.c.h.b16 %v3642
    %v3714 = vunpack.c.l.b16 %v3643
    %v3715 = vunpack.c.h.b16 %v3643
    %v3716 = vunpack.c.l.b16 %v3644
    %v3717 = vunpack.c.h.b16 %v3644
    %v3718 = vunpack.c.l.b16 %v3645
    %v3719 = vunpack.c.h.b16 %v3645
    %v3720 = vunpack.c.l.b16 %v3646
    %v3721 = vunpack.c.h.b16 %v3646
    %v3722 = vunpack.c.l.b16 %v3647
    %v3723 = vunpack.c.h.b16 %v3647
    %v3724 = vunpack.c.l.b16 %v3648
    %v3725 = vunpack.c.h.b16 %v3648
    %v3726 = vunpack.c.l.b16 %v3649
    %v3727 = vunpack.c.h.b16 %v3649
    %v3728 = vunpack.c.l.b16 %v3650
    %v3729 = vunpack.c.h.b16 %v3650
    %v3730 = vunpack.c.l.b16 %v3651
    %v3731 = vunpack.c.h.b16 %v3651
    %v3732 = vunpack.c.l.b16 %v3652
    %v3733 = vunpack.c.h.b16 %v3652
    %v3734 = vunpack.c.l.b16 %v3653
    %v3735 = vunpack.c.h.b16 %v3653
    %v3736 = vunpack.c.l.b16 %v3654
    %v3737 = vunpack.c.h.b16 %v3654
    %v3738 = vunpack.c.l.b16 %v3655
    %v3739 = vunpack.c.h.b16 %v3655
    %v3740 = vunpack.c.l.b16 %v3656
    %v3741 = vunpack.c.h.b16 %v3656
    %v3742 = vunpack.c.l.b16 %v3657
    %v3743 = vunpack.c.h.b16 %v3657
    %v3744 = vunpack.c.l.b16 %v3658
    %v3745 = vunpack.c.h.b16 %v3658
    %v3746 = vunpack.c.l.b16 %v3659
    %v3747 = vunpack.c.h.b16 %v3659
    %v3748 = vunpack.c.l.b16 %v3660
    %v3749 = vunpack.c.h.b16 %v3660
    %v3750 = vunpack.c.l.b16 %v3661
    %v3751 = vunpack.c.h.b16 %v3661
    %v3752 = vunpack.c.l.b16 %v3662
    %v3753 = vunpack.c.h.b16 %v3662
    %v3754 = vunpack.c.l.b16 %v3663
    %v3755 = vunpack.c.h.b16 %v3663
    %v3756 = vunpack.c.l.b16 %v3664
    %v3757 = vunpack.c.h.b16 %v3664
    %v3758 = vunpack.c.l.b16 %v3665
    %v3759 = vunpack.c.h.b16 %v3665
    %v3760 = vunpack.c.l.b16 %v3666
    %v3761 = vunpack.c.h.b16 %v3666
    %v3762 = vunpack.c.l.b16 %v3667
    %v3763 = vunpack.c.h.b16 %v3667
    %v3764 = vpack.c.b16 %v3702, %v3700
    %v3765 = vpack.c.b16 %v3703, %v3701
    %v3766 = vpack.c.b16 %v3706, %v3704
    %v3767 = vpack.c.b16 %v3707, %v3705
    %v3768 = vpack.c.b16 %v3710, %v3708
    %v3769 = vpack.c.b16 %v3711, %v3709
    %v3770 = vpack.c.b16 %v3714, %v3712
    %v3771 = vpack.c.b16 %v3715, %v3713
    %v3772 = vpack.c.b16 %v3718, %v3716
    %v3773 = vpack.c.b16 %v3719, %v3717
    %v3774 = vpack.c.b16 %v3722, %v3720
    %v3775 = vpack.c.b16 %v3723, %v3721
    %v3776 = vpack.c.b16 %v3726, %v3724
    %v3777 = vpack.c.b16 %v3727, %v3725
    %v3778 = vpack.c.b16 %v3730, %v3728
    %v3779 = vpack.c.b16 %v3731, %v3729
    %v3780 = vpack.c.b16 %v3734, %v3732
    %v3781 = vpack.c.b16 %v3735, %v3733
    %v3782 = vpack.c.b16 %v3738, %v3736
    %v3783 = vpack.c.b16 %v3739, %v3737
    %v3784 = vpack.c.b16 %v3742, %v3740
    %v3785 = vpack.c.b16 %v3743, %v3741
    %v3786 = vpack.c.b16 %v3746, %v3744
    %v3787 = vpack.c.b16 %v3747, %v3745
    %v3788 = vpack.c.b16 %v3750, %v3748
    %v3789 = vpack.c.b16 %v3751, %v3749
    %v3790 = vpack.c.b16 %v3754, %v3752
    %v3791 = vpack.c.b16 %v3755, %v3753
    %v3792 = vpack.c.b16 %v3758, %v3756
    %v3793 = vpack.c.b16 %v3759, %v3757
    %v3794 = vpack.c.b16 %v3762, %v3760
    %v3795 = vpack.c.b16 %v3763, %v3761
    %3828 = vmatpush.bf16.msra.mxu0 %v3778
    %3829 = vmatpush.bf16.msra.mxu0 %v3776
    %3830 = vmatpush.bf16.msra.mxu0 %v3774
    %3831 = vmatpush.bf16.msra.mxu0 %v3772
    %3832 = vmatpush.bf16.msra.mxu0 %v3770
    %3833 = vmatpush.bf16.msra.mxu0 %v3768
    %3834 = vmatpush.bf16.msra.mxu0 %v3766
    %3835 = vmatpush.bf16.msra.mxu0 %v3764
    %3836 = vmatmul.bf16.gmra.mxu0 %v3633
    %v3837 = vpop.f32.mrf.mxu0
    %v3838 = vadd.f32 0.0, %v3837
    %v3839 = vpop.f32.mrf.mxu0
    %3840 = vdwg.mxu0
    %3841 = vmatpush.bf16.msra.mxu0 %v3794
    %3842 = vmatpush.bf16.msra.mxu0 %v3792
    %3843 = vmatpush.bf16.msra.mxu0 %v3790
    %3844 = vmatpush.bf16.msra.mxu0 %v3788
    %3845 = vmatpush.bf16.msra.mxu0 %v3786
    %3846 = vmatpush.bf16.msra.mxu0 %v3784
    %3847 = vmatpush.bf16.msra.mxu0 %v3782
    %3848 = vmatpush.bf16.msra.mxu0 %v3780
    %3849 = vmatmul.bf16.gmra.mxu0 %v3634
    %v3850 = vpop.f32.mrf.mxu0
    %v3851 = vadd.f32 %v3838, %v3850
    %v3852 = vpop.f32.mrf.mxu0
    %3853 = vdwg.mxu0
    %3854 = vmatpush.bf16.msra.mxu0 %v3779
    %3855 = vmatpush.bf16.msra.mxu0 %v3777
    %3856 = vmatpush.bf16.msra.mxu0 %v3775
    %3857 = vmatpush.bf16.msra.mxu0 %v3773
    %3858 = vmatpush.bf16.msra.mxu0 %v3771
    %3859 = vmatpush.bf16.msra.mxu0 %v3769
    %3860 = vmatpush.bf16.msra.mxu0 %v3767
    %3861 = vmatpush.bf16.msra.mxu0 %v3765
    %3862 = vmatmul.bf16.gmra.mxu0 %v3633
    %v3863 = vpop.f32.mrf.mxu0
    %v3864 = vadd.f32 0.0, %v3863
    %v3865 = vpop.f32.mrf.mxu0
    %3866 = vdwg.mxu0
    %3867 = vmatpush.bf16.msra.mxu0 %v3795
    %3868 = vmatpush.bf16.msra.mxu0 %v3793
    %3869 = vmatpush.bf16.msra.mxu0 %v3791
    %3870 = vmatpush.bf16.msra.mxu0 %v3789
    %3871 = vmatpush.bf16.msra.mxu0 %v3787
    %3872 = vmatpush.bf16.msra.mxu0 %v3785
    %3873 = vmatpush.bf16.msra.mxu0 %v3783
    %3874 = vmatpush.bf16.msra.mxu0 %v3781
    %3875 = vmatmul.bf16.gmra.mxu0 %v3634
    %v3876 = vpop.f32.mrf.mxu0
    %v3877 = vadd.f32 %v3864, %v3876
    %v3878 = vpop.f32.mrf.mxu0
    %3879 = vdwg.mxu0
    %v3880 = vadd.f32 %v3573, %v3851
    %v3881 = vadd.f32 %v3599, %v3877
    %s3882 = scalar_lea.vmem %s31, 6
    %v3883 = vld [vmem:[%s3882] sm:$0x3]
    %v3885 = vsel %vm3041, %v3883, 0
    %3887 = vmatpush.bf16.msra.mxu0 0
    %3888 = vmatpush.bf16.msra.mxu0 0
    %3889 = vmatpush.bf16.msra.mxu0 0
    %3890 = vmatpush.bf16.msra.mxu0 0
    %3891 = vmatpush.bf16.msra.mxu0 0
    %3892 = vmatpush.bf16.msra.mxu0 0
    %3893 = vmatpush.bf16.msra.mxu0 0
    %3894 = vmatpush.bf16.msra.mxu0 %v3047
    %3895 = vmatmul.bf16.gmra.mxu0 %v3885
    %v3896 = vpop.f32.mrf.mxu0
    %v3897 = vadd.f32 0.0, %v3896
    %v3898 = vpop.f32.mrf.mxu0
    %3899 = vdwg.mxu0
    %3900 = vmatpush.bf16.msra.mxu0 0
    %3901 = vmatpush.bf16.msra.mxu0 0
    %3902 = vmatpush.bf16.msra.mxu0 0
    %3903 = vmatpush.bf16.msra.mxu0 0
    %3904 = vmatpush.bf16.msra.mxu0 0
    %3905 = vmatpush.bf16.msra.mxu0 0
    %3906 = vmatpush.bf16.msra.mxu0 0
    %3907 = vmatpush.bf16.msra.mxu0 %v3050
    %3908 = vmatmul.bf16.gmra.mxu0 %v3885
    %v3909 = vpop.f32.mrf.mxu0
    %v3910 = vadd.f32 0.0, %v3909
    %v3911 = vpop.f32.mrf.mxu0
    %3912 = vdwg.mxu0
    %v3913 = vpack.c.bf16 %v3897, %v3897
    %v3914 = vpack.c.bf16 %v3910, %v3910
    %s3915 = scalar_lea.vmem [#allocation4], 768
    %v3916 = vld [vmem:[%s3915] sm:$0xff]
    %v3917 = vld [vmem:[%s3915 + $0x8] sm:$0xff]
    %v3918 = vld [vmem:[%s3915 + $0x10] sm:$0xff]
    %v3919 = vld [vmem:[%s3915 + $0x18] sm:$0xff]
    %v3920 = vld [vmem:[%s3915 + $0x20] sm:$0xff]
    %v3921 = vld [vmem:[%s3915 + $0x28] sm:$0xff]
    %v3922 = vld [vmem:[%s3915 + $0x30] sm:$0xff]
    %v3923 = vld [vmem:[%s3915 + $0x38] sm:$0xff]
    %v3924 = vld [vmem:[%s3915 + $0x40] sm:$0xff]
    %v3925 = vld [vmem:[%s3915 + $0x48] sm:$0xff]
    %v3926 = vld [vmem:[%s3915 + $0x50] sm:$0xff]
    %v3927 = vld [vmem:[%s3915 + $0x58] sm:$0xff]
    %v3928 = vld [vmem:[%s3915 + $0x60] sm:$0xff]
    %v3929 = vld [vmem:[%s3915 + $0x68] sm:$0xff]
    %v3930 = vld [vmem:[%s3915 + $0x70] sm:$0xff]
    %v3931 = vld [vmem:[%s3915 + $0x78] sm:$0xff]
    %v3932 = vld [vmem:[%s3915 + $0x80] sm:$0xff]
    %v3933 = vld [vmem:[%s3915 + $0x88] sm:$0xff]
    %v3934 = vld [vmem:[%s3915 + $0x90] sm:$0xff]
    %v3935 = vld [vmem:[%s3915 + $0x98] sm:$0xff]
    %v3936 = vld [vmem:[%s3915 + $0xa0] sm:$0xff]
    %v3937 = vld [vmem:[%s3915 + $0xa8] sm:$0xff]
    %v3938 = vld [vmem:[%s3915 + $0xb0] sm:$0xff]
    %v3939 = vld [vmem:[%s3915 + $0xb8] sm:$0xff]
    %v3940 = vld [vmem:[%s3915 + $0xc0] sm:$0xff]
    %v3941 = vld [vmem:[%s3915 + $0xc8] sm:$0xff]
    %v3942 = vld [vmem:[%s3915 + $0xd0] sm:$0xff]
    %v3943 = vld [vmem:[%s3915 + $0xd8] sm:$0xff]
    %v3944 = vld [vmem:[%s3915 + $0xe0] sm:$0xff]
    %v3945 = vld [vmem:[%s3915 + $0xe8] sm:$0xff]
    %v3946 = vld [vmem:[%s3915 + $0xf0] sm:$0xff]
    %v3947 = vld [vmem:[%s3915 + $0xf8] sm:$0xff]
    %v3980 = vunpack.c.l.b16 %v3916
    %v3981 = vunpack.c.h.b16 %v3916
    %v3982 = vunpack.c.l.b16 %v3917
    %v3983 = vunpack.c.h.b16 %v3917
    %v3984 = vunpack.c.l.b16 %v3918
    %v3985 = vunpack.c.h.b16 %v3918
    %v3986 = vunpack.c.l.b16 %v3919
    %v3987 = vunpack.c.h.b16 %v3919
    %v3988 = vunpack.c.l.b16 %v3920
    %v3989 = vunpack.c.h.b16 %v3920
    %v3990 = vunpack.c.l.b16 %v3921
    %v3991 = vunpack.c.h.b16 %v3921
    %v3992 = vunpack.c.l.b16 %v3922
    %v3993 = vunpack.c.h.b16 %v3922
    %v3994 = vunpack.c.l.b16 %v3923
    %v3995 = vunpack.c.h.b16 %v3923
    %v3996 = vunpack.c.l.b16 %v3924
    %v3997 = vunpack.c.h.b16 %v3924
    %v3998 = vunpack.c.l.b16 %v3925
    %v3999 = vunpack.c.h.b16 %v3925
    %v4000 = vunpack.c.l.b16 %v3926
    %v4001 = vunpack.c.h.b16 %v3926
    %v4002 = vunpack.c.l.b16 %v3927
    %v4003 = vunpack.c.h.b16 %v3927
    %v4004 = vunpack.c.l.b16 %v3928
    %v4005 = vunpack.c.h.b16 %v3928
    %v4006 = vunpack.c.l.b16 %v3929
    %v4007 = vunpack.c.h.b16 %v3929
    %v4008 = vunpack.c.l.b16 %v3930
    %v4009 = vunpack.c.h.b16 %v3930
    %v4010 = vunpack.c.l.b16 %v3931
    %v4011 = vunpack.c.h.b16 %v3931
    %v4012 = vunpack.c.l.b16 %v3932
    %v4013 = vunpack.c.h.b16 %v3932
    %v4014 = vunpack.c.l.b16 %v3933
    %v4015 = vunpack.c.h.b16 %v3933
    %v4016 = vunpack.c.l.b16 %v3934
    %v4017 = vunpack.c.h.b16 %v3934
    %v4018 = vunpack.c.l.b16 %v3935
    %v4019 = vunpack.c.h.b16 %v3935
    %v4020 = vunpack.c.l.b16 %v3936
    %v4021 = vunpack.c.h.b16 %v3936
    %v4022 = vunpack.c.l.b16 %v3937
    %v4023 = vunpack.c.h.b16 %v3937
    %v4024 = vunpack.c.l.b16 %v3938
    %v4025 = vunpack.c.h.b16 %v3938
    %v4026 = vunpack.c.l.b16 %v3939
    %v4027 = vunpack.c.h.b16 %v3939
    %v4028 = vunpack.c.l.b16 %v3940
    %v4029 = vunpack.c.h.b16 %v3940
    %v4030 = vunpack.c.l.b16 %v3941
    %v4031 = vunpack.c.h.b16 %v3941
    %v4032 = vunpack.c.l.b16 %v3942
    %v4033 = vunpack.c.h.b16 %v3942
    %v4034 = vunpack.c.l.b16 %v3943
    %v4035 = vunpack.c.h.b16 %v3943
    %v4036 = vunpack.c.l.b16 %v3944
    %v4037 = vunpack.c.h.b16 %v3944
    %v4038 = vunpack.c.l.b16 %v3945
    %v4039 = vunpack.c.h.b16 %v3945
    %v4040 = vunpack.c.l.b16 %v3946
    %v4041 = vunpack.c.h.b16 %v3946
    %v4042 = vunpack.c.l.b16 %v3947
    %v4043 = vunpack.c.h.b16 %v3947
    %v4044 = vpack.c.b16 %v3982, %v3980
    %v4045 = vpack.c.b16 %v3983, %v3981
    %v4046 = vpack.c.b16 %v3986, %v3984
    %v4047 = vpack.c.b16 %v3987, %v3985
    %v4048 = vpack.c.b16 %v3990, %v3988
    %v4049 = vpack.c.b16 %v3991, %v3989
    %v4050 = vpack.c.b16 %v3994, %v3992
    %v4051 = vpack.c.b16 %v3995, %v3993
    %v4052 = vpack.c.b16 %v3998, %v3996
    %v4053 = vpack.c.b16 %v3999, %v3997
    %v4054 = vpack.c.b16 %v4002, %v4000
    %v4055 = vpack.c.b16 %v4003, %v4001
    %v4056 = vpack.c.b16 %v4006, %v4004
    %v4057 = vpack.c.b16 %v4007, %v4005
    %v4058 = vpack.c.b16 %v4010, %v4008
    %v4059 = vpack.c.b16 %v4011, %v4009
    %v4060 = vpack.c.b16 %v4014, %v4012
    %v4061 = vpack.c.b16 %v4015, %v4013
    %v4062 = vpack.c.b16 %v4018, %v4016
    %v4063 = vpack.c.b16 %v4019, %v4017
    %v4064 = vpack.c.b16 %v4022, %v4020
    %v4065 = vpack.c.b16 %v4023, %v4021
    %v4066 = vpack.c.b16 %v4026, %v4024
    %v4067 = vpack.c.b16 %v4027, %v4025
    %v4068 = vpack.c.b16 %v4030, %v4028
    %v4069 = vpack.c.b16 %v4031, %v4029
    %v4070 = vpack.c.b16 %v4034, %v4032
    %v4071 = vpack.c.b16 %v4035, %v4033
    %v4072 = vpack.c.b16 %v4038, %v4036
    %v4073 = vpack.c.b16 %v4039, %v4037
    %v4074 = vpack.c.b16 %v4042, %v4040
    %v4075 = vpack.c.b16 %v4043, %v4041
    %4108 = vmatpush.bf16.msra.mxu0 %v4058
    %4109 = vmatpush.bf16.msra.mxu0 %v4056
    %4110 = vmatpush.bf16.msra.mxu0 %v4054
    %4111 = vmatpush.bf16.msra.mxu0 %v4052
    %4112 = vmatpush.bf16.msra.mxu0 %v4050
    %4113 = vmatpush.bf16.msra.mxu0 %v4048
    %4114 = vmatpush.bf16.msra.mxu0 %v4046
    %4115 = vmatpush.bf16.msra.mxu0 %v4044
    %4116 = vmatmul.bf16.gmra.mxu0 %v3913
    %v4117 = vpop.f32.mrf.mxu0
    %v4118 = vadd.f32 0.0, %v4117
    %v4119 = vpop.f32.mrf.mxu0
    %4120 = vdwg.mxu0
    %4121 = vmatpush.bf16.msra.mxu0 %v4074
    %4122 = vmatpush.bf16.msra.mxu0 %v4072
    %4123 = vmatpush.bf16.msra.mxu0 %v4070
    %4124 = vmatpush.bf16.msra.mxu0 %v4068
    %4125 = vmatpush.bf16.msra.mxu0 %v4066
    %4126 = vmatpush.bf16.msra.mxu0 %v4064
    %4127 = vmatpush.bf16.msra.mxu0 %v4062
    %4128 = vmatpush.bf16.msra.mxu0 %v4060
    %4129 = vmatmul.bf16.gmra.mxu0 %v3914
    %v4130 = vpop.f32.mrf.mxu0
    %v4131 = vadd.f32 %v4118, %v4130
    %v4132 = vpop.f32.mrf.mxu0
    %4133 = vdwg.mxu0
    %4134 = vmatpush.bf16.msra.mxu0 %v4059
    %4135 = vmatpush.bf16.msra.mxu0 %v4057
    %4136 = vmatpush.bf16.msra.mxu0 %v4055
    %4137 = vmatpush.bf16.msra.mxu0 %v4053
    %4138 = vmatpush.bf16.msra.mxu0 %v4051
    %4139 = vmatpush.bf16.msra.mxu0 %v4049
    %4140 = vmatpush.bf16.msra.mxu0 %v4047
    %4141 = vmatpush.bf16.msra.mxu0 %v4045
    %4142 = vmatmul.bf16.gmra.mxu0 %v3913
    %v4143 = vpop.f32.mrf.mxu0
    %v4144 = vadd.f32 0.0, %v4143
    %v4145 = vpop.f32.mrf.mxu0
    %4146 = vdwg.mxu0
    %4147 = vmatpush.bf16.msra.mxu0 %v4075
    %4148 = vmatpush.bf16.msra.mxu0 %v4073
    %4149 = vmatpush.bf16.msra.mxu0 %v4071
    %4150 = vmatpush.bf16.msra.mxu0 %v4069
    %4151 = vmatpush.bf16.msra.mxu0 %v4067
    %4152 = vmatpush.bf16.msra.mxu0 %v4065
    %4153 = vmatpush.bf16.msra.mxu0 %v4063
    %4154 = vmatpush.bf16.msra.mxu0 %v4061
    %4155 = vmatmul.bf16.gmra.mxu0 %v3914
    %v4156 = vpop.f32.mrf.mxu0
    %v4157 = vadd.f32 %v4144, %v4156
    %v4158 = vpop.f32.mrf.mxu0
    %4159 = vdwg.mxu0
    %v4160 = vadd.f32 %v3880, %v4131
    %v4161 = vadd.f32 %v3881, %v4157
    %v4162 = vsel %vm3045, %v4160, 0.0
    %v4163 = vrot.slane %v4162, 4
    %v4164 = vadd.f32 %v4162, %v4163
    %v4165 = vrot.slane %v4164, 2
    %v4166 = vadd.f32 %v4164, %v4165
    %v4167 = vrot.slane %v4166, 1
    %v4168 = vadd.f32 %v4166, %v4167
    %v4169 = vsel %vm3045, %v4161, 0.0
    %v4170 = vrot.slane %v4169, 4
    %v4171 = vadd.f32 %v4169, %v4170
    %v4172 = vrot.slane %v4171, 2
    %v4173 = vadd.f32 %v4171, %v4172
    %v4174 = vrot.slane %v4173, 1
    %v4175 = vadd.f32 %v4173, %v4174
    %v4176 = vmul.f32 %v4160, %v4160
    %v4177 = vmul.f32 %v4161, %v4161
    %v4178 = vsel %vm3045, %v4176, 0.0
    %v4179 = vrot.slane %v4178, 4
    %v4180 = vadd.f32 %v4178, %v4179
    %v4181 = vrot.slane %v4180, 2
    %v4182 = vadd.f32 %v4180, %v4181
    %v4183 = vrot.slane %v4182, 1
    %v4184 = vadd.f32 %v4182, %v4183
    %v4185 = vsel %vm3045, %v4177, 0.0
    %v4186 = vrot.slane %v4185, 4
    %v4187 = vadd.f32 %v4185, %v4186
    %v4188 = vrot.slane %v4187, 2
    %v4189 = vadd.f32 %v4187, %v4188
    %v4190 = vrot.slane %v4189, 1
    %v4191 = vadd.f32 %v4189, %v4190
    %v4192 = vld [vmem:[%s35] sm:$0xff]
    %v4193 = vld [vmem:[%s35 + $0x8] sm:$0xff]
    %v4194 = vld [vmem:[%s35 + $0x10] sm:$0xff]
    %v4195 = vld [vmem:[%s35 + $0x18] sm:$0xff]
    %v4196 = vld [vmem:[%s35 + $0x20] sm:$0xff]
    %v4197 = vld [vmem:[%s35 + $0x28] sm:$0xff]
    %v4198 = vld [vmem:[%s35 + $0x30] sm:$0xff]
    %v4199 = vld [vmem:[%s35 + $0x38] sm:$0xff]
    %v4200 = vld [vmem:[%s35 + $0x40] sm:$0xff]
    %v4201 = vld [vmem:[%s35 + $0x48] sm:$0xff]
    %v4202 = vld [vmem:[%s35 + $0x50] sm:$0xff]
    %v4203 = vld [vmem:[%s35 + $0x58] sm:$0xff]
    %v4204 = vld [vmem:[%s35 + $0x60] sm:$0xff]
    %v4205 = vld [vmem:[%s35 + $0x68] sm:$0xff]
    %v4206 = vld [vmem:[%s35 + $0x70] sm:$0xff]
    %v4207 = vld [vmem:[%s35 + $0x78] sm:$0xff]
    %v4208 = vld [vmem:[%s35 + $0x80] sm:$0xff]
    %v4209 = vld [vmem:[%s35 + $0x88] sm:$0xff]
    %v4210 = vld [vmem:[%s35 + $0x90] sm:$0xff]
    %v4211 = vld [vmem:[%s35 + $0x98] sm:$0xff]
    %v4212 = vld [vmem:[%s35 + $0xa0] sm:$0xff]
    %v4213 = vld [vmem:[%s35 + $0xa8] sm:$0xff]
    %v4214 = vld [vmem:[%s35 + $0xb0] sm:$0xff]
    %v4215 = vld [vmem:[%s35 + $0xb8] sm:$0xff]
    %v4216 = vld [vmem:[%s35 + $0xc0] sm:$0xff]
    %v4217 = vld [vmem:[%s35 + $0xc8] sm:$0xff]
    %v4218 = vld [vmem:[%s35 + $0xd0] sm:$0xff]
    %v4219 = vld [vmem:[%s35 + $0xd8] sm:$0xff]
    %v4220 = vld [vmem:[%s35 + $0xe0] sm:$0xff]
    %v4221 = vld [vmem:[%s35 + $0xe8] sm:$0xff]
    %v4222 = vld [vmem:[%s35 + $0xf0] sm:$0xff]
    %v4223 = vld [vmem:[%s35 + $0xf8] sm:$0xff]
    %4224 = vmatpush.msra.mxu0 %v4207
    %4225 = vmatpush.msra.mxu0 %v4206
    %4226 = vmatpush.msra.mxu0 %v4205
    %4227 = vmatpush.msra.mxu0 %v4204
    %4228 = vmatpush.msra.mxu0 %v4203
    %4229 = vmatpush.msra.mxu0 %v4202
    %4230 = vmatpush.msra.mxu0 %v4201
    %4231 = vmatpush.msra.mxu0 %v4200
    %4232 = vmatpush.msra.mxu0 %v4199
    %4233 = vmatpush.msra.mxu0 %v4198
    %4234 = vmatpush.msra.mxu0 %v4197
    %4235 = vmatpush.msra.mxu0 %v4196
    %4236 = vmatpush.msra.mxu0 %v4195
    %4237 = vmatpush.msra.mxu0 %v4194
    %4238 = vmatpush.msra.mxu0 %v4193
    %4239 = vmatpush.msra.mxu0 %v4192
    %4240 = vmatmul.f32.gmra.mxu0 %v4168
    %v4241 = vpop.f32.mrf.mxu0
    %v4242 = vadd.f32 0.0, %v4241
    %4243 = vdwg.mxu0
    %4244 = vmatpush.msra.mxu0 %v4223
    %4245 = vmatpush.msra.mxu0 %v4222
    %4246 = vmatpush.msra.mxu0 %v4221
    %4247 = vmatpush.msra.mxu0 %v4220
    %4248 = vmatpush.msra.mxu0 %v4219
    %4249 = vmatpush.msra.mxu0 %v4218
    %4250 = vmatpush.msra.mxu0 %v4217
    %4251 = vmatpush.msra.mxu0 %v4216
    %4252 = vmatpush.msra.mxu0 %v4215
    %4253 = vmatpush.msra.mxu0 %v4214
    %4254 = vmatpush.msra.mxu0 %v4213
    %4255 = vmatpush.msra.mxu0 %v4212
    %4256 = vmatpush.msra.mxu0 %v4211
    %4257 = vmatpush.msra.mxu0 %v4210
    %4258 = vmatpush.msra.mxu0 %v4209
    %4259 = vmatpush.msra.mxu0 %v4208
    %4260 = vmatmul.f32.gmra.mxu0 %v4175
    %v4261 = vpop.f32.mrf.mxu0
    %v4262 = vadd.f32 %v4242, %v4261
    %4263 = vdwg.mxu0
    %v4264 = vmul.f32 %v4262, 0.125
    %4265 = vmatpush.msra.mxu0 %v4207
    %4266 = vmatpush.msra.mxu0 %v4206
    %4267 = vmatpush.msra.mxu0 %v4205
    %4268 = vmatpush.msra.mxu0 %v4204
    %4269 = vmatpush.msra.mxu0 %v4203
    %4270 = vmatpush.msra.mxu0 %v4202
    %4271 = vmatpush.msra.mxu0 %v4201
    %4272 = vmatpush.msra.mxu0 %v4200
    %4273 = vmatpush.msra.mxu0 %v4199
    %4274 = vmatpush.msra.mxu0 %v4198
    %4275 = vmatpush.msra.mxu0 %v4197
    %4276 = vmatpush.msra.mxu0 %v4196
    %4277 = vmatpush.msra.mxu0 %v4195
    %4278 = vmatpush.msra.mxu0 %v4194
    %4279 = vmatpush.msra.mxu0 %v4193
    %4280 = vmatpush.msra.mxu0 %v4192
    %4281 = vmatmul.f32.gmra.mxu0 %v4184
    %v4282 = vpop.f32.mrf.mxu0
    %v4283 = vadd.f32 0.0, %v4282
    %4284 = vdwg.mxu0
    %4285 = vmatpush.msra.mxu0 %v4223
    %4286 = vmatpush.msra.mxu0 %v4222
    %4287 = vmatpush.msra.mxu0 %v4221
    %4288 = vmatpush.msra.mxu0 %v4220
    %4289 = vmatpush.msra.mxu0 %v4219
    %4290 = vmatpush.msra.mxu0 %v4218
    %4291 = vmatpush.msra.mxu0 %v4217
    %4292 = vmatpush.msra.mxu0 %v4216
    %4293 = vmatpush.msra.mxu0 %v4215
    %4294 = vmatpush.msra.mxu0 %v4214
    %4295 = vmatpush.msra.mxu0 %v4213
    %4296 = vmatpush.msra.mxu0 %v4212
    %4297 = vmatpush.msra.mxu0 %v4211
    %4298 = vmatpush.msra.mxu0 %v4210
    %4299 = vmatpush.msra.mxu0 %v4209
    %4300 = vmatpush.msra.mxu0 %v4208
    %4301 = vmatmul.f32.gmra.mxu0 %v4191
    %v4302 = vpop.f32.mrf.mxu0
    %v4303 = vadd.f32 %v4283, %v4302
    %4304 = vdwg.mxu0
    %v4305 = vmul.f32 %v4303, 0.125
    %v4306 = vmul.f32 %v4264, %v4264
    %v4307 = vsub.f32 %v4305, %v4306
    %v4308 = vmax.f32 %v4307, 0.0
    %v4309 = vld [vmem:[%s39] sm:$0x1]
    %v4310 = vadd.f32 %v4308, 1e-05
    %v4311 = vrsqrt.pop %v4310
    %v4312 = vmul.f32 %v4311, %v4310
    %v4313 = vmul.f32 %v4312, %v4311
    %v4314 = vmul.f32 0.5, %v4313
    %v4315 = vsub.f32 1.5, %v4314
    %v4316 = vmul.f32 %v4311, %v4315
    %vm4317 = vweird.f32 %v4310
    %vm4318 = vweird.f32 %v4311
    %vm4319 = vmor %vm4317, %vm4318
    %v4320 = vsel %vm4319, %v4311, %v4316
    %v4321 = vmul.f32 %v4309, %v4320
    %v4322 = vld [vmem:[%s41] sm:$0x1]
    %v4323 = vmul.f32 %v4264, %v4321
    %v4324 = vsub.f32 %v4322, %v4323
    %v4325 = vld [vmem:[%s37] sm:$0xff]
    %v4326 = vld [vmem:[%s37 + $0x8] sm:$0xff]
    %v4327 = vld [vmem:[%s37 + $0x10] sm:$0xff]
    %v4328 = vld [vmem:[%s37 + $0x18] sm:$0xff]
    %v4329 = vld [vmem:[%s37 + $0x20] sm:$0xff]
    %v4330 = vld [vmem:[%s37 + $0x28] sm:$0xff]
    %v4331 = vld [vmem:[%s37 + $0x30] sm:$0xff]
    %v4332 = vld [vmem:[%s37 + $0x38] sm:$0xff]
    %v4333 = vld [vmem:[%s37 + $0x40] sm:$0xff]
    %v4334 = vld [vmem:[%s37 + $0x48] sm:$0xff]
    %v4335 = vld [vmem:[%s37 + $0x50] sm:$0xff]
    %v4336 = vld [vmem:[%s37 + $0x58] sm:$0xff]
    %v4337 = vld [vmem:[%s37 + $0x60] sm:$0xff]
    %v4338 = vld [vmem:[%s37 + $0x68] sm:$0xff]
    %v4339 = vld [vmem:[%s37 + $0x70] sm:$0xff]
    %v4340 = vld [vmem:[%s37 + $0x78] sm:$0xff]
    %v4341 = vld [vmem:[%s37 + $0x80] sm:$0xff]
    %v4342 = vld [vmem:[%s37 + $0x88] sm:$0xff]
    %v4343 = vld [vmem:[%s37 + $0x90] sm:$0xff]
    %v4344 = vld [vmem:[%s37 + $0x98] sm:$0xff]
    %v4345 = vld [vmem:[%s37 + $0xa0] sm:$0xff]
    %v4346 = vld [vmem:[%s37 + $0xa8] sm:$0xff]
    %v4347 = vld [vmem:[%s37 + $0xb0] sm:$0xff]
    %v4348 = vld [vmem:[%s37 + $0xb8] sm:$0xff]
    %v4349 = vld [vmem:[%s37 + $0xc0] sm:$0xff]
    %v4350 = vld [vmem:[%s37 + $0xc8] sm:$0xff]
    %v4351 = vld [vmem:[%s37 + $0xd0] sm:$0xff]
    %v4352 = vld [vmem:[%s37 + $0xd8] sm:$0xff]
    %v4353 = vld [vmem:[%s37 + $0xe0] sm:$0xff]
    %v4354 = vld [vmem:[%s37 + $0xe8] sm:$0xff]
    %v4355 = vld [vmem:[%s37 + $0xf0] sm:$0xff]
    %v4356 = vld [vmem:[%s37 + $0xf8] sm:$0xff]
    %4357 = vmatpush.msra.mxu0 %v4355
    %4358 = vmatpush.msra.mxu0 %v4353
    %4359 = vmatpush.msra.mxu0 %v4351
    %4360 = vmatpush.msra.mxu0 %v4349
    %4361 = vmatpush.msra.mxu0 %v4347
    %4362 = vmatpush.msra.mxu0 %v4345
    %4363 = vmatpush.msra.mxu0 %v4343
    %4364 = vmatpush.msra.mxu0 %v4341
    %4365 = vmatpush.msra.mxu0 %v4339
    %4366 = vmatpush.msra.mxu0 %v4337
    %4367 = vmatpush.msra.mxu0 %v4335
    %4368 = vmatpush.msra.mxu0 %v4333
    %4369 = vmatpush.msra.mxu0 %v4331
    %4370 = vmatpush.msra.mxu0 %v4329
    %4371 = vmatpush.msra.mxu0 %v4327
    %4372 = vmatpush.msra.mxu0 %v4325
    %4373 = vmatmul.f32.gmra.mxu0 %v4321
    %v4374 = vpop.f32.mrf.mxu0
    %v4375 = vadd.f32 0.0, %v4374
    %4376 = vdwg.mxu0
    %4377 = vmatpush.msra.mxu0 %v4356
    %4378 = vmatpush.msra.mxu0 %v4354
    %4379 = vmatpush.msra.mxu0 %v4352
    %4380 = vmatpush.msra.mxu0 %v4350
    %4381 = vmatpush.msra.mxu0 %v4348
    %4382 = vmatpush.msra.mxu0 %v4346
    %4383 = vmatpush.msra.mxu0 %v4344
    %4384 = vmatpush.msra.mxu0 %v4342
    %4385 = vmatpush.msra.mxu0 %v4340
    %4386 = vmatpush.msra.mxu0 %v4338
    %4387 = vmatpush.msra.mxu0 %v4336
    %4388 = vmatpush.msra.mxu0 %v4334
    %4389 = vmatpush.msra.mxu0 %v4332
    %4390 = vmatpush.msra.mxu0 %v4330
    %4391 = vmatpush.msra.mxu0 %v4328
    %4392 = vmatpush.msra.mxu0 %v4326
    %4393 = vmatmul.f32.gmra.mxu0 %v4321
    %v4394 = vpop.f32.mrf.mxu0
    %v4395 = vadd.f32 0.0, %v4394
    %4396 = vdwg.mxu0
    %v4397 = vperm.slane %v4375, 0
    %v4398 = vperm.slane %v4395, 0
    %v4399 = vmul.f32 %v4160, %v4397
    %v4400 = vmul.f32 %v4161, %v4398
    %4401 = vmatpush.msra.mxu0 %v4355
    %4402 = vmatpush.msra.mxu0 %v4353
    %4403 = vmatpush.msra.mxu0 %v4351
    %4404 = vmatpush.msra.mxu0 %v4349
    %4405 = vmatpush.msra.mxu0 %v4347
    %4406 = vmatpush.msra.mxu0 %v4345
    %4407 = vmatpush.msra.mxu0 %v4343
    %4408 = vmatpush.msra.mxu0 %v4341
    %4409 = vmatpush.msra.mxu0 %v4339
    %4410 = vmatpush.msra.mxu0 %v4337
    %4411 = vmatpush.msra.mxu0 %v4335
    %4412 = vmatpush.msra.mxu0 %v4333
    %4413 = vmatpush.msra.mxu0 %v4331
    %4414 = vmatpush.msra.mxu0 %v4329
    %4415 = vmatpush.msra.mxu0 %v4327
    %4416 = vmatpush.msra.mxu0 %v4325
    %4417 = vmatmul.f32.gmra.mxu0 %v4324
    %v4418 = vpop.f32.mrf.mxu0
    %v4419 = vadd.f32 0.0, %v4418
    %4420 = vdwg.mxu0
    %4421 = vmatpush.msra.mxu0 %v4356
    %4422 = vmatpush.msra.mxu0 %v4354
    %4423 = vmatpush.msra.mxu0 %v4352
    %4424 = vmatpush.msra.mxu0 %v4350
    %4425 = vmatpush.msra.mxu0 %v4348
    %4426 = vmatpush.msra.mxu0 %v4346
    %4427 = vmatpush.msra.mxu0 %v4344
    %4428 = vmatpush.msra.mxu0 %v4342
    %4429 = vmatpush.msra.mxu0 %v4340
    %4430 = vmatpush.msra.mxu0 %v4338
    %4431 = vmatpush.msra.mxu0 %v4336
    %4432 = vmatpush.msra.mxu0 %v4334
    %4433 = vmatpush.msra.mxu0 %v4332
    %4434 = vmatpush.msra.mxu0 %v4330
    %4435 = vmatpush.msra.mxu0 %v4328
    %4436 = vmatpush.msra.mxu0 %v4326
    %4437 = vmatmul.f32.gmra.mxu0 %v4324
    %v4438 = vpop.f32.mrf.mxu0
    %v4439 = vadd.f32 0.0, %v4438
    %4440 = vdwg.mxu0
    %v4441 = vperm.slane %v4419, 0
    %v4442 = vperm.slane %v4439, 0
    %v4443 = vadd.f32 %v4399, %v4441
    %v4444 = vadd.f32 %v4400, %v4442
    %vm4445 = vcmp.ge.f32.partialorder %v4443, 0.0
    %vm4446 = vcmp.ge.f32.partialorder %v4444, 0.0
    %v4447 = vmul.f32 %v4443, 0.2
    %v4448 = vmul.f32 %v4444, 0.2
    %v4449 = vsel %vm4445, %v4443, %v4447
    %v4450 = vsel %vm4446, %v4444, %v4448
    %v4451 = vpack.c.bf16 %v4449, %v4449
    %v4452 = vpack.c.bf16 %v4450, %v4450
    %v4453 = vld [vmem:[%s43] sm:$0xf]
    %vm4454 = vcmask 31744
    %v4456 = vsel %vm4454, %v4453, 0
    %vm4458 = vcmask 1041408
    %v4460 = vsel %vm4458, %v4451, 0
    %v4463 = vsel %vm4458, %v4452, 0
    %4465 = vmatpush.bf16.msra.mxu0 0
    %4466 = vmatpush.bf16.msra.mxu0 0
    %4467 = vmatpush.bf16.msra.mxu0 0
    %4468 = vmatpush.bf16.msra.mxu0 0
    %4469 = vmatpush.bf16.msra.mxu0 0
    %4470 = vmatpush.bf16.msra.mxu0 0
    %4471 = vmatpush.bf16.msra.mxu0 0
    %4472 = vmatpush.bf16.msra.mxu0 %v4460
    %4473 = vmatmul.bf16.gmra.mxu0 %v4456
    %v4474 = vpop.f32.mrf.mxu0
    %v4475 = vadd.f32 0.0, %v4474
    %v4476 = vpop.f32.mrf.mxu0
    %4477 = vdwg.mxu0
    %4478 = vmatpush.bf16.msra.mxu0 0
    %4479 = vmatpush.bf16.msra.mxu0 0
    %4480 = vmatpush.bf16.msra.mxu0 0
    %4481 = vmatpush.bf16.msra.mxu0 0
    %4482 = vmatpush.bf16.msra.mxu0 0
    %4483 = vmatpush.bf16.msra.mxu0 0
    %4484 = vmatpush.bf16.msra.mxu0 0
    %4485 = vmatpush.bf16.msra.mxu0 %v4463
    %4486 = vmatmul.bf16.gmra.mxu0 %v4456
    %v4487 = vpop.f32.mrf.mxu0
    %v4488 = vadd.f32 0.0, %v4487
    %v4489 = vpop.f32.mrf.mxu0
    %4490 = vdwg.mxu0
    %v4491 = vpack.c.bf16 %v4475, %v4475
    %v4492 = vpack.c.bf16 %v4488, %v4488
    %v4493 = vld [vmem:[#allocation6] sm:$0xff]
    %v4494 = vld [vmem:[#allocation6 + $0x8] sm:$0xff]
    %v4495 = vld [vmem:[#allocation6 + $0x10] sm:$0xff]
    %v4496 = vld [vmem:[#allocation6 + $0x18] sm:$0xff]
    %v4497 = vld [vmem:[#allocation6 + $0x20] sm:$0xff]
    %v4498 = vld [vmem:[#allocation6 + $0x28] sm:$0xff]
    %v4499 = vld [vmem:[#allocation6 + $0x30] sm:$0xff]
    %v4500 = vld [vmem:[#allocation6 + $0x38] sm:$0xff]
    %v4501 = vld [vmem:[#allocation6 + $0x40] sm:$0xff]
    %v4502 = vld [vmem:[#allocation6 + $0x48] sm:$0xff]
    %v4503 = vld [vmem:[#allocation6 + $0x50] sm:$0xff]
    %v4504 = vld [vmem:[#allocation6 + $0x58] sm:$0xff]
    %v4505 = vld [vmem:[#allocation6 + $0x60] sm:$0xff]
    %v4506 = vld [vmem:[#allocation6 + $0x68] sm:$0xff]
    %v4507 = vld [vmem:[#allocation6 + $0x70] sm:$0xff]
    %v4508 = vld [vmem:[#allocation6 + $0x78] sm:$0xff]
    %v4509 = vld [vmem:[#allocation6 + $0x80] sm:$0xff]
    %v4510 = vld [vmem:[#allocation6 + $0x88] sm:$0xff]
    %v4511 = vld [vmem:[#allocation6 + $0x90] sm:$0xff]
    %v4512 = vld [vmem:[#allocation6 + $0x98] sm:$0xff]
    %v4513 = vld [vmem:[#allocation6 + $0xa0] sm:$0xff]
    %v4514 = vld [vmem:[#allocation6 + $0xa8] sm:$0xff]
    %v4515 = vld [vmem:[#allocation6 + $0xb0] sm:$0xff]
    %v4516 = vld [vmem:[#allocation6 + $0xb8] sm:$0xff]
    %v4517 = vld [vmem:[#allocation6 + $0xc0] sm:$0xff]
    %v4518 = vld [vmem:[#allocation6 + $0xc8] sm:$0xff]
    %v4519 = vld [vmem:[#allocation6 + $0xd0] sm:$0xff]
    %v4520 = vld [vmem:[#allocation6 + $0xd8] sm:$0xff]
    %v4521 = vld [vmem:[#allocation6 + $0xe0] sm:$0xff]
    %v4522 = vld [vmem:[#allocation6 + $0xe8] sm:$0xff]
    %v4523 = vld [vmem:[#allocation6 + $0xf0] sm:$0xff]
    %v4524 = vld [vmem:[#allocation6 + $0xf8] sm:$0xff]
    %s4525 = scalar_lea.vmem %s43, 4
    %v4526 = vld [vmem:[%s4525] sm:$0xf]
    %v4528 = vsel %vm4454, %v4526, 0
    %4530 = vmatpush.bf16.msra.mxu0 0
    %4531 = vmatpush.bf16.msra.mxu0 0
    %4532 = vmatpush.bf16.msra.mxu0 0
    %4533 = vmatpush.bf16.msra.mxu0 0
    %4534 = vmatpush.bf16.msra.mxu0 0
    %4535 = vmatpush.bf16.msra.mxu0 0
    %4536 = vmatpush.bf16.msra.mxu0 0
    %4537 = vmatpush.bf16.msra.mxu0 %v4460
    %4538 = vmatmul.bf16.gmra.mxu0 %v4528
    %v4539 = vpop.f32.mrf.mxu0
    %v4540 = vadd.f32 0.0, %v4539
    %v4541 = vpop.f32.mrf.mxu0
    %4542 = vdwg.mxu0
    %4543 = vmatpush.bf16.msra.mxu0 0
    %4544 = vmatpush.bf16.msra.mxu0 0
    %4545 = vmatpush.bf16.msra.mxu0 0
    %4546 = vmatpush.bf16.msra.mxu0 0
    %4547 = vmatpush.bf16.msra.mxu0 0
    %4548 = vmatpush.bf16.msra.mxu0 0
    %4549 = vmatpush.bf16.msra.mxu0 0
    %4550 = vmatpush.bf16.msra.mxu0 %v4463
    %4551 = vmatmul.bf16.gmra.mxu0 %v4528
    %v4552 = vpop.f32.mrf.mxu0
    %v4553 = vadd.f32 0.0, %v4552
    %v4554 = vpop.f32.mrf.mxu0
    %4555 = vdwg.mxu0
    %v4556 = vpack.c.bf16 %v4540, %v4540
    %v4557 = vpack.c.bf16 %v4553, %v4553
    %s4558 = scalar_lea.vmem [#allocation6], 256
    %v4559 = vld [vmem:[%s4558] sm:$0xff]
    %v4560 = vld [vmem:[%s4558 + $0x8] sm:$0xff]
    %v4561 = vld [vmem:[%s4558 + $0x10] sm:$0xff]
    %v4562 = vld [vmem:[%s4558 + $0x18] sm:$0xff]
    %v4563 = vld [vmem:[%s4558 + $0x20] sm:$0xff]
    %v4564 = vld [vmem:[%s4558 + $0x28] sm:$0xff]
    %v4565 = vld [vmem:[%s4558 + $0x30] sm:$0xff]
    %v4566 = vld [vmem:[%s4558 + $0x38] sm:$0xff]
    %v4567 = vld [vmem:[%s4558 + $0x40] sm:$0xff]
    %v4568 = vld [vmem:[%s4558 + $0x48] sm:$0xff]
    %v4569 = vld [vmem:[%s4558 + $0x50] sm:$0xff]
    %v4570 = vld [vmem:[%s4558 + $0x58] sm:$0xff]
    %v4571 = vld [vmem:[%s4558 + $0x60] sm:$0xff]
    %v4572 = vld [vmem:[%s4558 + $0x68] sm:$0xff]
    %v4573 = vld [vmem:[%s4558 + $0x70] sm:$0xff]
    %v4574 = vld [vmem:[%s4558 + $0x78] sm:$0xff]
    %v4575 = vld [vmem:[%s4558 + $0x80] sm:$0xff]
    %v4576 = vld [vmem:[%s4558 + $0x88] sm:$0xff]
    %v4577 = vld [vmem:[%s4558 + $0x90] sm:$0xff]
    %v4578 = vld [vmem:[%s4558 + $0x98] sm:$0xff]
    %v4579 = vld [vmem:[%s4558 + $0xa0] sm:$0xff]
    %v4580 = vld [vmem:[%s4558 + $0xa8] sm:$0xff]
    %v4581 = vld [vmem:[%s4558 + $0xb0] sm:$0xff]
    %v4582 = vld [vmem:[%s4558 + $0xb8] sm:$0xff]
    %v4583 = vld [vmem:[%s4558 + $0xc0] sm:$0xff]
    %v4584 = vld [vmem:[%s4558 + $0xc8] sm:$0xff]
    %v4585 = vld [vmem:[%s4558 + $0xd0] sm:$0xff]
    %v4586 = vld [vmem:[%s4558 + $0xd8] sm:$0xff]
    %v4587 = vld [vmem:[%s4558 + $0xe0] sm:$0xff]
    %v4588 = vld [vmem:[%s4558 + $0xe8] sm:$0xff]
    %v4589 = vld [vmem:[%s4558 + $0xf0] sm:$0xff]
    %v4590 = vld [vmem:[%s4558 + $0xf8] sm:$0xff]
    %v4623 = vunpack.c.l.b16 %v4559
    %v4624 = vunpack.c.h.b16 %v4559
    %v4625 = vunpack.c.l.b16 %v4560
    %v4626 = vunpack.c.h.b16 %v4560
    %v4627 = vunpack.c.l.b16 %v4561
    %v4628 = vunpack.c.h.b16 %v4561
    %v4629 = vunpack.c.l.b16 %v4562
    %v4630 = vunpack.c.h.b16 %v4562
    %v4631 = vunpack.c.l.b16 %v4563
    %v4632 = vunpack.c.h.b16 %v4563
    %v4633 = vunpack.c.l.b16 %v4564
    %v4634 = vunpack.c.h.b16 %v4564
    %v4635 = vunpack.c.l.b16 %v4565
    %v4636 = vunpack.c.h.b16 %v4565
    %v4637 = vunpack.c.l.b16 %v4566
    %v4638 = vunpack.c.h.b16 %v4566
    %v4639 = vunpack.c.l.b16 %v4567
    %v4640 = vunpack.c.h.b16 %v4567
    %v4641 = vunpack.c.l.b16 %v4568
    %v4642 = vunpack.c.h.b16 %v4568
    %v4643 = vunpack.c.l.b16 %v4569
    %v4644 = vunpack.c.h.b16 %v4569
    %v4645 = vunpack.c.l.b16 %v4570
    %v4646 = vunpack.c.h.b16 %v4570
    %v4647 = vunpack.c.l.b16 %v4571
    %v4648 = vunpack.c.h.b16 %v4571
    %v4649 = vunpack.c.l.b16 %v4572
    %v4650 = vunpack.c.h.b16 %v4572
    %v4651 = vunpack.c.l.b16 %v4573
    %v4652 = vunpack.c.h.b16 %v4573
    %v4653 = vunpack.c.l.b16 %v4574
    %v4654 = vunpack.c.h.b16 %v4574
    %v4655 = vunpack.c.l.b16 %v4575
    %v4656 = vunpack.c.h.b16 %v4575
    %v4657 = vunpack.c.l.b16 %v4576
    %v4658 = vunpack.c.h.b16 %v4576
    %v4659 = vunpack.c.l.b16 %v4577
    %v4660 = vunpack.c.h.b16 %v4577
    %v4661 = vunpack.c.l.b16 %v4578
    %v4662 = vunpack.c.h.b16 %v4578
    %v4663 = vunpack.c.l.b16 %v4579
    %v4664 = vunpack.c.h.b16 %v4579
    %v4665 = vunpack.c.l.b16 %v4580
    %v4666 = vunpack.c.h.b16 %v4580
    %v4667 = vunpack.c.l.b16 %v4581
    %v4668 = vunpack.c.h.b16 %v4581
    %v4669 = vunpack.c.l.b16 %v4582
    %v4670 = vunpack.c.h.b16 %v4582
    %v4671 = vunpack.c.l.b16 %v4583
    %v4672 = vunpack.c.h.b16 %v4583
    %v4673 = vunpack.c.l.b16 %v4584
    %v4674 = vunpack.c.h.b16 %v4584
    %v4675 = vunpack.c.l.b16 %v4585
    %v4676 = vunpack.c.h.b16 %v4585
    %v4677 = vunpack.c.l.b16 %v4586
    %v4678 = vunpack.c.h.b16 %v4586
    %v4679 = vunpack.c.l.b16 %v4587
    %v4680 = vunpack.c.h.b16 %v4587
    %v4681 = vunpack.c.l.b16 %v4588
    %v4682 = vunpack.c.h.b16 %v4588
    %v4683 = vunpack.c.l.b16 %v4589
    %v4684 = vunpack.c.h.b16 %v4589
    %v4685 = vunpack.c.l.b16 %v4590
    %v4686 = vunpack.c.h.b16 %v4590
    %v4687 = vpack.c.b16 %v4625, %v4623
    %v4688 = vpack.c.b16 %v4626, %v4624
    %v4689 = vpack.c.b16 %v4629, %v4627
    %v4690 = vpack.c.b16 %v4630, %v4628
    %v4691 = vpack.c.b16 %v4633, %v4631
    %v4692 = vpack.c.b16 %v4634, %v4632
    %v4693 = vpack.c.b16 %v4637, %v4635
    %v4694 = vpack.c.b16 %v4638, %v4636
    %v4695 = vpack.c.b16 %v4641, %v4639
    %v4696 = vpack.c.b16 %v4642, %v4640
    %v4697 = vpack.c.b16 %v4645, %v4643
    %v4698 = vpack.c.b16 %v4646, %v4644
    %v4699 = vpack.c.b16 %v4649, %v4647
    %v4700 = vpack.c.b16 %v4650, %v4648
    %v4701 = vpack.c.b16 %v4653, %v4651
    %v4702 = vpack.c.b16 %v4654, %v4652
    %v4703 = vpack.c.b16 %v4657, %v4655
    %v4704 = vpack.c.b16 %v4658, %v4656
    %v4705 = vpack.c.b16 %v4661, %v4659
    %v4706 = vpack.c.b16 %v4662, %v4660
    %v4707 = vpack.c.b16 %v4665, %v4663
    %v4708 = vpack.c.b16 %v4666, %v4664
    %v4709 = vpack.c.b16 %v4669, %v4667
    %v4710 = vpack.c.b16 %v4670, %v4668
    %v4711 = vpack.c.b16 %v4673, %v4671
    %v4712 = vpack.c.b16 %v4674, %v4672
    %v4713 = vpack.c.b16 %v4677, %v4675
    %v4714 = vpack.c.b16 %v4678, %v4676
    %v4715 = vpack.c.b16 %v4681, %v4679
    %v4716 = vpack.c.b16 %v4682, %v4680
    %v4717 = vpack.c.b16 %v4685, %v4683
    %v4718 = vpack.c.b16 %v4686, %v4684
    %4751 = vmatpush.bf16.msra.mxu0 %v4701
    %4752 = vmatpush.bf16.msra.mxu0 %v4699
    %4753 = vmatpush.bf16.msra.mxu0 %v4697
    %4754 = vmatpush.bf16.msra.mxu0 %v4695
    %4755 = vmatpush.bf16.msra.mxu0 %v4693
    %4756 = vmatpush.bf16.msra.mxu0 %v4691
    %4757 = vmatpush.bf16.msra.mxu0 %v4689
    %4758 = vmatpush.bf16.msra.mxu0 %v4687
    %4759 = vmatmul.bf16.gmra.mxu0 %v4556
    %v4760 = vpop.f32.mrf.mxu0
    %v4761 = vadd.f32 0.0, %v4760
    %v4762 = vpop.f32.mrf.mxu0
    %4763 = vdwg.mxu0
    %4764 = vmatpush.bf16.msra.mxu0 %v4717
    %4765 = vmatpush.bf16.msra.mxu0 %v4715
    %4766 = vmatpush.bf16.msra.mxu0 %v4713
    %4767 = vmatpush.bf16.msra.mxu0 %v4711
    %4768 = vmatpush.bf16.msra.mxu0 %v4709
    %4769 = vmatpush.bf16.msra.mxu0 %v4707
    %4770 = vmatpush.bf16.msra.mxu0 %v4705
    %4771 = vmatpush.bf16.msra.mxu0 %v4703
    %4772 = vmatmul.bf16.gmra.mxu0 %v4557
    %v4773 = vpop.f32.mrf.mxu0
    %v4774 = vadd.f32 %v4761, %v4773
    %v4775 = vpop.f32.mrf.mxu0
    %4776 = vdwg.mxu0
    %4777 = vmatpush.bf16.msra.mxu0 %v4702
    %4778 = vmatpush.bf16.msra.mxu0 %v4700
    %4779 = vmatpush.bf16.msra.mxu0 %v4698
    %4780 = vmatpush.bf16.msra.mxu0 %v4696
    %4781 = vmatpush.bf16.msra.mxu0 %v4694
    %4782 = vmatpush.bf16.msra.mxu0 %v4692
    %4783 = vmatpush.bf16.msra.mxu0 %v4690
    %4784 = vmatpush.bf16.msra.mxu0 %v4688
    %4785 = vmatmul.bf16.gmra.mxu0 %v4556
    %v4786 = vpop.f32.mrf.mxu0
    %v4787 = vadd.f32 0.0, %v4786
    %v4788 = vpop.f32.mrf.mxu0
    %4789 = vdwg.mxu0
    %4790 = vmatpush.bf16.msra.mxu0 %v4718
    %4791 = vmatpush.bf16.msra.mxu0 %v4716
    %4792 = vmatpush.bf16.msra.mxu0 %v4714
    %4793 = vmatpush.bf16.msra.mxu0 %v4712
    %4794 = vmatpush.bf16.msra.mxu0 %v4710
    %4795 = vmatpush.bf16.msra.mxu0 %v4708
    %4796 = vmatpush.bf16.msra.mxu0 %v4706
    %4797 = vmatpush.bf16.msra.mxu0 %v4704
    %4798 = vmatmul.bf16.gmra.mxu0 %v4557
    %v4799 = vpop.f32.mrf.mxu0
    %v4800 = vadd.f32 %v4787, %v4799
    %v4801 = vpop.f32.mrf.mxu0
    %4802 = vdwg.mxu0
    %v4835 = vunpack.c.l.b16 %v4493
    %v4836 = vunpack.c.h.b16 %v4493
    %v4837 = vunpack.c.l.b16 %v4494
    %v4838 = vunpack.c.h.b16 %v4494
    %v4839 = vunpack.c.l.b16 %v4495
    %v4840 = vunpack.c.h.b16 %v4495
    %v4841 = vunpack.c.l.b16 %v4496
    %v4842 = vunpack.c.h.b16 %v4496
    %v4843 = vunpack.c.l.b16 %v4497
    %v4844 = vunpack.c.h.b16 %v4497
    %v4845 = vunpack.c.l.b16 %v4498
    %v4846 = vunpack.c.h.b16 %v4498
    %v4847 = vunpack.c.l.b16 %v4499
    %v4848 = vunpack.c.h.b16 %v4499
    %v4849 = vunpack.c.l.b16 %v4500
    %v4850 = vunpack.c.h.b16 %v4500
    %v4851 = vunpack.c.l.b16 %v4501
    %v4852 = vunpack.c.h.b16 %v4501
    %v4853 = vunpack.c.l.b16 %v4502
    %v4854 = vunpack.c.h.b16 %v4502
    %v4855 = vunpack.c.l.b16 %v4503
    %v4856 = vunpack.c.h.b16 %v4503
    %v4857 = vunpack.c.l.b16 %v4504
    %v4858 = vunpack.c.h.b16 %v4504
    %v4859 = vunpack.c.l.b16 %v4505
    %v4860 = vunpack.c.h.b16 %v4505
    %v4861 = vunpack.c.l.b16 %v4506
    %v4862 = vunpack.c.h.b16 %v4506
    %v4863 = vunpack.c.l.b16 %v4507
    %v4864 = vunpack.c.h.b16 %v4507
    %v4865 = vunpack.c.l.b16 %v4508
    %v4866 = vunpack.c.h.b16 %v4508
    %v4867 = vunpack.c.l.b16 %v4509
    %v4868 = vunpack.c.h.b16 %v4509
    %v4869 = vunpack.c.l.b16 %v4510
    %v4870 = vunpack.c.h.b16 %v4510
    %v4871 = vunpack.c.l.b16 %v4511
    %v4872 = vunpack.c.h.b16 %v4511
    %v4873 = vunpack.c.l.b16 %v4512
    %v4874 = vunpack.c.h.b16 %v4512
    %v4875 = vunpack.c.l.b16 %v4513
    %v4876 = vunpack.c.h.b16 %v4513
    %v4877 = vunpack.c.l.b16 %v4514
    %v4878 = vunpack.c.h.b16 %v4514
    %v4879 = vunpack.c.l.b16 %v4515
    %v4880 = vunpack.c.h.b16 %v4515
    %v4881 = vunpack.c.l.b16 %v4516
    %v4882 = vunpack.c.h.b16 %v4516
    %v4883 = vunpack.c.l.b16 %v4517
    %v4884 = vunpack.c.h.b16 %v4517
    %v4885 = vunpack.c.l.b16 %v4518
    %v4886 = vunpack.c.h.b16 %v4518
    %v4887 = vunpack.c.l.b16 %v4519
    %v4888 = vunpack.c.h.b16 %v4519
    %v4889 = vunpack.c.l.b16 %v4520
    %v4890 = vunpack.c.h.b16 %v4520
    %v4891 = vunpack.c.l.b16 %v4521
    %v4892 = vunpack.c.h.b16 %v4521
    %v4893 = vunpack.c.l.b16 %v4522
    %v4894 = vunpack.c.h.b16 %v4522
    %v4895 = vunpack.c.l.b16 %v4523
    %v4896 = vunpack.c.h.b16 %v4523
    %v4897 = vunpack.c.l.b16 %v4524
    %v4898 = vunpack.c.h.b16 %v4524
    %v4899 = vpack.c.b16 %v4837, %v4835
    %v4900 = vpack.c.b16 %v4838, %v4836
    %v4901 = vpack.c.b16 %v4841, %v4839
    %v4902 = vpack.c.b16 %v4842, %v4840
    %v4903 = vpack.c.b16 %v4845, %v4843
    %v4904 = vpack.c.b16 %v4846, %v4844
    %v4905 = vpack.c.b16 %v4849, %v4847
    %v4906 = vpack.c.b16 %v4850, %v4848
    %v4907 = vpack.c.b16 %v4853, %v4851
    %v4908 = vpack.c.b16 %v4854, %v4852
    %v4909 = vpack.c.b16 %v4857, %v4855
    %v4910 = vpack.c.b16 %v4858, %v4856
    %v4911 = vpack.c.b16 %v4861, %v4859
    %v4912 = vpack.c.b16 %v4862, %v4860
    %v4913 = vpack.c.b16 %v4865, %v4863
    %v4914 = vpack.c.b16 %v4866, %v4864
    %v4915 = vpack.c.b16 %v4869, %v4867
    %v4916 = vpack.c.b16 %v4870, %v4868
    %v4917 = vpack.c.b16 %v4873, %v4871
    %v4918 = vpack.c.b16 %v4874, %v4872
    %v4919 = vpack.c.b16 %v4877, %v4875
    %v4920 = vpack.c.b16 %v4878, %v4876
    %v4921 = vpack.c.b16 %v4881, %v4879
    %v4922 = vpack.c.b16 %v4882, %v4880
    %v4923 = vpack.c.b16 %v4885, %v4883
    %v4924 = vpack.c.b16 %v4886, %v4884
    %v4925 = vpack.c.b16 %v4889, %v4887
    %v4926 = vpack.c.b16 %v4890, %v4888
    %v4927 = vpack.c.b16 %v4893, %v4891
    %v4928 = vpack.c.b16 %v4894, %v4892
    %v4929 = vpack.c.b16 %v4897, %v4895
    %v4930 = vpack.c.b16 %v4898, %v4896
    %4963 = vmatpush.bf16.msra.mxu0 %v4913
    %4964 = vmatpush.bf16.msra.mxu0 %v4911
    %4965 = vmatpush.bf16.msra.mxu0 %v4909
    %4966 = vmatpush.bf16.msra.mxu0 %v4907
    %4967 = vmatpush.bf16.msra.mxu0 %v4905
    %4968 = vmatpush.bf16.msra.mxu0 %v4903
    %4969 = vmatpush.bf16.msra.mxu0 %v4901
    %4970 = vmatpush.bf16.msra.mxu0 %v4899
    %4971 = vmatmul.bf16.gmra.mxu0 %v4491
    %v4972 = vpop.f32.mrf.mxu0
    %v4973 = vadd.f32 %v4774, %v4972
    %v4974 = vpop.f32.mrf.mxu0
    %4975 = vdwg.mxu0
    %4976 = vmatpush.bf16.msra.mxu0 %v4929
    %4977 = vmatpush.bf16.msra.mxu0 %v4927
    %4978 = vmatpush.bf16.msra.mxu0 %v4925
    %4979 = vmatpush.bf16.msra.mxu0 %v4923
    %4980 = vmatpush.bf16.msra.mxu0 %v4921
    %4981 = vmatpush.bf16.msra.mxu0 %v4919
    %4982 = vmatpush.bf16.msra.mxu0 %v4917
    %4983 = vmatpush.bf16.msra.mxu0 %v4915
    %4984 = vmatmul.bf16.gmra.mxu0 %v4492
    %v4985 = vpop.f32.mrf.mxu0
    %v4986 = vadd.f32 %v4973, %v4985
    %v4987 = vpop.f32.mrf.mxu0
    %4988 = vdwg.mxu0
    %4989 = vmatpush.bf16.msra.mxu0 %v4914
    %4990 = vmatpush.bf16.msra.mxu0 %v4912
    %4991 = vmatpush.bf16.msra.mxu0 %v4910
    %4992 = vmatpush.bf16.msra.mxu0 %v4908
    %4993 = vmatpush.bf16.msra.mxu0 %v4906
    %4994 = vmatpush.bf16.msra.mxu0 %v4904
    %4995 = vmatpush.bf16.msra.mxu0 %v4902
    %4996 = vmatpush.bf16.msra.mxu0 %v4900
    %4997 = vmatmul.bf16.gmra.mxu0 %v4491
    %v4998 = vpop.f32.mrf.mxu0
    %v4999 = vadd.f32 %v4800, %v4998
    %v5000 = vpop.f32.mrf.mxu0
    %5001 = vdwg.mxu0
    %5002 = vmatpush.bf16.msra.mxu0 %v4930
    %5003 = vmatpush.bf16.msra.mxu0 %v4928
    %5004 = vmatpush.bf16.msra.mxu0 %v4926
    %5005 = vmatpush.bf16.msra.mxu0 %v4924
    %5006 = vmatpush.bf16.msra.mxu0 %v4922
    %5007 = vmatpush.bf16.msra.mxu0 %v4920
    %5008 = vmatpush.bf16.msra.mxu0 %v4918
    %5009 = vmatpush.bf16.msra.mxu0 %v4916
    %5010 = vmatmul.bf16.gmra.mxu0 %v4492
    %v5011 = vpop.f32.mrf.mxu0
    %v5012 = vadd.f32 %v4999, %v5011
    %v5013 = vpop.f32.mrf.mxu0
    %5014 = vdwg.mxu0
    %s5015 = scalar_lea.vmem %s43, 8
    %v5016 = vld [vmem:[%s5015] sm:$0xf]
    %v5018 = vsel %vm4454, %v5016, 0
    %5020 = vmatpush.bf16.msra.mxu0 0
    %5021 = vmatpush.bf16.msra.mxu0 0
    %5022 = vmatpush.bf16.msra.mxu0 0
    %5023 = vmatpush.bf16.msra.mxu0 0
    %5024 = vmatpush.bf16.msra.mxu0 0
    %5025 = vmatpush.bf16.msra.mxu0 0
    %5026 = vmatpush.bf16.msra.mxu0 0
    %5027 = vmatpush.bf16.msra.mxu0 %v4460
    %5028 = vmatmul.bf16.gmra.mxu0 %v5018
    %v5029 = vpop.f32.mrf.mxu0
    %v5030 = vadd.f32 0.0, %v5029
    %v5031 = vpop.f32.mrf.mxu0
    %5032 = vdwg.mxu0
    %5033 = vmatpush.bf16.msra.mxu0 0
    %5034 = vmatpush.bf16.msra.mxu0 0
    %5035 = vmatpush.bf16.msra.mxu0 0
    %5036 = vmatpush.bf16.msra.mxu0 0
    %5037 = vmatpush.bf16.msra.mxu0 0
    %5038 = vmatpush.bf16.msra.mxu0 0
    %5039 = vmatpush.bf16.msra.mxu0 0
    %5040 = vmatpush.bf16.msra.mxu0 %v4463
    %5041 = vmatmul.bf16.gmra.mxu0 %v5018
    %v5042 = vpop.f32.mrf.mxu0
    %v5043 = vadd.f32 0.0, %v5042
    %v5044 = vpop.f32.mrf.mxu0
    %5045 = vdwg.mxu0
    %v5046 = vpack.c.bf16 %v5030, %v5030
    %v5047 = vpack.c.bf16 %v5043, %v5043
    %s5048 = scalar_lea.vmem [#allocation6], 512
    %v5049 = vld [vmem:[%s5048] sm:$0xff]
    %v5050 = vld [vmem:[%s5048 + $0x8] sm:$0xff]
    %v5051 = vld [vmem:[%s5048 + $0x10] sm:$0xff]
    %v5052 = vld [vmem:[%s5048 + $0x18] sm:$0xff]
    %v5053 = vld [vmem:[%s5048 + $0x20] sm:$0xff]
    %v5054 = vld [vmem:[%s5048 + $0x28] sm:$0xff]
    %v5055 = vld [vmem:[%s5048 + $0x30] sm:$0xff]
    %v5056 = vld [vmem:[%s5048 + $0x38] sm:$0xff]
    %v5057 = vld [vmem:[%s5048 + $0x40] sm:$0xff]
    %v5058 = vld [vmem:[%s5048 + $0x48] sm:$0xff]
    %v5059 = vld [vmem:[%s5048 + $0x50] sm:$0xff]
    %v5060 = vld [vmem:[%s5048 + $0x58] sm:$0xff]
    %v5061 = vld [vmem:[%s5048 + $0x60] sm:$0xff]
    %v5062 = vld [vmem:[%s5048 + $0x68] sm:$0xff]
    %v5063 = vld [vmem:[%s5048 + $0x70] sm:$0xff]
    %v5064 = vld [vmem:[%s5048 + $0x78] sm:$0xff]
    %v5065 = vld [vmem:[%s5048 + $0x80] sm:$0xff]
    %v5066 = vld [vmem:[%s5048 + $0x88] sm:$0xff]
    %v5067 = vld [vmem:[%s5048 + $0x90] sm:$0xff]
    %v5068 = vld [vmem:[%s5048 + $0x98] sm:$0xff]
    %v5069 = vld [vmem:[%s5048 + $0xa0] sm:$0xff]
    %v5070 = vld [vmem:[%s5048 + $0xa8] sm:$0xff]
    %v5071 = vld [vmem:[%s5048 + $0xb0] sm:$0xff]
    %v5072 = vld [vmem:[%s5048 + $0xb8] sm:$0xff]
    %v5073 = vld [vmem:[%s5048 + $0xc0] sm:$0xff]
    %v5074 = vld [vmem:[%s5048 + $0xc8] sm:$0xff]
    %v5075 = vld [vmem:[%s5048 + $0xd0] sm:$0xff]
    %v5076 = vld [vmem:[%s5048 + $0xd8] sm:$0xff]
    %v5077 = vld [vmem:[%s5048 + $0xe0] sm:$0xff]
    %v5078 = vld [vmem:[%s5048 + $0xe8] sm:$0xff]
    %v5079 = vld [vmem:[%s5048 + $0xf0] sm:$0xff]
    %v5080 = vld [vmem:[%s5048 + $0xf8] sm:$0xff]
    %v5113 = vunpack.c.l.b16 %v5049
    %v5114 = vunpack.c.h.b16 %v5049
    %v5115 = vunpack.c.l.b16 %v5050
    %v5116 = vunpack.c.h.b16 %v5050
    %v5117 = vunpack.c.l.b16 %v5051
    %v5118 = vunpack.c.h.b16 %v5051
    %v5119 = vunpack.c.l.b16 %v5052
    %v5120 = vunpack.c.h.b16 %v5052
    %v5121 = vunpack.c.l.b16 %v5053
    %v5122 = vunpack.c.h.b16 %v5053
    %v5123 = vunpack.c.l.b16 %v5054
    %v5124 = vunpack.c.h.b16 %v5054
    %v5125 = vunpack.c.l.b16 %v5055
    %v5126 = vunpack.c.h.b16 %v5055
    %v5127 = vunpack.c.l.b16 %v5056
    %v5128 = vunpack.c.h.b16 %v5056
    %v5129 = vunpack.c.l.b16 %v5057
    %v5130 = vunpack.c.h.b16 %v5057
    %v5131 = vunpack.c.l.b16 %v5058
    %v5132 = vunpack.c.h.b16 %v5058
    %v5133 = vunpack.c.l.b16 %v5059
    %v5134 = vunpack.c.h.b16 %v5059
    %v5135 = vunpack.c.l.b16 %v5060
    %v5136 = vunpack.c.h.b16 %v5060
    %v5137 = vunpack.c.l.b16 %v5061
    %v5138 = vunpack.c.h.b16 %v5061
    %v5139 = vunpack.c.l.b16 %v5062
    %v5140 = vunpack.c.h.b16 %v5062
    %v5141 = vunpack.c.l.b16 %v5063
    %v5142 = vunpack.c.h.b16 %v5063
    %v5143 = vunpack.c.l.b16 %v5064
    %v5144 = vunpack.c.h.b16 %v5064
    %v5145 = vunpack.c.l.b16 %v5065
    %v5146 = vunpack.c.h.b16 %v5065
    %v5147 = vunpack.c.l.b16 %v5066
    %v5148 = vunpack.c.h.b16 %v5066
    %v5149 = vunpack.c.l.b16 %v5067
    %v5150 = vunpack.c.h.b16 %v5067
    %v5151 = vunpack.c.l.b16 %v5068
    %v5152 = vunpack.c.h.b16 %v5068
    %v5153 = vunpack.c.l.b16 %v5069
    %v5154 = vunpack.c.h.b16 %v5069
    %v5155 = vunpack.c.l.b16 %v5070
    %v5156 = vunpack.c.h.b16 %v5070
    %v5157 = vunpack.c.l.b16 %v5071
    %v5158 = vunpack.c.h.b16 %v5071
    %v5159 = vunpack.c.l.b16 %v5072
    %v5160 = vunpack.c.h.b16 %v5072
    %v5161 = vunpack.c.l.b16 %v5073
    %v5162 = vunpack.c.h.b16 %v5073
    %v5163 = vunpack.c.l.b16 %v5074
    %v5164 = vunpack.c.h.b16 %v5074
    %v5165 = vunpack.c.l.b16 %v5075
    %v5166 = vunpack.c.h.b16 %v5075
    %v5167 = vunpack.c.l.b16 %v5076
    %v5168 = vunpack.c.h.b16 %v5076
    %v5169 = vunpack.c.l.b16 %v5077
    %v5170 = vunpack.c.h.b16 %v5077
    %v5171 = vunpack.c.l.b16 %v5078
    %v5172 = vunpack.c.h.b16 %v5078
    %v5173 = vunpack.c.l.b16 %v5079
    %v5174 = vunpack.c.h.b16 %v5079
    %v5175 = vunpack.c.l.b16 %v5080
    %v5176 = vunpack.c.h.b16 %v5080
    %v5177 = vpack.c.b16 %v5115, %v5113
    %v5178 = vpack.c.b16 %v5116, %v5114
    %v5179 = vpack.c.b16 %v5119, %v5117
    %v5180 = vpack.c.b16 %v5120, %v5118
    %v5181 = vpack.c.b16 %v5123, %v5121
    %v5182 = vpack.c.b16 %v5124, %v5122
    %v5183 = vpack.c.b16 %v5127, %v5125
    %v5184 = vpack.c.b16 %v5128, %v5126
    %v5185 = vpack.c.b16 %v5131, %v5129
    %v5186 = vpack.c.b16 %v5132, %v5130
    %v5187 = vpack.c.b16 %v5135, %v5133
    %v5188 = vpack.c.b16 %v5136, %v5134
    %v5189 = vpack.c.b16 %v5139, %v5137
    %v5190 = vpack.c.b16 %v5140, %v5138
    %v5191 = vpack.c.b16 %v5143, %v5141
    %v5192 = vpack.c.b16 %v5144, %v5142
    %v5193 = vpack.c.b16 %v5147, %v5145
    %v5194 = vpack.c.b16 %v5148, %v5146
    %v5195 = vpack.c.b16 %v5151, %v5149
    %v5196 = vpack.c.b16 %v5152, %v5150
    %v5197 = vpack.c.b16 %v5155, %v5153
    %v5198 = vpack.c.b16 %v5156, %v5154
    %v5199 = vpack.c.b16 %v5159, %v5157
    %v5200 = vpack.c.b16 %v5160, %v5158
    %v5201 = vpack.c.b16 %v5163, %v5161
    %v5202 = vpack.c.b16 %v5164, %v5162
    %v5203 = vpack.c.b16 %v5167, %v5165
    %v5204 = vpack.c.b16 %v5168, %v5166
    %v5205 = vpack.c.b16 %v5171, %v5169
    %v5206 = vpack.c.b16 %v5172, %v5170
    %v5207 = vpack.c.b16 %v5175, %v5173
    %v5208 = vpack.c.b16 %v5176, %v5174
    %5241 = vmatpush.bf16.msra.mxu0 %v5191
    %5242 = vmatpush.bf16.msra.mxu0 %v5189
    %5243 = vmatpush.bf16.msra.mxu0 %v5187
    %5244 = vmatpush.bf16.msra.mxu0 %v5185
    %5245 = vmatpush.bf16.msra.mxu0 %v5183
    %5246 = vmatpush.bf16.msra.mxu0 %v5181
    %5247 = vmatpush.bf16.msra.mxu0 %v5179
    %5248 = vmatpush.bf16.msra.mxu0 %v5177
    %5249 = vmatmul.bf16.gmra.mxu0 %v5046
    %v5250 = vpop.f32.mrf.mxu0
    %v5251 = vadd.f32 0.0, %v5250
    %v5252 = vpop.f32.mrf.mxu0
    %5253 = vdwg.mxu0
    %5254 = vmatpush.bf16.msra.mxu0 %v5207
    %5255 = vmatpush.bf16.msra.mxu0 %v5205
    %5256 = vmatpush.bf16.msra.mxu0 %v5203
    %5257 = vmatpush.bf16.msra.mxu0 %v5201
    %5258 = vmatpush.bf16.msra.mxu0 %v5199
    %5259 = vmatpush.bf16.msra.mxu0 %v5197
    %5260 = vmatpush.bf16.msra.mxu0 %v5195
    %5261 = vmatpush.bf16.msra.mxu0 %v5193
    %5262 = vmatmul.bf16.gmra.mxu0 %v5047
    %v5263 = vpop.f32.mrf.mxu0
    %v5264 = vadd.f32 %v5251, %v5263
    %v5265 = vpop.f32.mrf.mxu0
    %5266 = vdwg.mxu0
    %5267 = vmatpush.bf16.msra.mxu0 %v5192
    %5268 = vmatpush.bf16.msra.mxu0 %v5190
    %5269 = vmatpush.bf16.msra.mxu0 %v5188
    %5270 = vmatpush.bf16.msra.mxu0 %v5186
    %5271 = vmatpush.bf16.msra.mxu0 %v5184
    %5272 = vmatpush.bf16.msra.mxu0 %v5182
    %5273 = vmatpush.bf16.msra.mxu0 %v5180
    %5274 = vmatpush.bf16.msra.mxu0 %v5178
    %5275 = vmatmul.bf16.gmra.mxu0 %v5046
    %v5276 = vpop.f32.mrf.mxu0
    %v5277 = vadd.f32 0.0, %v5276
    %v5278 = vpop.f32.mrf.mxu0
    %5279 = vdwg.mxu0
    %5280 = vmatpush.bf16.msra.mxu0 %v5208
    %5281 = vmatpush.bf16.msra.mxu0 %v5206
    %5282 = vmatpush.bf16.msra.mxu0 %v5204
    %5283 = vmatpush.bf16.msra.mxu0 %v5202
    %5284 = vmatpush.bf16.msra.mxu0 %v5200
    %5285 = vmatpush.bf16.msra.mxu0 %v5198
    %5286 = vmatpush.bf16.msra.mxu0 %v5196
    %5287 = vmatpush.bf16.msra.mxu0 %v5194
    %5288 = vmatmul.bf16.gmra.mxu0 %v5047
    %v5289 = vpop.f32.mrf.mxu0
    %v5290 = vadd.f32 %v5277, %v5289
    %v5291 = vpop.f32.mrf.mxu0
    %5292 = vdwg.mxu0
    %v5293 = vadd.f32 %v4986, %v5264
    %v5294 = vadd.f32 %v5012, %v5290
    %s5295 = scalar_lea.vmem %s43, 12
    %v5296 = vld [vmem:[%s5295] sm:$0xf]
    %v5298 = vsel %vm4454, %v5296, 0
    %5300 = vmatpush.bf16.msra.mxu0 0
    %5301 = vmatpush.bf16.msra.mxu0 0
    %5302 = vmatpush.bf16.msra.mxu0 0
    %5303 = vmatpush.bf16.msra.mxu0 0
    %5304 = vmatpush.bf16.msra.mxu0 0
    %5305 = vmatpush.bf16.msra.mxu0 0
    %5306 = vmatpush.bf16.msra.mxu0 0
    %5307 = vmatpush.bf16.msra.mxu0 %v4460
    %5308 = vmatmul.bf16.gmra.mxu0 %v5298
    %v5309 = vpop.f32.mrf.mxu0
    %v5310 = vadd.f32 0.0, %v5309
    %v5311 = vpop.f32.mrf.mxu0
    %5312 = vdwg.mxu0
    %5313 = vmatpush.bf16.msra.mxu0 0
    %5314 = vmatpush.bf16.msra.mxu0 0
    %5315 = vmatpush.bf16.msra.mxu0 0
    %5316 = vmatpush.bf16.msra.mxu0 0
    %5317 = vmatpush.bf16.msra.mxu0 0
    %5318 = vmatpush.bf16.msra.mxu0 0
    %5319 = vmatpush.bf16.msra.mxu0 0
    %5320 = vmatpush.bf16.msra.mxu0 %v4463
    %5321 = vmatmul.bf16.gmra.mxu0 %v5298
    %v5322 = vpop.f32.mrf.mxu0
    %v5323 = vadd.f32 0.0, %v5322
    %v5324 = vpop.f32.mrf.mxu0
    %5325 = vdwg.mxu0
    %v5326 = vpack.c.bf16 %v5310, %v5310
    %v5327 = vpack.c.bf16 %v5323, %v5323
    %s5328 = scalar_lea.vmem [#allocation6], 768
    %v5329 = vld [vmem:[%s5328] sm:$0xff]
    %v5330 = vld [vmem:[%s5328 + $0x8] sm:$0xff]
    %v5331 = vld [vmem:[%s5328 + $0x10] sm:$0xff]
    %v5332 = vld [vmem:[%s5328 + $0x18] sm:$0xff]
    %v5333 = vld [vmem:[%s5328 + $0x20] sm:$0xff]
    %v5334 = vld [vmem:[%s5328 + $0x28] sm:$0xff]
    %v5335 = vld [vmem:[%s5328 + $0x30] sm:$0xff]
    %v5336 = vld [vmem:[%s5328 + $0x38] sm:$0xff]
    %v5337 = vld [vmem:[%s5328 + $0x40] sm:$0xff]
    %v5338 = vld [vmem:[%s5328 + $0x48] sm:$0xff]
    %v5339 = vld [vmem:[%s5328 + $0x50] sm:$0xff]
    %v5340 = vld [vmem:[%s5328 + $0x58] sm:$0xff]
    %v5341 = vld [vmem:[%s5328 + $0x60] sm:$0xff]
    %v5342 = vld [vmem:[%s5328 + $0x68] sm:$0xff]
    %v5343 = vld [vmem:[%s5328 + $0x70] sm:$0xff]
    %v5344 = vld [vmem:[%s5328 + $0x78] sm:$0xff]
    %v5345 = vld [vmem:[%s5328 + $0x80] sm:$0xff]
    %v5346 = vld [vmem:[%s5328 + $0x88] sm:$0xff]
    %v5347 = vld [vmem:[%s5328 + $0x90] sm:$0xff]
    %v5348 = vld [vmem:[%s5328 + $0x98] sm:$0xff]
    %v5349 = vld [vmem:[%s5328 + $0xa0] sm:$0xff]
    %v5350 = vld [vmem:[%s5328 + $0xa8] sm:$0xff]
    %v5351 = vld [vmem:[%s5328 + $0xb0] sm:$0xff]
    %v5352 = vld [vmem:[%s5328 + $0xb8] sm:$0xff]
    %v5353 = vld [vmem:[%s5328 + $0xc0] sm:$0xff]
    %v5354 = vld [vmem:[%s5328 + $0xc8] sm:$0xff]
    %v5355 = vld [vmem:[%s5328 + $0xd0] sm:$0xff]
    %v5356 = vld [vmem:[%s5328 + $0xd8] sm:$0xff]
    %v5357 = vld [vmem:[%s5328 + $0xe0] sm:$0xff]
    %v5358 = vld [vmem:[%s5328 + $0xe8] sm:$0xff]
    %v5359 = vld [vmem:[%s5328 + $0xf0] sm:$0xff]
    %v5360 = vld [vmem:[%s5328 + $0xf8] sm:$0xff]
    %v5393 = vunpack.c.l.b16 %v5329
    %v5394 = vunpack.c.h.b16 %v5329
    %v5395 = vunpack.c.l.b16 %v5330
    %v5396 = vunpack.c.h.b16 %v5330
    %v5397 = vunpack.c.l.b16 %v5331
    %v5398 = vunpack.c.h.b16 %v5331
    %v5399 = vunpack.c.l.b16 %v5332
    %v5400 = vunpack.c.h.b16 %v5332
    %v5401 = vunpack.c.l.b16 %v5333
    %v5402 = vunpack.c.h.b16 %v5333
    %v5403 = vunpack.c.l.b16 %v5334
    %v5404 = vunpack.c.h.b16 %v5334
    %v5405 = vunpack.c.l.b16 %v5335
    %v5406 = vunpack.c.h.b16 %v5335
    %v5407 = vunpack.c.l.b16 %v5336
    %v5408 = vunpack.c.h.b16 %v5336
    %v5409 = vunpack.c.l.b16 %v5337
    %v5410 = vunpack.c.h.b16 %v5337
    %v5411 = vunpack.c.l.b16 %v5338
    %v5412 = vunpack.c.h.b16 %v5338
    %v5413 = vunpack.c.l.b16 %v5339
    %v5414 = vunpack.c.h.b16 %v5339
    %v5415 = vunpack.c.l.b16 %v5340
    %v5416 = vunpack.c.h.b16 %v5340
    %v5417 = vunpack.c.l.b16 %v5341
    %v5418 = vunpack.c.h.b16 %v5341
    %v5419 = vunpack.c.l.b16 %v5342
    %v5420 = vunpack.c.h.b16 %v5342
    %v5421 = vunpack.c.l.b16 %v5343
    %v5422 = vunpack.c.h.b16 %v5343
    %v5423 = vunpack.c.l.b16 %v5344
    %v5424 = vunpack.c.h.b16 %v5344
    %v5425 = vunpack.c.l.b16 %v5345
    %v5426 = vunpack.c.h.b16 %v5345
    %v5427 = vunpack.c.l.b16 %v5346
    %v5428 = vunpack.c.h.b16 %v5346
    %v5429 = vunpack.c.l.b16 %v5347
    %v5430 = vunpack.c.h.b16 %v5347
    %v5431 = vunpack.c.l.b16 %v5348
    %v5432 = vunpack.c.h.b16 %v5348
    %v5433 = vunpack.c.l.b16 %v5349
    %v5434 = vunpack.c.h.b16 %v5349
    %v5435 = vunpack.c.l.b16 %v5350
    %v5436 = vunpack.c.h.b16 %v5350
    %v5437 = vunpack.c.l.b16 %v5351
    %v5438 = vunpack.c.h.b16 %v5351
    %v5439 = vunpack.c.l.b16 %v5352
    %v5440 = vunpack.c.h.b16 %v5352
    %v5441 = vunpack.c.l.b16 %v5353
    %v5442 = vunpack.c.h.b16 %v5353
    %v5443 = vunpack.c.l.b16 %v5354
    %v5444 = vunpack.c.h.b16 %v5354
    %v5445 = vunpack.c.l.b16 %v5355
    %v5446 = vunpack.c.h.b16 %v5355
    %v5447 = vunpack.c.l.b16 %v5356
    %v5448 = vunpack.c.h.b16 %v5356
    %v5449 = vunpack.c.l.b16 %v5357
    %v5450 = vunpack.c.h.b16 %v5357
    %v5451 = vunpack.c.l.b16 %v5358
    %v5452 = vunpack.c.h.b16 %v5358
    %v5453 = vunpack.c.l.b16 %v5359
    %v5454 = vunpack.c.h.b16 %v5359
    %v5455 = vunpack.c.l.b16 %v5360
    %v5456 = vunpack.c.h.b16 %v5360
    %v5457 = vpack.c.b16 %v5395, %v5393
    %v5458 = vpack.c.b16 %v5396, %v5394
    %v5459 = vpack.c.b16 %v5399, %v5397
    %v5460 = vpack.c.b16 %v5400, %v5398
    %v5461 = vpack.c.b16 %v5403, %v5401
    %v5462 = vpack.c.b16 %v5404, %v5402
    %v5463 = vpack.c.b16 %v5407, %v5405
    %v5464 = vpack.c.b16 %v5408, %v5406
    %v5465 = vpack.c.b16 %v5411, %v5409
    %v5466 = vpack.c.b16 %v5412, %v5410
    %v5467 = vpack.c.b16 %v5415, %v5413
    %v5468 = vpack.c.b16 %v5416, %v5414
    %v5469 = vpack.c.b16 %v5419, %v5417
    %v5470 = vpack.c.b16 %v5420, %v5418
    %v5471 = vpack.c.b16 %v5423, %v5421
    %v5472 = vpack.c.b16 %v5424, %v5422
    %v5473 = vpack.c.b16 %v5427, %v5425
    %v5474 = vpack.c.b16 %v5428, %v5426
    %v5475 = vpack.c.b16 %v5431, %v5429
    %v5476 = vpack.c.b16 %v5432, %v5430
    %v5477 = vpack.c.b16 %v5435, %v5433
    %v5478 = vpack.c.b16 %v5436, %v5434
    %v5479 = vpack.c.b16 %v5439, %v5437
    %v5480 = vpack.c.b16 %v5440, %v5438
    %v5481 = vpack.c.b16 %v5443, %v5441
    %v5482 = vpack.c.b16 %v5444, %v5442
    %v5483 = vpack.c.b16 %v5447, %v5445
    %v5484 = vpack.c.b16 %v5448, %v5446
    %v5485 = vpack.c.b16 %v5451, %v5449
    %v5486 = vpack.c.b16 %v5452, %v5450
    %v5487 = vpack.c.b16 %v5455, %v5453
    %v5488 = vpack.c.b16 %v5456, %v5454
    %5521 = vmatpush.bf16.msra.mxu0 %v5471
    %5522 = vmatpush.bf16.msra.mxu0 %v5469
    %5523 = vmatpush.bf16.msra.mxu0 %v5467
    %5524 = vmatpush.bf16.msra.mxu0 %v5465
    %5525 = vmatpush.bf16.msra.mxu0 %v5463
    %5526 = vmatpush.bf16.msra.mxu0 %v5461
    %5527 = vmatpush.bf16.msra.mxu0 %v5459
    %5528 = vmatpush.bf16.msra.mxu0 %v5457
    %5529 = vmatmul.bf16.gmra.mxu0 %v5326
    %v5530 = vpop.f32.mrf.mxu0
    %v5531 = vadd.f32 0.0, %v5530
    %v5532 = vpop.f32.mrf.mxu0
    %5533 = vdwg.mxu0
    %5534 = vmatpush.bf16.msra.mxu0 %v5487
    %5535 = vmatpush.bf16.msra.mxu0 %v5485
    %5536 = vmatpush.bf16.msra.mxu0 %v5483
    %5537 = vmatpush.bf16.msra.mxu0 %v5481
    %5538 = vmatpush.bf16.msra.mxu0 %v5479
    %5539 = vmatpush.bf16.msra.mxu0 %v5477
    %5540 = vmatpush.bf16.msra.mxu0 %v5475
    %5541 = vmatpush.bf16.msra.mxu0 %v5473
    %5542 = vmatmul.bf16.gmra.mxu0 %v5327
    %v5543 = vpop.f32.mrf.mxu0
    %v5544 = vadd.f32 %v5531, %v5543
    %v5545 = vpop.f32.mrf.mxu0
    %5546 = vdwg.mxu0
    %5547 = vmatpush.bf16.msra.mxu0 %v5472
    %5548 = vmatpush.bf16.msra.mxu0 %v5470
    %5549 = vmatpush.bf16.msra.mxu0 %v5468
    %5550 = vmatpush.bf16.msra.mxu0 %v5466
    %5551 = vmatpush.bf16.msra.mxu0 %v5464
    %5552 = vmatpush.bf16.msra.mxu0 %v5462
    %5553 = vmatpush.bf16.msra.mxu0 %v5460
    %5554 = vmatpush.bf16.msra.mxu0 %v5458
    %5555 = vmatmul.bf16.gmra.mxu0 %v5326
    %v5556 = vpop.f32.mrf.mxu0
    %v5557 = vadd.f32 0.0, %v5556
    %v5558 = vpop.f32.mrf.mxu0
    %5559 = vdwg.mxu0
    %5560 = vmatpush.bf16.msra.mxu0 %v5488
    %5561 = vmatpush.bf16.msra.mxu0 %v5486
    %5562 = vmatpush.bf16.msra.mxu0 %v5484
    %5563 = vmatpush.bf16.msra.mxu0 %v5482
    %5564 = vmatpush.bf16.msra.mxu0 %v5480
    %5565 = vmatpush.bf16.msra.mxu0 %v5478
    %5566 = vmatpush.bf16.msra.mxu0 %v5476
    %5567 = vmatpush.bf16.msra.mxu0 %v5474
    %5568 = vmatmul.bf16.gmra.mxu0 %v5327
    %v5569 = vpop.f32.mrf.mxu0
    %v5570 = vadd.f32 %v5557, %v5569
    %v5571 = vpop.f32.mrf.mxu0
    %5572 = vdwg.mxu0
    %v5573 = vadd.f32 %v5293, %v5544
    %v5574 = vadd.f32 %v5294, %v5570
    %v5575 = vrot.slane %v5573, 4
    %v5576 = vadd.f32 %v5573, %v5575
    %v5577 = vrot.slane %v5576, 2
    %v5578 = vadd.f32 %v5576, %v5577
    %v5579 = vrot.slane %v5578, 1
    %v5580 = vadd.f32 %v5578, %v5579
    %v5581 = vrot.slane %v5574, 4
    %v5582 = vadd.f32 %v5574, %v5581
    %v5583 = vrot.slane %v5582, 2
    %v5584 = vadd.f32 %v5582, %v5583
    %v5585 = vrot.slane %v5584, 1
    %v5586 = vadd.f32 %v5584, %v5585
    %v5587 = vmul.f32 %v5573, %v5573
    %v5588 = vmul.f32 %v5574, %v5574
    %v5589 = vrot.slane %v5587, 4
    %v5590 = vadd.f32 %v5587, %v5589
    %v5591 = vrot.slane %v5590, 2
    %v5592 = vadd.f32 %v5590, %v5591
    %v5593 = vrot.slane %v5592, 1
    %v5594 = vadd.f32 %v5592, %v5593
    %v5595 = vrot.slane %v5588, 4
    %v5596 = vadd.f32 %v5588, %v5595
    %v5597 = vrot.slane %v5596, 2
    %v5598 = vadd.f32 %v5596, %v5597
    %v5599 = vrot.slane %v5598, 1
    %v5600 = vadd.f32 %v5598, %v5599
    %v5601 = vld [vmem:[%s47] sm:$0xff]
    %v5602 = vld [vmem:[%s47 + $0x8] sm:$0xff]
    %v5603 = vld [vmem:[%s47 + $0x10] sm:$0xff]
    %v5604 = vld [vmem:[%s47 + $0x18] sm:$0xff]
    %v5605 = vld [vmem:[%s47 + $0x20] sm:$0xff]
    %v5606 = vld [vmem:[%s47 + $0x28] sm:$0xff]
    %v5607 = vld [vmem:[%s47 + $0x30] sm:$0xff]
    %v5608 = vld [vmem:[%s47 + $0x38] sm:$0xff]
    %v5609 = vld [vmem:[%s47 + $0x40] sm:$0xff]
    %v5610 = vld [vmem:[%s47 + $0x48] sm:$0xff]
    %v5611 = vld [vmem:[%s47 + $0x50] sm:$0xff]
    %v5612 = vld [vmem:[%s47 + $0x58] sm:$0xff]
    %v5613 = vld [vmem:[%s47 + $0x60] sm:$0xff]
    %v5614 = vld [vmem:[%s47 + $0x68] sm:$0xff]
    %v5615 = vld [vmem:[%s47 + $0x70] sm:$0xff]
    %v5616 = vld [vmem:[%s47 + $0x78] sm:$0xff]
    %v5617 = vld [vmem:[%s47 + $0x80] sm:$0xff]
    %v5618 = vld [vmem:[%s47 + $0x88] sm:$0xff]
    %v5619 = vld [vmem:[%s47 + $0x90] sm:$0xff]
    %v5620 = vld [vmem:[%s47 + $0x98] sm:$0xff]
    %v5621 = vld [vmem:[%s47 + $0xa0] sm:$0xff]
    %v5622 = vld [vmem:[%s47 + $0xa8] sm:$0xff]
    %v5623 = vld [vmem:[%s47 + $0xb0] sm:$0xff]
    %v5624 = vld [vmem:[%s47 + $0xb8] sm:$0xff]
    %v5625 = vld [vmem:[%s47 + $0xc0] sm:$0xff]
    %v5626 = vld [vmem:[%s47 + $0xc8] sm:$0xff]
    %v5627 = vld [vmem:[%s47 + $0xd0] sm:$0xff]
    %v5628 = vld [vmem:[%s47 + $0xd8] sm:$0xff]
    %v5629 = vld [vmem:[%s47 + $0xe0] sm:$0xff]
    %v5630 = vld [vmem:[%s47 + $0xe8] sm:$0xff]
    %v5631 = vld [vmem:[%s47 + $0xf0] sm:$0xff]
    %v5632 = vld [vmem:[%s47 + $0xf8] sm:$0xff]
    %5633 = vmatpush.msra.mxu0 %v5616
    %5634 = vmatpush.msra.mxu0 %v5615
    %5635 = vmatpush.msra.mxu0 %v5614
    %5636 = vmatpush.msra.mxu0 %v5613
    %5637 = vmatpush.msra.mxu0 %v5612
    %5638 = vmatpush.msra.mxu0 %v5611
    %5639 = vmatpush.msra.mxu0 %v5610
    %5640 = vmatpush.msra.mxu0 %v5609
    %5641 = vmatpush.msra.mxu0 %v5608
    %5642 = vmatpush.msra.mxu0 %v5607
    %5643 = vmatpush.msra.mxu0 %v5606
    %5644 = vmatpush.msra.mxu0 %v5605
    %5645 = vmatpush.msra.mxu0 %v5604
    %5646 = vmatpush.msra.mxu0 %v5603
    %5647 = vmatpush.msra.mxu0 %v5602
    %5648 = vmatpush.msra.mxu0 %v5601
    %5649 = vmatmul.f32.gmra.mxu0 %v5580
    %v5650 = vpop.f32.mrf.mxu0
    %v5651 = vadd.f32 0.0, %v5650
    %5652 = vdwg.mxu0
    %5653 = vmatpush.msra.mxu0 %v5632
    %5654 = vmatpush.msra.mxu0 %v5631
    %5655 = vmatpush.msra.mxu0 %v5630
    %5656 = vmatpush.msra.mxu0 %v5629
    %5657 = vmatpush.msra.mxu0 %v5628
    %5658 = vmatpush.msra.mxu0 %v5627
    %5659 = vmatpush.msra.mxu0 %v5626
    %5660 = vmatpush.msra.mxu0 %v5625
    %5661 = vmatpush.msra.mxu0 %v5624
    %5662 = vmatpush.msra.mxu0 %v5623
    %5663 = vmatpush.msra.mxu0 %v5622
    %5664 = vmatpush.msra.mxu0 %v5621
    %5665 = vmatpush.msra.mxu0 %v5620
    %5666 = vmatpush.msra.mxu0 %v5619
    %5667 = vmatpush.msra.mxu0 %v5618
    %5668 = vmatpush.msra.mxu0 %v5617
    %5669 = vmatmul.f32.gmra.mxu0 %v5586
    %v5670 = vpop.f32.mrf.mxu0
    %v5671 = vadd.f32 %v5651, %v5670
    %5672 = vdwg.mxu0
    %v5673 = vmul.f32 %v5671, 0.03125
    %5674 = vmatpush.msra.mxu0 %v5616
    %5675 = vmatpush.msra.mxu0 %v5615
    %5676 = vmatpush.msra.mxu0 %v5614
    %5677 = vmatpush.msra.mxu0 %v5613
    %5678 = vmatpush.msra.mxu0 %v5612
    %5679 = vmatpush.msra.mxu0 %v5611
    %5680 = vmatpush.msra.mxu0 %v5610
    %5681 = vmatpush.msra.mxu0 %v5609
    %5682 = vmatpush.msra.mxu0 %v5608
    %5683 = vmatpush.msra.mxu0 %v5607
    %5684 = vmatpush.msra.mxu0 %v5606
    %5685 = vmatpush.msra.mxu0 %v5605
    %5686 = vmatpush.msra.mxu0 %v5604
    %5687 = vmatpush.msra.mxu0 %v5603
    %5688 = vmatpush.msra.mxu0 %v5602
    %5689 = vmatpush.msra.mxu0 %v5601
    %5690 = vmatmul.f32.gmra.mxu0 %v5594
    %v5691 = vpop.f32.mrf.mxu0
    %v5692 = vadd.f32 0.0, %v5691
    %5693 = vdwg.mxu0
    %5694 = vmatpush.msra.mxu0 %v5632
    %5695 = vmatpush.msra.mxu0 %v5631
    %5696 = vmatpush.msra.mxu0 %v5630
    %5697 = vmatpush.msra.mxu0 %v5629
    %5698 = vmatpush.msra.mxu0 %v5628
    %5699 = vmatpush.msra.mxu0 %v5627
    %5700 = vmatpush.msra.mxu0 %v5626
    %5701 = vmatpush.msra.mxu0 %v5625
    %5702 = vmatpush.msra.mxu0 %v5624
    %5703 = vmatpush.msra.mxu0 %v5623
    %5704 = vmatpush.msra.mxu0 %v5622
    %5705 = vmatpush.msra.mxu0 %v5621
    %5706 = vmatpush.msra.mxu0 %v5620
    %5707 = vmatpush.msra.mxu0 %v5619
    %5708 = vmatpush.msra.mxu0 %v5618
    %5709 = vmatpush.msra.mxu0 %v5617
    %5710 = vmatmul.f32.gmra.mxu0 %v5600
    %v5711 = vpop.f32.mrf.mxu0
    %v5712 = vadd.f32 %v5692, %v5711
    %5713 = vdwg.mxu0
    %v5714 = vmul.f32 %v5712, 0.03125
    %v5715 = vmul.f32 %v5673, %v5673
    %v5716 = vsub.f32 %v5714, %v5715
    %v5717 = vmax.f32 %v5716, 0.0
    %v5718 = vld [vmem:[%s51] sm:$0x1]
    %v5719 = vadd.f32 %v5717, 1e-05
    %v5720 = vrsqrt.pop %v5719
    %v5721 = vmul.f32 %v5720, %v5719
    %v5722 = vmul.f32 %v5721, %v5720
    %v5723 = vmul.f32 0.5, %v5722
    %v5724 = vsub.f32 1.5, %v5723
    %v5725 = vmul.f32 %v5720, %v5724
    %vm5726 = vweird.f32 %v5719
    %vm5727 = vweird.f32 %v5720
    %vm5728 = vmor %vm5726, %vm5727
    %v5729 = vsel %vm5728, %v5720, %v5725
    %v5730 = vmul.f32 %v5718, %v5729
    %v5731 = vld [vmem:[%s53] sm:$0x1]
    %v5732 = vmul.f32 %v5673, %v5730
    %v5733 = vsub.f32 %v5731, %v5732
    %v5734 = vld [vmem:[%s49] sm:$0xff]
    %v5735 = vld [vmem:[%s49 + $0x8] sm:$0xff]
    %v5736 = vld [vmem:[%s49 + $0x10] sm:$0xff]
    %v5737 = vld [vmem:[%s49 + $0x18] sm:$0xff]
    %v5738 = vld [vmem:[%s49 + $0x20] sm:$0xff]
    %v5739 = vld [vmem:[%s49 + $0x28] sm:$0xff]
    %v5740 = vld [vmem:[%s49 + $0x30] sm:$0xff]
    %v5741 = vld [vmem:[%s49 + $0x38] sm:$0xff]
    %v5742 = vld [vmem:[%s49 + $0x40] sm:$0xff]
    %v5743 = vld [vmem:[%s49 + $0x48] sm:$0xff]
    %v5744 = vld [vmem:[%s49 + $0x50] sm:$0xff]
    %v5745 = vld [vmem:[%s49 + $0x58] sm:$0xff]
    %v5746 = vld [vmem:[%s49 + $0x60] sm:$0xff]
    %v5747 = vld [vmem:[%s49 + $0x68] sm:$0xff]
    %v5748 = vld [vmem:[%s49 + $0x70] sm:$0xff]
    %v5749 = vld [vmem:[%s49 + $0x78] sm:$0xff]
    %v5751 = vsel %vm280, %v5730, 0
    %5753 = vmatpush.msra.mxu0 0.0
    %5754 = vmatpush.msra.mxu0 0.0
    %5755 = vmatpush.msra.mxu0 0.0
    %5756 = vmatpush.msra.mxu0 0.0
    %5757 = vmatpush.msra.mxu0 0.0
    %5758 = vmatpush.msra.mxu0 0.0
    %5759 = vmatpush.msra.mxu0 0.0
    %5760 = vmatpush.msra.mxu0 0.0
    %5761 = vmatpush.msra.mxu0 %v5748
    %5762 = vmatpush.msra.mxu0 %v5746
    %5763 = vmatpush.msra.mxu0 %v5744
    %5764 = vmatpush.msra.mxu0 %v5742
    %5765 = vmatpush.msra.mxu0 %v5740
    %5766 = vmatpush.msra.mxu0 %v5738
    %5767 = vmatpush.msra.mxu0 %v5736
    %5768 = vmatpush.msra.mxu0 %v5734
    %5769 = vmatmul.f32.gmra.mxu0 %v5751
    %v5770 = vpop.f32.mrf.mxu0
    %v5771 = vadd.f32 0.0, %v5770
    %5772 = vdwg.mxu0
    %5773 = vmatpush.msra.mxu0 0.0
    %5774 = vmatpush.msra.mxu0 0.0
    %5775 = vmatpush.msra.mxu0 0.0
    %5776 = vmatpush.msra.mxu0 0.0
    %5777 = vmatpush.msra.mxu0 0.0
    %5778 = vmatpush.msra.mxu0 0.0
    %5779 = vmatpush.msra.mxu0 0.0
    %5780 = vmatpush.msra.mxu0 0.0
    %5781 = vmatpush.msra.mxu0 %v5749
    %5782 = vmatpush.msra.mxu0 %v5747
    %5783 = vmatpush.msra.mxu0 %v5745
    %5784 = vmatpush.msra.mxu0 %v5743
    %5785 = vmatpush.msra.mxu0 %v5741
    %5786 = vmatpush.msra.mxu0 %v5739
    %5787 = vmatpush.msra.mxu0 %v5737
    %5788 = vmatpush.msra.mxu0 %v5735
    %5789 = vmatmul.f32.gmra.mxu0 %v5751
    %v5790 = vpop.f32.mrf.mxu0
    %v5791 = vadd.f32 0.0, %v5790
    %5792 = vdwg.mxu0
    %v5793 = vperm.slane %v5771, 0
    %v5794 = vperm.slane %v5791, 0
    %v5795 = vmul.f32 %v5573, %v5793
    %v5796 = vmul.f32 %v5574, %v5794
    %v5798 = vsel %vm280, %v5733, 0
    %5800 = vmatpush.msra.mxu0 0.0
    %5801 = vmatpush.msra.mxu0 0.0
    %5802 = vmatpush.msra.mxu0 0.0
    %5803 = vmatpush.msra.mxu0 0.0
    %5804 = vmatpush.msra.mxu0 0.0
    %5805 = vmatpush.msra.mxu0 0.0
    %5806 = vmatpush.msra.mxu0 0.0
    %5807 = vmatpush.msra.mxu0 0.0
    %5808 = vmatpush.msra.mxu0 %v5748
    %5809 = vmatpush.msra.mxu0 %v5746
    %5810 = vmatpush.msra.mxu0 %v5744
    %5811 = vmatpush.msra.mxu0 %v5742
    %5812 = vmatpush.msra.mxu0 %v5740
    %5813 = vmatpush.msra.mxu0 %v5738
    %5814 = vmatpush.msra.mxu0 %v5736
    %5815 = vmatpush.msra.mxu0 %v5734
    %5816 = vmatmul.f32.gmra.mxu0 %v5798
    %v5817 = vpop.f32.mrf.mxu0
    %v5818 = vadd.f32 0.0, %v5817
    %5819 = vdwg.mxu0
    %5820 = vmatpush.msra.mxu0 0.0
    %5821 = vmatpush.msra.mxu0 0.0
    %5822 = vmatpush.msra.mxu0 0.0
    %5823 = vmatpush.msra.mxu0 0.0
    %5824 = vmatpush.msra.mxu0 0.0
    %5825 = vmatpush.msra.mxu0 0.0
    %5826 = vmatpush.msra.mxu0 0.0
    %5827 = vmatpush.msra.mxu0 0.0
    %5828 = vmatpush.msra.mxu0 %v5749
    %5829 = vmatpush.msra.mxu0 %v5747
    %5830 = vmatpush.msra.mxu0 %v5745
    %5831 = vmatpush.msra.mxu0 %v5743
    %5832 = vmatpush.msra.mxu0 %v5741
    %5833 = vmatpush.msra.mxu0 %v5739
    %5834 = vmatpush.msra.mxu0 %v5737
    %5835 = vmatpush.msra.mxu0 %v5735
    %5836 = vmatmul.f32.gmra.mxu0 %v5798
    %v5837 = vpop.f32.mrf.mxu0
    %v5838 = vadd.f32 0.0, %v5837
    %5839 = vdwg.mxu0
    %v5840 = vperm.slane %v5818, 0
    %v5841 = vperm.slane %v5838, 0
    %v5842 = vadd.f32 %v5795, %v5840
    %v5843 = vadd.f32 %v5796, %v5841
    %v5844 = vmax.f32 %v5842, 0.0
    %v5845 = vmax.f32 %v5843, 0.0
    %v5846 = vpack.c.bf16 %v5844, %v5844
    %v5847 = vpack.c.bf16 %v5845, %v5845
    %v5848 = vld [vmem:[%s55] sm:$0xf]
    %v5849 = vld [vmem:[%s55 + $0x4] sm:$0xf]
    %v5852 = vunpack.c.l.b16 %v5848
    %v5853 = vunpack.c.l.b16 %v5849
    %v5854 = vpack.c.b16 %v5853, %v5852
    %v5856 = vsel %vm3041, %v5854, 0
    %v5859 = vsel %vm3045, %v5846, 0
    %v5862 = vsel %vm3045, %v5847, 0
    %5864 = vmatpush.bf16.msra.mxu0 0
    %5865 = vmatpush.bf16.msra.mxu0 0
    %5866 = vmatpush.bf16.msra.mxu0 0
    %5867 = vmatpush.bf16.msra.mxu0 0
    %5868 = vmatpush.bf16.msra.mxu0 0
    %5869 = vmatpush.bf16.msra.mxu0 0
    %5870 = vmatpush.bf16.msra.mxu0 0
    %5871 = vmatpush.bf16.msra.mxu0 %v5859
    %5872 = vmatmul.bf16.gmra.mxu0 %v5856
    %v5873 = vpop.f32.mrf.mxu0
    %v5874 = vadd.f32 0.0, %v5873
    %v5875 = vpop.f32.mrf.mxu0
    %v5876 = vadd.f32 0.0, %v5875
    %5877 = vdwg.mxu0
    %5878 = vmatpush.bf16.msra.mxu0 0
    %5879 = vmatpush.bf16.msra.mxu0 0
    %5880 = vmatpush.bf16.msra.mxu0 0
    %5881 = vmatpush.bf16.msra.mxu0 0
    %5882 = vmatpush.bf16.msra.mxu0 0
    %5883 = vmatpush.bf16.msra.mxu0 0
    %5884 = vmatpush.bf16.msra.mxu0 0
    %5885 = vmatpush.bf16.msra.mxu0 %v5862
    %5886 = vmatmul.bf16.gmra.mxu0 %v5856
    %v5887 = vpop.f32.mrf.mxu0
    %v5888 = vadd.f32 0.0, %v5887
    %v5889 = vpop.f32.mrf.mxu0
    %v5890 = vadd.f32 0.0, %v5889
    %5891 = vdwg.mxu0
    %v5892 = vpack.c.bf16 %v5876, %v5874
    %v5893 = vpack.c.bf16 %v5890, %v5888
    %v5894 = vld [vmem:[#allocation7] sm:$0xff]
    %v5895 = vld [vmem:[#allocation7 + $0x8] sm:$0xff]
    %v5896 = vld [vmem:[#allocation7 + $0x10] sm:$0xff]
    %v5897 = vld [vmem:[#allocation7 + $0x18] sm:$0xff]
    %v5898 = vld [vmem:[#allocation7 + $0x20] sm:$0xff]
    %v5899 = vld [vmem:[#allocation7 + $0x28] sm:$0xff]
    %v5900 = vld [vmem:[#allocation7 + $0x30] sm:$0xff]
    %v5901 = vld [vmem:[#allocation7 + $0x38] sm:$0xff]
    %v5902 = vld [vmem:[#allocation7 + $0x40] sm:$0xff]
    %v5903 = vld [vmem:[#allocation7 + $0x48] sm:$0xff]
    %v5904 = vld [vmem:[#allocation7 + $0x50] sm:$0xff]
    %v5905 = vld [vmem:[#allocation7 + $0x58] sm:$0xff]
    %v5906 = vld [vmem:[#allocation7 + $0x60] sm:$0xff]
    %v5907 = vld [vmem:[#allocation7 + $0x68] sm:$0xff]
    %v5908 = vld [vmem:[#allocation7 + $0x70] sm:$0xff]
    %v5909 = vld [vmem:[#allocation7 + $0x78] sm:$0xff]
    %v5910 = vld [vmem:[#allocation7 + $0x80] sm:$0xff]
    %v5911 = vld [vmem:[#allocation7 + $0x88] sm:$0xff]
    %v5912 = vld [vmem:[#allocation7 + $0x90] sm:$0xff]
    %v5913 = vld [vmem:[#allocation7 + $0x98] sm:$0xff]
    %v5914 = vld [vmem:[#allocation7 + $0xa0] sm:$0xff]
    %v5915 = vld [vmem:[#allocation7 + $0xa8] sm:$0xff]
    %v5916 = vld [vmem:[#allocation7 + $0xb0] sm:$0xff]
    %v5917 = vld [vmem:[#allocation7 + $0xb8] sm:$0xff]
    %v5918 = vld [vmem:[#allocation7 + $0xc0] sm:$0xff]
    %v5919 = vld [vmem:[#allocation7 + $0xc8] sm:$0xff]
    %v5920 = vld [vmem:[#allocation7 + $0xd0] sm:$0xff]
    %v5921 = vld [vmem:[#allocation7 + $0xd8] sm:$0xff]
    %v5922 = vld [vmem:[#allocation7 + $0xe0] sm:$0xff]
    %v5923 = vld [vmem:[#allocation7 + $0xe8] sm:$0xff]
    %v5924 = vld [vmem:[#allocation7 + $0xf0] sm:$0xff]
    %v5925 = vld [vmem:[#allocation7 + $0xf8] sm:$0xff]
    %s5926 = scalar_lea.vmem %s55, 8
    %v5927 = vld [vmem:[%s5926] sm:$0xf]
    %v5928 = vld [vmem:[%s5926 + $0x4] sm:$0xf]
    %v5931 = vunpack.c.l.b16 %v5927
    %v5932 = vunpack.c.l.b16 %v5928
    %v5933 = vpack.c.b16 %v5932, %v5931
    %v5935 = vsel %vm3041, %v5933, 0
    %5937 = vmatpush.bf16.msra.mxu0 0
    %5938 = vmatpush.bf16.msra.mxu0 0
    %5939 = vmatpush.bf16.msra.mxu0 0
    %5940 = vmatpush.bf16.msra.mxu0 0
    %5941 = vmatpush.bf16.msra.mxu0 0
    %5942 = vmatpush.bf16.msra.mxu0 0
    %5943 = vmatpush.bf16.msra.mxu0 0
    %5944 = vmatpush.bf16.msra.mxu0 %v5859
    %5945 = vmatmul.bf16.gmra.mxu0 %v5935
    %v5946 = vpop.f32.mrf.mxu0
    %v5947 = vadd.f32 0.0, %v5946
    %v5948 = vpop.f32.mrf.mxu0
    %v5949 = vadd.f32 0.0, %v5948
    %5950 = vdwg.mxu0
    %5951 = vmatpush.bf16.msra.mxu0 0
    %5952 = vmatpush.bf16.msra.mxu0 0
    %5953 = vmatpush.bf16.msra.mxu0 0
    %5954 = vmatpush.bf16.msra.mxu0 0
    %5955 = vmatpush.bf16.msra.mxu0 0
    %5956 = vmatpush.bf16.msra.mxu0 0
    %5957 = vmatpush.bf16.msra.mxu0 0
    %5958 = vmatpush.bf16.msra.mxu0 %v5862
    %5959 = vmatmul.bf16.gmra.mxu0 %v5935
    %v5960 = vpop.f32.mrf.mxu0
    %v5961 = vadd.f32 0.0, %v5960
    %v5962 = vpop.f32.mrf.mxu0
    %v5963 = vadd.f32 0.0, %v5962
    %5964 = vdwg.mxu0
    %v5965 = vpack.c.bf16 %v5949, %v5947
    %v5966 = vpack.c.bf16 %v5963, %v5961
    %s5967 = scalar_lea.vmem [#allocation7], 256
    %v5968 = vld [vmem:[%s5967] sm:$0xff]
    %v5969 = vld [vmem:[%s5967 + $0x8] sm:$0xff]
    %v5970 = vld [vmem:[%s5967 + $0x10] sm:$0xff]
    %v5971 = vld [vmem:[%s5967 + $0x18] sm:$0xff]
    %v5972 = vld [vmem:[%s5967 + $0x20] sm:$0xff]
    %v5973 = vld [vmem:[%s5967 + $0x28] sm:$0xff]
    %v5974 = vld [vmem:[%s5967 + $0x30] sm:$0xff]
    %v5975 = vld [vmem:[%s5967 + $0x38] sm:$0xff]
    %v5976 = vld [vmem:[%s5967 + $0x40] sm:$0xff]
    %v5977 = vld [vmem:[%s5967 + $0x48] sm:$0xff]
    %v5978 = vld [vmem:[%s5967 + $0x50] sm:$0xff]
    %v5979 = vld [vmem:[%s5967 + $0x58] sm:$0xff]
    %v5980 = vld [vmem:[%s5967 + $0x60] sm:$0xff]
    %v5981 = vld [vmem:[%s5967 + $0x68] sm:$0xff]
    %v5982 = vld [vmem:[%s5967 + $0x70] sm:$0xff]
    %v5983 = vld [vmem:[%s5967 + $0x78] sm:$0xff]
    %v5984 = vld [vmem:[%s5967 + $0x80] sm:$0xff]
    %v5985 = vld [vmem:[%s5967 + $0x88] sm:$0xff]
    %v5986 = vld [vmem:[%s5967 + $0x90] sm:$0xff]
    %v5987 = vld [vmem:[%s5967 + $0x98] sm:$0xff]
    %v5988 = vld [vmem:[%s5967 + $0xa0] sm:$0xff]
    %v5989 = vld [vmem:[%s5967 + $0xa8] sm:$0xff]
    %v5990 = vld [vmem:[%s5967 + $0xb0] sm:$0xff]
    %v5991 = vld [vmem:[%s5967 + $0xb8] sm:$0xff]
    %v5992 = vld [vmem:[%s5967 + $0xc0] sm:$0xff]
    %v5993 = vld [vmem:[%s5967 + $0xc8] sm:$0xff]
    %v5994 = vld [vmem:[%s5967 + $0xd0] sm:$0xff]
    %v5995 = vld [vmem:[%s5967 + $0xd8] sm:$0xff]
    %v5996 = vld [vmem:[%s5967 + $0xe0] sm:$0xff]
    %v5997 = vld [vmem:[%s5967 + $0xe8] sm:$0xff]
    %v5998 = vld [vmem:[%s5967 + $0xf0] sm:$0xff]
    %v5999 = vld [vmem:[%s5967 + $0xf8] sm:$0xff]
    %v6032 = vunpack.c.l.b16 %v5968
    %v6033 = vunpack.c.h.b16 %v5968
    %v6034 = vunpack.c.l.b16 %v5969
    %v6035 = vunpack.c.h.b16 %v5969
    %v6036 = vunpack.c.l.b16 %v5970
    %v6037 = vunpack.c.h.b16 %v5970
    %v6038 = vunpack.c.l.b16 %v5971
    %v6039 = vunpack.c.h.b16 %v5971
    %v6040 = vunpack.c.l.b16 %v5972
    %v6041 = vunpack.c.h.b16 %v5972
    %v6042 = vunpack.c.l.b16 %v5973
    %v6043 = vunpack.c.h.b16 %v5973
    %v6044 = vunpack.c.l.b16 %v5974
    %v6045 = vunpack.c.h.b16 %v5974
    %v6046 = vunpack.c.l.b16 %v5975
    %v6047 = vunpack.c.h.b16 %v5975
    %v6048 = vunpack.c.l.b16 %v5976
    %v6049 = vunpack.c.h.b16 %v5976
    %v6050 = vunpack.c.l.b16 %v5977
    %v6051 = vunpack.c.h.b16 %v5977
    %v6052 = vunpack.c.l.b16 %v5978
    %v6053 = vunpack.c.h.b16 %v5978
    %v6054 = vunpack.c.l.b16 %v5979
    %v6055 = vunpack.c.h.b16 %v5979
    %v6056 = vunpack.c.l.b16 %v5980
    %v6057 = vunpack.c.h.b16 %v5980
    %v6058 = vunpack.c.l.b16 %v5981
    %v6059 = vunpack.c.h.b16 %v5981
    %v6060 = vunpack.c.l.b16 %v5982
    %v6061 = vunpack.c.h.b16 %v5982
    %v6062 = vunpack.c.l.b16 %v5983
    %v6063 = vunpack.c.h.b16 %v5983
    %v6064 = vunpack.c.l.b16 %v5984
    %v6065 = vunpack.c.h.b16 %v5984
    %v6066 = vunpack.c.l.b16 %v5985
    %v6067 = vunpack.c.h.b16 %v5985
    %v6068 = vunpack.c.l.b16 %v5986
    %v6069 = vunpack.c.h.b16 %v5986
    %v6070 = vunpack.c.l.b16 %v5987
    %v6071 = vunpack.c.h.b16 %v5987
    %v6072 = vunpack.c.l.b16 %v5988
    %v6073 = vunpack.c.h.b16 %v5988
    %v6074 = vunpack.c.l.b16 %v5989
    %v6075 = vunpack.c.h.b16 %v5989
    %v6076 = vunpack.c.l.b16 %v5990
    %v6077 = vunpack.c.h.b16 %v5990
    %v6078 = vunpack.c.l.b16 %v5991
    %v6079 = vunpack.c.h.b16 %v5991
    %v6080 = vunpack.c.l.b16 %v5992
    %v6081 = vunpack.c.h.b16 %v5992
    %v6082 = vunpack.c.l.b16 %v5993
    %v6083 = vunpack.c.h.b16 %v5993
    %v6084 = vunpack.c.l.b16 %v5994
    %v6085 = vunpack.c.h.b16 %v5994
    %v6086 = vunpack.c.l.b16 %v5995
    %v6087 = vunpack.c.h.b16 %v5995
    %v6088 = vunpack.c.l.b16 %v5996
    %v6089 = vunpack.c.h.b16 %v5996
    %v6090 = vunpack.c.l.b16 %v5997
    %v6091 = vunpack.c.h.b16 %v5997
    %v6092 = vunpack.c.l.b16 %v5998
    %v6093 = vunpack.c.h.b16 %v5998
    %v6094 = vunpack.c.l.b16 %v5999
    %v6095 = vunpack.c.h.b16 %v5999
    %v6096 = vpack.c.b16 %v6034, %v6032
    %v6097 = vpack.c.b16 %v6035, %v6033
    %v6098 = vpack.c.b16 %v6038, %v6036
    %v6099 = vpack.c.b16 %v6039, %v6037
    %v6100 = vpack.c.b16 %v6042, %v6040
    %v6101 = vpack.c.b16 %v6043, %v6041
    %v6102 = vpack.c.b16 %v6046, %v6044
    %v6103 = vpack.c.b16 %v6047, %v6045
    %v6104 = vpack.c.b16 %v6050, %v6048
    %v6105 = vpack.c.b16 %v6051, %v6049
    %v6106 = vpack.c.b16 %v6054, %v6052
    %v6107 = vpack.c.b16 %v6055, %v6053
    %v6108 = vpack.c.b16 %v6058, %v6056
    %v6109 = vpack.c.b16 %v6059, %v6057
    %v6110 = vpack.c.b16 %v6062, %v6060
    %v6111 = vpack.c.b16 %v6063, %v6061
    %v6112 = vpack.c.b16 %v6066, %v6064
    %v6113 = vpack.c.b16 %v6067, %v6065
    %v6114 = vpack.c.b16 %v6070, %v6068
    %v6115 = vpack.c.b16 %v6071, %v6069
    %v6116 = vpack.c.b16 %v6074, %v6072
    %v6117 = vpack.c.b16 %v6075, %v6073
    %v6118 = vpack.c.b16 %v6078, %v6076
    %v6119 = vpack.c.b16 %v6079, %v6077
    %v6120 = vpack.c.b16 %v6082, %v6080
    %v6121 = vpack.c.b16 %v6083, %v6081
    %v6122 = vpack.c.b16 %v6086, %v6084
    %v6123 = vpack.c.b16 %v6087, %v6085
    %v6124 = vpack.c.b16 %v6090, %v6088
    %v6125 = vpack.c.b16 %v6091, %v6089
    %v6126 = vpack.c.b16 %v6094, %v6092
    %v6127 = vpack.c.b16 %v6095, %v6093
    %6160 = vmatpush.bf16.msra.mxu0 %v6110
    %6161 = vmatpush.bf16.msra.mxu0 %v6108
    %6162 = vmatpush.bf16.msra.mxu0 %v6106
    %6163 = vmatpush.bf16.msra.mxu0 %v6104
    %6164 = vmatpush.bf16.msra.mxu0 %v6102
    %6165 = vmatpush.bf16.msra.mxu0 %v6100
    %6166 = vmatpush.bf16.msra.mxu0 %v6098
    %6167 = vmatpush.bf16.msra.mxu0 %v6096
    %6168 = vmatmul.bf16.gmra.mxu0 %v5965
    %v6169 = vpop.f32.mrf.mxu0
    %v6170 = vadd.f32 0.0, %v6169
    %v6171 = vpop.f32.mrf.mxu0
    %v6172 = vadd.f32 0.0, %v6171
    %6173 = vdwg.mxu0
    %6174 = vmatpush.bf16.msra.mxu0 %v6126
    %6175 = vmatpush.bf16.msra.mxu0 %v6124
    %6176 = vmatpush.bf16.msra.mxu0 %v6122
    %6177 = vmatpush.bf16.msra.mxu0 %v6120
    %6178 = vmatpush.bf16.msra.mxu0 %v6118
    %6179 = vmatpush.bf16.msra.mxu0 %v6116
    %6180 = vmatpush.bf16.msra.mxu0 %v6114
    %6181 = vmatpush.bf16.msra.mxu0 %v6112
    %6182 = vmatmul.bf16.gmra.mxu0 %v5966
    %v6183 = vpop.f32.mrf.mxu0
    %v6184 = vadd.f32 %v6170, %v6183
    %v6185 = vpop.f32.mrf.mxu0
    %v6186 = vadd.f32 %v6172, %v6185
    %6187 = vdwg.mxu0
    %6188 = vmatpush.bf16.msra.mxu0 %v6111
    %6189 = vmatpush.bf16.msra.mxu0 %v6109
    %6190 = vmatpush.bf16.msra.mxu0 %v6107
    %6191 = vmatpush.bf16.msra.mxu0 %v6105
    %6192 = vmatpush.bf16.msra.mxu0 %v6103
    %6193 = vmatpush.bf16.msra.mxu0 %v6101
    %6194 = vmatpush.bf16.msra.mxu0 %v6099
    %6195 = vmatpush.bf16.msra.mxu0 %v6097
    %6196 = vmatmul.bf16.gmra.mxu0 %v5965
    %v6197 = vpop.f32.mrf.mxu0
    %v6198 = vadd.f32 0.0, %v6197
    %v6199 = vpop.f32.mrf.mxu0
    %v6200 = vadd.f32 0.0, %v6199
    %6201 = vdwg.mxu0
    %6202 = vmatpush.bf16.msra.mxu0 %v6127
    %6203 = vmatpush.bf16.msra.mxu0 %v6125
    %6204 = vmatpush.bf16.msra.mxu0 %v6123
    %6205 = vmatpush.bf16.msra.mxu0 %v6121
    %6206 = vmatpush.bf16.msra.mxu0 %v6119
    %6207 = vmatpush.bf16.msra.mxu0 %v6117
    %6208 = vmatpush.bf16.msra.mxu0 %v6115
    %6209 = vmatpush.bf16.msra.mxu0 %v6113
    %6210 = vmatmul.bf16.gmra.mxu0 %v5966
    %v6211 = vpop.f32.mrf.mxu0
    %v6212 = vadd.f32 %v6198, %v6211
    %v6213 = vpop.f32.mrf.mxu0
    %v6214 = vadd.f32 %v6200, %v6213
    %6215 = vdwg.mxu0
    %v6248 = vunpack.c.l.b16 %v5894
    %v6249 = vunpack.c.h.b16 %v5894
    %v6250 = vunpack.c.l.b16 %v5895
    %v6251 = vunpack.c.h.b16 %v5895
    %v6252 = vunpack.c.l.b16 %v5896
    %v6253 = vunpack.c.h.b16 %v5896
    %v6254 = vunpack.c.l.b16 %v5897
    %v6255 = vunpack.c.h.b16 %v5897
    %v6256 = vunpack.c.l.b16 %v5898
    %v6257 = vunpack.c.h.b16 %v5898
    %v6258 = vunpack.c.l.b16 %v5899
    %v6259 = vunpack.c.h.b16 %v5899
    %v6260 = vunpack.c.l.b16 %v5900
    %v6261 = vunpack.c.h.b16 %v5900
    %v6262 = vunpack.c.l.b16 %v5901
    %v6263 = vunpack.c.h.b16 %v5901
    %v6264 = vunpack.c.l.b16 %v5902
    %v6265 = vunpack.c.h.b16 %v5902
    %v6266 = vunpack.c.l.b16 %v5903
    %v6267 = vunpack.c.h.b16 %v5903
    %v6268 = vunpack.c.l.b16 %v5904
    %v6269 = vunpack.c.h.b16 %v5904
    %v6270 = vunpack.c.l.b16 %v5905
    %v6271 = vunpack.c.h.b16 %v5905
    %v6272 = vunpack.c.l.b16 %v5906
    %v6273 = vunpack.c.h.b16 %v5906
    %v6274 = vunpack.c.l.b16 %v5907
    %v6275 = vunpack.c.h.b16 %v5907
    %v6276 = vunpack.c.l.b16 %v5908
    %v6277 = vunpack.c.h.b16 %v5908
    %v6278 = vunpack.c.l.b16 %v5909
    %v6279 = vunpack.c.h.b16 %v5909
    %v6280 = vunpack.c.l.b16 %v5910
    %v6281 = vunpack.c.h.b16 %v5910
    %v6282 = vunpack.c.l.b16 %v5911
    %v6283 = vunpack.c.h.b16 %v5911
    %v6284 = vunpack.c.l.b16 %v5912
    %v6285 = vunpack.c.h.b16 %v5912
    %v6286 = vunpack.c.l.b16 %v5913
    %v6287 = vunpack.c.h.b16 %v5913
    %v6288 = vunpack.c.l.b16 %v5914
    %v6289 = vunpack.c.h.b16 %v5914
    %v6290 = vunpack.c.l.b16 %v5915
    %v6291 = vunpack.c.h.b16 %v5915
    %v6292 = vunpack.c.l.b16 %v5916
    %v6293 = vunpack.c.h.b16 %v5916
    %v6294 = vunpack.c.l.b16 %v5917
    %v6295 = vunpack.c.h.b16 %v5917
    %v6296 = vunpack.c.l.b16 %v5918
    %v6297 = vunpack.c.h.b16 %v5918
    %v6298 = vunpack.c.l.b16 %v5919
    %v6299 = vunpack.c.h.b16 %v5919
    %v6300 = vunpack.c.l.b16 %v5920
    %v6301 = vunpack.c.h.b16 %v5920
    %v6302 = vunpack.c.l.b16 %v5921
    %v6303 = vunpack.c.h.b16 %v5921
    %v6304 = vunpack.c.l.b16 %v5922
    %v6305 = vunpack.c.h.b16 %v5922
    %v6306 = vunpack.c.l.b16 %v5923
    %v6307 = vunpack.c.h.b16 %v5923
    %v6308 = vunpack.c.l.b16 %v5924
    %v6309 = vunpack.c.h.b16 %v5924
    %v6310 = vunpack.c.l.b16 %v5925
    %v6311 = vunpack.c.h.b16 %v5925
    %v6312 = vpack.c.b16 %v6250, %v6248
    %v6313 = vpack.c.b16 %v6251, %v6249
    %v6314 = vpack.c.b16 %v6254, %v6252
    %v6315 = vpack.c.b16 %v6255, %v6253
    %v6316 = vpack.c.b16 %v6258, %v6256
    %v6317 = vpack.c.b16 %v6259, %v6257
    %v6318 = vpack.c.b16 %v6262, %v6260
    %v6319 = vpack.c.b16 %v6263, %v6261
    %v6320 = vpack.c.b16 %v6266, %v6264
    %v6321 = vpack.c.b16 %v6267, %v6265
    %v6322 = vpack.c.b16 %v6270, %v6268
    %v6323 = vpack.c.b16 %v6271, %v6269
    %v6324 = vpack.c.b16 %v6274, %v6272
    %v6325 = vpack.c.b16 %v6275, %v6273
    %v6326 = vpack.c.b16 %v6278, %v6276
    %v6327 = vpack.c.b16 %v6279, %v6277
    %v6328 = vpack.c.b16 %v6282, %v6280
    %v6329 = vpack.c.b16 %v6283, %v6281
    %v6330 = vpack.c.b16 %v6286, %v6284
    %v6331 = vpack.c.b16 %v6287, %v6285
    %v6332 = vpack.c.b16 %v6290, %v6288
    %v6333 = vpack.c.b16 %v6291, %v6289
    %v6334 = vpack.c.b16 %v6294, %v6292
    %v6335 = vpack.c.b16 %v6295, %v6293
    %v6336 = vpack.c.b16 %v6298, %v6296
    %v6337 = vpack.c.b16 %v6299, %v6297
    %v6338 = vpack.c.b16 %v6302, %v6300
    %v6339 = vpack.c.b16 %v6303, %v6301
    %v6340 = vpack.c.b16 %v6306, %v6304
    %v6341 = vpack.c.b16 %v6307, %v6305
    %v6342 = vpack.c.b16 %v6310, %v6308
    %v6343 = vpack.c.b16 %v6311, %v6309
    %6376 = vmatpush.bf16.msra.mxu0 %v6326
    %6377 = vmatpush.bf16.msra.mxu0 %v6324
    %6378 = vmatpush.bf16.msra.mxu0 %v6322
    %6379 = vmatpush.bf16.msra.mxu0 %v6320
    %6380 = vmatpush.bf16.msra.mxu0 %v6318
    %6381 = vmatpush.bf16.msra.mxu0 %v6316
    %6382 = vmatpush.bf16.msra.mxu0 %v6314
    %6383 = vmatpush.bf16.msra.mxu0 %v6312
    %6384 = vmatmul.bf16.gmra.mxu0 %v5892
    %v6385 = vpop.f32.mrf.mxu0
    %v6386 = vadd.f32 %v6184, %v6385
    %v6387 = vpop.f32.mrf.mxu0
    %v6388 = vadd.f32 %v6186, %v6387
    %6389 = vdwg.mxu0
    %6390 = vmatpush.bf16.msra.mxu0 %v6342
    %6391 = vmatpush.bf16.msra.mxu0 %v6340
    %6392 = vmatpush.bf16.msra.mxu0 %v6338
    %6393 = vmatpush.bf16.msra.mxu0 %v6336
    %6394 = vmatpush.bf16.msra.mxu0 %v6334
    %6395 = vmatpush.bf16.msra.mxu0 %v6332
    %6396 = vmatpush.bf16.msra.mxu0 %v6330
    %6397 = vmatpush.bf16.msra.mxu0 %v6328
    %6398 = vmatmul.bf16.gmra.mxu0 %v5893
    %v6399 = vpop.f32.mrf.mxu0
    %v6400 = vadd.f32 %v6386, %v6399
    %v6401 = vpop.f32.mrf.mxu0
    %v6402 = vadd.f32 %v6388, %v6401
    %6403 = vdwg.mxu0
    %6404 = vmatpush.bf16.msra.mxu0 %v6327
    %6405 = vmatpush.bf16.msra.mxu0 %v6325
    %6406 = vmatpush.bf16.msra.mxu0 %v6323
    %6407 = vmatpush.bf16.msra.mxu0 %v6321
    %6408 = vmatpush.bf16.msra.mxu0 %v6319
    %6409 = vmatpush.bf16.msra.mxu0 %v6317
    %6410 = vmatpush.bf16.msra.mxu0 %v6315
    %6411 = vmatpush.bf16.msra.mxu0 %v6313
    %6412 = vmatmul.bf16.gmra.mxu0 %v5892
    %v6413 = vpop.f32.mrf.mxu0
    %v6414 = vadd.f32 %v6212, %v6413
    %v6415 = vpop.f32.mrf.mxu0
    %v6416 = vadd.f32 %v6214, %v6415
    %6417 = vdwg.mxu0
    %6418 = vmatpush.bf16.msra.mxu0 %v6343
    %6419 = vmatpush.bf16.msra.mxu0 %v6341
    %6420 = vmatpush.bf16.msra.mxu0 %v6339
    %6421 = vmatpush.bf16.msra.mxu0 %v6337
    %6422 = vmatpush.bf16.msra.mxu0 %v6335
    %6423 = vmatpush.bf16.msra.mxu0 %v6333
    %6424 = vmatpush.bf16.msra.mxu0 %v6331
    %6425 = vmatpush.bf16.msra.mxu0 %v6329
    %6426 = vmatmul.bf16.gmra.mxu0 %v5893
    %v6427 = vpop.f32.mrf.mxu0
    %v6428 = vadd.f32 %v6414, %v6427
    %v6429 = vpop.f32.mrf.mxu0
    %v6430 = vadd.f32 %v6416, %v6429
    %6431 = vdwg.mxu0
    %s6432 = scalar_lea.vmem %s55, 16
    %v6433 = vld [vmem:[%s6432] sm:$0xf]
    %v6434 = vld [vmem:[%s6432 + $0x4] sm:$0xf]
    %v6437 = vunpack.c.l.b16 %v6433
    %v6438 = vunpack.c.l.b16 %v6434
    %v6439 = vpack.c.b16 %v6438, %v6437
    %v6441 = vsel %vm3041, %v6439, 0
    %6443 = vmatpush.bf16.msra.mxu0 0
    %6444 = vmatpush.bf16.msra.mxu0 0
    %6445 = vmatpush.bf16.msra.mxu0 0
    %6446 = vmatpush.bf16.msra.mxu0 0
    %6447 = vmatpush.bf16.msra.mxu0 0
    %6448 = vmatpush.bf16.msra.mxu0 0
    %6449 = vmatpush.bf16.msra.mxu0 0
    %6450 = vmatpush.bf16.msra.mxu0 %v5859
    %6451 = vmatmul.bf16.gmra.mxu0 %v6441
    %v6452 = vpop.f32.mrf.mxu0
    %v6453 = vadd.f32 0.0, %v6452
    %v6454 = vpop.f32.mrf.mxu0
    %v6455 = vadd.f32 0.0, %v6454
    %6456 = vdwg.mxu0
    %6457 = vmatpush.bf16.msra.mxu0 0
    %6458 = vmatpush.bf16.msra.mxu0 0
    %6459 = vmatpush.bf16.msra.mxu0 0
    %6460 = vmatpush.bf16.msra.mxu0 0
    %6461 = vmatpush.bf16.msra.mxu0 0
    %6462 = vmatpush.bf16.msra.mxu0 0
    %6463 = vmatpush.bf16.msra.mxu0 0
    %6464 = vmatpush.bf16.msra.mxu0 %v5862
    %6465 = vmatmul.bf16.gmra.mxu0 %v6441
    %v6466 = vpop.f32.mrf.mxu0
    %v6467 = vadd.f32 0.0, %v6466
    %v6468 = vpop.f32.mrf.mxu0
    %v6469 = vadd.f32 0.0, %v6468
    %6470 = vdwg.mxu0
    %v6471 = vpack.c.bf16 %v6455, %v6453
    %v6472 = vpack.c.bf16 %v6469, %v6467
    %s6473 = scalar_lea.vmem [#allocation7], 512
    %v6474 = vld [vmem:[%s6473] sm:$0xff]
    %v6475 = vld [vmem:[%s6473 + $0x8] sm:$0xff]
    %v6476 = vld [vmem:[%s6473 + $0x10] sm:$0xff]
    %v6477 = vld [vmem:[%s6473 + $0x18] sm:$0xff]
    %v6478 = vld [vmem:[%s6473 + $0x20] sm:$0xff]
    %v6479 = vld [vmem:[%s6473 + $0x28] sm:$0xff]
    %v6480 = vld [vmem:[%s6473 + $0x30] sm:$0xff]
    %v6481 = vld [vmem:[%s6473 + $0x38] sm:$0xff]
    %v6482 = vld [vmem:[%s6473 + $0x40] sm:$0xff]
    %v6483 = vld [vmem:[%s6473 + $0x48] sm:$0xff]
    %v6484 = vld [vmem:[%s6473 + $0x50] sm:$0xff]
    %v6485 = vld [vmem:[%s6473 + $0x58] sm:$0xff]
    %v6486 = vld [vmem:[%s6473 + $0x60] sm:$0xff]
    %v6487 = vld [vmem:[%s6473 + $0x68] sm:$0xff]
    %v6488 = vld [vmem:[%s6473 + $0x70] sm:$0xff]
    %v6489 = vld [vmem:[%s6473 + $0x78] sm:$0xff]
    %v6490 = vld [vmem:[%s6473 + $0x80] sm:$0xff]
    %v6491 = vld [vmem:[%s6473 + $0x88] sm:$0xff]
    %v6492 = vld [vmem:[%s6473 + $0x90] sm:$0xff]
    %v6493 = vld [vmem:[%s6473 + $0x98] sm:$0xff]
    %v6494 = vld [vmem:[%s6473 + $0xa0] sm:$0xff]
    %v6495 = vld [vmem:[%s6473 + $0xa8] sm:$0xff]
    %v6496 = vld [vmem:[%s6473 + $0xb0] sm:$0xff]
    %v6497 = vld [vmem:[%s6473 + $0xb8] sm:$0xff]
    %v6498 = vld [vmem:[%s6473 + $0xc0] sm:$0xff]
    %v6499 = vld [vmem:[%s6473 + $0xc8] sm:$0xff]
    %v6500 = vld [vmem:[%s6473 + $0xd0] sm:$0xff]
    %v6501 = vld [vmem:[%s6473 + $0xd8] sm:$0xff]
    %v6502 = vld [vmem:[%s6473 + $0xe0] sm:$0xff]
    %v6503 = vld [vmem:[%s6473 + $0xe8] sm:$0xff]
    %v6504 = vld [vmem:[%s6473 + $0xf0] sm:$0xff]
    %v6505 = vld [vmem:[%s6473 + $0xf8] sm:$0xff]
    %v6538 = vunpack.c.l.b16 %v6474
    %v6539 = vunpack.c.h.b16 %v6474
    %v6540 = vunpack.c.l.b16 %v6475
    %v6541 = vunpack.c.h.b16 %v6475
    %v6542 = vunpack.c.l.b16 %v6476
    %v6543 = vunpack.c.h.b16 %v6476
    %v6544 = vunpack.c.l.b16 %v6477
    %v6545 = vunpack.c.h.b16 %v6477
    %v6546 = vunpack.c.l.b16 %v6478
    %v6547 = vunpack.c.h.b16 %v6478
    %v6548 = vunpack.c.l.b16 %v6479
    %v6549 = vunpack.c.h.b16 %v6479
    %v6550 = vunpack.c.l.b16 %v6480
    %v6551 = vunpack.c.h.b16 %v6480
    %v6552 = vunpack.c.l.b16 %v6481
    %v6553 = vunpack.c.h.b16 %v6481
    %v6554 = vunpack.c.l.b16 %v6482
    %v6555 = vunpack.c.h.b16 %v6482
    %v6556 = vunpack.c.l.b16 %v6483
    %v6557 = vunpack.c.h.b16 %v6483
    %v6558 = vunpack.c.l.b16 %v6484
    %v6559 = vunpack.c.h.b16 %v6484
    %v6560 = vunpack.c.l.b16 %v6485
    %v6561 = vunpack.c.h.b16 %v6485
    %v6562 = vunpack.c.l.b16 %v6486
    %v6563 = vunpack.c.h.b16 %v6486
    %v6564 = vunpack.c.l.b16 %v6487
    %v6565 = vunpack.c.h.b16 %v6487
    %v6566 = vunpack.c.l.b16 %v6488
    %v6567 = vunpack.c.h.b16 %v6488
    %v6568 = vunpack.c.l.b16 %v6489
    %v6569 = vunpack.c.h.b16 %v6489
    %v6570 = vunpack.c.l.b16 %v6490
    %v6571 = vunpack.c.h.b16 %v6490
    %v6572 = vunpack.c.l.b16 %v6491
    %v6573 = vunpack.c.h.b16 %v6491
    %v6574 = vunpack.c.l.b16 %v6492
    %v6575 = vunpack.c.h.b16 %v6492
    %v6576 = vunpack.c.l.b16 %v6493
    %v6577 = vunpack.c.h.b16 %v6493
    %v6578 = vunpack.c.l.b16 %v6494
    %v6579 = vunpack.c.h.b16 %v6494
    %v6580 = vunpack.c.l.b16 %v6495
    %v6581 = vunpack.c.h.b16 %v6495
    %v6582 = vunpack.c.l.b16 %v6496
    %v6583 = vunpack.c.h.b16 %v6496
    %v6584 = vunpack.c.l.b16 %v6497
    %v6585 = vunpack.c.h.b16 %v6497
    %v6586 = vunpack.c.l.b16 %v6498
    %v6587 = vunpack.c.h.b16 %v6498
    %v6588 = vunpack.c.l.b16 %v6499
    %v6589 = vunpack.c.h.b16 %v6499
    %v6590 = vunpack.c.l.b16 %v6500
    %v6591 = vunpack.c.h.b16 %v6500
    %v6592 = vunpack.c.l.b16 %v6501
    %v6593 = vunpack.c.h.b16 %v6501
    %v6594 = vunpack.c.l.b16 %v6502
    %v6595 = vunpack.c.h.b16 %v6502
    %v6596 = vunpack.c.l.b16 %v6503
    %v6597 = vunpack.c.h.b16 %v6503
    %v6598 = vunpack.c.l.b16 %v6504
    %v6599 = vunpack.c.h.b16 %v6504
    %v6600 = vunpack.c.l.b16 %v6505
    %v6601 = vunpack.c.h.b16 %v6505
    %v6602 = vpack.c.b16 %v6540, %v6538
    %v6603 = vpack.c.b16 %v6541, %v6539
    %v6604 = vpack.c.b16 %v6544, %v6542
    %v6605 = vpack.c.b16 %v6545, %v6543
    %v6606 = vpack.c.b16 %v6548, %v6546
    %v6607 = vpack.c.b16 %v6549, %v6547
    %v6608 = vpack.c.b16 %v6552, %v6550
    %v6609 = vpack.c.b16 %v6553, %v6551
    %v6610 = vpack.c.b16 %v6556, %v6554
    %v6611 = vpack.c.b16 %v6557, %v6555
    %v6612 = vpack.c.b16 %v6560, %v6558
    %v6613 = vpack.c.b16 %v6561, %v6559
    %v6614 = vpack.c.b16 %v6564, %v6562
    %v6615 = vpack.c.b16 %v6565, %v6563
    %v6616 = vpack.c.b16 %v6568, %v6566
    %v6617 = vpack.c.b16 %v6569, %v6567
    %v6618 = vpack.c.b16 %v6572, %v6570
    %v6619 = vpack.c.b16 %v6573, %v6571
    %v6620 = vpack.c.b16 %v6576, %v6574
    %v6621 = vpack.c.b16 %v6577, %v6575
    %v6622 = vpack.c.b16 %v6580, %v6578
    %v6623 = vpack.c.b16 %v6581, %v6579
    %v6624 = vpack.c.b16 %v6584, %v6582
    %v6625 = vpack.c.b16 %v6585, %v6583
    %v6626 = vpack.c.b16 %v6588, %v6586
    %v6627 = vpack.c.b16 %v6589, %v6587
    %v6628 = vpack.c.b16 %v6592, %v6590
    %v6629 = vpack.c.b16 %v6593, %v6591
    %v6630 = vpack.c.b16 %v6596, %v6594
    %v6631 = vpack.c.b16 %v6597, %v6595
    %v6632 = vpack.c.b16 %v6600, %v6598
    %v6633 = vpack.c.b16 %v6601, %v6599
    %6666 = vmatpush.bf16.msra.mxu0 %v6616
    %6667 = vmatpush.bf16.msra.mxu0 %v6614
    %6668 = vmatpush.bf16.msra.mxu0 %v6612
    %6669 = vmatpush.bf16.msra.mxu0 %v6610
    %6670 = vmatpush.bf16.msra.mxu0 %v6608
    %6671 = vmatpush.bf16.msra.mxu0 %v6606
    %6672 = vmatpush.bf16.msra.mxu0 %v6604
    %6673 = vmatpush.bf16.msra.mxu0 %v6602
    %6674 = vmatmul.bf16.gmra.mxu0 %v6471
    %v6675 = vpop.f32.mrf.mxu0
    %v6676 = vadd.f32 0.0, %v6675
    %v6677 = vpop.f32.mrf.mxu0
    %v6678 = vadd.f32 0.0, %v6677
    %6679 = vdwg.mxu0
    %6680 = vmatpush.bf16.msra.mxu0 %v6632
    %6681 = vmatpush.bf16.msra.mxu0 %v6630
    %6682 = vmatpush.bf16.msra.mxu0 %v6628
    %6683 = vmatpush.bf16.msra.mxu0 %v6626
    %6684 = vmatpush.bf16.msra.mxu0 %v6624
    %6685 = vmatpush.bf16.msra.mxu0 %v6622
    %6686 = vmatpush.bf16.msra.mxu0 %v6620
    %6687 = vmatpush.bf16.msra.mxu0 %v6618
    %6688 = vmatmul.bf16.gmra.mxu0 %v6472
    %v6689 = vpop.f32.mrf.mxu0
    %v6690 = vadd.f32 %v6676, %v6689
    %v6691 = vpop.f32.mrf.mxu0
    %v6692 = vadd.f32 %v6678, %v6691
    %6693 = vdwg.mxu0
    %6694 = vmatpush.bf16.msra.mxu0 %v6617
    %6695 = vmatpush.bf16.msra.mxu0 %v6615
    %6696 = vmatpush.bf16.msra.mxu0 %v6613
    %6697 = vmatpush.bf16.msra.mxu0 %v6611
    %6698 = vmatpush.bf16.msra.mxu0 %v6609
    %6699 = vmatpush.bf16.msra.mxu0 %v6607
    %6700 = vmatpush.bf16.msra.mxu0 %v6605
    %6701 = vmatpush.bf16.msra.mxu0 %v6603
    %6702 = vmatmul.bf16.gmra.mxu0 %v6471
    %v6703 = vpop.f32.mrf.mxu0
    %v6704 = vadd.f32 0.0, %v6703
    %v6705 = vpop.f32.mrf.mxu0
    %v6706 = vadd.f32 0.0, %v6705
    %6707 = vdwg.mxu0
    %6708 = vmatpush.bf16.msra.mxu0 %v6633
    %6709 = vmatpush.bf16.msra.mxu0 %v6631
    %6710 = vmatpush.bf16.msra.mxu0 %v6629
    %6711 = vmatpush.bf16.msra.mxu0 %v6627
    %6712 = vmatpush.bf16.msra.mxu0 %v6625
    %6713 = vmatpush.bf16.msra.mxu0 %v6623
    %6714 = vmatpush.bf16.msra.mxu0 %v6621
    %6715 = vmatpush.bf16.msra.mxu0 %v6619
    %6716 = vmatmul.bf16.gmra.mxu0 %v6472
    %v6717 = vpop.f32.mrf.mxu0
    %v6718 = vadd.f32 %v6704, %v6717
    %v6719 = vpop.f32.mrf.mxu0
    %v6720 = vadd.f32 %v6706, %v6719
    %6721 = vdwg.mxu0
    %v6722 = vadd.f32 %v6400, %v6690
    %v6723 = vadd.f32 %v6428, %v6718
    %v6724 = vadd.f32 %v6402, %v6692
    %v6725 = vadd.f32 %v6430, %v6720
    %s6726 = scalar_lea.vmem %s55, 24
    %v6727 = vld [vmem:[%s6726] sm:$0xf]
    %v6728 = vld [vmem:[%s6726 + $0x4] sm:$0xf]
    %v6731 = vunpack.c.l.b16 %v6727
    %v6732 = vunpack.c.l.b16 %v6728
    %v6733 = vpack.c.b16 %v6732, %v6731
    %v6735 = vsel %vm3041, %v6733, 0
    %6737 = vmatpush.bf16.msra.mxu0 0
    %6738 = vmatpush.bf16.msra.mxu0 0
    %6739 = vmatpush.bf16.msra.mxu0 0
    %6740 = vmatpush.bf16.msra.mxu0 0
    %6741 = vmatpush.bf16.msra.mxu0 0
    %6742 = vmatpush.bf16.msra.mxu0 0
    %6743 = vmatpush.bf16.msra.mxu0 0
    %6744 = vmatpush.bf16.msra.mxu0 %v5859
    %6745 = vmatmul.bf16.gmra.mxu0 %v6735
    %v6746 = vpop.f32.mrf.mxu0
    %v6747 = vadd.f32 0.0, %v6746
    %v6748 = vpop.f32.mrf.mxu0
    %v6749 = vadd.f32 0.0, %v6748
    %6750 = vdwg.mxu0
    %6751 = vmatpush.bf16.msra.mxu0 0
    %6752 = vmatpush.bf16.msra.mxu0 0
    %6753 = vmatpush.bf16.msra.mxu0 0
    %6754 = vmatpush.bf16.msra.mxu0 0
    %6755 = vmatpush.bf16.msra.mxu0 0
    %6756 = vmatpush.bf16.msra.mxu0 0
    %6757 = vmatpush.bf16.msra.mxu0 0
    %6758 = vmatpush.bf16.msra.mxu0 %v5862
    %6759 = vmatmul.bf16.gmra.mxu0 %v6735
    %v6760 = vpop.f32.mrf.mxu0
    %v6761 = vadd.f32 0.0, %v6760
    %v6762 = vpop.f32.mrf.mxu0
    %v6763 = vadd.f32 0.0, %v6762
    %6764 = vdwg.mxu0
    %v6765 = vpack.c.bf16 %v6749, %v6747
    %v6766 = vpack.c.bf16 %v6763, %v6761
    %s6767 = scalar_lea.vmem [#allocation7], 768
    %v6768 = vld [vmem:[%s6767] sm:$0xff]
    %v6769 = vld [vmem:[%s6767 + $0x8] sm:$0xff]
    %v6770 = vld [vmem:[%s6767 + $0x10] sm:$0xff]
    %v6771 = vld [vmem:[%s6767 + $0x18] sm:$0xff]
    %v6772 = vld [vmem:[%s6767 + $0x20] sm:$0xff]
    %v6773 = vld [vmem:[%s6767 + $0x28] sm:$0xff]
    %v6774 = vld [vmem:[%s6767 + $0x30] sm:$0xff]
    %v6775 = vld [vmem:[%s6767 + $0x38] sm:$0xff]
    %v6776 = vld [vmem:[%s6767 + $0x40] sm:$0xff]
    %v6777 = vld [vmem:[%s6767 + $0x48] sm:$0xff]
    %v6778 = vld [vmem:[%s6767 + $0x50] sm:$0xff]
    %v6779 = vld [vmem:[%s6767 + $0x58] sm:$0xff]
    %v6780 = vld [vmem:[%s6767 + $0x60] sm:$0xff]
    %v6781 = vld [vmem:[%s6767 + $0x68] sm:$0xff]
    %v6782 = vld [vmem:[%s6767 + $0x70] sm:$0xff]
    %v6783 = vld [vmem:[%s6767 + $0x78] sm:$0xff]
    %v6784 = vld [vmem:[%s6767 + $0x80] sm:$0xff]
    %v6785 = vld [vmem:[%s6767 + $0x88] sm:$0xff]
    %v6786 = vld [vmem:[%s6767 + $0x90] sm:$0xff]
    %v6787 = vld [vmem:[%s6767 + $0x98] sm:$0xff]
    %v6788 = vld [vmem:[%s6767 + $0xa0] sm:$0xff]
    %v6789 = vld [vmem:[%s6767 + $0xa8] sm:$0xff]
    %v6790 = vld [vmem:[%s6767 + $0xb0] sm:$0xff]
    %v6791 = vld [vmem:[%s6767 + $0xb8] sm:$0xff]
    %v6792 = vld [vmem:[%s6767 + $0xc0] sm:$0xff]
    %v6793 = vld [vmem:[%s6767 + $0xc8] sm:$0xff]
    %v6794 = vld [vmem:[%s6767 + $0xd0] sm:$0xff]
    %v6795 = vld [vmem:[%s6767 + $0xd8] sm:$0xff]
    %v6796 = vld [vmem:[%s6767 + $0xe0] sm:$0xff]
    %v6797 = vld [vmem:[%s6767 + $0xe8] sm:$0xff]
    %v6798 = vld [vmem:[%s6767 + $0xf0] sm:$0xff]
    %v6799 = vld [vmem:[%s6767 + $0xf8] sm:$0xff]
    %v6832 = vunpack.c.l.b16 %v6768
    %v6833 = vunpack.c.h.b16 %v6768
    %v6834 = vunpack.c.l.b16 %v6769
    %v6835 = vunpack.c.h.b16 %v6769
    %v6836 = vunpack.c.l.b16 %v6770
    %v6837 = vunpack.c.h.b16 %v6770
    %v6838 = vunpack.c.l.b16 %v6771
    %v6839 = vunpack.c.h.b16 %v6771
    %v6840 = vunpack.c.l.b16 %v6772
    %v6841 = vunpack.c.h.b16 %v6772
    %v6842 = vunpack.c.l.b16 %v6773
    %v6843 = vunpack.c.h.b16 %v6773
    %v6844 = vunpack.c.l.b16 %v6774
    %v6845 = vunpack.c.h.b16 %v6774
    %v6846 = vunpack.c.l.b16 %v6775
    %v6847 = vunpack.c.h.b16 %v6775
    %v6848 = vunpack.c.l.b16 %v6776
    %v6849 = vunpack.c.h.b16 %v6776
    %v6850 = vunpack.c.l.b16 %v6777
    %v6851 = vunpack.c.h.b16 %v6777
    %v6852 = vunpack.c.l.b16 %v6778
    %v6853 = vunpack.c.h.b16 %v6778
    %v6854 = vunpack.c.l.b16 %v6779
    %v6855 = vunpack.c.h.b16 %v6779
    %v6856 = vunpack.c.l.b16 %v6780
    %v6857 = vunpack.c.h.b16 %v6780
    %v6858 = vunpack.c.l.b16 %v6781
    %v6859 = vunpack.c.h.b16 %v6781
    %v6860 = vunpack.c.l.b16 %v6782
    %v6861 = vunpack.c.h.b16 %v6782
    %v6862 = vunpack.c.l.b16 %v6783
    %v6863 = vunpack.c.h.b16 %v6783
    %v6864 = vunpack.c.l.b16 %v6784
    %v6865 = vunpack.c.h.b16 %v6784
    %v6866 = vunpack.c.l.b16 %v6785
    %v6867 = vunpack.c.h.b16 %v6785
    %v6868 = vunpack.c.l.b16 %v6786
    %v6869 = vunpack.c.h.b16 %v6786
    %v6870 = vunpack.c.l.b16 %v6787
    %v6871 = vunpack.c.h.b16 %v6787
    %v6872 = vunpack.c.l.b16 %v6788
    %v6873 = vunpack.c.h.b16 %v6788
    %v6874 = vunpack.c.l.b16 %v6789
    %v6875 = vunpack.c.h.b16 %v6789
    %v6876 = vunpack.c.l.b16 %v6790
    %v6877 = vunpack.c.h.b16 %v6790
    %v6878 = vunpack.c.l.b16 %v6791
    %v6879 = vunpack.c.h.b16 %v6791
    %v6880 = vunpack.c.l.b16 %v6792
    %v6881 = vunpack.c.h.b16 %v6792
    %v6882 = vunpack.c.l.b16 %v6793
    %v6883 = vunpack.c.h.b16 %v6793
    %v6884 = vunpack.c.l.b16 %v6794
    %v6885 = vunpack.c.h.b16 %v6794
    %v6886 = vunpack.c.l.b16 %v6795
    %v6887 = vunpack.c.h.b16 %v6795
    %v6888 = vunpack.c.l.b16 %v6796
    %v6889 = vunpack.c.h.b16 %v6796
    %v6890 = vunpack.c.l.b16 %v6797
    %v6891 = vunpack.c.h.b16 %v6797
    %v6892 = vunpack.c.l.b16 %v6798
    %v6893 = vunpack.c.h.b16 %v6798
    %v6894 = vunpack.c.l.b16 %v6799
    %v6895 = vunpack.c.h.b16 %v6799
    %v6896 = vpack.c.b16 %v6834, %v6832
    %v6897 = vpack.c.b16 %v6835, %v6833
    %v6898 = vpack.c.b16 %v6838, %v6836
    %v6899 = vpack.c.b16 %v6839, %v6837
    %v6900 = vpack.c.b16 %v6842, %v6840
    %v6901 = vpack.c.b16 %v6843, %v6841
    %v6902 = vpack.c.b16 %v6846, %v6844
    %v6903 = vpack.c.b16 %v6847, %v6845
    %v6904 = vpack.c.b16 %v6850, %v6848
    %v6905 = vpack.c.b16 %v6851, %v6849
    %v6906 = vpack.c.b16 %v6854, %v6852
    %v6907 = vpack.c.b16 %v6855, %v6853
    %v6908 = vpack.c.b16 %v6858, %v6856
    %v6909 = vpack.c.b16 %v6859, %v6857
    %v6910 = vpack.c.b16 %v6862, %v6860
    %v6911 = vpack.c.b16 %v6863, %v6861
    %v6912 = vpack.c.b16 %v6866, %v6864
    %v6913 = vpack.c.b16 %v6867, %v6865
    %v6914 = vpack.c.b16 %v6870, %v6868
    %v6915 = vpack.c.b16 %v6871, %v6869
    %v6916 = vpack.c.b16 %v6874, %v6872
    %v6917 = vpack.c.b16 %v6875, %v6873
    %v6918 = vpack.c.b16 %v6878, %v6876
    %v6919 = vpack.c.b16 %v6879, %v6877
    %v6920 = vpack.c.b16 %v6882, %v6880
    %v6921 = vpack.c.b16 %v6883, %v6881
    %v6922 = vpack.c.b16 %v6886, %v6884
    %v6923 = vpack.c.b16 %v6887, %v6885
    %v6924 = vpack.c.b16 %v6890, %v6888
    %v6925 = vpack.c.b16 %v6891, %v6889
    %v6926 = vpack.c.b16 %v6894, %v6892
    %v6927 = vpack.c.b16 %v6895, %v6893
    %6960 = vmatpush.bf16.msra.mxu0 %v6910
    %6961 = vmatpush.bf16.msra.mxu0 %v6908
    %6962 = vmatpush.bf16.msra.mxu0 %v6906
    %6963 = vmatpush.bf16.msra.mxu0 %v6904
    %6964 = vmatpush.bf16.msra.mxu0 %v6902
    %6965 = vmatpush.bf16.msra.mxu0 %v6900
    %6966 = vmatpush.bf16.msra.mxu0 %v6898
    %6967 = vmatpush.bf16.msra.mxu0 %v6896
    %6968 = vmatmul.bf16.gmra.mxu0 %v6765
    %v6969 = vpop.f32.mrf.mxu0
    %v6970 = vadd.f32 0.0, %v6969
    %v6971 = vpop.f32.mrf.mxu0
    %v6972 = vadd.f32 0.0, %v6971
    %6973 = vdwg.mxu0
    %6974 = vmatpush.bf16.msra.mxu0 %v6926
    %6975 = vmatpush.bf16.msra.mxu0 %v6924
    %6976 = vmatpush.bf16.msra.mxu0 %v6922
    %6977 = vmatpush.bf16.msra.mxu0 %v6920
    %6978 = vmatpush.bf16.msra.mxu0 %v6918
    %6979 = vmatpush.bf16.msra.mxu0 %v6916
    %6980 = vmatpush.bf16.msra.mxu0 %v6914
    %6981 = vmatpush.bf16.msra.mxu0 %v6912
    %6982 = vmatmul.bf16.gmra.mxu0 %v6766
    %v6983 = vpop.f32.mrf.mxu0
    %v6984 = vadd.f32 %v6970, %v6983
    %v6985 = vpop.f32.mrf.mxu0
    %v6986 = vadd.f32 %v6972, %v6985
    %6987 = vdwg.mxu0
    %6988 = vmatpush.bf16.msra.mxu0 %v6911
    %6989 = vmatpush.bf16.msra.mxu0 %v6909
    %6990 = vmatpush.bf16.msra.mxu0 %v6907
    %6991 = vmatpush.bf16.msra.mxu0 %v6905
    %6992 = vmatpush.bf16.msra.mxu0 %v6903
    %6993 = vmatpush.bf16.msra.mxu0 %v6901
    %6994 = vmatpush.bf16.msra.mxu0 %v6899
    %6995 = vmatpush.bf16.msra.mxu0 %v6897
    %6996 = vmatmul.bf16.gmra.mxu0 %v6765
    %v6997 = vpop.f32.mrf.mxu0
    %v6998 = vadd.f32 0.0, %v6997
    %v6999 = vpop.f32.mrf.mxu0
    %v7000 = vadd.f32 0.0, %v6999
    %7001 = vdwg.mxu0
    %7002 = vmatpush.bf16.msra.mxu0 %v6927
    %7003 = vmatpush.bf16.msra.mxu0 %v6925
    %7004 = vmatpush.bf16.msra.mxu0 %v6923
    %7005 = vmatpush.bf16.msra.mxu0 %v6921
    %7006 = vmatpush.bf16.msra.mxu0 %v6919
    %7007 = vmatpush.bf16.msra.mxu0 %v6917
    %7008 = vmatpush.bf16.msra.mxu0 %v6915
    %7009 = vmatpush.bf16.msra.mxu0 %v6913
    %7010 = vmatmul.bf16.gmra.mxu0 %v6766
    %v7011 = vpop.f32.mrf.mxu0
    %v7012 = vadd.f32 %v6998, %v7011
    %v7013 = vpop.f32.mrf.mxu0
    %v7014 = vadd.f32 %v7000, %v7013
    %7015 = vdwg.mxu0
    %v7016 = vadd.f32 %v6722, %v6984
    %v7017 = vadd.f32 %v6723, %v7012
    %v7018 = vadd.f32 %v6724, %v6986
    %v7019 = vadd.f32 %v6725, %v7014
    %v7020 = vadd.f32 %v7016, %v7018
    %v7021 = vrot.slane %v7020, 4
    %v7022 = vadd.f32 %v7020, %v7021
    %v7023 = vrot.slane %v7022, 2
    %v7024 = vadd.f32 %v7022, %v7023
    %v7025 = vrot.slane %v7024, 1
    %v7026 = vadd.f32 %v7024, %v7025
    %v7027 = vadd.f32 %v7017, %v7019
    %v7028 = vrot.slane %v7027, 4
    %v7029 = vadd.f32 %v7027, %v7028
    %v7030 = vrot.slane %v7029, 2
    %v7031 = vadd.f32 %v7029, %v7030
    %v7032 = vrot.slane %v7031, 1
    %v7033 = vadd.f32 %v7031, %v7032
    %v7034 = vmul.f32 %v7016, %v7016
    %v7035 = vmul.f32 %v7017, %v7017
    %v7036 = vmul.f32 %v7018, %v7018
    %v7037 = vmul.f32 %v7019, %v7019
    %v7038 = vadd.f32 %v7034, %v7036
    %v7039 = vrot.slane %v7038, 4
    %v7040 = vadd.f32 %v7038, %v7039
    %v7041 = vrot.slane %v7040, 2
    %v7042 = vadd.f32 %v7040, %v7041
    %v7043 = vrot.slane %v7042, 1
    %v7044 = vadd.f32 %v7042, %v7043
    %v7045 = vadd.f32 %v7035, %v7037
    %v7046 = vrot.slane %v7045, 4
    %v7047 = vadd.f32 %v7045, %v7046
    %v7048 = vrot.slane %v7047, 2
    %v7049 = vadd.f32 %v7047, %v7048
    %v7050 = vrot.slane %v7049, 1
    %v7051 = vadd.f32 %v7049, %v7050
    %v7052 = vld [vmem:[%s59] sm:$0xff]
    %v7053 = vld [vmem:[%s59 + $0x8] sm:$0xff]
    %v7054 = vld [vmem:[%s59 + $0x10] sm:$0xff]
    %v7055 = vld [vmem:[%s59 + $0x18] sm:$0xff]
    %v7056 = vld [vmem:[%s59 + $0x20] sm:$0xff]
    %v7057 = vld [vmem:[%s59 + $0x28] sm:$0xff]
    %v7058 = vld [vmem:[%s59 + $0x30] sm:$0xff]
    %v7059 = vld [vmem:[%s59 + $0x38] sm:$0xff]
    %v7060 = vld [vmem:[%s59 + $0x40] sm:$0xff]
    %v7061 = vld [vmem:[%s59 + $0x48] sm:$0xff]
    %v7062 = vld [vmem:[%s59 + $0x50] sm:$0xff]
    %v7063 = vld [vmem:[%s59 + $0x58] sm:$0xff]
    %v7064 = vld [vmem:[%s59 + $0x60] sm:$0xff]
    %v7065 = vld [vmem:[%s59 + $0x68] sm:$0xff]
    %v7066 = vld [vmem:[%s59 + $0x70] sm:$0xff]
    %v7067 = vld [vmem:[%s59 + $0x78] sm:$0xff]
    %v7068 = vld [vmem:[%s59 + $0x80] sm:$0xff]
    %v7069 = vld [vmem:[%s59 + $0x88] sm:$0xff]
    %v7070 = vld [vmem:[%s59 + $0x90] sm:$0xff]
    %v7071 = vld [vmem:[%s59 + $0x98] sm:$0xff]
    %v7072 = vld [vmem:[%s59 + $0xa0] sm:$0xff]
    %v7073 = vld [vmem:[%s59 + $0xa8] sm:$0xff]
    %v7074 = vld [vmem:[%s59 + $0xb0] sm:$0xff]
    %v7075 = vld [vmem:[%s59 + $0xb8] sm:$0xff]
    %v7076 = vld [vmem:[%s59 + $0xc0] sm:$0xff]
    %v7077 = vld [vmem:[%s59 + $0xc8] sm:$0xff]
    %v7078 = vld [vmem:[%s59 + $0xd0] sm:$0xff]
    %v7079 = vld [vmem:[%s59 + $0xd8] sm:$0xff]
    %v7080 = vld [vmem:[%s59 + $0xe0] sm:$0xff]
    %v7081 = vld [vmem:[%s59 + $0xe8] sm:$0xff]
    %v7082 = vld [vmem:[%s59 + $0xf0] sm:$0xff]
    %v7083 = vld [vmem:[%s59 + $0xf8] sm:$0xff]
    %7084 = vmatpush.msra.mxu0 %v7067
    %7085 = vmatpush.msra.mxu0 %v7066
    %7086 = vmatpush.msra.mxu0 %v7065
    %7087 = vmatpush.msra.mxu0 %v7064
    %7088 = vmatpush.msra.mxu0 %v7063
    %7089 = vmatpush.msra.mxu0 %v7062
    %7090 = vmatpush.msra.mxu0 %v7061
    %7091 = vmatpush.msra.mxu0 %v7060
    %7092 = vmatpush.msra.mxu0 %v7059
    %7093 = vmatpush.msra.mxu0 %v7058
    %7094 = vmatpush.msra.mxu0 %v7057
    %7095 = vmatpush.msra.mxu0 %v7056
    %7096 = vmatpush.msra.mxu0 %v7055
    %7097 = vmatpush.msra.mxu0 %v7054
    %7098 = vmatpush.msra.mxu0 %v7053
    %7099 = vmatpush.msra.mxu0 %v7052
    %7100 = vmatmul.f32.gmra.mxu0 %v7026
    %v7101 = vpop.f32.mrf.mxu0
    %v7102 = vadd.f32 0.0, %v7101
    %7103 = vdwg.mxu0
    %7104 = vmatpush.msra.mxu0 %v7083
    %7105 = vmatpush.msra.mxu0 %v7082
    %7106 = vmatpush.msra.mxu0 %v7081
    %7107 = vmatpush.msra.mxu0 %v7080
    %7108 = vmatpush.msra.mxu0 %v7079
    %7109 = vmatpush.msra.mxu0 %v7078
    %7110 = vmatpush.msra.mxu0 %v7077
    %7111 = vmatpush.msra.mxu0 %v7076
    %7112 = vmatpush.msra.mxu0 %v7075
    %7113 = vmatpush.msra.mxu0 %v7074
    %7114 = vmatpush.msra.mxu0 %v7073
    %7115 = vmatpush.msra.mxu0 %v7072
    %7116 = vmatpush.msra.mxu0 %v7071
    %7117 = vmatpush.msra.mxu0 %v7070
    %7118 = vmatpush.msra.mxu0 %v7069
    %7119 = vmatpush.msra.mxu0 %v7068
    %7120 = vmatmul.f32.gmra.mxu0 %v7033
    %v7121 = vpop.f32.mrf.mxu0
    %v7122 = vadd.f32 %v7102, %v7121
    %7123 = vdwg.mxu0
    %v7124 = vmul.f32 %v7122, 0.0078125
    %7125 = vmatpush.msra.mxu0 %v7067
    %7126 = vmatpush.msra.mxu0 %v7066
    %7127 = vmatpush.msra.mxu0 %v7065
    %7128 = vmatpush.msra.mxu0 %v7064
    %7129 = vmatpush.msra.mxu0 %v7063
    %7130 = vmatpush.msra.mxu0 %v7062
    %7131 = vmatpush.msra.mxu0 %v7061
    %7132 = vmatpush.msra.mxu0 %v7060
    %7133 = vmatpush.msra.mxu0 %v7059
    %7134 = vmatpush.msra.mxu0 %v7058
    %7135 = vmatpush.msra.mxu0 %v7057
    %7136 = vmatpush.msra.mxu0 %v7056
    %7137 = vmatpush.msra.mxu0 %v7055
    %7138 = vmatpush.msra.mxu0 %v7054
    %7139 = vmatpush.msra.mxu0 %v7053
    %7140 = vmatpush.msra.mxu0 %v7052
    %7141 = vmatmul.f32.gmra.mxu0 %v7044
    %v7142 = vpop.f32.mrf.mxu0
    %v7143 = vadd.f32 0.0, %v7142
    %7144 = vdwg.mxu0
    %7145 = vmatpush.msra.mxu0 %v7083
    %7146 = vmatpush.msra.mxu0 %v7082
    %7147 = vmatpush.msra.mxu0 %v7081
    %7148 = vmatpush.msra.mxu0 %v7080
    %7149 = vmatpush.msra.mxu0 %v7079
    %7150 = vmatpush.msra.mxu0 %v7078
    %7151 = vmatpush.msra.mxu0 %v7077
    %7152 = vmatpush.msra.mxu0 %v7076
    %7153 = vmatpush.msra.mxu0 %v7075
    %7154 = vmatpush.msra.mxu0 %v7074
    %7155 = vmatpush.msra.mxu0 %v7073
    %7156 = vmatpush.msra.mxu0 %v7072
    %7157 = vmatpush.msra.mxu0 %v7071
    %7158 = vmatpush.msra.mxu0 %v7070
    %7159 = vmatpush.msra.mxu0 %v7069
    %7160 = vmatpush.msra.mxu0 %v7068
    %7161 = vmatmul.f32.gmra.mxu0 %v7051
    %v7162 = vpop.f32.mrf.mxu0
    %v7163 = vadd.f32 %v7143, %v7162
    %7164 = vdwg.mxu0
    %v7165 = vmul.f32 %v7163, 0.0078125
    %v7166 = vmul.f32 %v7124, %v7124
    %v7167 = vsub.f32 %v7165, %v7166
    %v7168 = vmax.f32 %v7167, 0.0
    %v7169 = vld [vmem:[%s63] sm:$0x1]
    %v7170 = vadd.f32 %v7168, 1e-05
    %v7171 = vrsqrt.pop %v7170
    %v7172 = vmul.f32 %v7171, %v7170
    %v7173 = vmul.f32 %v7172, %v7171
    %v7174 = vmul.f32 0.5, %v7173
    %v7175 = vsub.f32 1.5, %v7174
    %v7176 = vmul.f32 %v7171, %v7175
    %vm7177 = vweird.f32 %v7170
    %vm7178 = vweird.f32 %v7171
    %vm7179 = vmor %vm7177, %vm7178
    %v7180 = vsel %vm7179, %v7171, %v7176
    %v7181 = vmul.f32 %v7169, %v7180
    %v7182 = vld [vmem:[%s65] sm:$0x1]
    %v7183 = vmul.f32 %v7124, %v7181
    %v7184 = vsub.f32 %v7182, %v7183
    %v7185 = vld [vmem:[%s61] sm:$0xff]
    %v7186 = vld [vmem:[%s61 + $0x8] sm:$0xff]
    %v7187 = vld [vmem:[%s61 + $0x10] sm:$0xff]
    %v7188 = vld [vmem:[%s61 + $0x18] sm:$0xff]
    %v7189 = vld [vmem:[%s61 + $0x20] sm:$0xff]
    %v7190 = vld [vmem:[%s61 + $0x28] sm:$0xff]
    %v7191 = vld [vmem:[%s61 + $0x30] sm:$0xff]
    %v7192 = vld [vmem:[%s61 + $0x38] sm:$0xff]
    %v7194 = vsel %vm759, %v7181, 0
    %7196 = vmatpush.msra.mxu0 0.0
    %7197 = vmatpush.msra.mxu0 0.0
    %7198 = vmatpush.msra.mxu0 0.0
    %7199 = vmatpush.msra.mxu0 0.0
    %7200 = vmatpush.msra.mxu0 0.0
    %7201 = vmatpush.msra.mxu0 0.0
    %7202 = vmatpush.msra.mxu0 0.0
    %7203 = vmatpush.msra.mxu0 0.0
    %7204 = vmatpush.msra.mxu0 0.0
    %7205 = vmatpush.msra.mxu0 0.0
    %7206 = vmatpush.msra.mxu0 0.0
    %7207 = vmatpush.msra.mxu0 0.0
    %7208 = vmatpush.msra.mxu0 %v7191
    %7209 = vmatpush.msra.mxu0 %v7189
    %7210 = vmatpush.msra.mxu0 %v7187
    %7211 = vmatpush.msra.mxu0 %v7185
    %7212 = vmatmul.f32.gmra.mxu0 %v7194
    %v7213 = vpop.f32.mrf.mxu0
    %v7214 = vadd.f32 0.0, %v7213
    %7215 = vdwg.mxu0
    %7216 = vmatpush.msra.mxu0 0.0
    %7217 = vmatpush.msra.mxu0 0.0
    %7218 = vmatpush.msra.mxu0 0.0
    %7219 = vmatpush.msra.mxu0 0.0
    %7220 = vmatpush.msra.mxu0 0.0
    %7221 = vmatpush.msra.mxu0 0.0
    %7222 = vmatpush.msra.mxu0 0.0
    %7223 = vmatpush.msra.mxu0 0.0
    %7224 = vmatpush.msra.mxu0 0.0
    %7225 = vmatpush.msra.mxu0 0.0
    %7226 = vmatpush.msra.mxu0 0.0
    %7227 = vmatpush.msra.mxu0 0.0
    %7228 = vmatpush.msra.mxu0 %v7192
    %7229 = vmatpush.msra.mxu0 %v7190
    %7230 = vmatpush.msra.mxu0 %v7188
    %7231 = vmatpush.msra.mxu0 %v7186
    %7232 = vmatmul.f32.gmra.mxu0 %v7194
    %v7233 = vpop.f32.mrf.mxu0
    %v7234 = vadd.f32 0.0, %v7233
    %7235 = vdwg.mxu0
    %v7236 = vperm.slane %v7214, 0
    %v7237 = vperm.slane %v7234, 0
    %v7238 = vmul.f32 %v7016, %v7236
    %v7239 = vmul.f32 %v7017, %v7237
    %v7240 = vmul.f32 %v7018, %v7236
    %v7241 = vmul.f32 %v7019, %v7237
    %v7243 = vsel %vm759, %v7184, 0
    %7245 = vmatpush.msra.mxu0 0.0
    %7246 = vmatpush.msra.mxu0 0.0
    %7247 = vmatpush.msra.mxu0 0.0
    %7248 = vmatpush.msra.mxu0 0.0
    %7249 = vmatpush.msra.mxu0 0.0
    %7250 = vmatpush.msra.mxu0 0.0
    %7251 = vmatpush.msra.mxu0 0.0
    %7252 = vmatpush.msra.mxu0 0.0
    %7253 = vmatpush.msra.mxu0 0.0
    %7254 = vmatpush.msra.mxu0 0.0
    %7255 = vmatpush.msra.mxu0 0.0
    %7256 = vmatpush.msra.mxu0 0.0
    %7257 = vmatpush.msra.mxu0 %v7191
    %7258 = vmatpush.msra.mxu0 %v7189
    %7259 = vmatpush.msra.mxu0 %v7187
    %7260 = vmatpush.msra.mxu0 %v7185
    %7261 = vmatmul.f32.gmra.mxu0 %v7243
    %v7262 = vpop.f32.mrf.mxu0
    %v7263 = vadd.f32 0.0, %v7262
    %7264 = vdwg.mxu0
    %7265 = vmatpush.msra.mxu0 0.0
    %7266 = vmatpush.msra.mxu0 0.0
    %7267 = vmatpush.msra.mxu0 0.0
    %7268 = vmatpush.msra.mxu0 0.0
    %7269 = vmatpush.msra.mxu0 0.0
    %7270 = vmatpush.msra.mxu0 0.0
    %7271 = vmatpush.msra.mxu0 0.0
    %7272 = vmatpush.msra.mxu0 0.0
    %7273 = vmatpush.msra.mxu0 0.0
    %7274 = vmatpush.msra.mxu0 0.0
    %7275 = vmatpush.msra.mxu0 0.0
    %7276 = vmatpush.msra.mxu0 0.0
    %7277 = vmatpush.msra.mxu0 %v7192
    %7278 = vmatpush.msra.mxu0 %v7190
    %7279 = vmatpush.msra.mxu0 %v7188
    %7280 = vmatpush.msra.mxu0 %v7186
    %7281 = vmatmul.f32.gmra.mxu0 %v7243
    %v7282 = vpop.f32.mrf.mxu0
    %v7283 = vadd.f32 0.0, %v7282
    %7284 = vdwg.mxu0
    %v7285 = vperm.slane %v7263, 0
    %v7286 = vperm.slane %v7283, 0
    %v7287 = vadd.f32 %v7238, %v7285
    %v7288 = vadd.f32 %v7239, %v7286
    %v7289 = vadd.f32 %v7240, %v7285
    %v7290 = vadd.f32 %v7241, %v7286
    %v7291 = vmax.f32 %v7287, 0.0
    %v7292 = vmax.f32 %v7288, 0.0
    %v7293 = vmax.f32 %v7289, 0.0
    %v7294 = vmax.f32 %v7290, 0.0
    %v7295 = vpack.c.bf16 %v7293, %v7291
    %v7296 = vpack.c.bf16 %v7294, %v7292
    %v7297 = vld [vmem:[%s67] sm:$0xf]
    %v7298 = vld [vmem:[%s67 + $0x4] sm:$0xf]
    %v7299 = vld [vmem:[%s67 + $0x8] sm:$0xf]
    %v7300 = vld [vmem:[%s67 + $0xc] sm:$0xf]
    %v7305 = vunpack.c.l.b16 %v7297
    %v7306 = vunpack.c.l.b16 %v7298
    %v7307 = vunpack.c.l.b16 %v7299
    %v7308 = vunpack.c.l.b16 %v7300
    %v7309 = vpack.c.b16 %v7306, %v7305
    %v7310 = vpack.c.b16 %v7308, %v7307
    %v7312 = vsel %vm1649, %v7309, 0
    %v7315 = vsel %vm1649, %v7310, 0
    %7317 = vmatpush.bf16.msra.mxu0 0
    %7318 = vmatpush.bf16.msra.mxu0 0
    %7319 = vmatpush.bf16.msra.mxu0 0
    %7320 = vmatpush.bf16.msra.mxu0 0
    %7321 = vmatpush.bf16.msra.mxu0 0
    %7322 = vmatpush.bf16.msra.mxu0 0
    %7323 = vmatpush.bf16.msra.mxu0 0
    %7324 = vmatpush.bf16.msra.mxu0 %v7295
    %7325 = vmatmul.bf16.gmra.mxu0 %v7312
    %v7326 = vpop.f32.mrf.mxu0
    %v7327 = vadd.f32 0.0, %v7326
    %v7328 = vpop.f32.mrf.mxu0
    %v7329 = vadd.f32 0.0, %v7328
    %7330 = vmatmul.bf16.gmra.mxu0 %v7315
    %v7331 = vpop.f32.mrf.mxu0
    %v7332 = vadd.f32 0.0, %v7331
    %v7333 = vpop.f32.mrf.mxu0
    %v7334 = vadd.f32 0.0, %v7333
    %7335 = vdwg.mxu0
    %7336 = vmatpush.bf16.msra.mxu0 0
    %7337 = vmatpush.bf16.msra.mxu0 0
    %7338 = vmatpush.bf16.msra.mxu0 0
    %7339 = vmatpush.bf16.msra.mxu0 0
    %7340 = vmatpush.bf16.msra.mxu0 0
    %7341 = vmatpush.bf16.msra.mxu0 0
    %7342 = vmatpush.bf16.msra.mxu0 0
    %7343 = vmatpush.bf16.msra.mxu0 %v7296
    %7344 = vmatmul.bf16.gmra.mxu0 %v7312
    %v7345 = vpop.f32.mrf.mxu0
    %v7346 = vadd.f32 0.0, %v7345
    %v7347 = vpop.f32.mrf.mxu0
    %v7348 = vadd.f32 0.0, %v7347
    %7349 = vmatmul.bf16.gmra.mxu0 %v7315
    %v7350 = vpop.f32.mrf.mxu0
    %v7351 = vadd.f32 0.0, %v7350
    %v7352 = vpop.f32.mrf.mxu0
    %v7353 = vadd.f32 0.0, %v7352
    %7354 = vdwg.mxu0
    %v7355 = vpack.c.bf16 %v7329, %v7327
    %v7356 = vpack.c.bf16 %v7348, %v7346
    %v7357 = vpack.c.bf16 %v7334, %v7332
    %v7358 = vpack.c.bf16 %v7353, %v7351
    %v7359 = vld [vmem:[%s69] sm:$0xf]
    %v7360 = vld [vmem:[%s69 + $0x4] sm:$0xf]
    %v7361 = vld [vmem:[%s69 + $0x8] sm:$0xf]
    %v7362 = vld [vmem:[%s69 + $0xc] sm:$0xf]
    %v7363 = vld [vmem:[%s69 + $0x10] sm:$0xf]
    %v7364 = vld [vmem:[%s69 + $0x14] sm:$0xf]
    %v7365 = vld [vmem:[%s69 + $0x18] sm:$0xf]
    %v7366 = vld [vmem:[%s69 + $0x1c] sm:$0xf]
    %v7367 = vld [vmem:[%s69 + $0x20] sm:$0xf]
    %v7368 = vld [vmem:[%s69 + $0x24] sm:$0xf]
    %v7369 = vld [vmem:[%s69 + $0x28] sm:$0xf]
    %v7370 = vld [vmem:[%s69 + $0x2c] sm:$0xf]
    %v7371 = vld [vmem:[%s69 + $0x30] sm:$0xf]
    %v7372 = vld [vmem:[%s69 + $0x34] sm:$0xf]
    %v7373 = vld [vmem:[%s69 + $0x38] sm:$0xf]
    %v7374 = vld [vmem:[%s69 + $0x3c] sm:$0xf]
    %v7375 = vld [vmem:[%s69 + $0x40] sm:$0xf]
    %v7376 = vld [vmem:[%s69 + $0x44] sm:$0xf]
    %v7377 = vld [vmem:[%s69 + $0x48] sm:$0xf]
    %v7378 = vld [vmem:[%s69 + $0x4c] sm:$0xf]
    %v7379 = vld [vmem:[%s69 + $0x50] sm:$0xf]
    %v7380 = vld [vmem:[%s69 + $0x54] sm:$0xf]
    %v7381 = vld [vmem:[%s69 + $0x58] sm:$0xf]
    %v7382 = vld [vmem:[%s69 + $0x5c] sm:$0xf]
    %v7383 = vld [vmem:[%s69 + $0x60] sm:$0xf]
    %v7384 = vld [vmem:[%s69 + $0x64] sm:$0xf]
    %v7385 = vld [vmem:[%s69 + $0x68] sm:$0xf]
    %v7386 = vld [vmem:[%s69 + $0x6c] sm:$0xf]
    %v7387 = vld [vmem:[%s69 + $0x70] sm:$0xf]
    %v7388 = vld [vmem:[%s69 + $0x74] sm:$0xf]
    %v7389 = vld [vmem:[%s69 + $0x78] sm:$0xf]
    %v7390 = vld [vmem:[%s69 + $0x7c] sm:$0xf]
    %s7391 = scalar_lea.vmem %s67, 16
    %v7392 = vld [vmem:[%s7391] sm:$0xf]
    %v7393 = vld [vmem:[%s7391 + $0x4] sm:$0xf]
    %v7394 = vld [vmem:[%s7391 + $0x8] sm:$0xf]
    %v7395 = vld [vmem:[%s7391 + $0xc] sm:$0xf]
    %v7400 = vunpack.c.l.b16 %v7392
    %v7401 = vunpack.c.l.b16 %v7393
    %v7402 = vunpack.c.l.b16 %v7394
    %v7403 = vunpack.c.l.b16 %v7395
    %v7404 = vpack.c.b16 %v7401, %v7400
    %v7405 = vpack.c.b16 %v7403, %v7402
    %v7407 = vsel %vm1649, %v7404, 0
    %v7410 = vsel %vm1649, %v7405, 0
    %7412 = vmatpush.bf16.msra.mxu0 0
    %7413 = vmatpush.bf16.msra.mxu0 0
    %7414 = vmatpush.bf16.msra.mxu0 0
    %7415 = vmatpush.bf16.msra.mxu0 0
    %7416 = vmatpush.bf16.msra.mxu0 0
    %7417 = vmatpush.bf16.msra.mxu0 0
    %7418 = vmatpush.bf16.msra.mxu0 0
    %7419 = vmatpush.bf16.msra.mxu0 %v7295
    %7420 = vmatmul.bf16.gmra.mxu0 %v7407
    %v7421 = vpop.f32.mrf.mxu0
    %v7422 = vadd.f32 0.0, %v7421
    %v7423 = vpop.f32.mrf.mxu0
    %v7424 = vadd.f32 0.0, %v7423
    %7425 = vmatmul.bf16.gmra.mxu0 %v7410
    %v7426 = vpop.f32.mrf.mxu0
    %v7427 = vadd.f32 0.0, %v7426
    %v7428 = vpop.f32.mrf.mxu0
    %v7429 = vadd.f32 0.0, %v7428
    %7430 = vdwg.mxu0
    %7431 = vmatpush.bf16.msra.mxu0 0
    %7432 = vmatpush.bf16.msra.mxu0 0
    %7433 = vmatpush.bf16.msra.mxu0 0
    %7434 = vmatpush.bf16.msra.mxu0 0
    %7435 = vmatpush.bf16.msra.mxu0 0
    %7436 = vmatpush.bf16.msra.mxu0 0
    %7437 = vmatpush.bf16.msra.mxu0 0
    %7438 = vmatpush.bf16.msra.mxu0 %v7296
    %7439 = vmatmul.bf16.gmra.mxu0 %v7407
    %v7440 = vpop.f32.mrf.mxu0
    %v7441 = vadd.f32 0.0, %v7440
    %v7442 = vpop.f32.mrf.mxu0
    %v7443 = vadd.f32 0.0, %v7442
    %7444 = vmatmul.bf16.gmra.mxu0 %v7410
    %v7445 = vpop.f32.mrf.mxu0
    %v7446 = vadd.f32 0.0, %v7445
    %v7447 = vpop.f32.mrf.mxu0
    %v7448 = vadd.f32 0.0, %v7447
    %7449 = vdwg.mxu0
    %v7450 = vpack.c.bf16 %v7424, %v7422
    %v7451 = vpack.c.bf16 %v7443, %v7441
    %v7452 = vpack.c.bf16 %v7429, %v7427
    %v7453 = vpack.c.bf16 %v7448, %v7446
    %s7454 = scalar_lea.vmem %s69, 128
    %v7455 = vld [vmem:[%s7454] sm:$0xf]
    %v7456 = vld [vmem:[%s7454 + $0x4] sm:$0xf]
    %v7457 = vld [vmem:[%s7454 + $0x8] sm:$0xf]
    %v7458 = vld [vmem:[%s7454 + $0xc] sm:$0xf]
    %v7459 = vld [vmem:[%s7454 + $0x10] sm:$0xf]
    %v7460 = vld [vmem:[%s7454 + $0x14] sm:$0xf]
    %v7461 = vld [vmem:[%s7454 + $0x18] sm:$0xf]
    %v7462 = vld [vmem:[%s7454 + $0x1c] sm:$0xf]
    %v7463 = vld [vmem:[%s7454 + $0x20] sm:$0xf]
    %v7464 = vld [vmem:[%s7454 + $0x24] sm:$0xf]
    %v7465 = vld [vmem:[%s7454 + $0x28] sm:$0xf]
    %v7466 = vld [vmem:[%s7454 + $0x2c] sm:$0xf]
    %v7467 = vld [vmem:[%s7454 + $0x30] sm:$0xf]
    %v7468 = vld [vmem:[%s7454 + $0x34] sm:$0xf]
    %v7469 = vld [vmem:[%s7454 + $0x38] sm:$0xf]
    %v7470 = vld [vmem:[%s7454 + $0x3c] sm:$0xf]
    %v7471 = vld [vmem:[%s7454 + $0x40] sm:$0xf]
    %v7472 = vld [vmem:[%s7454 + $0x44] sm:$0xf]
    %v7473 = vld [vmem:[%s7454 + $0x48] sm:$0xf]
    %v7474 = vld [vmem:[%s7454 + $0x4c] sm:$0xf]
    %v7475 = vld [vmem:[%s7454 + $0x50] sm:$0xf]
    %v7476 = vld [vmem:[%s7454 + $0x54] sm:$0xf]
    %v7477 = vld [vmem:[%s7454 + $0x58] sm:$0xf]
    %v7478 = vld [vmem:[%s7454 + $0x5c] sm:$0xf]
    %v7479 = vld [vmem:[%s7454 + $0x60] sm:$0xf]
    %v7480 = vld [vmem:[%s7454 + $0x64] sm:$0xf]
    %v7481 = vld [vmem:[%s7454 + $0x68] sm:$0xf]
    %v7482 = vld [vmem:[%s7454 + $0x6c] sm:$0xf]
    %v7483 = vld [vmem:[%s7454 + $0x70] sm:$0xf]
    %v7484 = vld [vmem:[%s7454 + $0x74] sm:$0xf]
    %v7485 = vld [vmem:[%s7454 + $0x78] sm:$0xf]
    %v7486 = vld [vmem:[%s7454 + $0x7c] sm:$0xf]
    %v7519 = vunpack.c.l.b16 %v7455
    %v7520 = vunpack.c.l.b16 %v7456
    %v7521 = vunpack.c.l.b16 %v7457
    %v7522 = vunpack.c.l.b16 %v7458
    %v7523 = vunpack.c.l.b16 %v7459
    %v7524 = vunpack.c.l.b16 %v7460
    %v7525 = vunpack.c.l.b16 %v7461
    %v7526 = vunpack.c.l.b16 %v7462
    %v7527 = vunpack.c.l.b16 %v7463
    %v7528 = vunpack.c.l.b16 %v7464
    %v7529 = vunpack.c.l.b16 %v7465
    %v7530 = vunpack.c.l.b16 %v7466
    %v7531 = vunpack.c.l.b16 %v7467
    %v7532 = vunpack.c.l.b16 %v7468
    %v7533 = vunpack.c.l.b16 %v7469
    %v7534 = vunpack.c.l.b16 %v7470
    %v7535 = vunpack.c.l.b16 %v7471
    %v7536 = vunpack.c.l.b16 %v7472
    %v7537 = vunpack.c.l.b16 %v7473
    %v7538 = vunpack.c.l.b16 %v7474
    %v7539 = vunpack.c.l.b16 %v7475
    %v7540 = vunpack.c.l.b16 %v7476
    %v7541 = vunpack.c.l.b16 %v7477
    %v7542 = vunpack.c.l.b16 %v7478
    %v7543 = vunpack.c.l.b16 %v7479
    %v7544 = vunpack.c.l.b16 %v7480
    %v7545 = vunpack.c.l.b16 %v7481
    %v7546 = vunpack.c.l.b16 %v7482
    %v7547 = vunpack.c.l.b16 %v7483
    %v7548 = vunpack.c.l.b16 %v7484
    %v7549 = vunpack.c.l.b16 %v7485
    %v7550 = vunpack.c.l.b16 %v7486
    %v7551 = vpack.c.b16 %v7520, %v7519
    %v7552 = vpack.c.b16 %v7522, %v7521
    %v7553 = vpack.c.b16 %v7524, %v7523
    %v7554 = vpack.c.b16 %v7526, %v7525
    %v7555 = vpack.c.b16 %v7528, %v7527
    %v7556 = vpack.c.b16 %v7530, %v7529
    %v7557 = vpack.c.b16 %v7532, %v7531
    %v7558 = vpack.c.b16 %v7534, %v7533
    %v7559 = vpack.c.b16 %v7536, %v7535
    %v7560 = vpack.c.b16 %v7538, %v7537
    %v7561 = vpack.c.b16 %v7540, %v7539
    %v7562 = vpack.c.b16 %v7542, %v7541
    %v7563 = vpack.c.b16 %v7544, %v7543
    %v7564 = vpack.c.b16 %v7546, %v7545
    %v7565 = vpack.c.b16 %v7548, %v7547
    %v7566 = vpack.c.b16 %v7550, %v7549
    %7583 = vmatpush.bf16.msra.mxu0 %v7558
    %7584 = vmatpush.bf16.msra.mxu0 %v7557
    %7585 = vmatpush.bf16.msra.mxu0 %v7556
    %7586 = vmatpush.bf16.msra.mxu0 %v7555
    %7587 = vmatpush.bf16.msra.mxu0 %v7554
    %7588 = vmatpush.bf16.msra.mxu0 %v7553
    %7589 = vmatpush.bf16.msra.mxu0 %v7552
    %7590 = vmatpush.bf16.msra.mxu0 %v7551
    %7591 = vmatmul.bf16.gmra.mxu0 %v7450
    %v7592 = vpop.f32.mrf.mxu0
    %v7593 = vadd.f32 0.0, %v7592
    %v7594 = vpop.f32.mrf.mxu0
    %v7595 = vadd.f32 0.0, %v7594
    %7596 = vmatmul.bf16.gmra.mxu0 %v7452
    %v7597 = vpop.f32.mrf.mxu0
    %v7598 = vadd.f32 0.0, %v7597
    %v7599 = vpop.f32.mrf.mxu0
    %v7600 = vadd.f32 0.0, %v7599
    %7601 = vdwg.mxu0
    %7602 = vmatpush.bf16.msra.mxu0 %v7566
    %7603 = vmatpush.bf16.msra.mxu0 %v7565
    %7604 = vmatpush.bf16.msra.mxu0 %v7564
    %7605 = vmatpush.bf16.msra.mxu0 %v7563
    %7606 = vmatpush.bf16.msra.mxu0 %v7562
    %7607 = vmatpush.bf16.msra.mxu0 %v7561
    %7608 = vmatpush.bf16.msra.mxu0 %v7560
    %7609 = vmatpush.bf16.msra.mxu0 %v7559
    %7610 = vmatmul.bf16.gmra.mxu0 %v7451
    %v7611 = vpop.f32.mrf.mxu0
    %v7612 = vadd.f32 %v7593, %v7611
    %v7613 = vpop.f32.mrf.mxu0
    %v7614 = vadd.f32 %v7595, %v7613
    %7615 = vmatmul.bf16.gmra.mxu0 %v7453
    %v7616 = vpop.f32.mrf.mxu0
    %v7617 = vadd.f32 %v7598, %v7616
    %v7618 = vpop.f32.mrf.mxu0
    %v7619 = vadd.f32 %v7600, %v7618
    %7620 = vdwg.mxu0
    %v7653 = vunpack.c.l.b16 %v7359
    %v7654 = vunpack.c.l.b16 %v7360
    %v7655 = vunpack.c.l.b16 %v7361
    %v7656 = vunpack.c.l.b16 %v7362
    %v7657 = vunpack.c.l.b16 %v7363
    %v7658 = vunpack.c.l.b16 %v7364
    %v7659 = vunpack.c.l.b16 %v7365
    %v7660 = vunpack.c.l.b16 %v7366
    %v7661 = vunpack.c.l.b16 %v7367
    %v7662 = vunpack.c.l.b16 %v7368
    %v7663 = vunpack.c.l.b16 %v7369
    %v7664 = vunpack.c.l.b16 %v7370
    %v7665 = vunpack.c.l.b16 %v7371
    %v7666 = vunpack.c.l.b16 %v7372
    %v7667 = vunpack.c.l.b16 %v7373
    %v7668 = vunpack.c.l.b16 %v7374
    %v7669 = vunpack.c.l.b16 %v7375
    %v7670 = vunpack.c.l.b16 %v7376
    %v7671 = vunpack.c.l.b16 %v7377
    %v7672 = vunpack.c.l.b16 %v7378
    %v7673 = vunpack.c.l.b16 %v7379
    %v7674 = vunpack.c.l.b16 %v7380
    %v7675 = vunpack.c.l.b16 %v7381
    %v7676 = vunpack.c.l.b16 %v7382
    %v7677 = vunpack.c.l.b16 %v7383
    %v7678 = vunpack.c.l.b16 %v7384
    %v7679 = vunpack.c.l.b16 %v7385
    %v7680 = vunpack.c.l.b16 %v7386
    %v7681 = vunpack.c.l.b16 %v7387
    %v7682 = vunpack.c.l.b16 %v7388
    %v7683 = vunpack.c.l.b16 %v7389
    %v7684 = vunpack.c.l.b16 %v7390
    %v7685 = vpack.c.b16 %v7654, %v7653
    %v7686 = vpack.c.b16 %v7656, %v7655
    %v7687 = vpack.c.b16 %v7658, %v7657
    %v7688 = vpack.c.b16 %v7660, %v7659
    %v7689 = vpack.c.b16 %v7662, %v7661
    %v7690 = vpack.c.b16 %v7664, %v7663
    %v7691 = vpack.c.b16 %v7666, %v7665
    %v7692 = vpack.c.b16 %v7668, %v7667
    %v7693 = vpack.c.b16 %v7670, %v7669
    %v7694 = vpack.c.b16 %v7672, %v7671
    %v7695 = vpack.c.b16 %v7674, %v7673
    %v7696 = vpack.c.b16 %v7676, %v7675
    %v7697 = vpack.c.b16 %v7678, %v7677
    %v7698 = vpack.c.b16 %v7680, %v7679
    %v7699 = vpack.c.b16 %v7682, %v7681
    %v7700 = vpack.c.b16 %v7684, %v7683
    %7717 = vmatpush.bf16.msra.mxu0 %v7692
    %7718 = vmatpush.bf16.msra.mxu0 %v7691
    %7719 = vmatpush.bf16.msra.mxu0 %v7690
    %7720 = vmatpush.bf16.msra.mxu0 %v7689
    %7721 = vmatpush.bf16.msra.mxu0 %v7688
    %7722 = vmatpush.bf16.msra.mxu0 %v7687
    %7723 = vmatpush.bf16.msra.mxu0 %v7686
    %7724 = vmatpush.bf16.msra.mxu0 %v7685
    %7725 = vmatmul.bf16.gmra.mxu0 %v7355
    %v7726 = vpop.f32.mrf.mxu0
    %v7727 = vadd.f32 %v7612, %v7726
    %v7728 = vpop.f32.mrf.mxu0
    %v7729 = vadd.f32 %v7614, %v7728
    %7730 = vmatmul.bf16.gmra.mxu0 %v7357
    %v7731 = vpop.f32.mrf.mxu0
    %v7732 = vadd.f32 %v7617, %v7731
    %v7733 = vpop.f32.mrf.mxu0
    %v7734 = vadd.f32 %v7619, %v7733
    %7735 = vdwg.mxu0
    %7736 = vmatpush.bf16.msra.mxu0 %v7700
    %7737 = vmatpush.bf16.msra.mxu0 %v7699
    %7738 = vmatpush.bf16.msra.mxu0 %v7698
    %7739 = vmatpush.bf16.msra.mxu0 %v7697
    %7740 = vmatpush.bf16.msra.mxu0 %v7696
    %7741 = vmatpush.bf16.msra.mxu0 %v7695
    %7742 = vmatpush.bf16.msra.mxu0 %v7694
    %7743 = vmatpush.bf16.msra.mxu0 %v7693
    %7744 = vmatmul.bf16.gmra.mxu0 %v7356
    %v7745 = vpop.f32.mrf.mxu0
    %v7746 = vadd.f32 %v7727, %v7745
    %v7747 = vpop.f32.mrf.mxu0
    %v7748 = vadd.f32 %v7729, %v7747
    %7749 = vmatmul.bf16.gmra.mxu0 %v7358
    %v7750 = vpop.f32.mrf.mxu0
    %v7751 = vadd.f32 %v7732, %v7750
    %v7752 = vpop.f32.mrf.mxu0
    %v7753 = vadd.f32 %v7734, %v7752
    %7754 = vdwg.mxu0
    %s7755 = scalar_lea.vmem %s67, 32
    %v7756 = vld [vmem:[%s7755] sm:$0xf]
    %v7757 = vld [vmem:[%s7755 + $0x4] sm:$0xf]
    %v7758 = vld [vmem:[%s7755 + $0x8] sm:$0xf]
    %v7759 = vld [vmem:[%s7755 + $0xc] sm:$0xf]
    %v7764 = vunpack.c.l.b16 %v7756
    %v7765 = vunpack.c.l.b16 %v7757
    %v7766 = vunpack.c.l.b16 %v7758
    %v7767 = vunpack.c.l.b16 %v7759
    %v7768 = vpack.c.b16 %v7765, %v7764
    %v7769 = vpack.c.b16 %v7767, %v7766
    %v7771 = vsel %vm1649, %v7768, 0
    %v7774 = vsel %vm1649, %v7769, 0
    %7776 = vmatpush.bf16.msra.mxu0 0
    %7777 = vmatpush.bf16.msra.mxu0 0
    %7778 = vmatpush.bf16.msra.mxu0 0
    %7779 = vmatpush.bf16.msra.mxu0 0
    %7780 = vmatpush.bf16.msra.mxu0 0
    %7781 = vmatpush.bf16.msra.mxu0 0
    %7782 = vmatpush.bf16.msra.mxu0 0
    %7783 = vmatpush.bf16.msra.mxu0 %v7295
    %7784 = vmatmul.bf16.gmra.mxu0 %v7771
    %v7785 = vpop.f32.mrf.mxu0
    %v7786 = vadd.f32 0.0, %v7785
    %v7787 = vpop.f32.mrf.mxu0
    %v7788 = vadd.f32 0.0, %v7787
    %7789 = vmatmul.bf16.gmra.mxu0 %v7774
    %v7790 = vpop.f32.mrf.mxu0
    %v7791 = vadd.f32 0.0, %v7790
    %v7792 = vpop.f32.mrf.mxu0
    %v7793 = vadd.f32 0.0, %v7792
    %7794 = vdwg.mxu0
    %7795 = vmatpush.bf16.msra.mxu0 0
    %7796 = vmatpush.bf16.msra.mxu0 0
    %7797 = vmatpush.bf16.msra.mxu0 0
    %7798 = vmatpush.bf16.msra.mxu0 0
    %7799 = vmatpush.bf16.msra.mxu0 0
    %7800 = vmatpush.bf16.msra.mxu0 0
    %7801 = vmatpush.bf16.msra.mxu0 0
    %7802 = vmatpush.bf16.msra.mxu0 %v7296
    %7803 = vmatmul.bf16.gmra.mxu0 %v7771
    %v7804 = vpop.f32.mrf.mxu0
    %v7805 = vadd.f32 0.0, %v7804
    %v7806 = vpop.f32.mrf.mxu0
    %v7807 = vadd.f32 0.0, %v7806
    %7808 = vmatmul.bf16.gmra.mxu0 %v7774
    %v7809 = vpop.f32.mrf.mxu0
    %v7810 = vadd.f32 0.0, %v7809
    %v7811 = vpop.f32.mrf.mxu0
    %v7812 = vadd.f32 0.0, %v7811
    %7813 = vdwg.mxu0
    %v7814 = vpack.c.bf16 %v7788, %v7786
    %v7815 = vpack.c.bf16 %v7807, %v7805
    %v7816 = vpack.c.bf16 %v7793, %v7791
    %v7817 = vpack.c.bf16 %v7812, %v7810
    %s7818 = scalar_lea.vmem %s69, 256
    %v7819 = vld [vmem:[%s7818] sm:$0xf]
    %v7820 = vld [vmem:[%s7818 + $0x4] sm:$0xf]
    %v7821 = vld [vmem:[%s7818 + $0x8] sm:$0xf]
    %v7822 = vld [vmem:[%s7818 + $0xc] sm:$0xf]
    %v7823 = vld [vmem:[%s7818 + $0x10] sm:$0xf]
    %v7824 = vld [vmem:[%s7818 + $0x14] sm:$0xf]
    %v7825 = vld [vmem:[%s7818 + $0x18] sm:$0xf]
    %v7826 = vld [vmem:[%s7818 + $0x1c] sm:$0xf]
    %v7827 = vld [vmem:[%s7818 + $0x20] sm:$0xf]
    %v7828 = vld [vmem:[%s7818 + $0x24] sm:$0xf]
    %v7829 = vld [vmem:[%s7818 + $0x28] sm:$0xf]
    %v7830 = vld [vmem:[%s7818 + $0x2c] sm:$0xf]
    %v7831 = vld [vmem:[%s7818 + $0x30] sm:$0xf]
    %v7832 = vld [vmem:[%s7818 + $0x34] sm:$0xf]
    %v7833 = vld [vmem:[%s7818 + $0x38] sm:$0xf]
    %v7834 = vld [vmem:[%s7818 + $0x3c] sm:$0xf]
    %v7835 = vld [vmem:[%s7818 + $0x40] sm:$0xf]
    %v7836 = vld [vmem:[%s7818 + $0x44] sm:$0xf]
    %v7837 = vld [vmem:[%s7818 + $0x48] sm:$0xf]
    %v7838 = vld [vmem:[%s7818 + $0x4c] sm:$0xf]
    %v7839 = vld [vmem:[%s7818 + $0x50] sm:$0xf]
    %v7840 = vld [vmem:[%s7818 + $0x54] sm:$0xf]
    %v7841 = vld [vmem:[%s7818 + $0x58] sm:$0xf]
    %v7842 = vld [vmem:[%s7818 + $0x5c] sm:$0xf]
    %v7843 = vld [vmem:[%s7818 + $0x60] sm:$0xf]
    %v7844 = vld [vmem:[%s7818 + $0x64] sm:$0xf]
    %v7845 = vld [vmem:[%s7818 + $0x68] sm:$0xf]
    %v7846 = vld [vmem:[%s7818 + $0x6c] sm:$0xf]
    %v7847 = vld [vmem:[%s7818 + $0x70] sm:$0xf]
    %v7848 = vld [vmem:[%s7818 + $0x74] sm:$0xf]
    %v7849 = vld [vmem:[%s7818 + $0x78] sm:$0xf]
    %v7850 = vld [vmem:[%s7818 + $0x7c] sm:$0xf]
    %v7883 = vunpack.c.l.b16 %v7819
    %v7884 = vunpack.c.l.b16 %v7820
    %v7885 = vunpack.c.l.b16 %v7821
    %v7886 = vunpack.c.l.b16 %v7822
    %v7887 = vunpack.c.l.b16 %v7823
    %v7888 = vunpack.c.l.b16 %v7824
    %v7889 = vunpack.c.l.b16 %v7825
    %v7890 = vunpack.c.l.b16 %v7826
    %v7891 = vunpack.c.l.b16 %v7827
    %v7892 = vunpack.c.l.b16 %v7828
    %v7893 = vunpack.c.l.b16 %v7829
    %v7894 = vunpack.c.l.b16 %v7830
    %v7895 = vunpack.c.l.b16 %v7831
    %v7896 = vunpack.c.l.b16 %v7832
    %v7897 = vunpack.c.l.b16 %v7833
    %v7898 = vunpack.c.l.b16 %v7834
    %v7899 = vunpack.c.l.b16 %v7835
    %v7900 = vunpack.c.l.b16 %v7836
    %v7901 = vunpack.c.l.b16 %v7837
    %v7902 = vunpack.c.l.b16 %v7838
    %v7903 = vunpack.c.l.b16 %v7839
    %v7904 = vunpack.c.l.b16 %v7840
    %v7905 = vunpack.c.l.b16 %v7841
    %v7906 = vunpack.c.l.b16 %v7842
    %v7907 = vunpack.c.l.b16 %v7843
    %v7908 = vunpack.c.l.b16 %v7844
    %v7909 = vunpack.c.l.b16 %v7845
    %v7910 = vunpack.c.l.b16 %v7846
    %v7911 = vunpack.c.l.b16 %v7847
    %v7912 = vunpack.c.l.b16 %v7848
    %v7913 = vunpack.c.l.b16 %v7849
    %v7914 = vunpack.c.l.b16 %v7850
    %v7915 = vpack.c.b16 %v7884, %v7883
    %v7916 = vpack.c.b16 %v7886, %v7885
    %v7917 = vpack.c.b16 %v7888, %v7887
    %v7918 = vpack.c.b16 %v7890, %v7889
    %v7919 = vpack.c.b16 %v7892, %v7891
    %v7920 = vpack.c.b16 %v7894, %v7893
    %v7921 = vpack.c.b16 %v7896, %v7895
    %v7922 = vpack.c.b16 %v7898, %v7897
    %v7923 = vpack.c.b16 %v7900, %v7899
    %v7924 = vpack.c.b16 %v7902, %v7901
    %v7925 = vpack.c.b16 %v7904, %v7903
    %v7926 = vpack.c.b16 %v7906, %v7905
    %v7927 = vpack.c.b16 %v7908, %v7907
    %v7928 = vpack.c.b16 %v7910, %v7909
    %v7929 = vpack.c.b16 %v7912, %v7911
    %v7930 = vpack.c.b16 %v7914, %v7913
    %7947 = vmatpush.bf16.msra.mxu0 %v7922
    %7948 = vmatpush.bf16.msra.mxu0 %v7921
    %7949 = vmatpush.bf16.msra.mxu0 %v7920
    %7950 = vmatpush.bf16.msra.mxu0 %v7919
    %7951 = vmatpush.bf16.msra.mxu0 %v7918
    %7952 = vmatpush.bf16.msra.mxu0 %v7917
    %7953 = vmatpush.bf16.msra.mxu0 %v7916
    %7954 = vmatpush.bf16.msra.mxu0 %v7915
    %7955 = vmatmul.bf16.gmra.mxu0 %v7814
    %v7956 = vpop.f32.mrf.mxu0
    %v7957 = vadd.f32 0.0, %v7956
    %v7958 = vpop.f32.mrf.mxu0
    %v7959 = vadd.f32 0.0, %v7958
    %7960 = vmatmul.bf16.gmra.mxu0 %v7816
    %v7961 = vpop.f32.mrf.mxu0
    %v7962 = vadd.f32 0.0, %v7961
    %v7963 = vpop.f32.mrf.mxu0
    %v7964 = vadd.f32 0.0, %v7963
    %7965 = vdwg.mxu0
    %7966 = vmatpush.bf16.msra.mxu0 %v7930
    %7967 = vmatpush.bf16.msra.mxu0 %v7929
    %7968 = vmatpush.bf16.msra.mxu0 %v7928
    %7969 = vmatpush.bf16.msra.mxu0 %v7927
    %7970 = vmatpush.bf16.msra.mxu0 %v7926
    %7971 = vmatpush.bf16.msra.mxu0 %v7925
    %7972 = vmatpush.bf16.msra.mxu0 %v7924
    %7973 = vmatpush.bf16.msra.mxu0 %v7923
    %7974 = vmatmul.bf16.gmra.mxu0 %v7815
    %v7975 = vpop.f32.mrf.mxu0
    %v7976 = vadd.f32 %v7957, %v7975
    %v7977 = vpop.f32.mrf.mxu0
    %v7978 = vadd.f32 %v7959, %v7977
    %7979 = vmatmul.bf16.gmra.mxu0 %v7817
    %v7980 = vpop.f32.mrf.mxu0
    %v7981 = vadd.f32 %v7962, %v7980
    %v7982 = vpop.f32.mrf.mxu0
    %v7983 = vadd.f32 %v7964, %v7982
    %7984 = vdwg.mxu0
    %v7985 = vadd.f32 %v7746, %v7976
    %v7986 = vadd.f32 %v7748, %v7978
    %v7987 = vadd.f32 %v7751, %v7981
    %v7988 = vadd.f32 %v7753, %v7983
    %s7989 = scalar_lea.vmem %s67, 48
    %v7990 = vld [vmem:[%s7989] sm:$0xf]
    %v7991 = vld [vmem:[%s7989 + $0x4] sm:$0xf]
    %v7992 = vld [vmem:[%s7989 + $0x8] sm:$0xf]
    %v7993 = vld [vmem:[%s7989 + $0xc] sm:$0xf]
    %v7998 = vunpack.c.l.b16 %v7990
    %v7999 = vunpack.c.l.b16 %v7991
    %v8000 = vunpack.c.l.b16 %v7992
    %v8001 = vunpack.c.l.b16 %v7993
    %v8002 = vpack.c.b16 %v7999, %v7998
    %v8003 = vpack.c.b16 %v8001, %v8000
    %v8005 = vsel %vm1649, %v8002, 0
    %v8008 = vsel %vm1649, %v8003, 0
    %8010 = vmatpush.bf16.msra.mxu0 0
    %8011 = vmatpush.bf16.msra.mxu0 0
    %8012 = vmatpush.bf16.msra.mxu0 0
    %8013 = vmatpush.bf16.msra.mxu0 0
    %8014 = vmatpush.bf16.msra.mxu0 0
    %8015 = vmatpush.bf16.msra.mxu0 0
    %8016 = vmatpush.bf16.msra.mxu0 0
    %8017 = vmatpush.bf16.msra.mxu0 %v7295
    %8018 = vmatmul.bf16.gmra.mxu0 %v8005
    %v8019 = vpop.f32.mrf.mxu0
    %v8020 = vadd.f32 0.0, %v8019
    %v8021 = vpop.f32.mrf.mxu0
    %v8022 = vadd.f32 0.0, %v8021
    %8023 = vmatmul.bf16.gmra.mxu0 %v8008
    %v8024 = vpop.f32.mrf.mxu0
    %v8025 = vadd.f32 0.0, %v8024
    %v8026 = vpop.f32.mrf.mxu0
    %v8027 = vadd.f32 0.0, %v8026
    %8028 = vdwg.mxu0
    %8029 = vmatpush.bf16.msra.mxu0 0
    %8030 = vmatpush.bf16.msra.mxu0 0
    %8031 = vmatpush.bf16.msra.mxu0 0
    %8032 = vmatpush.bf16.msra.mxu0 0
    %8033 = vmatpush.bf16.msra.mxu0 0
    %8034 = vmatpush.bf16.msra.mxu0 0
    %8035 = vmatpush.bf16.msra.mxu0 0
    %8036 = vmatpush.bf16.msra.mxu0 %v7296
    %8037 = vmatmul.bf16.gmra.mxu0 %v8005
    %v8038 = vpop.f32.mrf.mxu0
    %v8039 = vadd.f32 0.0, %v8038
    %v8040 = vpop.f32.mrf.mxu0
    %v8041 = vadd.f32 0.0, %v8040
    %8042 = vmatmul.bf16.gmra.mxu0 %v8008
    %v8043 = vpop.f32.mrf.mxu0
    %v8044 = vadd.f32 0.0, %v8043
    %v8045 = vpop.f32.mrf.mxu0
    %v8046 = vadd.f32 0.0, %v8045
    %8047 = vdwg.mxu0
    %v8048 = vpack.c.bf16 %v8022, %v8020
    %v8049 = vpack.c.bf16 %v8041, %v8039
    %v8050 = vpack.c.bf16 %v8027, %v8025
    %v8051 = vpack.c.bf16 %v8046, %v8044
    %s8052 = scalar_lea.vmem %s69, 384
    %v8053 = vld [vmem:[%s8052] sm:$0xf]
    %v8054 = vld [vmem:[%s8052 + $0x4] sm:$0xf]
    %v8055 = vld [vmem:[%s8052 + $0x8] sm:$0xf]
    %v8056 = vld [vmem:[%s8052 + $0xc] sm:$0xf]
    %v8057 = vld [vmem:[%s8052 + $0x10] sm:$0xf]
    %v8058 = vld [vmem:[%s8052 + $0x14] sm:$0xf]
    %v8059 = vld [vmem:[%s8052 + $0x18] sm:$0xf]
    %v8060 = vld [vmem:[%s8052 + $0x1c] sm:$0xf]
    %v8061 = vld [vmem:[%s8052 + $0x20] sm:$0xf]
    %v8062 = vld [vmem:[%s8052 + $0x24] sm:$0xf]
    %v8063 = vld [vmem:[%s8052 + $0x28] sm:$0xf]
    %v8064 = vld [vmem:[%s8052 + $0x2c] sm:$0xf]
    %v8065 = vld [vmem:[%s8052 + $0x30] sm:$0xf]
    %v8066 = vld [vmem:[%s8052 + $0x34] sm:$0xf]
    %v8067 = vld [vmem:[%s8052 + $0x38] sm:$0xf]
    %v8068 = vld [vmem:[%s8052 + $0x3c] sm:$0xf]
    %v8069 = vld [vmem:[%s8052 + $0x40] sm:$0xf]
    %v8070 = vld [vmem:[%s8052 + $0x44] sm:$0xf]
    %v8071 = vld [vmem:[%s8052 + $0x48] sm:$0xf]
    %v8072 = vld [vmem:[%s8052 + $0x4c] sm:$0xf]
    %v8073 = vld [vmem:[%s8052 + $0x50] sm:$0xf]
    %v8074 = vld [vmem:[%s8052 + $0x54] sm:$0xf]
    %v8075 = vld [vmem:[%s8052 + $0x58] sm:$0xf]
    %v8076 = vld [vmem:[%s8052 + $0x5c] sm:$0xf]
    %v8077 = vld [vmem:[%s8052 + $0x60] sm:$0xf]
    %v8078 = vld [vmem:[%s8052 + $0x64] sm:$0xf]
    %v8079 = vld [vmem:[%s8052 + $0x68] sm:$0xf]
    %v8080 = vld [vmem:[%s8052 + $0x6c] sm:$0xf]
    %v8081 = vld [vmem:[%s8052 + $0x70] sm:$0xf]
    %v8082 = vld [vmem:[%s8052 + $0x74] sm:$0xf]
    %v8083 = vld [vmem:[%s8052 + $0x78] sm:$0xf]
    %v8084 = vld [vmem:[%s8052 + $0x7c] sm:$0xf]
    %v8117 = vunpack.c.l.b16 %v8053
    %v8118 = vunpack.c.l.b16 %v8054
    %v8119 = vunpack.c.l.b16 %v8055
    %v8120 = vunpack.c.l.b16 %v8056
    %v8121 = vunpack.c.l.b16 %v8057
    %v8122 = vunpack.c.l.b16 %v8058
    %v8123 = vunpack.c.l.b16 %v8059
    %v8124 = vunpack.c.l.b16 %v8060
    %v8125 = vunpack.c.l.b16 %v8061
    %v8126 = vunpack.c.l.b16 %v8062
    %v8127 = vunpack.c.l.b16 %v8063
    %v8128 = vunpack.c.l.b16 %v8064
    %v8129 = vunpack.c.l.b16 %v8065
    %v8130 = vunpack.c.l.b16 %v8066
    %v8131 = vunpack.c.l.b16 %v8067
    %v8132 = vunpack.c.l.b16 %v8068
    %v8133 = vunpack.c.l.b16 %v8069
    %v8134 = vunpack.c.l.b16 %v8070
    %v8135 = vunpack.c.l.b16 %v8071
    %v8136 = vunpack.c.l.b16 %v8072
    %v8137 = vunpack.c.l.b16 %v8073
    %v8138 = vunpack.c.l.b16 %v8074
    %v8139 = vunpack.c.l.b16 %v8075
    %v8140 = vunpack.c.l.b16 %v8076
    %v8141 = vunpack.c.l.b16 %v8077
    %v8142 = vunpack.c.l.b16 %v8078
    %v8143 = vunpack.c.l.b16 %v8079
    %v8144 = vunpack.c.l.b16 %v8080
    %v8145 = vunpack.c.l.b16 %v8081
    %v8146 = vunpack.c.l.b16 %v8082
    %v8147 = vunpack.c.l.b16 %v8083
    %v8148 = vunpack.c.l.b16 %v8084
    %v8149 = vpack.c.b16 %v8118, %v8117
    %v8150 = vpack.c.b16 %v8120, %v8119
    %v8151 = vpack.c.b16 %v8122, %v8121
    %v8152 = vpack.c.b16 %v8124, %v8123
    %v8153 = vpack.c.b16 %v8126, %v8125
    %v8154 = vpack.c.b16 %v8128, %v8127
    %v8155 = vpack.c.b16 %v8130, %v8129
    %v8156 = vpack.c.b16 %v8132, %v8131
    %v8157 = vpack.c.b16 %v8134, %v8133
    %v8158 = vpack.c.b16 %v8136, %v8135
    %v8159 = vpack.c.b16 %v8138, %v8137
    %v8160 = vpack.c.b16 %v8140, %v8139
    %v8161 = vpack.c.b16 %v8142, %v8141
    %v8162 = vpack.c.b16 %v8144, %v8143
    %v8163 = vpack.c.b16 %v8146, %v8145
    %v8164 = vpack.c.b16 %v8148, %v8147
    %8181 = vmatpush.bf16.msra.mxu0 %v8156
    %8182 = vmatpush.bf16.msra.mxu0 %v8155
    %8183 = vmatpush.bf16.msra.mxu0 %v8154
    %8184 = vmatpush.bf16.msra.mxu0 %v8153
    %8185 = vmatpush.bf16.msra.mxu0 %v8152
    %8186 = vmatpush.bf16.msra.mxu0 %v8151
    %8187 = vmatpush.bf16.msra.mxu0 %v8150
    %8188 = vmatpush.bf16.msra.mxu0 %v8149
    %8189 = vmatmul.bf16.gmra.mxu0 %v8048
    %v8190 = vpop.f32.mrf.mxu0
    %v8191 = vadd.f32 0.0, %v8190
    %v8192 = vpop.f32.mrf.mxu0
    %v8193 = vadd.f32 0.0, %v8192
    %8194 = vmatmul.bf16.gmra.mxu0 %v8050
    %v8195 = vpop.f32.mrf.mxu0
    %v8196 = vadd.f32 0.0, %v8195
    %v8197 = vpop.f32.mrf.mxu0
    %v8198 = vadd.f32 0.0, %v8197
    %8199 = vdwg.mxu0
    %8200 = vmatpush.bf16.msra.mxu0 %v8164
    %8201 = vmatpush.bf16.msra.mxu0 %v8163
    %8202 = vmatpush.bf16.msra.mxu0 %v8162
    %8203 = vmatpush.bf16.msra.mxu0 %v8161
    %8204 = vmatpush.bf16.msra.mxu0 %v8160
    %8205 = vmatpush.bf16.msra.mxu0 %v8159
    %8206 = vmatpush.bf16.msra.mxu0 %v8158
    %8207 = vmatpush.bf16.msra.mxu0 %v8157
    %8208 = vmatmul.bf16.gmra.mxu0 %v8049
    %v8209 = vpop.f32.mrf.mxu0
    %v8210 = vadd.f32 %v8191, %v8209
    %v8211 = vpop.f32.mrf.mxu0
    %v8212 = vadd.f32 %v8193, %v8211
    %8213 = vmatmul.bf16.gmra.mxu0 %v8051
    %v8214 = vpop.f32.mrf.mxu0
    %v8215 = vadd.f32 %v8196, %v8214
    %v8216 = vpop.f32.mrf.mxu0
    %v8217 = vadd.f32 %v8198, %v8216
    %8218 = vdwg.mxu0
    %v8219 = vadd.f32 %v7985, %v8210
    %v8220 = vadd.f32 %v7986, %v8212
    %v8221 = vadd.f32 %v7987, %v8215
    %v8222 = vadd.f32 %v7988, %v8217
    %v8223 = vadd.f32 %v8219, %v8220
    %v8224 = vadd.f32 %v8223, %v8221
    %v8225 = vadd.f32 %v8224, %v8222
    %v8226 = vrot.slane %v8225, 4
    %v8227 = vadd.f32 %v8225, %v8226
    %v8228 = vrot.slane %v8227, 2
    %v8229 = vadd.f32 %v8227, %v8228
    %v8230 = vrot.slane %v8229, 1
    %v8231 = vadd.f32 %v8229, %v8230
    %v8232 = vmul.f32 %v8219, %v8219
    %v8233 = vmul.f32 %v8220, %v8220
    %v8234 = vmul.f32 %v8221, %v8221
    %v8235 = vmul.f32 %v8222, %v8222
    %v8236 = vadd.f32 %v8232, %v8233
    %v8237 = vadd.f32 %v8236, %v8234
    %v8238 = vadd.f32 %v8237, %v8235
    %v8239 = vrot.slane %v8238, 4
    %v8240 = vadd.f32 %v8238, %v8239
    %v8241 = vrot.slane %v8240, 2
    %v8242 = vadd.f32 %v8240, %v8241
    %v8243 = vrot.slane %v8242, 1
    %v8244 = vadd.f32 %v8242, %v8243
    %v8245 = vld [vmem:[%s71] sm:$0xff]
    %v8246 = vld [vmem:[%s71 + $0x8] sm:$0xff]
    %v8247 = vld [vmem:[%s71 + $0x10] sm:$0xff]
    %v8248 = vld [vmem:[%s71 + $0x18] sm:$0xff]
    %v8249 = vld [vmem:[%s71 + $0x20] sm:$0xff]
    %v8250 = vld [vmem:[%s71 + $0x28] sm:$0xff]
    %v8251 = vld [vmem:[%s71 + $0x30] sm:$0xff]
    %v8252 = vld [vmem:[%s71 + $0x38] sm:$0xff]
    %v8253 = vld [vmem:[%s71 + $0x40] sm:$0xff]
    %v8254 = vld [vmem:[%s71 + $0x48] sm:$0xff]
    %v8255 = vld [vmem:[%s71 + $0x50] sm:$0xff]
    %v8256 = vld [vmem:[%s71 + $0x58] sm:$0xff]
    %v8257 = vld [vmem:[%s71 + $0x60] sm:$0xff]
    %v8258 = vld [vmem:[%s71 + $0x68] sm:$0xff]
    %v8259 = vld [vmem:[%s71 + $0x70] sm:$0xff]
    %v8260 = vld [vmem:[%s71 + $0x78] sm:$0xff]
    %8261 = vmatpush.msra.mxu0 %v8260
    %8262 = vmatpush.msra.mxu0 %v8259
    %8263 = vmatpush.msra.mxu0 %v8258
    %8264 = vmatpush.msra.mxu0 %v8257
    %8265 = vmatpush.msra.mxu0 %v8256
    %8266 = vmatpush.msra.mxu0 %v8255
    %8267 = vmatpush.msra.mxu0 %v8254
    %8268 = vmatpush.msra.mxu0 %v8253
    %8269 = vmatpush.msra.mxu0 %v8252
    %8270 = vmatpush.msra.mxu0 %v8251
    %8271 = vmatpush.msra.mxu0 %v8250
    %8272 = vmatpush.msra.mxu0 %v8249
    %8273 = vmatpush.msra.mxu0 %v8248
    %8274 = vmatpush.msra.mxu0 %v8247
    %8275 = vmatpush.msra.mxu0 %v8246
    %8276 = vmatpush.msra.mxu0 %v8245
    %8277 = vmatmul.f32.gmra.mxu0 %v8231
    %v8278 = vpop.f32.mrf.mxu0
    %v8279 = vadd.f32 0.0, %v8278
    %8280 = vdwg.mxu0
    %v8281 = vmul.f32 %v8279, 0.001953125
    %8282 = vmatpush.msra.mxu0 %v8260
    %8283 = vmatpush.msra.mxu0 %v8259
    %8284 = vmatpush.msra.mxu0 %v8258
    %8285 = vmatpush.msra.mxu0 %v8257
    %8286 = vmatpush.msra.mxu0 %v8256
    %8287 = vmatpush.msra.mxu0 %v8255
    %8288 = vmatpush.msra.mxu0 %v8254
    %8289 = vmatpush.msra.mxu0 %v8253
    %8290 = vmatpush.msra.mxu0 %v8252
    %8291 = vmatpush.msra.mxu0 %v8251
    %8292 = vmatpush.msra.mxu0 %v8250
    %8293 = vmatpush.msra.mxu0 %v8249
    %8294 = vmatpush.msra.mxu0 %v8248
    %8295 = vmatpush.msra.mxu0 %v8247
    %8296 = vmatpush.msra.mxu0 %v8246
    %8297 = vmatpush.msra.mxu0 %v8245
    %8298 = vmatmul.f32.gmra.mxu0 %v8244
    %v8299 = vpop.f32.mrf.mxu0
    %v8300 = vadd.f32 0.0, %v8299
    %8301 = vdwg.mxu0
    %v8302 = vmul.f32 %v8300, 0.001953125
    %v8303 = vmul.f32 %v8281, %v8281
    %v8304 = vsub.f32 %v8302, %v8303
    %v8305 = vmax.f32 %v8304, 0.0
    %v8306 = vld [vmem:[%s75] sm:$0x1]
    %v8307 = vadd.f32 %v8305, 1e-05
    %v8308 = vrsqrt.pop %v8307
    %v8309 = vmul.f32 %v8308, %v8307
    %v8310 = vmul.f32 %v8309, %v8308
    %v8311 = vmul.f32 0.5, %v8310
    %v8312 = vsub.f32 1.5, %v8311
    %v8313 = vmul.f32 %v8308, %v8312
    %vm8314 = vweird.f32 %v8307
    %vm8315 = vweird.f32 %v8308
    %vm8316 = vmor %vm8314, %vm8315
    %v8317 = vsel %vm8316, %v8308, %v8313
    %v8318 = vmul.f32 %v8306, %v8317
    %v8319 = vld [vmem:[%s77] sm:$0x1]
    %v8320 = vmul.f32 %v8281, %v8318
    %v8321 = vsub.f32 %v8319, %v8320
    %v8322 = vld [vmem:[%s73] sm:$0xff]
    %v8324 = vsel %vm3041, %v8318, 0
    %8326 = vmatpush.msra.mxu0 0.0
    %8327 = vmatpush.msra.mxu0 0.0
    %8328 = vmatpush.msra.mxu0 0.0
    %8329 = vmatpush.msra.mxu0 0.0
    %8330 = vmatpush.msra.mxu0 0.0
    %8331 = vmatpush.msra.mxu0 0.0
    %8332 = vmatpush.msra.mxu0 0.0
    %8333 = vmatpush.msra.mxu0 0.0
    %8334 = vmatpush.msra.mxu0 0.0
    %8335 = vmatpush.msra.mxu0 0.0
    %8336 = vmatpush.msra.mxu0 0.0
    %8337 = vmatpush.msra.mxu0 0.0
    %8338 = vmatpush.msra.mxu0 0.0
    %8339 = vmatpush.msra.mxu0 0.0
    %8340 = vmatpush.msra.mxu0 0.0
    %8341 = vmatpush.msra.mxu0 %v8322
    %8342 = vmatmul.f32.gmra.mxu0 %v8324
    %v8343 = vpop.f32.mrf.mxu0
    %v8344 = vadd.f32 0.0, %v8343
    %8345 = vdwg.mxu0
    %v8346 = vperm.slane %v8344, 0
    %v8347 = vmul.f32 %v8219, %v8346
    %v8348 = vmul.f32 %v8220, %v8346
    %v8349 = vmul.f32 %v8221, %v8346
    %v8350 = vmul.f32 %v8222, %v8346
    %v8352 = vsel %vm3041, %v8321, 0
    %8354 = vmatpush.msra.mxu0 0.0
    %8355 = vmatpush.msra.mxu0 0.0
    %8356 = vmatpush.msra.mxu0 0.0
    %8357 = vmatpush.msra.mxu0 0.0
    %8358 = vmatpush.msra.mxu0 0.0
    %8359 = vmatpush.msra.mxu0 0.0
    %8360 = vmatpush.msra.mxu0 0.0
    %8361 = vmatpush.msra.mxu0 0.0
    %8362 = vmatpush.msra.mxu0 0.0
    %8363 = vmatpush.msra.mxu0 0.0
    %8364 = vmatpush.msra.mxu0 0.0
    %8365 = vmatpush.msra.mxu0 0.0
    %8366 = vmatpush.msra.mxu0 0.0
    %8367 = vmatpush.msra.mxu0 0.0
    %8368 = vmatpush.msra.mxu0 0.0
    %8369 = vmatpush.msra.mxu0 %v8322
    %8370 = vmatmul.f32.gmra.mxu0 %v8352
    %v8371 = vpop.f32.mrf.mxu0
    %v8372 = vadd.f32 0.0, %v8371
    %8373 = vdwg.mxu0
    %v8374 = vperm.slane %v8372, 0
    %v8375 = vadd.f32 %v8347, %v8374
    %v8376 = vadd.f32 %v8348, %v8374
    %v8377 = vadd.f32 %v8349, %v8374
    %v8378 = vadd.f32 %v8350, %v8374
    %v8379 = vmax.f32 %v8375, 0.0
    %v8380 = vmax.f32 %v8376, 0.0
    %v8381 = vmax.f32 %v8377, 0.0
    %v8382 = vmax.f32 %v8378, 0.0
    %v8383 = vpack.c.bf16 %v8380, %v8379
    %v8384 = vpack.c.bf16 %v8382, %v8381
    %v8385 = vld [vmem:[%s79] sm:$0xf]
    %v8386 = vld [vmem:[%s79 + $0x4] sm:$0xf]
    %v8387 = vld [vmem:[%s79 + $0x8] sm:$0xf]
    %v8388 = vld [vmem:[%s79 + $0xc] sm:$0xf]
    %v8389 = vld [vmem:[%s79 + $0x10] sm:$0xf]
    %v8390 = vld [vmem:[%s79 + $0x14] sm:$0xf]
    %v8391 = vld [vmem:[%s79 + $0x18] sm:$0xf]
    %v8392 = vld [vmem:[%s79 + $0x1c] sm:$0xf]
    %v8401 = vunpack.c.l.b16 %v8385
    %v8402 = vunpack.c.l.b16 %v8386
    %v8403 = vunpack.c.l.b16 %v8387
    %v8404 = vunpack.c.l.b16 %v8388
    %v8405 = vunpack.c.l.b16 %v8389
    %v8406 = vunpack.c.l.b16 %v8390
    %v8407 = vunpack.c.l.b16 %v8391
    %v8408 = vunpack.c.l.b16 %v8392
    %v8409 = vpack.c.b16 %v8402, %v8401
    %v8410 = vpack.c.b16 %v8404, %v8403
    %v8411 = vpack.c.b16 %v8406, %v8405
    %v8412 = vpack.c.b16 %v8408, %v8407
    %v8414 = vsel %vm759, %v8409, 0
    %v8417 = vsel %vm759, %v8410, 0
    %v8420 = vsel %vm759, %v8411, 0
    %v8423 = vsel %vm759, %v8412, 0
    %8425 = vmatpush.bf16.msra.mxu0 0
    %8426 = vmatpush.bf16.msra.mxu0 0
    %8427 = vmatpush.bf16.msra.mxu0 0
    %8428 = vmatpush.bf16.msra.mxu0 0
    %8429 = vmatpush.bf16.msra.mxu0 0
    %8430 = vmatpush.bf16.msra.mxu0 0
    %8431 = vmatpush.bf16.msra.mxu0 %v8384
    %8432 = vmatpush.bf16.msra.mxu0 %v8383
    %8433 = vmatmul.bf16.gmra.mxu0 %v8414
    %v8434 = vpop.f32.mrf.mxu0
    %v8435 = vadd.f32 0.0, %v8434
    %v8436 = vpop.f32.mrf.mxu0
    %v8437 = vadd.f32 0.0, %v8436
    %8438 = vmatmul.bf16.gmra.mxu0 %v8417
    %v8439 = vpop.f32.mrf.mxu0
    %v8440 = vadd.f32 0.0, %v8439
    %v8441 = vpop.f32.mrf.mxu0
    %v8442 = vadd.f32 0.0, %v8441
    %8443 = vmatmul.bf16.gmra.mxu0 %v8420
    %v8444 = vpop.f32.mrf.mxu0
    %v8445 = vadd.f32 0.0, %v8444
    %v8446 = vpop.f32.mrf.mxu0
    %v8447 = vadd.f32 0.0, %v8446
    %8448 = vmatmul.bf16.gmra.mxu0 %v8423
    %v8449 = vpop.f32.mrf.mxu0
    %v8450 = vadd.f32 0.0, %v8449
    %v8451 = vpop.f32.mrf.mxu0
    %v8452 = vadd.f32 0.0, %v8451
    %8453 = vdwg.mxu0
    %v8454 = vpack.c.bf16 %v8437, %v8435
    %v8455 = vpack.c.bf16 %v8442, %v8440
    %v8456 = vpack.c.bf16 %v8447, %v8445
    %v8457 = vpack.c.bf16 %v8452, %v8450
    %v8458 = vld [vmem:[%s81] sm:$0xf]
    %v8459 = vld [vmem:[%s81 + $0x4] sm:$0xf]
    %v8460 = vld [vmem:[%s81 + $0x8] sm:$0xf]
    %v8461 = vld [vmem:[%s81 + $0xc] sm:$0xf]
    %v8462 = vld [vmem:[%s81 + $0x10] sm:$0xf]
    %v8463 = vld [vmem:[%s81 + $0x14] sm:$0xf]
    %v8464 = vld [vmem:[%s81 + $0x18] sm:$0xf]
    %v8465 = vld [vmem:[%s81 + $0x1c] sm:$0xf]
    %v8466 = vld [vmem:[%s81 + $0x20] sm:$0xf]
    %v8467 = vld [vmem:[%s81 + $0x24] sm:$0xf]
    %v8468 = vld [vmem:[%s81 + $0x28] sm:$0xf]
    %v8469 = vld [vmem:[%s81 + $0x2c] sm:$0xf]
    %v8470 = vld [vmem:[%s81 + $0x30] sm:$0xf]
    %v8471 = vld [vmem:[%s81 + $0x34] sm:$0xf]
    %v8472 = vld [vmem:[%s81 + $0x38] sm:$0xf]
    %v8473 = vld [vmem:[%s81 + $0x3c] sm:$0xf]
    %s8474 = scalar_lea.vmem %s79, 32
    %v8475 = vld [vmem:[%s8474] sm:$0xf]
    %v8476 = vld [vmem:[%s8474 + $0x4] sm:$0xf]
    %v8477 = vld [vmem:[%s8474 + $0x8] sm:$0xf]
    %v8478 = vld [vmem:[%s8474 + $0xc] sm:$0xf]
    %v8479 = vld [vmem:[%s8474 + $0x10] sm:$0xf]
    %v8480 = vld [vmem:[%s8474 + $0x14] sm:$0xf]
    %v8481 = vld [vmem:[%s8474 + $0x18] sm:$0xf]
    %v8482 = vld [vmem:[%s8474 + $0x1c] sm:$0xf]
    %v8491 = vunpack.c.l.b16 %v8475
    %v8492 = vunpack.c.l.b16 %v8476
    %v8493 = vunpack.c.l.b16 %v8477
    %v8494 = vunpack.c.l.b16 %v8478
    %v8495 = vunpack.c.l.b16 %v8479
    %v8496 = vunpack.c.l.b16 %v8480
    %v8497 = vunpack.c.l.b16 %v8481
    %v8498 = vunpack.c.l.b16 %v8482
    %v8499 = vpack.c.b16 %v8492, %v8491
    %v8500 = vpack.c.b16 %v8494, %v8493
    %v8501 = vpack.c.b16 %v8496, %v8495
    %v8502 = vpack.c.b16 %v8498, %v8497
    %v8504 = vsel %vm759, %v8499, 0
    %v8507 = vsel %vm759, %v8500, 0
    %v8510 = vsel %vm759, %v8501, 0
    %v8513 = vsel %vm759, %v8502, 0
    %8515 = vmatpush.bf16.msra.mxu0 0
    %8516 = vmatpush.bf16.msra.mxu0 0
    %8517 = vmatpush.bf16.msra.mxu0 0
    %8518 = vmatpush.bf16.msra.mxu0 0
    %8519 = vmatpush.bf16.msra.mxu0 0
    %8520 = vmatpush.bf16.msra.mxu0 0
    %8521 = vmatpush.bf16.msra.mxu0 %v8384
    %8522 = vmatpush.bf16.msra.mxu0 %v8383
    %8523 = vmatmul.bf16.gmra.mxu0 %v8504
    %v8524 = vpop.f32.mrf.mxu0
    %v8525 = vadd.f32 0.0, %v8524
    %v8526 = vpop.f32.mrf.mxu0
    %v8527 = vadd.f32 0.0, %v8526
    %8528 = vmatmul.bf16.gmra.mxu0 %v8507
    %v8529 = vpop.f32.mrf.mxu0
    %v8530 = vadd.f32 0.0, %v8529
    %v8531 = vpop.f32.mrf.mxu0
    %v8532 = vadd.f32 0.0, %v8531
    %8533 = vmatmul.bf16.gmra.mxu0 %v8510
    %v8534 = vpop.f32.mrf.mxu0
    %v8535 = vadd.f32 0.0, %v8534
    %v8536 = vpop.f32.mrf.mxu0
    %v8537 = vadd.f32 0.0, %v8536
    %8538 = vmatmul.bf16.gmra.mxu0 %v8513
    %v8539 = vpop.f32.mrf.mxu0
    %v8540 = vadd.f32 0.0, %v8539
    %v8541 = vpop.f32.mrf.mxu0
    %v8542 = vadd.f32 0.0, %v8541
    %8543 = vdwg.mxu0
    %v8544 = vpack.c.bf16 %v8527, %v8525
    %v8545 = vpack.c.bf16 %v8532, %v8530
    %v8546 = vpack.c.bf16 %v8537, %v8535
    %v8547 = vpack.c.bf16 %v8542, %v8540
    %s8548 = scalar_lea.vmem %s81, 64
    %v8549 = vld [vmem:[%s8548] sm:$0xf]
    %v8550 = vld [vmem:[%s8548 + $0x4] sm:$0xf]
    %v8551 = vld [vmem:[%s8548 + $0x8] sm:$0xf]
    %v8552 = vld [vmem:[%s8548 + $0xc] sm:$0xf]
    %v8553 = vld [vmem:[%s8548 + $0x10] sm:$0xf]
    %v8554 = vld [vmem:[%s8548 + $0x14] sm:$0xf]
    %v8555 = vld [vmem:[%s8548 + $0x18] sm:$0xf]
    %v8556 = vld [vmem:[%s8548 + $0x1c] sm:$0xf]
    %v8557 = vld [vmem:[%s8548 + $0x20] sm:$0xf]
    %v8558 = vld [vmem:[%s8548 + $0x24] sm:$0xf]
    %v8559 = vld [vmem:[%s8548 + $0x28] sm:$0xf]
    %v8560 = vld [vmem:[%s8548 + $0x2c] sm:$0xf]
    %v8561 = vld [vmem:[%s8548 + $0x30] sm:$0xf]
    %v8562 = vld [vmem:[%s8548 + $0x34] sm:$0xf]
    %v8563 = vld [vmem:[%s8548 + $0x38] sm:$0xf]
    %v8564 = vld [vmem:[%s8548 + $0x3c] sm:$0xf]
    %v8581 = vunpack.c.l.b16 %v8549
    %v8582 = vunpack.c.l.b16 %v8550
    %v8583 = vunpack.c.l.b16 %v8551
    %v8584 = vunpack.c.l.b16 %v8552
    %v8585 = vunpack.c.l.b16 %v8553
    %v8586 = vunpack.c.l.b16 %v8554
    %v8587 = vunpack.c.l.b16 %v8555
    %v8588 = vunpack.c.l.b16 %v8556
    %v8589 = vunpack.c.l.b16 %v8557
    %v8590 = vunpack.c.l.b16 %v8558
    %v8591 = vunpack.c.l.b16 %v8559
    %v8592 = vunpack.c.l.b16 %v8560
    %v8593 = vunpack.c.l.b16 %v8561
    %v8594 = vunpack.c.l.b16 %v8562
    %v8595 = vunpack.c.l.b16 %v8563
    %v8596 = vunpack.c.l.b16 %v8564
    %v8597 = vpack.c.b16 %v8582, %v8581
    %v8598 = vpack.c.b16 %v8584, %v8583
    %v8599 = vpack.c.b16 %v8586, %v8585
    %v8600 = vpack.c.b16 %v8588, %v8587
    %v8601 = vpack.c.b16 %v8590, %v8589
    %v8602 = vpack.c.b16 %v8592, %v8591
    %v8603 = vpack.c.b16 %v8594, %v8593
    %v8604 = vpack.c.b16 %v8596, %v8595
    %8613 = vmatpush.bf16.msra.mxu0 %v8604
    %8614 = vmatpush.bf16.msra.mxu0 %v8603
    %8615 = vmatpush.bf16.msra.mxu0 %v8602
    %8616 = vmatpush.bf16.msra.mxu0 %v8601
    %8617 = vmatpush.bf16.msra.mxu0 %v8600
    %8618 = vmatpush.bf16.msra.mxu0 %v8599
    %8619 = vmatpush.bf16.msra.mxu0 %v8598
    %8620 = vmatpush.bf16.msra.mxu0 %v8597
    %8621 = vmatmul.bf16.gmra.mxu0 %v8544
    %v8622 = vpop.f32.mrf.mxu0
    %v8623 = vadd.f32 0.0, %v8622
    %v8624 = vpop.f32.mrf.mxu0
    %v8625 = vadd.f32 0.0, %v8624
    %8626 = vmatmul.bf16.gmra.mxu0 %v8545
    %v8627 = vpop.f32.mrf.mxu0
    %v8628 = vadd.f32 0.0, %v8627
    %v8629 = vpop.f32.mrf.mxu0
    %v8630 = vadd.f32 0.0, %v8629
    %8631 = vmatmul.bf16.gmra.mxu0 %v8546
    %v8632 = vpop.f32.mrf.mxu0
    %v8633 = vadd.f32 0.0, %v8632
    %v8634 = vpop.f32.mrf.mxu0
    %v8635 = vadd.f32 0.0, %v8634
    %8636 = vmatmul.bf16.gmra.mxu0 %v8547
    %v8637 = vpop.f32.mrf.mxu0
    %v8638 = vadd.f32 0.0, %v8637
    %v8639 = vpop.f32.mrf.mxu0
    %v8640 = vadd.f32 0.0, %v8639
    %8641 = vdwg.mxu0
    %v8658 = vunpack.c.l.b16 %v8458
    %v8659 = vunpack.c.l.b16 %v8459
    %v8660 = vunpack.c.l.b16 %v8460
    %v8661 = vunpack.c.l.b16 %v8461
    %v8662 = vunpack.c.l.b16 %v8462
    %v8663 = vunpack.c.l.b16 %v8463
    %v8664 = vunpack.c.l.b16 %v8464
    %v8665 = vunpack.c.l.b16 %v8465
    %v8666 = vunpack.c.l.b16 %v8466
    %v8667 = vunpack.c.l.b16 %v8467
    %v8668 = vunpack.c.l.b16 %v8468
    %v8669 = vunpack.c.l.b16 %v8469
    %v8670 = vunpack.c.l.b16 %v8470
    %v8671 = vunpack.c.l.b16 %v8471
    %v8672 = vunpack.c.l.b16 %v8472
    %v8673 = vunpack.c.l.b16 %v8473
    %v8674 = vpack.c.b16 %v8659, %v8658
    %v8675 = vpack.c.b16 %v8661, %v8660
    %v8676 = vpack.c.b16 %v8663, %v8662
    %v8677 = vpack.c.b16 %v8665, %v8664
    %v8678 = vpack.c.b16 %v8667, %v8666
    %v8679 = vpack.c.b16 %v8669, %v8668
    %v8680 = vpack.c.b16 %v8671, %v8670
    %v8681 = vpack.c.b16 %v8673, %v8672
    %8690 = vmatpush.bf16.msra.mxu0 %v8681
    %8691 = vmatpush.bf16.msra.mxu0 %v8680
    %8692 = vmatpush.bf16.msra.mxu0 %v8679
    %8693 = vmatpush.bf16.msra.mxu0 %v8678
    %8694 = vmatpush.bf16.msra.mxu0 %v8677
    %8695 = vmatpush.bf16.msra.mxu0 %v8676
    %8696 = vmatpush.bf16.msra.mxu0 %v8675
    %8697 = vmatpush.bf16.msra.mxu0 %v8674
    %8698 = vmatmul.bf16.gmra.mxu0 %v8454
    %v8699 = vpop.f32.mrf.mxu0
    %v8700 = vadd.f32 %v8623, %v8699
    %v8701 = vpop.f32.mrf.mxu0
    %v8702 = vadd.f32 %v8625, %v8701
    %8703 = vmatmul.bf16.gmra.mxu0 %v8455
    %v8704 = vpop.f32.mrf.mxu0
    %v8705 = vadd.f32 %v8628, %v8704
    %v8706 = vpop.f32.mrf.mxu0
    %v8707 = vadd.f32 %v8630, %v8706
    %8708 = vmatmul.bf16.gmra.mxu0 %v8456
    %v8709 = vpop.f32.mrf.mxu0
    %v8710 = vadd.f32 %v8633, %v8709
    %v8711 = vpop.f32.mrf.mxu0
    %v8712 = vadd.f32 %v8635, %v8711
    %8713 = vmatmul.bf16.gmra.mxu0 %v8457
    %v8714 = vpop.f32.mrf.mxu0
    %v8715 = vadd.f32 %v8638, %v8714
    %v8716 = vpop.f32.mrf.mxu0
    %v8717 = vadd.f32 %v8640, %v8716
    %8718 = vdwg.mxu0
    %s8719 = scalar_lea.vmem %s79, 64
    %v8720 = vld [vmem:[%s8719] sm:$0xf]
    %v8721 = vld [vmem:[%s8719 + $0x4] sm:$0xf]
    %v8722 = vld [vmem:[%s8719 + $0x8] sm:$0xf]
    %v8723 = vld [vmem:[%s8719 + $0xc] sm:$0xf]
    %v8724 = vld [vmem:[%s8719 + $0x10] sm:$0xf]
    %v8725 = vld [vmem:[%s8719 + $0x14] sm:$0xf]
    %v8726 = vld [vmem:[%s8719 + $0x18] sm:$0xf]
    %v8727 = vld [vmem:[%s8719 + $0x1c] sm:$0xf]
    %v8736 = vunpack.c.l.b16 %v8720
    %v8737 = vunpack.c.l.b16 %v8721
    %v8738 = vunpack.c.l.b16 %v8722
    %v8739 = vunpack.c.l.b16 %v8723
    %v8740 = vunpack.c.l.b16 %v8724
    %v8741 = vunpack.c.l.b16 %v8725
    %v8742 = vunpack.c.l.b16 %v8726
    %v8743 = vunpack.c.l.b16 %v8727
    %v8744 = vpack.c.b16 %v8737, %v8736
    %v8745 = vpack.c.b16 %v8739, %v8738
    %v8746 = vpack.c.b16 %v8741, %v8740
    %v8747 = vpack.c.b16 %v8743, %v8742
    %v8749 = vsel %vm759, %v8744, 0
    %v8752 = vsel %vm759, %v8745, 0
    %v8755 = vsel %vm759, %v8746, 0
    %v8758 = vsel %vm759, %v8747, 0
    %8760 = vmatpush.bf16.msra.mxu0 0
    %8761 = vmatpush.bf16.msra.mxu0 0
    %8762 = vmatpush.bf16.msra.mxu0 0
    %8763 = vmatpush.bf16.msra.mxu0 0
    %8764 = vmatpush.bf16.msra.mxu0 0
    %8765 = vmatpush.bf16.msra.mxu0 0
    %8766 = vmatpush.bf16.msra.mxu0 %v8384
    %8767 = vmatpush.bf16.msra.mxu0 %v8383
    %8768 = vmatmul.bf16.gmra.mxu0 %v8749
    %v8769 = vpop.f32.mrf.mxu0
    %v8770 = vadd.f32 0.0, %v8769
    %v8771 = vpop.f32.mrf.mxu0
    %v8772 = vadd.f32 0.0, %v8771
    %8773 = vmatmul.bf16.gmra.mxu0 %v8752
    %v8774 = vpop.f32.mrf.mxu0
    %v8775 = vadd.f32 0.0, %v8774
    %v8776 = vpop.f32.mrf.mxu0
    %v8777 = vadd.f32 0.0, %v8776
    %8778 = vmatmul.bf16.gmra.mxu0 %v8755
    %v8779 = vpop.f32.mrf.mxu0
    %v8780 = vadd.f32 0.0, %v8779
    %v8781 = vpop.f32.mrf.mxu0
    %v8782 = vadd.f32 0.0, %v8781
    %8783 = vmatmul.bf16.gmra.mxu0 %v8758
    %v8784 = vpop.f32.mrf.mxu0
    %v8785 = vadd.f32 0.0, %v8784
    %v8786 = vpop.f32.mrf.mxu0
    %v8787 = vadd.f32 0.0, %v8786
    %8788 = vdwg.mxu0
    %v8789 = vpack.c.bf16 %v8772, %v8770
    %v8790 = vpack.c.bf16 %v8777, %v8775
    %v8791 = vpack.c.bf16 %v8782, %v8780
    %v8792 = vpack.c.bf16 %v8787, %v8785
    %s8793 = scalar_lea.vmem %s81, 128
    %v8794 = vld [vmem:[%s8793] sm:$0xf]
    %v8795 = vld [vmem:[%s8793 + $0x4] sm:$0xf]
    %v8796 = vld [vmem:[%s8793 + $0x8] sm:$0xf]
    %v8797 = vld [vmem:[%s8793 + $0xc] sm:$0xf]
    %v8798 = vld [vmem:[%s8793 + $0x10] sm:$0xf]
    %v8799 = vld [vmem:[%s8793 + $0x14] sm:$0xf]
    %v8800 = vld [vmem:[%s8793 + $0x18] sm:$0xf]
    %v8801 = vld [vmem:[%s8793 + $0x1c] sm:$0xf]
    %v8802 = vld [vmem:[%s8793 + $0x20] sm:$0xf]
    %v8803 = vld [vmem:[%s8793 + $0x24] sm:$0xf]
    %v8804 = vld [vmem:[%s8793 + $0x28] sm:$0xf]
    %v8805 = vld [vmem:[%s8793 + $0x2c] sm:$0xf]
    %v8806 = vld [vmem:[%s8793 + $0x30] sm:$0xf]
    %v8807 = vld [vmem:[%s8793 + $0x34] sm:$0xf]
    %v8808 = vld [vmem:[%s8793 + $0x38] sm:$0xf]
    %v8809 = vld [vmem:[%s8793 + $0x3c] sm:$0xf]
    %v8826 = vunpack.c.l.b16 %v8794
    %v8827 = vunpack.c.l.b16 %v8795
    %v8828 = vunpack.c.l.b16 %v8796
    %v8829 = vunpack.c.l.b16 %v8797
    %v8830 = vunpack.c.l.b16 %v8798
    %v8831 = vunpack.c.l.b16 %v8799
    %v8832 = vunpack.c.l.b16 %v8800
    %v8833 = vunpack.c.l.b16 %v8801
    %v8834 = vunpack.c.l.b16 %v8802
    %v8835 = vunpack.c.l.b16 %v8803
    %v8836 = vunpack.c.l.b16 %v8804
    %v8837 = vunpack.c.l.b16 %v8805
    %v8838 = vunpack.c.l.b16 %v8806
    %v8839 = vunpack.c.l.b16 %v8807
    %v8840 = vunpack.c.l.b16 %v8808
    %v8841 = vunpack.c.l.b16 %v8809
    %v8842 = vpack.c.b16 %v8827, %v8826
    %v8843 = vpack.c.b16 %v8829, %v8828
    %v8844 = vpack.c.b16 %v8831, %v8830
    %v8845 = vpack.c.b16 %v8833, %v8832
    %v8846 = vpack.c.b16 %v8835, %v8834
    %v8847 = vpack.c.b16 %v8837, %v8836
    %v8848 = vpack.c.b16 %v8839, %v8838
    %v8849 = vpack.c.b16 %v8841, %v8840
    %8858 = vmatpush.bf16.msra.mxu0 %v8849
    %8859 = vmatpush.bf16.msra.mxu0 %v8848
    %8860 = vmatpush.bf16.msra.mxu0 %v8847
    %8861 = vmatpush.bf16.msra.mxu0 %v8846
    %8862 = vmatpush.bf16.msra.mxu0 %v8845
    %8863 = vmatpush.bf16.msra.mxu0 %v8844
    %8864 = vmatpush.bf16.msra.mxu0 %v8843
    %8865 = vmatpush.bf16.msra.mxu0 %v8842
    %8866 = vmatmul.bf16.gmra.mxu0 %v8789
    %v8867 = vpop.f32.mrf.mxu0
    %v8868 = vadd.f32 0.0, %v8867
    %v8869 = vpop.f32.mrf.mxu0
    %v8870 = vadd.f32 0.0, %v8869
    %8871 = vmatmul.bf16.gmra.mxu0 %v8790
    %v8872 = vpop.f32.mrf.mxu0
    %v8873 = vadd.f32 0.0, %v8872
    %v8874 = vpop.f32.mrf.mxu0
    %v8875 = vadd.f32 0.0, %v8874
    %8876 = vmatmul.bf16.gmra.mxu0 %v8791
    %v8877 = vpop.f32.mrf.mxu0
    %v8878 = vadd.f32 0.0, %v8877
    %v8879 = vpop.f32.mrf.mxu0
    %v8880 = vadd.f32 0.0, %v8879
    %8881 = vmatmul.bf16.gmra.mxu0 %v8792
    %v8882 = vpop.f32.mrf.mxu0
    %v8883 = vadd.f32 0.0, %v8882
    %v8884 = vpop.f32.mrf.mxu0
    %v8885 = vadd.f32 0.0, %v8884
    %8886 = vdwg.mxu0
    %v8887 = vadd.f32 %v8700, %v8868
    %v8888 = vadd.f32 %v8702, %v8870
    %v8889 = vadd.f32 %v8705, %v8873
    %v8890 = vadd.f32 %v8707, %v8875
    %v8891 = vadd.f32 %v8710, %v8878
    %v8892 = vadd.f32 %v8712, %v8880
    %v8893 = vadd.f32 %v8715, %v8883
    %v8894 = vadd.f32 %v8717, %v8885
    %s8895 = scalar_lea.vmem %s79, 96
    %v8896 = vld [vmem:[%s8895] sm:$0xf]
    %v8897 = vld [vmem:[%s8895 + $0x4] sm:$0xf]
    %v8898 = vld [vmem:[%s8895 + $0x8] sm:$0xf]
    %v8899 = vld [vmem:[%s8895 + $0xc] sm:$0xf]
    %v8900 = vld [vmem:[%s8895 + $0x10] sm:$0xf]
    %v8901 = vld [vmem:[%s8895 + $0x14] sm:$0xf]
    %v8902 = vld [vmem:[%s8895 + $0x18] sm:$0xf]
    %v8903 = vld [vmem:[%s8895 + $0x1c] sm:$0xf]
    %v8912 = vunpack.c.l.b16 %v8896
    %v8913 = vunpack.c.l.b16 %v8897
    %v8914 = vunpack.c.l.b16 %v8898
    %v8915 = vunpack.c.l.b16 %v8899
    %v8916 = vunpack.c.l.b16 %v8900
    %v8917 = vunpack.c.l.b16 %v8901
    %v8918 = vunpack.c.l.b16 %v8902
    %v8919 = vunpack.c.l.b16 %v8903
    %v8920 = vpack.c.b16 %v8913, %v8912
    %v8921 = vpack.c.b16 %v8915, %v8914
    %v8922 = vpack.c.b16 %v8917, %v8916
    %v8923 = vpack.c.b16 %v8919, %v8918
    %v8925 = vsel %vm759, %v8920, 0
    %v8928 = vsel %vm759, %v8921, 0
    %v8931 = vsel %vm759, %v8922, 0
    %v8934 = vsel %vm759, %v8923, 0
    %8936 = vmatpush.bf16.msra.mxu0 0
    %8937 = vmatpush.bf16.msra.mxu0 0
    %8938 = vmatpush.bf16.msra.mxu0 0
    %8939 = vmatpush.bf16.msra.mxu0 0
    %8940 = vmatpush.bf16.msra.mxu0 0
    %8941 = vmatpush.bf16.msra.mxu0 0
    %8942 = vmatpush.bf16.msra.mxu0 %v8384
    %8943 = vmatpush.bf16.msra.mxu0 %v8383
    %8944 = vmatmul.bf16.gmra.mxu0 %v8925
    %v8945 = vpop.f32.mrf.mxu0
    %v8946 = vadd.f32 0.0, %v8945
    %v8947 = vpop.f32.mrf.mxu0
    %v8948 = vadd.f32 0.0, %v8947
    %8949 = vmatmul.bf16.gmra.mxu0 %v8928
    %v8950 = vpop.f32.mrf.mxu0
    %v8951 = vadd.f32 0.0, %v8950
    %v8952 = vpop.f32.mrf.mxu0
    %v8953 = vadd.f32 0.0, %v8952
    %8954 = vmatmul.bf16.gmra.mxu0 %v8931
    %v8955 = vpop.f32.mrf.mxu0
    %v8956 = vadd.f32 0.0, %v8955
    %v8957 = vpop.f32.mrf.mxu0
    %v8958 = vadd.f32 0.0, %v8957
    %8959 = vmatmul.bf16.gmra.mxu0 %v8934
    %v8960 = vpop.f32.mrf.mxu0
    %v8961 = vadd.f32 0.0, %v8960
    %v8962 = vpop.f32.mrf.mxu0
    %v8963 = vadd.f32 0.0, %v8962
    %8964 = vdwg.mxu0
    %v8965 = vpack.c.bf16 %v8948, %v8946
    %v8966 = vpack.c.bf16 %v8953, %v8951
    %v8967 = vpack.c.bf16 %v8958, %v8956
    %v8968 = vpack.c.bf16 %v8963, %v8961
    %s8969 = scalar_lea.vmem %s81, 192
    %v8970 = vld [vmem:[%s8969] sm:$0xf]
    %v8971 = vld [vmem:[%s8969 + $0x4] sm:$0xf]
    %v8972 = vld [vmem:[%s8969 + $0x8] sm:$0xf]
    %v8973 = vld [vmem:[%s8969 + $0xc] sm:$0xf]
    %v8974 = vld [vmem:[%s8969 + $0x10] sm:$0xf]
    %v8975 = vld [vmem:[%s8969 + $0x14] sm:$0xf]
    %v8976 = vld [vmem:[%s8969 + $0x18] sm:$0xf]
    %v8977 = vld [vmem:[%s8969 + $0x1c] sm:$0xf]
    %v8978 = vld [vmem:[%s8969 + $0x20] sm:$0xf]
    %v8979 = vld [vmem:[%s8969 + $0x24] sm:$0xf]
    %v8980 = vld [vmem:[%s8969 + $0x28] sm:$0xf]
    %v8981 = vld [vmem:[%s8969 + $0x2c] sm:$0xf]
    %v8982 = vld [vmem:[%s8969 + $0x30] sm:$0xf]
    %v8983 = vld [vmem:[%s8969 + $0x34] sm:$0xf]
    %v8984 = vld [vmem:[%s8969 + $0x38] sm:$0xf]
    %v8985 = vld [vmem:[%s8969 + $0x3c] sm:$0xf]
    %v9002 = vunpack.c.l.b16 %v8970
    %v9003 = vunpack.c.l.b16 %v8971
    %v9004 = vunpack.c.l.b16 %v8972
    %v9005 = vunpack.c.l.b16 %v8973
    %v9006 = vunpack.c.l.b16 %v8974
    %v9007 = vunpack.c.l.b16 %v8975
    %v9008 = vunpack.c.l.b16 %v8976
    %v9009 = vunpack.c.l.b16 %v8977
    %v9010 = vunpack.c.l.b16 %v8978
    %v9011 = vunpack.c.l.b16 %v8979
    %v9012 = vunpack.c.l.b16 %v8980
    %v9013 = vunpack.c.l.b16 %v8981
    %v9014 = vunpack.c.l.b16 %v8982
    %v9015 = vunpack.c.l.b16 %v8983
    %v9016 = vunpack.c.l.b16 %v8984
    %v9017 = vunpack.c.l.b16 %v8985
    %v9018 = vpack.c.b16 %v9003, %v9002
    %v9019 = vpack.c.b16 %v9005, %v9004
    %v9020 = vpack.c.b16 %v9007, %v9006
    %v9021 = vpack.c.b16 %v9009, %v9008
    %v9022 = vpack.c.b16 %v9011, %v9010
    %v9023 = vpack.c.b16 %v9013, %v9012
    %v9024 = vpack.c.b16 %v9015, %v9014
    %v9025 = vpack.c.b16 %v9017, %v9016
    %9034 = vmatpush.bf16.msra.mxu0 %v9025
    %9035 = vmatpush.bf16.msra.mxu0 %v9024
    %9036 = vmatpush.bf16.msra.mxu0 %v9023
    %9037 = vmatpush.bf16.msra.mxu0 %v9022
    %9038 = vmatpush.bf16.msra.mxu0 %v9021
    %9039 = vmatpush.bf16.msra.mxu0 %v9020
    %9040 = vmatpush.bf16.msra.mxu0 %v9019
    %9041 = vmatpush.bf16.msra.mxu0 %v9018
    %9042 = vmatmul.bf16.gmra.mxu0 %v8965
    %v9043 = vpop.f32.mrf.mxu0
    %v9044 = vadd.f32 0.0, %v9043
    %v9045 = vpop.f32.mrf.mxu0
    %v9046 = vadd.f32 0.0, %v9045
    %9047 = vmatmul.bf16.gmra.mxu0 %v8966
    %v9048 = vpop.f32.mrf.mxu0
    %v9049 = vadd.f32 0.0, %v9048
    %v9050 = vpop.f32.mrf.mxu0
    %v9051 = vadd.f32 0.0, %v9050
    %9052 = vmatmul.bf16.gmra.mxu0 %v8967
    %v9053 = vpop.f32.mrf.mxu0
    %v9054 = vadd.f32 0.0, %v9053
    %v9055 = vpop.f32.mrf.mxu0
    %v9056 = vadd.f32 0.0, %v9055
    %9057 = vmatmul.bf16.gmra.mxu0 %v8968
    %v9058 = vpop.f32.mrf.mxu0
    %v9059 = vadd.f32 0.0, %v9058
    %v9060 = vpop.f32.mrf.mxu0
    %v9061 = vadd.f32 0.0, %v9060
    %9062 = vdwg.mxu0
    %v9063 = vadd.f32 %v8887, %v9044
    %v9064 = vadd.f32 %v8888, %v9046
    %v9065 = vadd.f32 %v8889, %v9049
    %v9066 = vadd.f32 %v8890, %v9051
    %v9067 = vadd.f32 %v8891, %v9054
    %v9068 = vadd.f32 %v8892, %v9056
    %v9069 = vadd.f32 %v8893, %v9059
    %v9070 = vadd.f32 %v8894, %v9061
    %v9071 = vtanh.pop %v9063
    %v9072 = vtanh.pop %v9064
    %v9073 = vtanh.pop %v9065
    %v9074 = vtanh.pop %v9066
    %v9075 = vtanh.pop %v9067
    %v9076 = vtanh.pop %v9068
    %v9077 = vtanh.pop %v9069
    %v9078 = vtanh.pop %v9070
    %9079 = vst.msk [vmem:[%s83] sm:$0xff] %vm411, %v9071
    %9080 = vst.msk [vmem:[%s83 + $0x8] sm:$0xff] %vm411, %v9072
    %9081 = vst.msk [vmem:[%s83 + $0x10] sm:$0xff] %vm411, %v9073
    %9082 = vst.msk [vmem:[%s83 + $0x18] sm:$0xff] %vm411, %v9074
    %9083 = vst.msk [vmem:[%s83 + $0x20] sm:$0xff] %vm411, %v9075
    %9084 = vst.msk [vmem:[%s83 + $0x28] sm:$0xff] %vm411, %v9076
    %9085 = vst.msk [vmem:[%s83 + $0x30] sm:$0xff] %vm411, %v9077
    %9086 = vst.msk [vmem:[%s83 + $0x38] sm:$0xff] %vm411, %v9078
    // Predicated region
    $region182: #{generator_forward.1} parent=1 // pred_check
      _
    $region183: #{generator_forward.1} parent=1 // pred_check_branch
      %9088 = sbr.rel (0) target = $region185
    $region184: #{generator_forward.1} parent=1 // pred_region
      _
    $region185: #{generator_forward.1} parent=1 // pred_fallthru
      _
    // Predicated region
    $region186: #{generator_forward.1} parent=1 // pred_check
      _
    $region187: #{generator_forward.1} parent=1 // pred_check_branch
      %9090 = sbr.rel (0) target = $region189
    $region188: #{generator_forward.1} parent=1 // pred_region
      _
    $region189: #{generator_forward.1} parent=1 // pred_fallthru
      _
    %9091 = vsyncpa [#allocation3], 1
    %9092 = vsyncpa [#allocation5], 1
    %9093 = vsyncpa [#allocation8], 1

</llo_original>
